<compile_context>
chip_gen: v7x
topology: tpu7x:2x2x1
jax: 0.10.0
libtpu: 0.0.40
codegen_flags: <defaults>
</compile_context>

<pallas_src>
import functools

import jax
import jax.numpy as jnp
from jax.experimental import pallas as pl
from jax.experimental.pallas import tpu as pltpu


def _round_up(x, m):
    return ((x + m - 1) // m) * m


@functools.partial(jax.jit, static_argnames=("tm",))
def double_conv_forward(x_nchw, conv_w, conv_b, bn_gamma, bn_beta,
                        bn_mean, bn_var, *, tm=512, eps=1e-5):
    """Conv2d(3x3, pad=1) -> BatchNorm2d (eval) -> ReLU. NCHW in / NCHW out."""
    N, Cin, H, W = x_nchw.shape
    Cout = conv_w.shape[0]
    Hp, Wp = H + 2, W + 2
    Cpad = _round_up(max(Cout, 128), 128)          # lane-dense output channels

    # ---- glue: NCHW -> NHWC, single spatial zero-pad, flatten to (rows, Cin) ----
    x = jnp.transpose(x_nchw, (0, 2, 3, 1))                    # (N, H, W, Cin)
    xp = jnp.pad(x, ((0, 0), (1, 1), (1, 1), (0, 0)))          # (N, Hp, Wp, Cin)
    m_space = N * Hp * Wp                                      # flat output space
    xf = xp.reshape(m_space, Cin)

    # Row tiling: every output row p needs input rows [p, p + 2*Wp + 2].
    tm = min(tm, _round_up(m_space, 8))
    halo = _round_up(2 * Wp + 2, 8)
    slab = tm + halo                                           # input window rows
    n_tiles = pl.cdiv(m_space, tm)
    rows_hbm = n_tiles * tm + halo                             # keep every window in-bounds
    xf = jnp.pad(xf, ((0, rows_hbm - m_space), (0, 0)))

    # Weights (Cout,Cin,3,3) -> (9,Cin,Cout); fold BN scale; pad to 128 lanes.
    scale = bn_gamma / jnp.sqrt(bn_var + eps)                  # (Cout,)
    bias = (conv_b - bn_mean) * scale + bn_beta                # (Cout,)
    w9 = jnp.transpose(conv_w, (2, 3, 1, 0)).reshape(9, Cin, Cout)
    w9 = w9 * scale[None, None, :]
    w9 = jnp.pad(w9, ((0, 0), (0, 0), (0, Cpad - Cout)))
    bias_p = jnp.pad(bias, (0, Cpad - Cout)).reshape(1, Cpad)

    # Flat-row offsets of the 9 taps (dh, dw) in the padded image.
    taps = tuple(dh * Wp + dw for dh in range(3) for dw in range(3))

    def kernel(x_ref, w_ref, b_ref, o_ref):
        # Init output tile with the BN-folded bias, accumulate 9 shifted
        # matmuls (MXU, f32 accumulation), then ReLU.  Output tile is
        # (tm, 128)-lane dense -> unmasked stores.
        o_ref[...] = jnp.broadcast_to(b_ref[...], o_ref.shape)
        for k, t in enumerate(taps):
            o_ref[...] += jnp.dot(x_ref[pl.ds(t, tm), :], w_ref[k],
                                  preferred_element_type=jnp.float32)
        o_ref[...] = jnp.maximum(o_ref[...], 0.0)

    # VMEM budget: double-buffered input slab + weights + bias + output tiles.
    vmem_bytes = 2 * (slab * Cin + 9 * Cin * Cpad + Cpad + tm * Cpad) * 4
    vmem_limit = int(min(100 * 2**20, max(2 * vmem_bytes, 16 * 2**20)))

    out_flat = pl.pallas_call(
        kernel,
        out_shape=jax.ShapeDtypeStruct((n_tiles * tm, Cpad), jnp.float32),
        grid=(n_tiles,),
        in_specs=[
            # Overlapping (halo) input windows: element-indexed rows.
            pl.BlockSpec((pl.Element(slab), pl.Element(Cin)),
                         lambda i: (i * tm, 0)),
            pl.BlockSpec((9, Cin, Cpad), lambda i: (0, 0, 0)),
            pl.BlockSpec((1, Cpad), lambda i: (0, 0)),
        ],
        out_specs=pl.BlockSpec((tm, Cpad), lambda i: (i, 0)),
        compiler_params=pltpu.CompilerParams(
            dimension_semantics=("parallel",),
            vmem_limit_bytes=vmem_limit),
    )(xf, w9, bias_p)

    # Valid conv output for pixel (n, h, w) lives at flat row n*Hp*Wp + h*Wp + w.
    out = out_flat[:m_space].reshape(N, Hp, Wp, Cpad)[:, :H, :W, :Cout]
    return jnp.transpose(out, (0, 3, 1, 2)).astype(x_nchw.dtype)   # back to NCHW


def _reference(x_nchw, conv_w, conv_b, gamma, beta, mean, var, eps=1e-5):
    y = jax.lax.conv_general_dilated(
        x_nchw, conv_w, window_strides=(1, 1), padding=((1, 1), (1, 1)),
        dimension_numbers=("NCHW", "OIHW", "NCHW"))
    y = y + conv_b[None, :, None, None]
    y = (y - mean[None, :, None, None]) / jnp.sqrt(var + eps)[None, :, None, None]
    y = y * gamma[None, :, None, None] + beta[None, :, None, None]
    return jnp.maximum(y, 0.0)


if __name__ == "__main__":
    N, Cin, Cout, H, W = 2, 4, 8, 16, 16

    key = jax.random.PRNGKey(0)
    kx, kw, kb, kg, kbe, km, kv = jax.random.split(key, 7)

    x = jax.random.normal(kx, (N, Cin, H, W), dtype=jnp.float32)

    # deterministic synthetic parameters (shapes from nn.Conv2d / nn.BatchNorm2d)
    conv_w = jax.random.normal(kw, (Cout, Cin, 3, 3), dtype=jnp.float32) * 0.1
    conv_b = jax.random.normal(kb, (Cout,), dtype=jnp.float32) * 0.1
    bn_gamma = 1.0 + 0.1 * jax.random.normal(kg, (Cout,), dtype=jnp.float32)
    bn_beta = 0.1 * jax.random.normal(kbe, (Cout,), dtype=jnp.float32)
    bn_mean = 0.1 * jax.random.normal(km, (Cout,), dtype=jnp.float32)
    bn_var = 1.0 + 0.1 * jax.random.uniform(kv, (Cout,), dtype=jnp.float32)

    out = double_conv_forward(x, conv_w, conv_b, bn_gamma, bn_beta, bn_mean, bn_var)
    out = jax.block_until_ready(out)

    ref = _reference(x, conv_w, conv_b, bn_gamma, bn_beta, bn_mean, bn_var)
    assert out.shape == (N, Cout, H, W)
    assert jnp.allclose(out, ref, atol=1e-4, rtol=1e-4), "mismatch vs reference"

    print("KERNEL_OK")
</pallas_src>

<mosaic_0001>
module attributes {stable_mosaic.version = 11 : i64} {
  func.func @kernel(%arg0: i32, %arg1: memref<552x4xf32, #tpu.memory_space<vmem>>, %arg2: memref<9x4x128xf32, #tpu.memory_space<vmem>>, %arg3: memref<1x128xf32, #tpu.memory_space<vmem>>, %arg4: memref<512x128xf32, #tpu.memory_space<vmem>>) attributes {dimension_semantics = [#tpu.dimension_semantics<parallel>], iteration_bounds = array<i64: 2>, scalar_prefetch = 0 : i64, scratch_operands = 0 : i64, tpu.core_type = #tpu.core_type<tc>, window_params = [{transform_indices = @transform_0, window_bounds = array<i64: 552, 4>, window_kind = #tpu.element_window<[0, 0], [0, 0]>}, {pipeline_mode = #tpu.pipeline_mode<synchronous>, transform_indices = @transform_1, window_bounds = array<i64: 9, 4, 128>}, {pipeline_mode = #tpu.pipeline_mode<synchronous>, transform_indices = @transform_2, window_bounds = array<i64: 1, 128>}, {transform_indices = @transform_3, window_bounds = array<i64: 512, 128>}]} {
    %c0 = arith.constant 0 : index
    %c0_0 = arith.constant 0 : index
    %0 = vector.load %arg3[%c0, %c0_0] : memref<1x128xf32, #tpu.memory_space<vmem>>, vector<1x128xf32>
    %1 = vector.shape_cast %0 : vector<1x128xf32> to vector<1x128xf32>
    %2 = vector.broadcast %1 : vector<1x128xf32> to vector<512x128xf32>
    %c0_1 = arith.constant 0 : index
    %c0_2 = arith.constant 0 : index
    %3 = vector.load %arg4[%c0_1, %c0_2] : memref<512x128xf32, #tpu.memory_space<vmem>>, vector<512x128xf32>
    tpu.vector_store %arg4[%c0_1, %c0_2], %2 {strides = array<i32>} : memref<512x128xf32, #tpu.memory_space<vmem>>, vector<512x128xf32>,
    %c0_3 = arith.constant 0 : index
    %c0_4 = arith.constant 0 : index
    %4 = vector.load %arg4[%c0_3, %c0_4] : memref<512x128xf32, #tpu.memory_space<vmem>>, vector<512x128xf32>
    %c0_5 = arith.constant 0 : index
    %c0_6 = arith.constant 0 : index
    %5 = vector.load %arg1[%c0_5, %c0_6] : memref<552x4xf32, #tpu.memory_space<vmem>>, vector<512x4xf32>
    %c0_7 = arith.constant 0 : index
    %c0_8 = arith.constant 0 : index
    %c0_9 = arith.constant 0 : index
    %6 = vector.load %arg2[%c0_7, %c0_8, %c0_9] : memref<9x4x128xf32, #tpu.memory_space<vmem>>, vector<1x4x128xf32>
    %7 = vector.shape_cast %6 : vector<1x4x128xf32> to vector<4x128xf32>
    %cst = arith.constant dense<0.000000e+00> : vector<512x128xf32>
    %8 = tpu.matmul %5, %7, %cst {dimension_numbers = #tpu.dot_dimension_numbers<[1], [0], [0], [1], [0, 0, 1, 1], [], []>} : vector<512x4xf32>, vector<4x128xf32>, vector<512x128xf32> -> vector<512x128xf32>
    %9 = arith.addf %4, %8 : vector<512x128xf32>
    %c0_10 = arith.constant 0 : index
    %c0_11 = arith.constant 0 : index
    %10 = vector.load %arg4[%c0_10, %c0_11] : memref<512x128xf32, #tpu.memory_space<vmem>>, vector<512x128xf32>
    tpu.vector_store %arg4[%c0_10, %c0_11], %9 {strides = array<i32>} : memref<512x128xf32, #tpu.memory_space<vmem>>, vector<512x128xf32>,
    %c0_12 = arith.constant 0 : index
    %c0_13 = arith.constant 0 : index
    %11 = vector.load %arg4[%c0_12, %c0_13] : memref<512x128xf32, #tpu.memory_space<vmem>>, vector<512x128xf32>
    %c1 = arith.constant 1 : index
    %c0_14 = arith.constant 0 : index
    %12 = vector.load %arg1[%c1, %c0_14] : memref<552x4xf32, #tpu.memory_space<vmem>>, vector<512x4xf32>
    %c1_15 = arith.constant 1 : index
    %c0_16 = arith.constant 0 : index
    %c0_17 = arith.constant 0 : index
    %13 = vector.load %arg2[%c1_15, %c0_16, %c0_17] : memref<9x4x128xf32, #tpu.memory_space<vmem>>, vector<1x4x128xf32>
    %14 = vector.shape_cast %13 : vector<1x4x128xf32> to vector<4x128xf32>
    %cst_18 = arith.constant dense<0.000000e+00> : vector<512x128xf32>
    %15 = tpu.matmul %12, %14, %cst_18 {dimension_numbers = #tpu.dot_dimension_numbers<[1], [0], [0], [1], [0, 0, 1, 1], [], []>} : vector<512x4xf32>, vector<4x128xf32>, vector<512x128xf32> -> vector<512x128xf32>
    %16 = arith.addf %11, %15 : vector<512x128xf32>
    %c0_19 = arith.constant 0 : index
    %c0_20 = arith.constant 0 : index
    %17 = vector.load %arg4[%c0_19, %c0_20] : memref<512x128xf32, #tpu.memory_space<vmem>>, vector<512x128xf32>
    tpu.vector_store %arg4[%c0_19, %c0_20], %16 {strides = array<i32>} : memref<512x128xf32, #tpu.memory_space<vmem>>, vector<512x128xf32>,
    %c0_21 = arith.constant 0 : index
    %c0_22 = arith.constant 0 : index
    %18 = vector.load %arg4[%c0_21, %c0_22] : memref<512x128xf32, #tpu.memory_space<vmem>>, vector<512x128xf32>
    %c2 = arith.constant 2 : index
    %c0_23 = arith.constant 0 : index
    %19 = vector.load %arg1[%c2, %c0_23] : memref<552x4xf32, #tpu.memory_space<vmem>>, vector<512x4xf32>
    %c2_24 = arith.constant 2 : index
    %c0_25 = arith.constant 0 : index
    %c0_26 = arith.constant 0 : index
    %20 = vector.load %arg2[%c2_24, %c0_25, %c0_26] : memref<9x4x128xf32, #tpu.memory_space<vmem>>, vector<1x4x128xf32>
    %21 = vector.shape_cast %20 : vector<1x4x128xf32> to vector<4x128xf32>
    %cst_27 = arith.constant dense<0.000000e+00> : vector<512x128xf32>
    %22 = tpu.matmul %19, %21, %cst_27 {dimension_numbers = #tpu.dot_dimension_numbers<[1], [0], [0], [1], [0, 0, 1, 1], [], []>} : vector<512x4xf32>, vector<4x128xf32>, vector<512x128xf32> -> vector<512x128xf32>
    %23 = arith.addf %18, %22 : vector<512x128xf32>
    %c0_28 = arith.constant 0 : index
    %c0_29 = arith.constant 0 : index
    %24 = vector.load %arg4[%c0_28, %c0_29] : memref<512x128xf32, #tpu.memory_space<vmem>>, vector<512x128xf32>
    tpu.vector_store %arg4[%c0_28, %c0_29], %23 {strides = array<i32>} : memref<512x128xf32, #tpu.memory_space<vmem>>, vector<512x128xf32>,
    %c0_30 = arith.constant 0 : index
    %c0_31 = arith.constant 0 : index
    %25 = vector.load %arg4[%c0_30, %c0_31] : memref<512x128xf32, #tpu.memory_space<vmem>>, vector<512x128xf32>
    %c18 = arith.constant 18 : index
    %c0_32 = arith.constant 0 : index
    %26 = vector.load %arg1[%c18, %c0_32] : memref<552x4xf32, #tpu.memory_space<vmem>>, vector<512x4xf32>
    %c3 = arith.constant 3 : index
    %c0_33 = arith.constant 0 : index
    %c0_34 = arith.constant 0 : index
    %27 = vector.load %arg2[%c3, %c0_33, %c0_34] : memref<9x4x128xf32, #tpu.memory_space<vmem>>, vector<1x4x128xf32>
    %28 = vector.shape_cast %27 : vector<1x4x128xf32> to vector<4x128xf32>
    %cst_35 = arith.constant dense<0.000000e+00> : vector<512x128xf32>
    %29 = tpu.matmul %26, %28, %cst_35 {dimension_numbers = #tpu.dot_dimension_numbers<[1], [0], [0], [1], [0, 0, 1, 1], [], []>} : vector<512x4xf32>, vector<4x128xf32>, vector<512x128xf32> -> vector<512x128xf32>
    %30 = arith.addf %25, %29 : vector<512x128xf32>
    %c0_36 = arith.constant 0 : index
    %c0_37 = arith.constant 0 : index
    %31 = vector.load %arg4[%c0_36, %c0_37] : memref<512x128xf32, #tpu.memory_space<vmem>>, vector<512x128xf32>
    tpu.vector_store %arg4[%c0_36, %c0_37], %30 {strides = array<i32>} : memref<512x128xf32, #tpu.memory_space<vmem>>, vector<512x128xf32>,
    %c0_38 = arith.constant 0 : index
    %c0_39 = arith.constant 0 : index
    %32 = vector.load %arg4[%c0_38, %c0_39] : memref<512x128xf32, #tpu.memory_space<vmem>>, vector<512x128xf32>
    %c19 = arith.constant 19 : index
    %c0_40 = arith.constant 0 : index
    %33 = vector.load %arg1[%c19, %c0_40] : memref<552x4xf32, #tpu.memory_space<vmem>>, vector<512x4xf32>
    %c4 = arith.constant 4 : index
    %c0_41 = arith.constant 0 : index
    %c0_42 = arith.constant 0 : index
    %34 = vector.load %arg2[%c4, %c0_41, %c0_42] : memref<9x4x128xf32, #tpu.memory_space<vmem>>, vector<1x4x128xf32>
    %35 = vector.shape_cast %34 : vector<1x4x128xf32> to vector<4x128xf32>
    %cst_43 = arith.constant dense<0.000000e+00> : vector<512x128xf32>
    %36 = tpu.matmul %33, %35, %cst_43 {dimension_numbers = #tpu.dot_dimension_numbers<[1], [0], [0], [1], [0, 0, 1, 1], [], []>} : vector<512x4xf32>, vector<4x128xf32>, vector<512x128xf32> -> vector<512x128xf32>
    %37 = arith.addf %32, %36 : vector<512x128xf32>
    %c0_44 = arith.constant 0 : index
    %c0_45 = arith.constant 0 : index
    %38 = vector.load %arg4[%c0_44, %c0_45] : memref<512x128xf32, #tpu.memory_space<vmem>>, vector<512x128xf32>
    tpu.vector_store %arg4[%c0_44, %c0_45], %37 {strides = array<i32>} : memref<512x128xf32, #tpu.memory_space<vmem>>, vector<512x128xf32>,
    %c0_46 = arith.constant 0 : index
    %c0_47 = arith.constant 0 : index
    %39 = vector.load %arg4[%c0_46, %c0_47] : memref<512x128xf32, #tpu.memory_space<vmem>>, vector<512x128xf32>
    %c20 = arith.constant 20 : index
    %c0_48 = arith.constant 0 : index
    %40 = vector.load %arg1[%c20, %c0_48] : memref<552x4xf32, #tpu.memory_space<vmem>>, vector<512x4xf32>
    %c5 = arith.constant 5 : index
    %c0_49 = arith.constant 0 : index
    %c0_50 = arith.constant 0 : index
    %41 = vector.load %arg2[%c5, %c0_49, %c0_50] : memref<9x4x128xf32, #tpu.memory_space<vmem>>, vector<1x4x128xf32>
    %42 = vector.shape_cast %41 : vector<1x4x128xf32> to vector<4x128xf32>
    %cst_51 = arith.constant dense<0.000000e+00> : vector<512x128xf32>
    %43 = tpu.matmul %40, %42, %cst_51 {dimension_numbers = #tpu.dot_dimension_numbers<[1], [0], [0], [1], [0, 0, 1, 1], [], []>} : vector<512x4xf32>, vector<4x128xf32>, vector<512x128xf32> -> vector<512x128xf32>
    %44 = arith.addf %39, %43 : vector<512x128xf32>
    %c0_52 = arith.constant 0 : index
    %c0_53 = arith.constant 0 : index
    %45 = vector.load %arg4[%c0_52, %c0_53] : memref<512x128xf32, #tpu.memory_space<vmem>>, vector<512x128xf32>
    tpu.vector_store %arg4[%c0_52, %c0_53], %44 {strides = array<i32>} : memref<512x128xf32, #tpu.memory_space<vmem>>, vector<512x128xf32>,
    %c0_54 = arith.constant 0 : index
    %c0_55 = arith.constant 0 : index
    %46 = vector.load %arg4[%c0_54, %c0_55] : memref<512x128xf32, #tpu.memory_space<vmem>>, vector<512x128xf32>
    %c36 = arith.constant 36 : index
    %c0_56 = arith.constant 0 : index
    %47 = vector.load %arg1[%c36, %c0_56] : memref<552x4xf32, #tpu.memory_space<vmem>>, vector<512x4xf32>
    %c6 = arith.constant 6 : index
    %c0_57 = arith.constant 0 : index
    %c0_58 = arith.constant 0 : index
    %48 = vector.load %arg2[%c6, %c0_57, %c0_58] : memref<9x4x128xf32, #tpu.memory_space<vmem>>, vector<1x4x128xf32>
    %49 = vector.shape_cast %48 : vector<1x4x128xf32> to vector<4x128xf32>
    %cst_59 = arith.constant dense<0.000000e+00> : vector<512x128xf32>
    %50 = tpu.matmul %47, %49, %cst_59 {dimension_numbers = #tpu.dot_dimension_numbers<[1], [0], [0], [1], [0, 0, 1, 1], [], []>} : vector<512x4xf32>, vector<4x128xf32>, vector<512x128xf32> -> vector<512x128xf32>
    %51 = arith.addf %46, %50 : vector<512x128xf32>
    %c0_60 = arith.constant 0 : index
    %c0_61 = arith.constant 0 : index
    %52 = vector.load %arg4[%c0_60, %c0_61] : memref<512x128xf32, #tpu.memory_space<vmem>>, vector<512x128xf32>
    tpu.vector_store %arg4[%c0_60, %c0_61], %51 {strides = array<i32>} : memref<512x128xf32, #tpu.memory_space<vmem>>, vector<512x128xf32>,
    %c0_62 = arith.constant 0 : index
    %c0_63 = arith.constant 0 : index
    %53 = vector.load %arg4[%c0_62, %c0_63] : memref<512x128xf32, #tpu.memory_space<vmem>>, vector<512x128xf32>
    %c37 = arith.constant 37 : index
    %c0_64 = arith.constant 0 : index
    %54 = vector.load %arg1[%c37, %c0_64] : memref<552x4xf32, #tpu.memory_space<vmem>>, vector<512x4xf32>
    %c7 = arith.constant 7 : index
    %c0_65 = arith.constant 0 : index
    %c0_66 = arith.constant 0 : index
    %55 = vector.load %arg2[%c7, %c0_65, %c0_66] : memref<9x4x128xf32, #tpu.memory_space<vmem>>, vector<1x4x128xf32>
    %56 = vector.shape_cast %55 : vector<1x4x128xf32> to vector<4x128xf32>
    %cst_67 = arith.constant dense<0.000000e+00> : vector<512x128xf32>
    %57 = tpu.matmul %54, %56, %cst_67 {dimension_numbers = #tpu.dot_dimension_numbers<[1], [0], [0], [1], [0, 0, 1, 1], [], []>} : vector<512x4xf32>, vector<4x128xf32>, vector<512x128xf32> -> vector<512x128xf32>
    %58 = arith.addf %53, %57 : vector<512x128xf32>
    %c0_68 = arith.constant 0 : index
    %c0_69 = arith.constant 0 : index
    %59 = vector.load %arg4[%c0_68, %c0_69] : memref<512x128xf32, #tpu.memory_space<vmem>>, vector<512x128xf32>
    tpu.vector_store %arg4[%c0_68, %c0_69], %58 {strides = array<i32>} : memref<512x128xf32, #tpu.memory_space<vmem>>, vector<512x128xf32>,
    %c0_70 = arith.constant 0 : index
    %c0_71 = arith.constant 0 : index
    %60 = vector.load %arg4[%c0_70, %c0_71] : memref<512x128xf32, #tpu.memory_space<vmem>>, vector<512x128xf32>
    %c38 = arith.constant 38 : index
    %c0_72 = arith.constant 0 : index
    %61 = vector.load %arg1[%c38, %c0_72] : memref<552x4xf32, #tpu.memory_space<vmem>>, vector<512x4xf32>
    %c8 = arith.constant 8 : index
    %c0_73 = arith.constant 0 : index
    %c0_74 = arith.constant 0 : index
    %62 = vector.load %arg2[%c8, %c0_73, %c0_74] : memref<9x4x128xf32, #tpu.memory_space<vmem>>, vector<1x4x128xf32>
    %63 = vector.shape_cast %62 : vector<1x4x128xf32> to vector<4x128xf32>
    %cst_75 = arith.constant dense<0.000000e+00> : vector<512x128xf32>
    %64 = tpu.matmul %61, %63, %cst_75 {dimension_numbers = #tpu.dot_dimension_numbers<[1], [0], [0], [1], [0, 0, 1, 1], [], []>} : vector<512x4xf32>, vector<4x128xf32>, vector<512x128xf32> -> vector<512x128xf32>
    %65 = arith.addf %60, %64 : vector<512x128xf32>
    %c0_76 = arith.constant 0 : index
    %c0_77 = arith.constant 0 : index
    %66 = vector.load %arg4[%c0_76, %c0_77] : memref<512x128xf32, #tpu.memory_space<vmem>>, vector<512x128xf32>
    tpu.vector_store %arg4[%c0_76, %c0_77], %65 {strides = array<i32>} : memref<512x128xf32, #tpu.memory_space<vmem>>, vector<512x128xf32>,
    %c0_78 = arith.constant 0 : index
    %c0_79 = arith.constant 0 : index
    %67 = vector.load %arg4[%c0_78, %c0_79] : memref<512x128xf32, #tpu.memory_space<vmem>>, vector<512x128xf32>
    %cst_80 = arith.constant 0.000000e+00 : f32
    %68 = vector.broadcast %cst_80 : f32 to vector<512x128xf32>
    %69 = arith.maximumf %67, %68 : vector<512x128xf32>
    %c0_81 = arith.constant 0 : index
    %c0_82 = arith.constant 0 : index
    %70 = vector.load %arg4[%c0_81, %c0_82] : memref<512x128xf32, #tpu.memory_space<vmem>>, vector<512x128xf32>
    tpu.vector_store %arg4[%c0_81, %c0_82], %69 {strides = array<i32>} : memref<512x128xf32, #tpu.memory_space<vmem>>, vector<512x128xf32>,
    return
  }
  func.func @transform_0(%arg0: i32) -> (i32, i32) {
    %c512_i32 = arith.constant 512 : i32
    %0 = arith.muli %arg0, %c512_i32 : i32
    %c0_i32 = arith.constant 0 : i32
    %c0_i32_0 = arith.constant 0 : i32
    return %0, %c0_i32 : i32, i32
  }
  func.func @transform_1(%arg0: i32) -> (i32, i32, i32) {
    %c0_i32 = arith.constant 0 : i32
    %c0_i32_0 = arith.constant 0 : i32
    %c0_i32_1 = arith.constant 0 : i32
    %c0_i32_2 = arith.constant 0 : i32
    return %c0_i32, %c0_i32_0, %c0_i32_1 : i32, i32, i32
  }
  func.func @transform_2(%arg0: i32) -> (i32, i32) {
    %c0_i32 = arith.constant 0 : i32
    %c0_i32_0 = arith.constant 0 : i32
    %c0_i32_1 = arith.constant 0 : i32
    return %c0_i32, %c0_i32_0 : i32, i32
  }
  func.func @transform_3(%arg0: i32) -> (i32, i32) {
    %c0_i32 = arith.constant 0 : i32
    %c0_i32_0 = arith.constant 0 : i32
    return %arg0, %c0_i32 : i32, i32
  }
}

</mosaic_0001>

<llo_original>
// kernel: double_conv_forward.1
$region0: #{double_conv_forward.1}
  #allocation0 [shape = 'u32[]', space=smem, size = 0x4, offset = 0x4, fixed_abs, tag = 'smem constant byte address 0x4 - core index']
  #allocation1 [shape = 'u32[144,128]{1,0:T(1,128)}', space=vmem, size = 0x12000, scoped, tag = 'internal scratch']
  %s0 = inlined_call_operand.vmem [shape: f32[1064,4], index: 0, kind: input, shape index: {}]
  %s1 = inlined_call_operand.vmem [shape: f32[9,4,128], index: 1, kind: input, shape index: {}]
  %s2 = inlined_call_operand.vmem [shape: f32[1,128], index: 2, kind: input, shape index: {}]
  %s3 = inlined_call_operand.vmem [shape: f32[1024,128], index: 3, kind: output, shape index: {}]
  %s4 = sld [smem:[#allocation0]]
  $region45: #{double_conv_forward.1} parent=0
    _
  %s6 = ssub.s32 1, %s4
  %s7 = scalar_select 0, %s6, %s4
  loop: start=0, step=1, limit=4
  $region2: #{double_conv_forward.1} parent=0 // loop_pre_header
    _
  $region3: #{double_conv_forward.1} parent=0 // loop_header
    %s9 = sphi 0, %s13
    %p10 = scmp.ge.s32.totalorder %s9, 4
    %s37 = sphi 0, %s39
    %s40 = sphi 0, %s37
    %s41 = sphi 0, %s40
    %s57 = sphi 0, %s41
    %s61 = sphi 0, %s61
    %s63 = sphi 0, %s61
    %s64 = sphi 0, %s63
    %s78 = sphi 0, %s64
    %s82 = sphi 0, %s82
    %s84 = sphi 0, %s82
    %s85 = sphi 0, %s84
    %s99 = sphi 0, %s85
    %s105 = sphi 0, %s107
    %s108 = sphi 0, %s105
    %s109 = sphi 0, %s108
    %s125 = sphi 0, %s109
  $region4: #{double_conv_forward.1} parent=0 // loop_header_branch
    %12 = sbr.rel (%p10) target = $region8
  $region5: #{double_conv_forward.1} parent=0 // loop_body
    %s14 = ssub.s32 %s9, 1
    %s15 = ssub.s32 %s9, 2
    %s16 = sadd.s32 %s9, 1
    %s17 = smul.u32 %s9, 512
    %s18 = ssub.s32 0, 0
    %s19 = ssub.s32 0, 0
    %p20 = scmp.lt.s32.totalorder %s17, 0
    %s21 = ssub.s32 0, %s17
    %s22 = scalar_select %p20, %s21, %s17
    %s23 = sshrl.u32 %s22, 3
    %s24 = ssub.s32 0, %s23
    %s25 = scalar_select %p20, %s24, %s23
    %s26 = smul.u32 %s16, 512
    %s27 = ssub.s32 0, 0
    %s28 = ssub.s32 0, 0
    %p29 = scmp.lt.s32.totalorder %s26, 0
    %s30 = ssub.s32 0, %s26
    %s31 = scalar_select %p29, %s30, %s26
    %s32 = sshrl.u32 %s31, 3
    %s33 = ssub.s32 0, %s32
    %s34 = scalar_select %p29, %s33, %s32
    %s35 = ssub.s32 %s25, %s34
    %p36 = scmp.eq.s32.totalorder %s35, 0
    %s38 = sadd.s32 %s37, 1
    %s39 = scalar_select %p36, %s37, %s38
    %p42 = pneg %p36
    %p43 = scmp.eq.s32.totalorder %s9, 1
    %p44 = por %p42, %p43
    %p45 = scmp.ne.s32.totalorder %s37, %s40
    %p46 = scmp.eq.s32.totalorder %s9, 0
    %p47 = por %p45, %p46
    %p48 = scmp.ne.s32.totalorder %s37, %s40
    %p49 = scmp.eq.s32.totalorder %s14, 1
    %p50 = por %p48, %p49
    %p51 = scmp.ne.s32.totalorder %s40, %s41
    %p52 = scmp.eq.s32.totalorder %s14, 0
    %p53 = por %p51, %p52
    %p54 = scmp.ne.s32.totalorder %s40, %s41
    %p55 = scmp.eq.s32.totalorder %s15, 1
    %p56 = por %p54, %p55
    %p58 = scmp.ne.s32.totalorder %s41, %s57
    %p59 = scmp.eq.s32.totalorder %s15, 0
    %p60 = por %p58, %p59
    %s62 = sadd.s32 %s61, 1
    %p65 = scmp.eq.s32.totalorder %s9, 1
    %p66 = scmp.ne.s32.totalorder %s61, %s63
    %p67 = scmp.eq.s32.totalorder %s9, 0
    %p68 = por %p66, %p67
    %p69 = scmp.ne.s32.totalorder %s61, %s63
    %p70 = scmp.eq.s32.totalorder %s14, 1
    %p71 = por %p69, %p70
    %p72 = scmp.ne.s32.totalorder %s63, %s64
    %p73 = scmp.eq.s32.totalorder %s14, 0
    %p74 = por %p72, %p73
    %p75 = scmp.ne.s32.totalorder %s63, %s64
    %p76 = scmp.eq.s32.totalorder %s15, 1
    %p77 = por %p75, %p76
    %p79 = scmp.ne.s32.totalorder %s64, %s78
    %p80 = scmp.eq.s32.totalorder %s15, 0
    %p81 = por %p79, %p80
    %s83 = sadd.s32 %s82, 1
    %p86 = scmp.eq.s32.totalorder %s9, 1
    %p87 = scmp.ne.s32.totalorder %s82, %s84
    %p88 = scmp.eq.s32.totalorder %s9, 0
    %p89 = por %p87, %p88
    %p90 = scmp.ne.s32.totalorder %s82, %s84
    %p91 = scmp.eq.s32.totalorder %s14, 1
    %p92 = por %p90, %p91
    %p93 = scmp.ne.s32.totalorder %s84, %s85
    %p94 = scmp.eq.s32.totalorder %s14, 0
    %p95 = por %p93, %p94
    %p96 = scmp.ne.s32.totalorder %s84, %s85
    %p97 = scmp.eq.s32.totalorder %s15, 1
    %p98 = por %p96, %p97
    %p100 = scmp.ne.s32.totalorder %s85, %s99
    %p101 = scmp.eq.s32.totalorder %s15, 0
    %p102 = por %p100, %p101
    %s103 = ssub.s32 %s9, %s16
    %p104 = scmp.eq.s32.totalorder %s103, 0
    %s106 = sadd.s32 %s105, 1
    %s107 = scalar_select %p104, %s105, %s106
    %p110 = pneg %p104
    %p111 = scmp.eq.s32.totalorder %s9, 1
    %p112 = por %p110, %p111
    %p113 = scmp.ne.s32.totalorder %s105, %s108
    %p114 = scmp.eq.s32.totalorder %s9, 0
    %p115 = por %p113, %p114
    %p116 = scmp.ne.s32.totalorder %s105, %s108
    %p117 = scmp.eq.s32.totalorder %s14, 1
    %p118 = por %p116, %p117
    %p119 = scmp.ne.s32.totalorder %s108, %s109
    %p120 = scmp.eq.s32.totalorder %s14, 0
    %p121 = por %p119, %p120
    %p122 = scmp.ne.s32.totalorder %s108, %s109
    %p123 = scmp.eq.s32.totalorder %s15, 1
    %p124 = por %p122, %p123
    %p126 = scmp.ne.s32.totalorder %s109, %s125
    %p127 = scmp.eq.s32.totalorder %s15, 0
    %p128 = por %p126, %p127
    %p129 = scmp.le.s32.totalorder 1, %s9
    %p130 = scmp.lt.s32.totalorder %s9, 3
    %p131 = pnand %p129, %p130
    %p132 = pneg %p131
    // Predicated region
    $region9: #{double_conv_forward.1} parent=5 // pred_check
      _
    $region10: #{double_conv_forward.1} parent=5 // pred_check_branch
      %134 = sbr.rel (%p131) target = $region12
    $region11: #{double_conv_forward.1} parent=5 // pred_region
      %s135 = ssub.s32 %s9, 1
      // Predicated region
      $region13: #{double_conv_forward.1} parent=11 // pred_check
        %p136 = pneg %p74
      $region14: #{double_conv_forward.1} parent=11 // pred_check_branch
        %138 = sbr.rel (%p136) target = $region16
      $region15: #{double_conv_forward.1} parent=11 // pred_region
        _
      $region16: #{double_conv_forward.1} parent=11 // pred_fallthru
        _
      // Predicated region
      $region17: #{double_conv_forward.1} parent=11 // pred_check
        %p139 = pneg %p95
      $region18: #{double_conv_forward.1} parent=11 // pred_check_branch
        %141 = sbr.rel (%p139) target = $region20
      $region19: #{double_conv_forward.1} parent=11 // pred_region
        _
      $region20: #{double_conv_forward.1} parent=11 // pred_fallthru
        _
    $region12: #{double_conv_forward.1} parent=5 // pred_fallthru
      _
    %p142 = scmp.lt.s32.totalorder %s9, 2
    // Predicated region
    $region21: #{double_conv_forward.1} parent=5 // pred_check
      %p143 = pneg %p142
    $region22: #{double_conv_forward.1} parent=5 // pred_check_branch
      %145 = sbr.rel (%p143) target = $region24
    $region23: #{double_conv_forward.1} parent=5 // pred_region
      // Predicated region
      $region25: #{double_conv_forward.1} parent=23 // pred_check
        %p146 = pneg %p47
      $region26: #{double_conv_forward.1} parent=23 // pred_check_branch
        %148 = sbr.rel (%p146) target = $region28
      $region27: #{double_conv_forward.1} parent=23 // pred_region
        %s149 = smul.u32 %s9, 512
        %s150 = ssub.s32 0, 0
        %s151 = ssub.s32 0, 0
        %p152 = scmp.lt.s32.totalorder %s149, 0
        %s153 = ssub.s32 0, %s149
        %s154 = scalar_select %p152, %s153, %s149
        %s155 = sshrl.u32 %s154, 3
        %s156 = ssub.s32 0, %s155
        %s157 = scalar_select %p152, %s156, %s155
        %p158 = scmp.lt.s32.totalorder %s157, 132
        %s159 = scalar_select %p158, %s157, 132
        %s160 = smul.addr %s159, 8
        %s161 = scalar_lea.vmem %s0, %s160
        %s162 = smul.u32 %s9, 512
        %s163 = ssub.s32 0, 0
        %s164 = ssub.s32 0, 0
        %p165 = scmp.lt.s32.totalorder %s162, 0
        %s166 = ssub.s32 0, %s162
        %s167 = scalar_select %p165, %s166, %s162
        %s168 = sshrl.u32 %s167, 3
        %s169 = ssub.s32 0, %s168
        %s170 = scalar_select %p165, %s169, %s168
      $region28: #{double_conv_forward.1} parent=23 // pred_fallthru
        _
    $region24: #{double_conv_forward.1} parent=5 // pred_fallthru
      _
    %p171 = scmp.le.s32.totalorder 1, %s9
    %p172 = scmp.lt.s32.totalorder %s9, 3
    %p173 = pnand %p171, %p172
    %p174 = pneg %p173
    // Predicated region
    $region29: #{double_conv_forward.1} parent=5 // pred_check
      _
    $region30: #{double_conv_forward.1} parent=5 // pred_check_branch
      %176 = sbr.rel (%p173) target = $region32
    $region31: #{double_conv_forward.1} parent=5 // pred_region
      %s177 = ssub.s32 %s9, 1
      %s178 = smul.u32 %s14, 512
      %s179 = ssub.s32 0, 0
      %s180 = ssub.s32 0, 0
      %p181 = scmp.lt.s32.totalorder %s178, 0
      %s182 = ssub.s32 0, %s178
      %s183 = scalar_select %p181, %s182, %s178
      %s184 = sshrl.u32 %s183, 3
      %s185 = ssub.s32 0, %s184
      %s186 = scalar_select %p181, %s185, %s184
      %p187 = scmp.lt.s32.totalorder %s186, 132
      %s188 = scalar_select %p187, %s186, 132
      %s189 = smul.addr %s188, 8
      %s190 = scalar_lea.vmem %s0, %s189
      %p191 = pneg %p53
      %p192 = pneg %p50
      %p193 = pneg %p74
      %p194 = pneg %p71
      %p195 = pneg %p95
      %p196 = pneg %p92
      %p197 = pneg %p121
      %p198 = pneg %p118
      %s199 = smul.u32 64, %s14
      %p200 = scmp.lt.s32.totalorder %s199, 127
      %s201 = scalar_select %p200, %s199, 127
      %s202 = smul.addr %s201, 8
      %s203 = scalar_lea.vmem %s3, %s202
      %s204 = smul.u32 %s14, 512
      %s205 = ssub.s32 0, 0
      %s206 = ssub.s32 0, 0
      %p207 = scmp.lt.s32.totalorder %s204, 0
      %s208 = ssub.s32 0, %s204
      %s209 = scalar_select %p207, %s208, %s204
      %s210 = sshrl.u32 %s209, 3
      %s211 = ssub.s32 0, %s210
      %s212 = scalar_select %p207, %s211, %s210
      %p213 = scmp.lt.s32.totalorder %s212, 132
      %s214 = scalar_select %p213, %s212, 132
      %s215 = smul.addr %s214, 8
      %s216 = scalar_lea.vmem %s0, %s215
      %s217 = smul.u32 %s14, 512
      %s218 = ssub.s32 0, 0
      %s219 = ssub.s32 0, 0
      %p220 = scmp.lt.s32.totalorder %s217, 0
      %s221 = ssub.s32 0, %s217
      %s222 = scalar_select %p220, %s221, %s217
      %s223 = sshrl.u32 %s222, 3
      %s224 = ssub.s32 0, %s223
      %s225 = scalar_select %p220, %s224, %s223
      %s226 = smul.u32 64, %s14
      %p227 = scmp.lt.s32.totalorder %s226, 127
      %s228 = scalar_select %p227, %s226, 127
      %s229 = smul.addr %s228, 8
      %s230 = scalar_lea.vmem %s3, %s229
      %s231 = smul.u32 64, %s14
      %v232 = vld [vmem:[%s2] sm:$0x1]
      %v234 = vlaneseq
      %v235 = vshrl.u32 %v234, 7
      %v236 = vsub.s32 0, %v235
      %v237 = vrot.slane %v232, %v236
      %239 = vst [vmem:[%s230] sm:$0xff] %v237
      %240 = vst [vmem:[%s230 + $0x8] sm:$0xff] %v237
      %241 = vst [vmem:[%s230 + $0x10] sm:$0xff] %v237
      %242 = vst [vmem:[%s230 + $0x18] sm:$0xff] %v237
      %243 = vst [vmem:[%s230 + $0x20] sm:$0xff] %v237
      %244 = vst [vmem:[%s230 + $0x28] sm:$0xff] %v237
      %245 = vst [vmem:[%s230 + $0x30] sm:$0xff] %v237
      %246 = vst [vmem:[%s230 + $0x38] sm:$0xff] %v237
      %247 = vst [vmem:[%s230 + $0x40] sm:$0xff] %v237
      %248 = vst [vmem:[%s230 + $0x48] sm:$0xff] %v237
      %249 = vst [vmem:[%s230 + $0x50] sm:$0xff] %v237
      %250 = vst [vmem:[%s230 + $0x58] sm:$0xff] %v237
      %251 = vst [vmem:[%s230 + $0x60] sm:$0xff] %v237
      %252 = vst [vmem:[%s230 + $0x68] sm:$0xff] %v237
      %253 = vst [vmem:[%s230 + $0x70] sm:$0xff] %v237
      %254 = vst [vmem:[%s230 + $0x78] sm:$0xff] %v237
      %255 = vst [vmem:[%s230 + $0x80] sm:$0xff] %v237
      %256 = vst [vmem:[%s230 + $0x88] sm:$0xff] %v237
      %257 = vst [vmem:[%s230 + $0x90] sm:$0xff] %v237
      %258 = vst [vmem:[%s230 + $0x98] sm:$0xff] %v237
      %259 = vst [vmem:[%s230 + $0xa0] sm:$0xff] %v237
      %260 = vst [vmem:[%s230 + $0xa8] sm:$0xff] %v237
      %261 = vst [vmem:[%s230 + $0xb0] sm:$0xff] %v237
      %262 = vst [vmem:[%s230 + $0xb8] sm:$0xff] %v237
      %263 = vst [vmem:[%s230 + $0xc0] sm:$0xff] %v237
      %264 = vst [vmem:[%s230 + $0xc8] sm:$0xff] %v237
      %265 = vst [vmem:[%s230 + $0xd0] sm:$0xff] %v237
      %266 = vst [vmem:[%s230 + $0xd8] sm:$0xff] %v237
      %267 = vst [vmem:[%s230 + $0xe0] sm:$0xff] %v237
      %268 = vst [vmem:[%s230 + $0xe8] sm:$0xff] %v237
      %269 = vst [vmem:[%s230 + $0xf0] sm:$0xff] %v237
      %270 = vst [vmem:[%s230 + $0xf8] sm:$0xff] %v237
      %271 = vst [vmem:[%s230 + $0x100] sm:$0xff] %v237
      %272 = vst [vmem:[%s230 + $0x108] sm:$0xff] %v237
      %273 = vst [vmem:[%s230 + $0x110] sm:$0xff] %v237
      %274 = vst [vmem:[%s230 + $0x118] sm:$0xff] %v237
      %275 = vst [vmem:[%s230 + $0x120] sm:$0xff] %v237
      %276 = vst [vmem:[%s230 + $0x128] sm:$0xff] %v237
      %277 = vst [vmem:[%s230 + $0x130] sm:$0xff] %v237
      %278 = vst [vmem:[%s230 + $0x138] sm:$0xff] %v237
      %279 = vst [vmem:[%s230 + $0x140] sm:$0xff] %v237
      %280 = vst [vmem:[%s230 + $0x148] sm:$0xff] %v237
      %281 = vst [vmem:[%s230 + $0x150] sm:$0xff] %v237
      %282 = vst [vmem:[%s230 + $0x158] sm:$0xff] %v237
      %283 = vst [vmem:[%s230 + $0x160] sm:$0xff] %v237
      %284 = vst [vmem:[%s230 + $0x168] sm:$0xff] %v237
      %285 = vst [vmem:[%s230 + $0x170] sm:$0xff] %v237
      %286 = vst [vmem:[%s230 + $0x178] sm:$0xff] %v237
      %287 = vst [vmem:[%s230 + $0x180] sm:$0xff] %v237
      %288 = vst [vmem:[%s230 + $0x188] sm:$0xff] %v237
      %289 = vst [vmem:[%s230 + $0x190] sm:$0xff] %v237
      %290 = vst [vmem:[%s230 + $0x198] sm:$0xff] %v237
      %291 = vst [vmem:[%s230 + $0x1a0] sm:$0xff] %v237
      %292 = vst [vmem:[%s230 + $0x1a8] sm:$0xff] %v237
      %293 = vst [vmem:[%s230 + $0x1b0] sm:$0xff] %v237
      %294 = vst [vmem:[%s230 + $0x1b8] sm:$0xff] %v237
      %295 = vst [vmem:[%s230 + $0x1c0] sm:$0xff] %v237
      %296 = vst [vmem:[%s230 + $0x1c8] sm:$0xff] %v237
      %297 = vst [vmem:[%s230 + $0x1d0] sm:$0xff] %v237
      %298 = vst [vmem:[%s230 + $0x1d8] sm:$0xff] %v237
      %299 = vst [vmem:[%s230 + $0x1e0] sm:$0xff] %v237
      %300 = vst [vmem:[%s230 + $0x1e8] sm:$0xff] %v237
      %301 = vst [vmem:[%s230 + $0x1f0] sm:$0xff] %v237
      %302 = vst [vmem:[%s230 + $0x1f8] sm:$0xff] %v237
      %v303 = vld [vmem:[%s230] sm:$0xff]
      %v304 = vld [vmem:[%s230 + $0x8] sm:$0xff]
      %v305 = vld [vmem:[%s230 + $0x10] sm:$0xff]
      %v306 = vld [vmem:[%s230 + $0x18] sm:$0xff]
      %v307 = vld [vmem:[%s230 + $0x20] sm:$0xff]
      %v308 = vld [vmem:[%s230 + $0x28] sm:$0xff]
      %v309 = vld [vmem:[%s230 + $0x30] sm:$0xff]
      %v310 = vld [vmem:[%s230 + $0x38] sm:$0xff]
      %v311 = vld [vmem:[%s230 + $0x40] sm:$0xff]
      %v312 = vld [vmem:[%s230 + $0x48] sm:$0xff]
      %v313 = vld [vmem:[%s230 + $0x50] sm:$0xff]
      %v314 = vld [vmem:[%s230 + $0x58] sm:$0xff]
      %v315 = vld [vmem:[%s230 + $0x60] sm:$0xff]
      %v316 = vld [vmem:[%s230 + $0x68] sm:$0xff]
      %v317 = vld [vmem:[%s230 + $0x70] sm:$0xff]
      %v318 = vld [vmem:[%s230 + $0x78] sm:$0xff]
      %v319 = vld [vmem:[%s230 + $0x80] sm:$0xff]
      %v320 = vld [vmem:[%s230 + $0x88] sm:$0xff]
      %v321 = vld [vmem:[%s230 + $0x90] sm:$0xff]
      %v322 = vld [vmem:[%s230 + $0x98] sm:$0xff]
      %v323 = vld [vmem:[%s230 + $0xa0] sm:$0xff]
      %v324 = vld [vmem:[%s230 + $0xa8] sm:$0xff]
      %v325 = vld [vmem:[%s230 + $0xb0] sm:$0xff]
      %v326 = vld [vmem:[%s230 + $0xb8] sm:$0xff]
      %v327 = vld [vmem:[%s230 + $0xc0] sm:$0xff]
      %v328 = vld [vmem:[%s230 + $0xc8] sm:$0xff]
      %v329 = vld [vmem:[%s230 + $0xd0] sm:$0xff]
      %v330 = vld [vmem:[%s230 + $0xd8] sm:$0xff]
      %v331 = vld [vmem:[%s230 + $0xe0] sm:$0xff]
      %v332 = vld [vmem:[%s230 + $0xe8] sm:$0xff]
      %v333 = vld [vmem:[%s230 + $0xf0] sm:$0xff]
      %v334 = vld [vmem:[%s230 + $0xf8] sm:$0xff]
      %v335 = vld [vmem:[%s230 + $0x100] sm:$0xff]
      %v336 = vld [vmem:[%s230 + $0x108] sm:$0xff]
      %v337 = vld [vmem:[%s230 + $0x110] sm:$0xff]
      %v338 = vld [vmem:[%s230 + $0x118] sm:$0xff]
      %v339 = vld [vmem:[%s230 + $0x120] sm:$0xff]
      %v340 = vld [vmem:[%s230 + $0x128] sm:$0xff]
      %v341 = vld [vmem:[%s230 + $0x130] sm:$0xff]
      %v342 = vld [vmem:[%s230 + $0x138] sm:$0xff]
      %v343 = vld [vmem:[%s230 + $0x140] sm:$0xff]
      %v344 = vld [vmem:[%s230 + $0x148] sm:$0xff]
      %v345 = vld [vmem:[%s230 + $0x150] sm:$0xff]
      %v346 = vld [vmem:[%s230 + $0x158] sm:$0xff]
      %v347 = vld [vmem:[%s230 + $0x160] sm:$0xff]
      %v348 = vld [vmem:[%s230 + $0x168] sm:$0xff]
      %v349 = vld [vmem:[%s230 + $0x170] sm:$0xff]
      %v350 = vld [vmem:[%s230 + $0x178] sm:$0xff]
      %v351 = vld [vmem:[%s230 + $0x180] sm:$0xff]
      %v352 = vld [vmem:[%s230 + $0x188] sm:$0xff]
      %v353 = vld [vmem:[%s230 + $0x190] sm:$0xff]
      %v354 = vld [vmem:[%s230 + $0x198] sm:$0xff]
      %v355 = vld [vmem:[%s230 + $0x1a0] sm:$0xff]
      %v356 = vld [vmem:[%s230 + $0x1a8] sm:$0xff]
      %v357 = vld [vmem:[%s230 + $0x1b0] sm:$0xff]
      %v358 = vld [vmem:[%s230 + $0x1b8] sm:$0xff]
      %v359 = vld [vmem:[%s230 + $0x1c0] sm:$0xff]
      %v360 = vld [vmem:[%s230 + $0x1c8] sm:$0xff]
      %v361 = vld [vmem:[%s230 + $0x1d0] sm:$0xff]
      %v362 = vld [vmem:[%s230 + $0x1d8] sm:$0xff]
      %v363 = vld [vmem:[%s230 + $0x1e0] sm:$0xff]
      %v364 = vld [vmem:[%s230 + $0x1e8] sm:$0xff]
      %v365 = vld [vmem:[%s230 + $0x1f0] sm:$0xff]
      %v366 = vld [vmem:[%s230 + $0x1f8] sm:$0xff]
      %v367 = vld [vmem:[%s216] sm:$0xff]
      %v368 = vld [vmem:[%s216 + $0x8] sm:$0xff]
      %v369 = vld [vmem:[%s216 + $0x10] sm:$0xff]
      %v370 = vld [vmem:[%s216 + $0x18] sm:$0xff]
      %v371 = vld [vmem:[%s216 + $0x20] sm:$0xff]
      %v372 = vld [vmem:[%s216 + $0x28] sm:$0xff]
      %v373 = vld [vmem:[%s216 + $0x30] sm:$0xff]
      %v374 = vld [vmem:[%s216 + $0x38] sm:$0xff]
      %v375 = vld [vmem:[%s216 + $0x40] sm:$0xff]
      %v376 = vld [vmem:[%s216 + $0x48] sm:$0xff]
      %v377 = vld [vmem:[%s216 + $0x50] sm:$0xff]
      %v378 = vld [vmem:[%s216 + $0x58] sm:$0xff]
      %v379 = vld [vmem:[%s216 + $0x60] sm:$0xff]
      %v380 = vld [vmem:[%s216 + $0x68] sm:$0xff]
      %v381 = vld [vmem:[%s216 + $0x70] sm:$0xff]
      %v382 = vld [vmem:[%s216 + $0x78] sm:$0xff]
      %v383 = vld [vmem:[%s216 + $0x80] sm:$0xff]
      %v384 = vld [vmem:[%s216 + $0x88] sm:$0xff]
      %v385 = vld [vmem:[%s216 + $0x90] sm:$0xff]
      %v386 = vld [vmem:[%s216 + $0x98] sm:$0xff]
      %v387 = vld [vmem:[%s216 + $0xa0] sm:$0xff]
      %v388 = vld [vmem:[%s216 + $0xa8] sm:$0xff]
      %v389 = vld [vmem:[%s216 + $0xb0] sm:$0xff]
      %v390 = vld [vmem:[%s216 + $0xb8] sm:$0xff]
      %v391 = vld [vmem:[%s216 + $0xc0] sm:$0xff]
      %v392 = vld [vmem:[%s216 + $0xc8] sm:$0xff]
      %v393 = vld [vmem:[%s216 + $0xd0] sm:$0xff]
      %v394 = vld [vmem:[%s216 + $0xd8] sm:$0xff]
      %v395 = vld [vmem:[%s216 + $0xe0] sm:$0xff]
      %v396 = vld [vmem:[%s216 + $0xe8] sm:$0xff]
      %v397 = vld [vmem:[%s216 + $0xf0] sm:$0xff]
      %v398 = vld [vmem:[%s216 + $0xf8] sm:$0xff]
      %v399 = vld [vmem:[%s216 + $0x100] sm:$0xff]
      %v400 = vld [vmem:[%s216 + $0x108] sm:$0xff]
      %v401 = vld [vmem:[%s216 + $0x110] sm:$0xff]
      %v402 = vld [vmem:[%s216 + $0x118] sm:$0xff]
      %v403 = vld [vmem:[%s216 + $0x120] sm:$0xff]
      %v404 = vld [vmem:[%s216 + $0x128] sm:$0xff]
      %v405 = vld [vmem:[%s216 + $0x130] sm:$0xff]
      %v406 = vld [vmem:[%s216 + $0x138] sm:$0xff]
      %v407 = vld [vmem:[%s216 + $0x140] sm:$0xff]
      %v408 = vld [vmem:[%s216 + $0x148] sm:$0xff]
      %v409 = vld [vmem:[%s216 + $0x150] sm:$0xff]
      %v410 = vld [vmem:[%s216 + $0x158] sm:$0xff]
      %v411 = vld [vmem:[%s216 + $0x160] sm:$0xff]
      %v412 = vld [vmem:[%s216 + $0x168] sm:$0xff]
      %v413 = vld [vmem:[%s216 + $0x170] sm:$0xff]
      %v414 = vld [vmem:[%s216 + $0x178] sm:$0xff]
      %v415 = vld [vmem:[%s216 + $0x180] sm:$0xff]
      %v416 = vld [vmem:[%s216 + $0x188] sm:$0xff]
      %v417 = vld [vmem:[%s216 + $0x190] sm:$0xff]
      %v418 = vld [vmem:[%s216 + $0x198] sm:$0xff]
      %v419 = vld [vmem:[%s216 + $0x1a0] sm:$0xff]
      %v420 = vld [vmem:[%s216 + $0x1a8] sm:$0xff]
      %v421 = vld [vmem:[%s216 + $0x1b0] sm:$0xff]
      %v422 = vld [vmem:[%s216 + $0x1b8] sm:$0xff]
      %v423 = vld [vmem:[%s216 + $0x1c0] sm:$0xff]
      %v424 = vld [vmem:[%s216 + $0x1c8] sm:$0xff]
      %v425 = vld [vmem:[%s216 + $0x1d0] sm:$0xff]
      %v426 = vld [vmem:[%s216 + $0x1d8] sm:$0xff]
      %v427 = vld [vmem:[%s216 + $0x1e0] sm:$0xff]
      %v428 = vld [vmem:[%s216 + $0x1e8] sm:$0xff]
      %v429 = vld [vmem:[%s216 + $0x1f0] sm:$0xff]
      %v430 = vld [vmem:[%s216 + $0x1f8] sm:$0xff]
      %v431 = vld [vmem:[%s1] sm:$0xf]
      %vm432 = vcmask 31744
      %v434 = vsel %vm432, %v367, 0
      %v437 = vsel %vm432, %v368, 0
      %v440 = vsel %vm432, %v369, 0
      %v443 = vsel %vm432, %v370, 0
      %v446 = vsel %vm432, %v371, 0
      %v449 = vsel %vm432, %v372, 0
      %v452 = vsel %vm432, %v373, 0
      %v455 = vsel %vm432, %v374, 0
      %v458 = vsel %vm432, %v375, 0
      %v461 = vsel %vm432, %v376, 0
      %v464 = vsel %vm432, %v377, 0
      %v467 = vsel %vm432, %v378, 0
      %v470 = vsel %vm432, %v379, 0
      %v473 = vsel %vm432, %v380, 0
      %v476 = vsel %vm432, %v381, 0
      %v479 = vsel %vm432, %v382, 0
      %v482 = vsel %vm432, %v383, 0
      %v485 = vsel %vm432, %v384, 0
      %v488 = vsel %vm432, %v385, 0
      %v491 = vsel %vm432, %v386, 0
      %v494 = vsel %vm432, %v387, 0
      %v497 = vsel %vm432, %v388, 0
      %v500 = vsel %vm432, %v389, 0
      %v503 = vsel %vm432, %v390, 0
      %v506 = vsel %vm432, %v391, 0
      %v509 = vsel %vm432, %v392, 0
      %v512 = vsel %vm432, %v393, 0
      %v515 = vsel %vm432, %v394, 0
      %v518 = vsel %vm432, %v395, 0
      %v521 = vsel %vm432, %v396, 0
      %v524 = vsel %vm432, %v397, 0
      %v527 = vsel %vm432, %v398, 0
      %v530 = vsel %vm432, %v399, 0
      %v533 = vsel %vm432, %v400, 0
      %v536 = vsel %vm432, %v401, 0
      %v539 = vsel %vm432, %v402, 0
      %v542 = vsel %vm432, %v403, 0
      %v545 = vsel %vm432, %v404, 0
      %v548 = vsel %vm432, %v405, 0
      %v551 = vsel %vm432, %v406, 0
      %v554 = vsel %vm432, %v407, 0
      %v557 = vsel %vm432, %v408, 0
      %v560 = vsel %vm432, %v409, 0
      %v563 = vsel %vm432, %v410, 0
      %v566 = vsel %vm432, %v411, 0
      %v569 = vsel %vm432, %v412, 0
      %v572 = vsel %vm432, %v413, 0
      %v575 = vsel %vm432, %v414, 0
      %v578 = vsel %vm432, %v415, 0
      %v581 = vsel %vm432, %v416, 0
      %v584 = vsel %vm432, %v417, 0
      %v587 = vsel %vm432, %v418, 0
      %v590 = vsel %vm432, %v419, 0
      %v593 = vsel %vm432, %v420, 0
      %v596 = vsel %vm432, %v421, 0
      %v599 = vsel %vm432, %v422, 0
      %v602 = vsel %vm432, %v423, 0
      %v605 = vsel %vm432, %v424, 0
      %v608 = vsel %vm432, %v425, 0
      %v611 = vsel %vm432, %v426, 0
      %v614 = vsel %vm432, %v427, 0
      %v617 = vsel %vm432, %v428, 0
      %v620 = vsel %vm432, %v429, 0
      %v623 = vsel %vm432, %v430, 0
      %vm625 = vcmask 1043456
      %v627 = vsel %vm625, %v431, 0
      %629 = vmatprep.subr.mxu0 0.0
      %630 = vmatpush1.msra.mxu0 %v627
      %631 = vmatprep.subr.mxu0 0.0
      %632 = vmatpush1.msra.mxu0 0.0
      %633 = vmatprep.subr.mxu0 0.0
      %634 = vmatpush1.msra.mxu0 0.0
      %635 = vmatprep.subr.mxu0 0.0
      %636 = vmatpush1.msra.mxu0 0.0
      %637 = vmatprep.subr.mxu0 0.0
      %638 = vmatpush1.msra.mxu0 0.0
      %639 = vmatprep.subr.mxu0 0.0
      %640 = vmatpush1.msra.mxu0 0.0
      %641 = vmatprep.subr.mxu0 0.0
      %642 = vmatpush1.msra.mxu0 0.0
      %643 = vmatprep.subr.mxu0 0.0
      %644 = vmatpush1.msra.mxu0 0.0
      %645 = vmatprep.subr.mxu0 0.0
      %646 = vmatpush1.msra.mxu0 0.0
      %647 = vmatprep.subr.mxu0 0.0
      %648 = vmatpush1.msra.mxu0 0.0
      %649 = vmatprep.subr.mxu0 0.0
      %650 = vmatpush1.msra.mxu0 0.0
      %651 = vmatprep.subr.mxu0 0.0
      %652 = vmatpush1.msra.mxu0 0.0
      %653 = vmatprep.subr.mxu0 0.0
      %654 = vmatpush1.msra.mxu0 0.0
      %655 = vmatprep.subr.mxu0 0.0
      %656 = vmatpush1.msra.mxu0 0.0
      %657 = vmatprep.subr.mxu0 0.0
      %658 = vmatpush1.msra.mxu0 0.0
      %659 = vmatprep.subr.mxu0 0.0
      %660 = vmatpush1.msra.mxu0 0.0
      %661 = vmatprep.subr.mxu0 0.0
      %662 = vmatpush1.msra.mxu0 0.0
      %663 = vmatprep.subr.mxu0 0.0
      %664 = vmatpush1.msra.mxu0 0.0
      %665 = vmatprep.subr.mxu0 0.0
      %666 = vmatpush1.msra.mxu0 0.0
      %667 = vmatprep.subr.mxu0 0.0
      %668 = vmatpush1.msra.mxu0 0.0
      %669 = vmatprep.subr.mxu0 0.0
      %670 = vmatpush1.msra.mxu0 0.0
      %671 = vmatprep.subr.mxu0 0.0
      %672 = vmatpush1.msra.mxu0 0.0
      %673 = vmatprep.subr.mxu0 0.0
      %674 = vmatpush1.msra.mxu0 0.0
      %675 = vmatprep.subr.mxu0 0.0
      %676 = vmatpush1.msra.mxu0 0.0
      %677 = vmatprep.subr.mxu0 0.0
      %678 = vmatpush1.msra.mxu0 0.0
      %679 = vmatprep.subr.mxu0 0.0
      %680 = vmatpush1.msra.mxu0 0.0
      %681 = vmatprep.subr.mxu0 0.0
      %682 = vmatpush1.msra.mxu0 0.0
      %683 = vmatprep.subr.mxu0 0.0
      %684 = vmatpush1.msra.mxu0 0.0
      %685 = vmatprep.subr.mxu0 0.0
      %686 = vmatpush1.msra.mxu0 0.0
      %687 = vmatprep.subr.mxu0 0.0
      %688 = vmatpush1.msra.mxu0 0.0
      %689 = vmatprep.subr.mxu0 0.0
      %690 = vmatpush1.msra.mxu0 0.0
      %691 = vmatprep.subr.mxu0 0.0
      %692 = vmatpush1.msra.mxu0 0.0
      %693 = vmatprep.mubr.f32.mxu0 0.0
      %694 = vmatmul.mubr.f32.gmra.mrb[0].mxu0 %v434
      %v695 = vpop.f32.mrb[0].mxu0
      %v696 = vadd.f32 0.0, %v695
      %v697 = vpop.f32.mrb[0].mxu0
      %698 = vmatprep.mubr.f32.mxu0 0.0
      %699 = vmatmul.mubr.f32.gmra.mrb[0].mxu0 %v437
      %v700 = vpop.f32.mrb[0].mxu0
      %v701 = vadd.f32 0.0, %v700
      %v702 = vpop.f32.mrb[0].mxu0
      %703 = vmatprep.mubr.f32.mxu0 0.0
      %704 = vmatmul.mubr.f32.gmra.mrb[0].mxu0 %v440
      %v705 = vpop.f32.mrb[0].mxu0
      %v706 = vadd.f32 0.0, %v705
      %v707 = vpop.f32.mrb[0].mxu0
      %708 = vmatprep.mubr.f32.mxu0 0.0
      %709 = vmatmul.mubr.f32.gmra.mrb[0].mxu0 %v443
      %v710 = vpop.f32.mrb[0].mxu0
      %v711 = vadd.f32 0.0, %v710
      %v712 = vpop.f32.mrb[0].mxu0
      %713 = vmatprep.mubr.f32.mxu0 0.0
      %714 = vmatmul.mubr.f32.gmra.mrb[0].mxu0 %v446
      %v715 = vpop.f32.mrb[0].mxu0
      %v716 = vadd.f32 0.0, %v715
      %v717 = vpop.f32.mrb[0].mxu0
      %718 = vmatprep.mubr.f32.mxu0 0.0
      %719 = vmatmul.mubr.f32.gmra.mrb[0].mxu0 %v449
      %v720 = vpop.f32.mrb[0].mxu0
      %v721 = vadd.f32 0.0, %v720
      %v722 = vpop.f32.mrb[0].mxu0
      %723 = vmatprep.mubr.f32.mxu0 0.0
      %724 = vmatmul.mubr.f32.gmra.mrb[0].mxu0 %v452
      %v725 = vpop.f32.mrb[0].mxu0
      %v726 = vadd.f32 0.0, %v725
      %v727 = vpop.f32.mrb[0].mxu0
      %728 = vmatprep.mubr.f32.mxu0 0.0
      %729 = vmatmul.mubr.f32.gmra.mrb[0].mxu0 %v455
      %v730 = vpop.f32.mrb[0].mxu0
      %v731 = vadd.f32 0.0, %v730
      %v732 = vpop.f32.mrb[0].mxu0
      %733 = vmatprep.mubr.f32.mxu0 0.0
      %734 = vmatmul.mubr.f32.gmra.mrb[0].mxu0 %v458
      %v735 = vpop.f32.mrb[0].mxu0
      %v736 = vadd.f32 0.0, %v735
      %v737 = vpop.f32.mrb[0].mxu0
      %738 = vmatprep.mubr.f32.mxu0 0.0
      %739 = vmatmul.mubr.f32.gmra.mrb[0].mxu0 %v461
      %v740 = vpop.f32.mrb[0].mxu0
      %v741 = vadd.f32 0.0, %v740
      %v742 = vpop.f32.mrb[0].mxu0
      %743 = vmatprep.mubr.f32.mxu0 0.0
      %744 = vmatmul.mubr.f32.gmra.mrb[0].mxu0 %v464
      %v745 = vpop.f32.mrb[0].mxu0
      %v746 = vadd.f32 0.0, %v745
      %v747 = vpop.f32.mrb[0].mxu0
      %748 = vmatprep.mubr.f32.mxu0 0.0
      %749 = vmatmul.mubr.f32.gmra.mrb[0].mxu0 %v467
      %v750 = vpop.f32.mrb[0].mxu0
      %v751 = vadd.f32 0.0, %v750
      %v752 = vpop.f32.mrb[0].mxu0
      %753 = vmatprep.mubr.f32.mxu0 0.0
      %754 = vmatmul.mubr.f32.gmra.mrb[0].mxu0 %v470
      %v755 = vpop.f32.mrb[0].mxu0
      %v756 = vadd.f32 0.0, %v755
      %v757 = vpop.f32.mrb[0].mxu0
      %758 = vmatprep.mubr.f32.mxu0 0.0
      %759 = vmatmul.mubr.f32.gmra.mrb[0].mxu0 %v473
      %v760 = vpop.f32.mrb[0].mxu0
      %v761 = vadd.f32 0.0, %v760
      %v762 = vpop.f32.mrb[0].mxu0
      %763 = vmatprep.mubr.f32.mxu0 0.0
      %764 = vmatmul.mubr.f32.gmra.mrb[0].mxu0 %v476
      %v765 = vpop.f32.mrb[0].mxu0
      %v766 = vadd.f32 0.0, %v765
      %v767 = vpop.f32.mrb[0].mxu0
      %768 = vmatprep.mubr.f32.mxu0 0.0
      %769 = vmatmul.mubr.f32.gmra.mrb[0].mxu0 %v479
      %v770 = vpop.f32.mrb[0].mxu0
      %v771 = vadd.f32 0.0, %v770
      %v772 = vpop.f32.mrb[0].mxu0
      %773 = vmatprep.mubr.f32.mxu0 0.0
      %774 = vmatmul.mubr.f32.gmra.mrb[0].mxu0 %v482
      %v775 = vpop.f32.mrb[0].mxu0
      %v776 = vadd.f32 0.0, %v775
      %v777 = vpop.f32.mrb[0].mxu0
      %778 = vmatprep.mubr.f32.mxu0 0.0
      %779 = vmatmul.mubr.f32.gmra.mrb[0].mxu0 %v485
      %v780 = vpop.f32.mrb[0].mxu0
      %v781 = vadd.f32 0.0, %v780
      %v782 = vpop.f32.mrb[0].mxu0
      %783 = vmatprep.mubr.f32.mxu0 0.0
      %784 = vmatmul.mubr.f32.gmra.mrb[0].mxu0 %v488
      %v785 = vpop.f32.mrb[0].mxu0
      %v786 = vadd.f32 0.0, %v785
      %v787 = vpop.f32.mrb[0].mxu0
      %788 = vmatprep.mubr.f32.mxu0 0.0
      %789 = vmatmul.mubr.f32.gmra.mrb[0].mxu0 %v491
      %v790 = vpop.f32.mrb[0].mxu0
      %v791 = vadd.f32 0.0, %v790
      %v792 = vpop.f32.mrb[0].mxu0
      %793 = vmatprep.mubr.f32.mxu0 0.0
      %794 = vmatmul.mubr.f32.gmra.mrb[0].mxu0 %v494
      %v795 = vpop.f32.mrb[0].mxu0
      %v796 = vadd.f32 0.0, %v795
      %v797 = vpop.f32.mrb[0].mxu0
      %798 = vmatprep.mubr.f32.mxu0 0.0
      %799 = vmatmul.mubr.f32.gmra.mrb[0].mxu0 %v497
      %v800 = vpop.f32.mrb[0].mxu0
      %v801 = vadd.f32 0.0, %v800
      %v802 = vpop.f32.mrb[0].mxu0
      %803 = vmatprep.mubr.f32.mxu0 0.0
      %804 = vmatmul.mubr.f32.gmra.mrb[0].mxu0 %v500
      %v805 = vpop.f32.mrb[0].mxu0
      %v806 = vadd.f32 0.0, %v805
      %v807 = vpop.f32.mrb[0].mxu0
      %808 = vmatprep.mubr.f32.mxu0 0.0
      %809 = vmatmul.mubr.f32.gmra.mrb[0].mxu0 %v503
      %v810 = vpop.f32.mrb[0].mxu0
      %v811 = vadd.f32 0.0, %v810
      %v812 = vpop.f32.mrb[0].mxu0
      %813 = vmatprep.mubr.f32.mxu0 0.0
      %814 = vmatmul.mubr.f32.gmra.mrb[0].mxu0 %v506
      %v815 = vpop.f32.mrb[0].mxu0
      %v816 = vadd.f32 0.0, %v815
      %v817 = vpop.f32.mrb[0].mxu0
      %818 = vmatprep.mubr.f32.mxu0 0.0
      %819 = vmatmul.mubr.f32.gmra.mrb[0].mxu0 %v509
      %v820 = vpop.f32.mrb[0].mxu0
      %v821 = vadd.f32 0.0, %v820
      %v822 = vpop.f32.mrb[0].mxu0
      %823 = vmatprep.mubr.f32.mxu0 0.0
      %824 = vmatmul.mubr.f32.gmra.mrb[0].mxu0 %v512
      %v825 = vpop.f32.mrb[0].mxu0
      %v826 = vadd.f32 0.0, %v825
      %v827 = vpop.f32.mrb[0].mxu0
      %828 = vmatprep.mubr.f32.mxu0 0.0
      %829 = vmatmul.mubr.f32.gmra.mrb[0].mxu0 %v515
      %v830 = vpop.f32.mrb[0].mxu0
      %v831 = vadd.f32 0.0, %v830
      %v832 = vpop.f32.mrb[0].mxu0
      %833 = vmatprep.mubr.f32.mxu0 0.0
      %834 = vmatmul.mubr.f32.gmra.mrb[0].mxu0 %v518
      %v835 = vpop.f32.mrb[0].mxu0
      %v836 = vadd.f32 0.0, %v835
      %v837 = vpop.f32.mrb[0].mxu0
      %838 = vmatprep.mubr.f32.mxu0 0.0
      %839 = vmatmul.mubr.f32.gmra.mrb[0].mxu0 %v521
      %v840 = vpop.f32.mrb[0].mxu0
      %v841 = vadd.f32 0.0, %v840
      %v842 = vpop.f32.mrb[0].mxu0
      %843 = vmatprep.mubr.f32.mxu0 0.0
      %844 = vmatmul.mubr.f32.gmra.mrb[0].mxu0 %v524
      %v845 = vpop.f32.mrb[0].mxu0
      %v846 = vadd.f32 0.0, %v845
      %v847 = vpop.f32.mrb[0].mxu0
      %848 = vmatprep.mubr.f32.mxu0 0.0
      %849 = vmatmul.mubr.f32.gmra.mrb[0].mxu0 %v527
      %v850 = vpop.f32.mrb[0].mxu0
      %v851 = vadd.f32 0.0, %v850
      %v852 = vpop.f32.mrb[0].mxu0
      %853 = vmatprep.mubr.f32.mxu0 0.0
      %854 = vmatmul.mubr.f32.gmra.mrb[0].mxu0 %v530
      %v855 = vpop.f32.mrb[0].mxu0
      %v856 = vadd.f32 0.0, %v855
      %v857 = vpop.f32.mrb[0].mxu0
      %858 = vmatprep.mubr.f32.mxu0 0.0
      %859 = vmatmul.mubr.f32.gmra.mrb[0].mxu0 %v533
      %v860 = vpop.f32.mrb[0].mxu0
      %v861 = vadd.f32 0.0, %v860
      %v862 = vpop.f32.mrb[0].mxu0
      %863 = vmatprep.mubr.f32.mxu0 0.0
      %864 = vmatmul.mubr.f32.gmra.mrb[0].mxu0 %v536
      %v865 = vpop.f32.mrb[0].mxu0
      %v866 = vadd.f32 0.0, %v865
      %v867 = vpop.f32.mrb[0].mxu0
      %868 = vmatprep.mubr.f32.mxu0 0.0
      %869 = vmatmul.mubr.f32.gmra.mrb[0].mxu0 %v539
      %v870 = vpop.f32.mrb[0].mxu0
      %v871 = vadd.f32 0.0, %v870
      %v872 = vpop.f32.mrb[0].mxu0
      %873 = vmatprep.mubr.f32.mxu0 0.0
      %874 = vmatmul.mubr.f32.gmra.mrb[0].mxu0 %v542
      %v875 = vpop.f32.mrb[0].mxu0
      %v876 = vadd.f32 0.0, %v875
      %v877 = vpop.f32.mrb[0].mxu0
      %878 = vmatprep.mubr.f32.mxu0 0.0
      %879 = vmatmul.mubr.f32.gmra.mrb[0].mxu0 %v545
      %v880 = vpop.f32.mrb[0].mxu0
      %v881 = vadd.f32 0.0, %v880
      %v882 = vpop.f32.mrb[0].mxu0
      %883 = vmatprep.mubr.f32.mxu0 0.0
      %884 = vmatmul.mubr.f32.gmra.mrb[0].mxu0 %v548
      %v885 = vpop.f32.mrb[0].mxu0
      %v886 = vadd.f32 0.0, %v885
      %v887 = vpop.f32.mrb[0].mxu0
      %888 = vmatprep.mubr.f32.mxu0 0.0
      %889 = vmatmul.mubr.f32.gmra.mrb[0].mxu0 %v551
      %v890 = vpop.f32.mrb[0].mxu0
      %v891 = vadd.f32 0.0, %v890
      %v892 = vpop.f32.mrb[0].mxu0
      %893 = vmatprep.mubr.f32.mxu0 0.0
      %894 = vmatmul.mubr.f32.gmra.mrb[0].mxu0 %v554
      %v895 = vpop.f32.mrb[0].mxu0
      %v896 = vadd.f32 0.0, %v895
      %v897 = vpop.f32.mrb[0].mxu0
      %898 = vmatprep.mubr.f32.mxu0 0.0
      %899 = vmatmul.mubr.f32.gmra.mrb[0].mxu0 %v557
      %v900 = vpop.f32.mrb[0].mxu0
      %v901 = vadd.f32 0.0, %v900
      %v902 = vpop.f32.mrb[0].mxu0
      %903 = vmatprep.mubr.f32.mxu0 0.0
      %904 = vmatmul.mubr.f32.gmra.mrb[0].mxu0 %v560
      %v905 = vpop.f32.mrb[0].mxu0
      %v906 = vadd.f32 0.0, %v905
      %v907 = vpop.f32.mrb[0].mxu0
      %908 = vmatprep.mubr.f32.mxu0 0.0
      %909 = vmatmul.mubr.f32.gmra.mrb[0].mxu0 %v563
      %v910 = vpop.f32.mrb[0].mxu0
      %v911 = vadd.f32 0.0, %v910
      %v912 = vpop.f32.mrb[0].mxu0
      %913 = vmatprep.mubr.f32.mxu0 0.0
      %914 = vmatmul.mubr.f32.gmra.mrb[0].mxu0 %v566
      %v915 = vpop.f32.mrb[0].mxu0
      %v916 = vadd.f32 0.0, %v915
      %v917 = vpop.f32.mrb[0].mxu0
      %918 = vmatprep.mubr.f32.mxu0 0.0
      %919 = vmatmul.mubr.f32.gmra.mrb[0].mxu0 %v569
      %v920 = vpop.f32.mrb[0].mxu0
      %v921 = vadd.f32 0.0, %v920
      %v922 = vpop.f32.mrb[0].mxu0
      %923 = vmatprep.mubr.f32.mxu0 0.0
      %924 = vmatmul.mubr.f32.gmra.mrb[0].mxu0 %v572
      %v925 = vpop.f32.mrb[0].mxu0
      %v926 = vadd.f32 0.0, %v925
      %v927 = vpop.f32.mrb[0].mxu0
      %928 = vmatprep.mubr.f32.mxu0 0.0
      %929 = vmatmul.mubr.f32.gmra.mrb[0].mxu0 %v575
      %v930 = vpop.f32.mrb[0].mxu0
      %v931 = vadd.f32 0.0, %v930
      %v932 = vpop.f32.mrb[0].mxu0
      %933 = vmatprep.mubr.f32.mxu0 0.0
      %934 = vmatmul.mubr.f32.gmra.mrb[0].mxu0 %v578
      %v935 = vpop.f32.mrb[0].mxu0
      %v936 = vadd.f32 0.0, %v935
      %v937 = vpop.f32.mrb[0].mxu0
      %938 = vmatprep.mubr.f32.mxu0 0.0
      %939 = vmatmul.mubr.f32.gmra.mrb[0].mxu0 %v581
      %v940 = vpop.f32.mrb[0].mxu0
      %v941 = vadd.f32 0.0, %v940
      %v942 = vpop.f32.mrb[0].mxu0
      %943 = vmatprep.mubr.f32.mxu0 0.0
      %944 = vmatmul.mubr.f32.gmra.mrb[0].mxu0 %v584
      %v945 = vpop.f32.mrb[0].mxu0
      %v946 = vadd.f32 0.0, %v945
      %v947 = vpop.f32.mrb[0].mxu0
      %948 = vmatprep.mubr.f32.mxu0 0.0
      %949 = vmatmul.mubr.f32.gmra.mrb[0].mxu0 %v587
      %v950 = vpop.f32.mrb[0].mxu0
      %v951 = vadd.f32 0.0, %v950
      %v952 = vpop.f32.mrb[0].mxu0
      %953 = vmatprep.mubr.f32.mxu0 0.0
      %954 = vmatmul.mubr.f32.gmra.mrb[0].mxu0 %v590
      %v955 = vpop.f32.mrb[0].mxu0
      %v956 = vadd.f32 0.0, %v955
      %v957 = vpop.f32.mrb[0].mxu0
      %958 = vmatprep.mubr.f32.mxu0 0.0
      %959 = vmatmul.mubr.f32.gmra.mrb[0].mxu0 %v593
      %v960 = vpop.f32.mrb[0].mxu0
      %v961 = vadd.f32 0.0, %v960
      %v962 = vpop.f32.mrb[0].mxu0
      %963 = vmatprep.mubr.f32.mxu0 0.0
      %964 = vmatmul.mubr.f32.gmra.mrb[0].mxu0 %v596
      %v965 = vpop.f32.mrb[0].mxu0
      %v966 = vadd.f32 0.0, %v965
      %v967 = vpop.f32.mrb[0].mxu0
      %968 = vmatprep.mubr.f32.mxu0 0.0
      %969 = vmatmul.mubr.f32.gmra.mrb[0].mxu0 %v599
      %v970 = vpop.f32.mrb[0].mxu0
      %v971 = vadd.f32 0.0, %v970
      %v972 = vpop.f32.mrb[0].mxu0
      %973 = vmatprep.mubr.f32.mxu0 0.0
      %974 = vmatmul.mubr.f32.gmra.mrb[0].mxu0 %v602
      %v975 = vpop.f32.mrb[0].mxu0
      %v976 = vadd.f32 0.0, %v975
      %v977 = vpop.f32.mrb[0].mxu0
      %978 = vmatprep.mubr.f32.mxu0 0.0
      %979 = vmatmul.mubr.f32.gmra.mrb[0].mxu0 %v605
      %v980 = vpop.f32.mrb[0].mxu0
      %v981 = vadd.f32 0.0, %v980
      %v982 = vpop.f32.mrb[0].mxu0
      %983 = vmatprep.mubr.f32.mxu0 0.0
      %984 = vmatmul.mubr.f32.gmra.mrb[0].mxu0 %v608
      %v985 = vpop.f32.mrb[0].mxu0
      %v986 = vadd.f32 0.0, %v985
      %v987 = vpop.f32.mrb[0].mxu0
      %988 = vmatprep.mubr.f32.mxu0 0.0
      %989 = vmatmul.mubr.f32.gmra.mrb[0].mxu0 %v611
      %v990 = vpop.f32.mrb[0].mxu0
      %v991 = vadd.f32 0.0, %v990
      %v992 = vpop.f32.mrb[0].mxu0
      %993 = vmatprep.mubr.f32.mxu0 0.0
      %994 = vmatmul.mubr.f32.gmra.mrb[0].mxu0 %v614
      %v995 = vpop.f32.mrb[0].mxu0
      %v996 = vadd.f32 0.0, %v995
      %v997 = vpop.f32.mrb[0].mxu0
      %998 = vmatprep.mubr.f32.mxu0 0.0
      %999 = vmatmul.mubr.f32.gmra.mrb[0].mxu0 %v617
      %v1000 = vpop.f32.mrb[0].mxu0
      %v1001 = vadd.f32 0.0, %v1000
      %v1002 = vpop.f32.mrb[0].mxu0
      %1003 = vmatprep.mubr.f32.mxu0 0.0
      %1004 = vmatmul.mubr.f32.gmra.mrb[0].mxu0 %v620
      %v1005 = vpop.f32.mrb[0].mxu0
      %v1006 = vadd.f32 0.0, %v1005
      %v1007 = vpop.f32.mrb[0].mxu0
      %1008 = vmatprep.mubr.f32.mxu0 0.0
      %1009 = vmatmul.mubr.f32.gmra.mrb[0].mxu0 %v623
      %v1010 = vpop.f32.mrb[0].mxu0
      %v1011 = vadd.f32 0.0, %v1010
      %v1012 = vpop.f32.mrb[0].mxu0
      %1013 = vdwg.mxu0
      %v1014 = vadd.f32 %v303, %v696
      %v1015 = vadd.f32 %v304, %v701
      %v1016 = vadd.f32 %v305, %v706
      %v1017 = vadd.f32 %v306, %v711
      %v1018 = vadd.f32 %v307, %v716
      %v1019 = vadd.f32 %v308, %v721
      %v1020 = vadd.f32 %v309, %v726
      %v1021 = vadd.f32 %v310, %v731
      %v1022 = vadd.f32 %v311, %v736
      %v1023 = vadd.f32 %v312, %v741
      %v1024 = vadd.f32 %v313, %v746
      %v1025 = vadd.f32 %v314, %v751
      %v1026 = vadd.f32 %v315, %v756
      %v1027 = vadd.f32 %v316, %v761
      %v1028 = vadd.f32 %v317, %v766
      %v1029 = vadd.f32 %v318, %v771
      %v1030 = vadd.f32 %v319, %v776
      %v1031 = vadd.f32 %v320, %v781
      %v1032 = vadd.f32 %v321, %v786
      %v1033 = vadd.f32 %v322, %v791
      %v1034 = vadd.f32 %v323, %v796
      %v1035 = vadd.f32 %v324, %v801
      %v1036 = vadd.f32 %v325, %v806
      %v1037 = vadd.f32 %v326, %v811
      %v1038 = vadd.f32 %v327, %v816
      %v1039 = vadd.f32 %v328, %v821
      %v1040 = vadd.f32 %v329, %v826
      %v1041 = vadd.f32 %v330, %v831
      %v1042 = vadd.f32 %v331, %v836
      %v1043 = vadd.f32 %v332, %v841
      %v1044 = vadd.f32 %v333, %v846
      %v1045 = vadd.f32 %v334, %v851
      %v1046 = vadd.f32 %v335, %v856
      %v1047 = vadd.f32 %v336, %v861
      %v1048 = vadd.f32 %v337, %v866
      %v1049 = vadd.f32 %v338, %v871
      %v1050 = vadd.f32 %v339, %v876
      %v1051 = vadd.f32 %v340, %v881
      %v1052 = vadd.f32 %v341, %v886
      %v1053 = vadd.f32 %v342, %v891
      %v1054 = vadd.f32 %v343, %v896
      %v1055 = vadd.f32 %v344, %v901
      %v1056 = vadd.f32 %v345, %v906
      %v1057 = vadd.f32 %v346, %v911
      %v1058 = vadd.f32 %v347, %v916
      %v1059 = vadd.f32 %v348, %v921
      %v1060 = vadd.f32 %v349, %v926
      %v1061 = vadd.f32 %v350, %v931
      %v1062 = vadd.f32 %v351, %v936
      %v1063 = vadd.f32 %v352, %v941
      %v1064 = vadd.f32 %v353, %v946
      %v1065 = vadd.f32 %v354, %v951
      %v1066 = vadd.f32 %v355, %v956
      %v1067 = vadd.f32 %v356, %v961
      %v1068 = vadd.f32 %v357, %v966
      %v1069 = vadd.f32 %v358, %v971
      %v1070 = vadd.f32 %v359, %v976
      %v1071 = vadd.f32 %v360, %v981
      %v1072 = vadd.f32 %v361, %v986
      %v1073 = vadd.f32 %v362, %v991
      %v1074 = vadd.f32 %v363, %v996
      %v1075 = vadd.f32 %v364, %v1001
      %v1076 = vadd.f32 %v365, %v1006
      %v1077 = vadd.f32 %v366, %v1011
      %1078 = vst [vmem:[%s230] sm:$0xff] %v1014
      %1079 = vst [vmem:[%s230 + $0x8] sm:$0xff] %v1015
      %1080 = vst [vmem:[%s230 + $0x10] sm:$0xff] %v1016
      %1081 = vst [vmem:[%s230 + $0x18] sm:$0xff] %v1017
      %1082 = vst [vmem:[%s230 + $0x20] sm:$0xff] %v1018
      %1083 = vst [vmem:[%s230 + $0x28] sm:$0xff] %v1019
      %1084 = vst [vmem:[%s230 + $0x30] sm:$0xff] %v1020
      %1085 = vst [vmem:[%s230 + $0x38] sm:$0xff] %v1021
      %1086 = vst [vmem:[%s230 + $0x40] sm:$0xff] %v1022
      %1087 = vst [vmem:[%s230 + $0x48] sm:$0xff] %v1023
      %1088 = vst [vmem:[%s230 + $0x50] sm:$0xff] %v1024
      %1089 = vst [vmem:[%s230 + $0x58] sm:$0xff] %v1025
      %1090 = vst [vmem:[%s230 + $0x60] sm:$0xff] %v1026
      %1091 = vst [vmem:[%s230 + $0x68] sm:$0xff] %v1027
      %1092 = vst [vmem:[%s230 + $0x70] sm:$0xff] %v1028
      %1093 = vst [vmem:[%s230 + $0x78] sm:$0xff] %v1029
      %1094 = vst [vmem:[%s230 + $0x80] sm:$0xff] %v1030
      %1095 = vst [vmem:[%s230 + $0x88] sm:$0xff] %v1031
      %1096 = vst [vmem:[%s230 + $0x90] sm:$0xff] %v1032
      %1097 = vst [vmem:[%s230 + $0x98] sm:$0xff] %v1033
      %1098 = vst [vmem:[%s230 + $0xa0] sm:$0xff] %v1034
      %1099 = vst [vmem:[%s230 + $0xa8] sm:$0xff] %v1035
      %1100 = vst [vmem:[%s230 + $0xb0] sm:$0xff] %v1036
      %1101 = vst [vmem:[%s230 + $0xb8] sm:$0xff] %v1037
      %1102 = vst [vmem:[%s230 + $0xc0] sm:$0xff] %v1038
      %1103 = vst [vmem:[%s230 + $0xc8] sm:$0xff] %v1039
      %1104 = vst [vmem:[%s230 + $0xd0] sm:$0xff] %v1040
      %1105 = vst [vmem:[%s230 + $0xd8] sm:$0xff] %v1041
      %1106 = vst [vmem:[%s230 + $0xe0] sm:$0xff] %v1042
      %1107 = vst [vmem:[%s230 + $0xe8] sm:$0xff] %v1043
      %1108 = vst [vmem:[%s230 + $0xf0] sm:$0xff] %v1044
      %1109 = vst [vmem:[%s230 + $0xf8] sm:$0xff] %v1045
      %1110 = vst [vmem:[%s230 + $0x100] sm:$0xff] %v1046
      %1111 = vst [vmem:[%s230 + $0x108] sm:$0xff] %v1047
      %1112 = vst [vmem:[%s230 + $0x110] sm:$0xff] %v1048
      %1113 = vst [vmem:[%s230 + $0x118] sm:$0xff] %v1049
      %1114 = vst [vmem:[%s230 + $0x120] sm:$0xff] %v1050
      %1115 = vst [vmem:[%s230 + $0x128] sm:$0xff] %v1051
      %1116 = vst [vmem:[%s230 + $0x130] sm:$0xff] %v1052
      %1117 = vst [vmem:[%s230 + $0x138] sm:$0xff] %v1053
      %1118 = vst [vmem:[%s230 + $0x140] sm:$0xff] %v1054
      %1119 = vst [vmem:[%s230 + $0x148] sm:$0xff] %v1055
      %1120 = vst [vmem:[%s230 + $0x150] sm:$0xff] %v1056
      %1121 = vst [vmem:[%s230 + $0x158] sm:$0xff] %v1057
      %1122 = vst [vmem:[%s230 + $0x160] sm:$0xff] %v1058
      %1123 = vst [vmem:[%s230 + $0x168] sm:$0xff] %v1059
      %1124 = vst [vmem:[%s230 + $0x170] sm:$0xff] %v1060
      %1125 = vst [vmem:[%s230 + $0x178] sm:$0xff] %v1061
      %1126 = vst [vmem:[%s230 + $0x180] sm:$0xff] %v1062
      %1127 = vst [vmem:[%s230 + $0x188] sm:$0xff] %v1063
      %1128 = vst [vmem:[%s230 + $0x190] sm:$0xff] %v1064
      %1129 = vst [vmem:[%s230 + $0x198] sm:$0xff] %v1065
      %1130 = vst [vmem:[%s230 + $0x1a0] sm:$0xff] %v1066
      %1131 = vst [vmem:[%s230 + $0x1a8] sm:$0xff] %v1067
      %1132 = vst [vmem:[%s230 + $0x1b0] sm:$0xff] %v1068
      %1133 = vst [vmem:[%s230 + $0x1b8] sm:$0xff] %v1069
      %1134 = vst [vmem:[%s230 + $0x1c0] sm:$0xff] %v1070
      %1135 = vst [vmem:[%s230 + $0x1c8] sm:$0xff] %v1071
      %1136 = vst [vmem:[%s230 + $0x1d0] sm:$0xff] %v1072
      %1137 = vst [vmem:[%s230 + $0x1d8] sm:$0xff] %v1073
      %1138 = vst [vmem:[%s230 + $0x1e0] sm:$0xff] %v1074
      %1139 = vst [vmem:[%s230 + $0x1e8] sm:$0xff] %v1075
      %1140 = vst [vmem:[%s230 + $0x1f0] sm:$0xff] %v1076
      %1141 = vst [vmem:[%s230 + $0x1f8] sm:$0xff] %v1077
      %v1142 = vld [vmem:[%s230] sm:$0xff]
      %v1143 = vld [vmem:[%s230 + $0x8] sm:$0xff]
      %v1144 = vld [vmem:[%s230 + $0x10] sm:$0xff]
      %v1145 = vld [vmem:[%s230 + $0x18] sm:$0xff]
      %v1146 = vld [vmem:[%s230 + $0x20] sm:$0xff]
      %v1147 = vld [vmem:[%s230 + $0x28] sm:$0xff]
      %v1148 = vld [vmem:[%s230 + $0x30] sm:$0xff]
      %v1149 = vld [vmem:[%s230 + $0x38] sm:$0xff]
      %v1150 = vld [vmem:[%s230 + $0x40] sm:$0xff]
      %v1151 = vld [vmem:[%s230 + $0x48] sm:$0xff]
      %v1152 = vld [vmem:[%s230 + $0x50] sm:$0xff]
      %v1153 = vld [vmem:[%s230 + $0x58] sm:$0xff]
      %v1154 = vld [vmem:[%s230 + $0x60] sm:$0xff]
      %v1155 = vld [vmem:[%s230 + $0x68] sm:$0xff]
      %v1156 = vld [vmem:[%s230 + $0x70] sm:$0xff]
      %v1157 = vld [vmem:[%s230 + $0x78] sm:$0xff]
      %v1158 = vld [vmem:[%s230 + $0x80] sm:$0xff]
      %v1159 = vld [vmem:[%s230 + $0x88] sm:$0xff]
      %v1160 = vld [vmem:[%s230 + $0x90] sm:$0xff]
      %v1161 = vld [vmem:[%s230 + $0x98] sm:$0xff]
      %v1162 = vld [vmem:[%s230 + $0xa0] sm:$0xff]
      %v1163 = vld [vmem:[%s230 + $0xa8] sm:$0xff]
      %v1164 = vld [vmem:[%s230 + $0xb0] sm:$0xff]
      %v1165 = vld [vmem:[%s230 + $0xb8] sm:$0xff]
      %v1166 = vld [vmem:[%s230 + $0xc0] sm:$0xff]
      %v1167 = vld [vmem:[%s230 + $0xc8] sm:$0xff]
      %v1168 = vld [vmem:[%s230 + $0xd0] sm:$0xff]
      %v1169 = vld [vmem:[%s230 + $0xd8] sm:$0xff]
      %v1170 = vld [vmem:[%s230 + $0xe0] sm:$0xff]
      %v1171 = vld [vmem:[%s230 + $0xe8] sm:$0xff]
      %v1172 = vld [vmem:[%s230 + $0xf0] sm:$0xff]
      %v1173 = vld [vmem:[%s230 + $0xf8] sm:$0xff]
      %v1174 = vld [vmem:[%s230 + $0x100] sm:$0xff]
      %v1175 = vld [vmem:[%s230 + $0x108] sm:$0xff]
      %v1176 = vld [vmem:[%s230 + $0x110] sm:$0xff]
      %v1177 = vld [vmem:[%s230 + $0x118] sm:$0xff]
      %v1178 = vld [vmem:[%s230 + $0x120] sm:$0xff]
      %v1179 = vld [vmem:[%s230 + $0x128] sm:$0xff]
      %v1180 = vld [vmem:[%s230 + $0x130] sm:$0xff]
      %v1181 = vld [vmem:[%s230 + $0x138] sm:$0xff]
      %v1182 = vld [vmem:[%s230 + $0x140] sm:$0xff]
      %v1183 = vld [vmem:[%s230 + $0x148] sm:$0xff]
      %v1184 = vld [vmem:[%s230 + $0x150] sm:$0xff]
      %v1185 = vld [vmem:[%s230 + $0x158] sm:$0xff]
      %v1186 = vld [vmem:[%s230 + $0x160] sm:$0xff]
      %v1187 = vld [vmem:[%s230 + $0x168] sm:$0xff]
      %v1188 = vld [vmem:[%s230 + $0x170] sm:$0xff]
      %v1189 = vld [vmem:[%s230 + $0x178] sm:$0xff]
      %v1190 = vld [vmem:[%s230 + $0x180] sm:$0xff]
      %v1191 = vld [vmem:[%s230 + $0x188] sm:$0xff]
      %v1192 = vld [vmem:[%s230 + $0x190] sm:$0xff]
      %v1193 = vld [vmem:[%s230 + $0x198] sm:$0xff]
      %v1194 = vld [vmem:[%s230 + $0x1a0] sm:$0xff]
      %v1195 = vld [vmem:[%s230 + $0x1a8] sm:$0xff]
      %v1196 = vld [vmem:[%s230 + $0x1b0] sm:$0xff]
      %v1197 = vld [vmem:[%s230 + $0x1b8] sm:$0xff]
      %v1198 = vld [vmem:[%s230 + $0x1c0] sm:$0xff]
      %v1199 = vld [vmem:[%s230 + $0x1c8] sm:$0xff]
      %v1200 = vld [vmem:[%s230 + $0x1d0] sm:$0xff]
      %v1201 = vld [vmem:[%s230 + $0x1d8] sm:$0xff]
      %v1202 = vld [vmem:[%s230 + $0x1e0] sm:$0xff]
      %v1203 = vld [vmem:[%s230 + $0x1e8] sm:$0xff]
      %v1204 = vld [vmem:[%s230 + $0x1f0] sm:$0xff]
      %v1205 = vld [vmem:[%s230 + $0x1f8] sm:$0xff]
      %v1206 = vld [vmem:[%s216 + $0x1] sm:$0xff]
      %v1207 = vld [vmem:[%s216 + $0x9] sm:$0xff]
      %v1208 = vld [vmem:[%s216 + $0x11] sm:$0xff]
      %v1209 = vld [vmem:[%s216 + $0x19] sm:$0xff]
      %v1210 = vld [vmem:[%s216 + $0x21] sm:$0xff]
      %v1211 = vld [vmem:[%s216 + $0x29] sm:$0xff]
      %v1212 = vld [vmem:[%s216 + $0x31] sm:$0xff]
      %v1213 = vld [vmem:[%s216 + $0x39] sm:$0xff]
      %v1214 = vld [vmem:[%s216 + $0x41] sm:$0xff]
      %v1215 = vld [vmem:[%s216 + $0x49] sm:$0xff]
      %v1216 = vld [vmem:[%s216 + $0x51] sm:$0xff]
      %v1217 = vld [vmem:[%s216 + $0x59] sm:$0xff]
      %v1218 = vld [vmem:[%s216 + $0x61] sm:$0xff]
      %v1219 = vld [vmem:[%s216 + $0x69] sm:$0xff]
      %v1220 = vld [vmem:[%s216 + $0x71] sm:$0xff]
      %v1221 = vld [vmem:[%s216 + $0x79] sm:$0xff]
      %v1222 = vld [vmem:[%s216 + $0x81] sm:$0xff]
      %v1223 = vld [vmem:[%s216 + $0x89] sm:$0xff]
      %v1224 = vld [vmem:[%s216 + $0x91] sm:$0xff]
      %v1225 = vld [vmem:[%s216 + $0x99] sm:$0xff]
      %v1226 = vld [vmem:[%s216 + $0xa1] sm:$0xff]
      %v1227 = vld [vmem:[%s216 + $0xa9] sm:$0xff]
      %v1228 = vld [vmem:[%s216 + $0xb1] sm:$0xff]
      %v1229 = vld [vmem:[%s216 + $0xb9] sm:$0xff]
      %v1230 = vld [vmem:[%s216 + $0xc1] sm:$0xff]
      %v1231 = vld [vmem:[%s216 + $0xc9] sm:$0xff]
      %v1232 = vld [vmem:[%s216 + $0xd1] sm:$0xff]
      %v1233 = vld [vmem:[%s216 + $0xd9] sm:$0xff]
      %v1234 = vld [vmem:[%s216 + $0xe1] sm:$0xff]
      %v1235 = vld [vmem:[%s216 + $0xe9] sm:$0xff]
      %v1236 = vld [vmem:[%s216 + $0xf1] sm:$0xff]
      %v1237 = vld [vmem:[%s216 + $0xf9] sm:$0xff]
      %v1238 = vld [vmem:[%s216 + $0x101] sm:$0xff]
      %v1239 = vld [vmem:[%s216 + $0x109] sm:$0xff]
      %v1240 = vld [vmem:[%s216 + $0x111] sm:$0xff]
      %v1241 = vld [vmem:[%s216 + $0x119] sm:$0xff]
      %v1242 = vld [vmem:[%s216 + $0x121] sm:$0xff]
      %v1243 = vld [vmem:[%s216 + $0x129] sm:$0xff]
      %v1244 = vld [vmem:[%s216 + $0x131] sm:$0xff]
      %v1245 = vld [vmem:[%s216 + $0x139] sm:$0xff]
      %v1246 = vld [vmem:[%s216 + $0x141] sm:$0xff]
      %v1247 = vld [vmem:[%s216 + $0x149] sm:$0xff]
      %v1248 = vld [vmem:[%s216 + $0x151] sm:$0xff]
      %v1249 = vld [vmem:[%s216 + $0x159] sm:$0xff]
      %v1250 = vld [vmem:[%s216 + $0x161] sm:$0xff]
      %v1251 = vld [vmem:[%s216 + $0x169] sm:$0xff]
      %v1252 = vld [vmem:[%s216 + $0x171] sm:$0xff]
      %v1253 = vld [vmem:[%s216 + $0x179] sm:$0xff]
      %v1254 = vld [vmem:[%s216 + $0x181] sm:$0xff]
      %v1255 = vld [vmem:[%s216 + $0x189] sm:$0xff]
      %v1256 = vld [vmem:[%s216 + $0x191] sm:$0xff]
      %v1257 = vld [vmem:[%s216 + $0x199] sm:$0xff]
      %v1258 = vld [vmem:[%s216 + $0x1a1] sm:$0xff]
      %v1259 = vld [vmem:[%s216 + $0x1a9] sm:$0xff]
      %v1260 = vld [vmem:[%s216 + $0x1b1] sm:$0xff]
      %v1261 = vld [vmem:[%s216 + $0x1b9] sm:$0xff]
      %v1262 = vld [vmem:[%s216 + $0x1c1] sm:$0xff]
      %v1263 = vld [vmem:[%s216 + $0x1c9] sm:$0xff]
      %v1264 = vld [vmem:[%s216 + $0x1d1] sm:$0xff]
      %v1265 = vld [vmem:[%s216 + $0x1d9] sm:$0xff]
      %v1266 = vld [vmem:[%s216 + $0x1e1] sm:$0xff]
      %v1267 = vld [vmem:[%s216 + $0x1e9] sm:$0xff]
      %v1268 = vld [vmem:[%s216 + $0x1f1] sm:$0xff]
      %v1269 = vld [vmem:[%s216 + $0x1f9] sm:$0xff]
      %s1270 = scalar_lea.vmem %s1, 4
      %v1271 = vld [vmem:[%s1270] sm:$0xf]
      %v1273 = vsel %vm432, %v1206, 0
      %v1276 = vsel %vm432, %v1207, 0
      %v1279 = vsel %vm432, %v1208, 0
      %v1282 = vsel %vm432, %v1209, 0
      %v1285 = vsel %vm432, %v1210, 0
      %v1288 = vsel %vm432, %v1211, 0
      %v1291 = vsel %vm432, %v1212, 0
      %v1294 = vsel %vm432, %v1213, 0
      %v1297 = vsel %vm432, %v1214, 0
      %v1300 = vsel %vm432, %v1215, 0
      %v1303 = vsel %vm432, %v1216, 0
      %v1306 = vsel %vm432, %v1217, 0
      %v1309 = vsel %vm432, %v1218, 0
      %v1312 = vsel %vm432, %v1219, 0
      %v1315 = vsel %vm432, %v1220, 0
      %v1318 = vsel %vm432, %v1221, 0
      %v1321 = vsel %vm432, %v1222, 0
      %v1324 = vsel %vm432, %v1223, 0
      %v1327 = vsel %vm432, %v1224, 0
      %v1330 = vsel %vm432, %v1225, 0
      %v1333 = vsel %vm432, %v1226, 0
      %v1336 = vsel %vm432, %v1227, 0
      %v1339 = vsel %vm432, %v1228, 0
      %v1342 = vsel %vm432, %v1229, 0
      %v1345 = vsel %vm432, %v1230, 0
      %v1348 = vsel %vm432, %v1231, 0
      %v1351 = vsel %vm432, %v1232, 0
      %v1354 = vsel %vm432, %v1233, 0
      %v1357 = vsel %vm432, %v1234, 0
      %v1360 = vsel %vm432, %v1235, 0
      %v1363 = vsel %vm432, %v1236, 0
      %v1366 = vsel %vm432, %v1237, 0
      %v1369 = vsel %vm432, %v1238, 0
      %v1372 = vsel %vm432, %v1239, 0
      %v1375 = vsel %vm432, %v1240, 0
      %v1378 = vsel %vm432, %v1241, 0
      %v1381 = vsel %vm432, %v1242, 0
      %v1384 = vsel %vm432, %v1243, 0
      %v1387 = vsel %vm432, %v1244, 0
      %v1390 = vsel %vm432, %v1245, 0
      %v1393 = vsel %vm432, %v1246, 0
      %v1396 = vsel %vm432, %v1247, 0
      %v1399 = vsel %vm432, %v1248, 0
      %v1402 = vsel %vm432, %v1249, 0
      %v1405 = vsel %vm432, %v1250, 0
      %v1408 = vsel %vm432, %v1251, 0
      %v1411 = vsel %vm432, %v1252, 0
      %v1414 = vsel %vm432, %v1253, 0
      %v1417 = vsel %vm432, %v1254, 0
      %v1420 = vsel %vm432, %v1255, 0
      %v1423 = vsel %vm432, %v1256, 0
      %v1426 = vsel %vm432, %v1257, 0
      %v1429 = vsel %vm432, %v1258, 0
      %v1432 = vsel %vm432, %v1259, 0
      %v1435 = vsel %vm432, %v1260, 0
      %v1438 = vsel %vm432, %v1261, 0
      %v1441 = vsel %vm432, %v1262, 0
      %v1444 = vsel %vm432, %v1263, 0
      %v1447 = vsel %vm432, %v1264, 0
      %v1450 = vsel %vm432, %v1265, 0
      %v1453 = vsel %vm432, %v1266, 0
      %v1456 = vsel %vm432, %v1267, 0
      %v1459 = vsel %vm432, %v1268, 0
      %v1462 = vsel %vm432, %v1269, 0
      %v1465 = vsel %vm625, %v1271, 0
      %1467 = vmatprep.subr.mxu0 0.0
      %1468 = vmatpush1.msra.mxu0 %v1465
      %1469 = vmatprep.subr.mxu0 0.0
      %1470 = vmatpush1.msra.mxu0 0.0
      %1471 = vmatprep.subr.mxu0 0.0
      %1472 = vmatpush1.msra.mxu0 0.0
      %1473 = vmatprep.subr.mxu0 0.0
      %1474 = vmatpush1.msra.mxu0 0.0
      %1475 = vmatprep.subr.mxu0 0.0
      %1476 = vmatpush1.msra.mxu0 0.0
      %1477 = vmatprep.subr.mxu0 0.0
      %1478 = vmatpush1.msra.mxu0 0.0
      %1479 = vmatprep.subr.mxu0 0.0
      %1480 = vmatpush1.msra.mxu0 0.0
      %1481 = vmatprep.subr.mxu0 0.0
      %1482 = vmatpush1.msra.mxu0 0.0
      %1483 = vmatprep.subr.mxu0 0.0
      %1484 = vmatpush1.msra.mxu0 0.0
      %1485 = vmatprep.subr.mxu0 0.0
      %1486 = vmatpush1.msra.mxu0 0.0
      %1487 = vmatprep.subr.mxu0 0.0
      %1488 = vmatpush1.msra.mxu0 0.0
      %1489 = vmatprep.subr.mxu0 0.0
      %1490 = vmatpush1.msra.mxu0 0.0
      %1491 = vmatprep.subr.mxu0 0.0
      %1492 = vmatpush1.msra.mxu0 0.0
      %1493 = vmatprep.subr.mxu0 0.0
      %1494 = vmatpush1.msra.mxu0 0.0
      %1495 = vmatprep.subr.mxu0 0.0
      %1496 = vmatpush1.msra.mxu0 0.0
      %1497 = vmatprep.subr.mxu0 0.0
      %1498 = vmatpush1.msra.mxu0 0.0
      %1499 = vmatprep.subr.mxu0 0.0
      %1500 = vmatpush1.msra.mxu0 0.0
      %1501 = vmatprep.subr.mxu0 0.0
      %1502 = vmatpush1.msra.mxu0 0.0
      %1503 = vmatprep.subr.mxu0 0.0
      %1504 = vmatpush1.msra.mxu0 0.0
      %1505 = vmatprep.subr.mxu0 0.0
      %1506 = vmatpush1.msra.mxu0 0.0
      %1507 = vmatprep.subr.mxu0 0.0
      %1508 = vmatpush1.msra.mxu0 0.0
      %1509 = vmatprep.subr.mxu0 0.0
      %1510 = vmatpush1.msra.mxu0 0.0
      %1511 = vmatprep.subr.mxu0 0.0
      %1512 = vmatpush1.msra.mxu0 0.0
      %1513 = vmatprep.subr.mxu0 0.0
      %1514 = vmatpush1.msra.mxu0 0.0
      %1515 = vmatprep.subr.mxu0 0.0
      %1516 = vmatpush1.msra.mxu0 0.0
      %1517 = vmatprep.subr.mxu0 0.0
      %1518 = vmatpush1.msra.mxu0 0.0
      %1519 = vmatprep.subr.mxu0 0.0
      %1520 = vmatpush1.msra.mxu0 0.0
      %1521 = vmatprep.subr.mxu0 0.0
      %1522 = vmatpush1.msra.mxu0 0.0
      %1523 = vmatprep.subr.mxu0 0.0
      %1524 = vmatpush1.msra.mxu0 0.0
      %1525 = vmatprep.subr.mxu0 0.0
      %1526 = vmatpush1.msra.mxu0 0.0
      %1527 = vmatprep.subr.mxu0 0.0
      %1528 = vmatpush1.msra.mxu0 0.0
      %1529 = vmatprep.subr.mxu0 0.0
      %1530 = vmatpush1.msra.mxu0 0.0
      %1531 = vmatprep.mubr.f32.mxu0 0.0
      %1532 = vmatmul.mubr.f32.gmra.mrb[0].mxu0 %v1273
      %v1533 = vpop.f32.mrb[0].mxu0
      %v1534 = vadd.f32 0.0, %v1533
      %v1535 = vpop.f32.mrb[0].mxu0
      %1536 = vmatprep.mubr.f32.mxu0 0.0
      %1537 = vmatmul.mubr.f32.gmra.mrb[0].mxu0 %v1276
      %v1538 = vpop.f32.mrb[0].mxu0
      %v1539 = vadd.f32 0.0, %v1538
      %v1540 = vpop.f32.mrb[0].mxu0
      %1541 = vmatprep.mubr.f32.mxu0 0.0
      %1542 = vmatmul.mubr.f32.gmra.mrb[0].mxu0 %v1279
      %v1543 = vpop.f32.mrb[0].mxu0
      %v1544 = vadd.f32 0.0, %v1543
      %v1545 = vpop.f32.mrb[0].mxu0
      %1546 = vmatprep.mubr.f32.mxu0 0.0
      %1547 = vmatmul.mubr.f32.gmra.mrb[0].mxu0 %v1282
      %v1548 = vpop.f32.mrb[0].mxu0
      %v1549 = vadd.f32 0.0, %v1548
      %v1550 = vpop.f32.mrb[0].mxu0
      %1551 = vmatprep.mubr.f32.mxu0 0.0
      %1552 = vmatmul.mubr.f32.gmra.mrb[0].mxu0 %v1285
      %v1553 = vpop.f32.mrb[0].mxu0
      %v1554 = vadd.f32 0.0, %v1553
      %v1555 = vpop.f32.mrb[0].mxu0
      %1556 = vmatprep.mubr.f32.mxu0 0.0
      %1557 = vmatmul.mubr.f32.gmra.mrb[0].mxu0 %v1288
      %v1558 = vpop.f32.mrb[0].mxu0
      %v1559 = vadd.f32 0.0, %v1558
      %v1560 = vpop.f32.mrb[0].mxu0
      %1561 = vmatprep.mubr.f32.mxu0 0.0
      %1562 = vmatmul.mubr.f32.gmra.mrb[0].mxu0 %v1291
      %v1563 = vpop.f32.mrb[0].mxu0
      %v1564 = vadd.f32 0.0, %v1563
      %v1565 = vpop.f32.mrb[0].mxu0
      %1566 = vmatprep.mubr.f32.mxu0 0.0
      %1567 = vmatmul.mubr.f32.gmra.mrb[0].mxu0 %v1294
      %v1568 = vpop.f32.mrb[0].mxu0
      %v1569 = vadd.f32 0.0, %v1568
      %v1570 = vpop.f32.mrb[0].mxu0
      %1571 = vmatprep.mubr.f32.mxu0 0.0
      %1572 = vmatmul.mubr.f32.gmra.mrb[0].mxu0 %v1297
      %v1573 = vpop.f32.mrb[0].mxu0
      %v1574 = vadd.f32 0.0, %v1573
      %v1575 = vpop.f32.mrb[0].mxu0
      %1576 = vmatprep.mubr.f32.mxu0 0.0
      %1577 = vmatmul.mubr.f32.gmra.mrb[0].mxu0 %v1300
      %v1578 = vpop.f32.mrb[0].mxu0
      %v1579 = vadd.f32 0.0, %v1578
      %v1580 = vpop.f32.mrb[0].mxu0
      %1581 = vmatprep.mubr.f32.mxu0 0.0
      %1582 = vmatmul.mubr.f32.gmra.mrb[0].mxu0 %v1303
      %v1583 = vpop.f32.mrb[0].mxu0
      %v1584 = vadd.f32 0.0, %v1583
      %v1585 = vpop.f32.mrb[0].mxu0
      %1586 = vmatprep.mubr.f32.mxu0 0.0
      %1587 = vmatmul.mubr.f32.gmra.mrb[0].mxu0 %v1306
      %v1588 = vpop.f32.mrb[0].mxu0
      %v1589 = vadd.f32 0.0, %v1588
      %v1590 = vpop.f32.mrb[0].mxu0
      %1591 = vmatprep.mubr.f32.mxu0 0.0
      %1592 = vmatmul.mubr.f32.gmra.mrb[0].mxu0 %v1309
      %v1593 = vpop.f32.mrb[0].mxu0
      %v1594 = vadd.f32 0.0, %v1593
      %v1595 = vpop.f32.mrb[0].mxu0
      %1596 = vmatprep.mubr.f32.mxu0 0.0
      %1597 = vmatmul.mubr.f32.gmra.mrb[0].mxu0 %v1312
      %v1598 = vpop.f32.mrb[0].mxu0
      %v1599 = vadd.f32 0.0, %v1598
      %v1600 = vpop.f32.mrb[0].mxu0
      %1601 = vmatprep.mubr.f32.mxu0 0.0
      %1602 = vmatmul.mubr.f32.gmra.mrb[0].mxu0 %v1315
      %v1603 = vpop.f32.mrb[0].mxu0
      %v1604 = vadd.f32 0.0, %v1603
      %v1605 = vpop.f32.mrb[0].mxu0
      %1606 = vmatprep.mubr.f32.mxu0 0.0
      %1607 = vmatmul.mubr.f32.gmra.mrb[0].mxu0 %v1318
      %v1608 = vpop.f32.mrb[0].mxu0
      %v1609 = vadd.f32 0.0, %v1608
      %v1610 = vpop.f32.mrb[0].mxu0
      %1611 = vmatprep.mubr.f32.mxu0 0.0
      %1612 = vmatmul.mubr.f32.gmra.mrb[0].mxu0 %v1321
      %v1613 = vpop.f32.mrb[0].mxu0
      %v1614 = vadd.f32 0.0, %v1613
      %v1615 = vpop.f32.mrb[0].mxu0
      %1616 = vmatprep.mubr.f32.mxu0 0.0
      %1617 = vmatmul.mubr.f32.gmra.mrb[0].mxu0 %v1324
      %v1618 = vpop.f32.mrb[0].mxu0
      %v1619 = vadd.f32 0.0, %v1618
      %v1620 = vpop.f32.mrb[0].mxu0
      %1621 = vmatprep.mubr.f32.mxu0 0.0
      %1622 = vmatmul.mubr.f32.gmra.mrb[0].mxu0 %v1327
      %v1623 = vpop.f32.mrb[0].mxu0
      %v1624 = vadd.f32 0.0, %v1623
      %v1625 = vpop.f32.mrb[0].mxu0
      %1626 = vmatprep.mubr.f32.mxu0 0.0
      %1627 = vmatmul.mubr.f32.gmra.mrb[0].mxu0 %v1330
      %v1628 = vpop.f32.mrb[0].mxu0
      %v1629 = vadd.f32 0.0, %v1628
      %v1630 = vpop.f32.mrb[0].mxu0
      %1631 = vmatprep.mubr.f32.mxu0 0.0
      %1632 = vmatmul.mubr.f32.gmra.mrb[0].mxu0 %v1333
      %v1633 = vpop.f32.mrb[0].mxu0
      %v1634 = vadd.f32 0.0, %v1633
      %v1635 = vpop.f32.mrb[0].mxu0
      %1636 = vmatprep.mubr.f32.mxu0 0.0
      %1637 = vmatmul.mubr.f32.gmra.mrb[0].mxu0 %v1336
      %v1638 = vpop.f32.mrb[0].mxu0
      %v1639 = vadd.f32 0.0, %v1638
      %v1640 = vpop.f32.mrb[0].mxu0
      %1641 = vmatprep.mubr.f32.mxu0 0.0
      %1642 = vmatmul.mubr.f32.gmra.mrb[0].mxu0 %v1339
      %v1643 = vpop.f32.mrb[0].mxu0
      %v1644 = vadd.f32 0.0, %v1643
      %v1645 = vpop.f32.mrb[0].mxu0
      %1646 = vmatprep.mubr.f32.mxu0 0.0
      %1647 = vmatmul.mubr.f32.gmra.mrb[0].mxu0 %v1342
      %v1648 = vpop.f32.mrb[0].mxu0
      %v1649 = vadd.f32 0.0, %v1648
      %v1650 = vpop.f32.mrb[0].mxu0
      %1651 = vmatprep.mubr.f32.mxu0 0.0
      %1652 = vmatmul.mubr.f32.gmra.mrb[0].mxu0 %v1345
      %v1653 = vpop.f32.mrb[0].mxu0
      %v1654 = vadd.f32 0.0, %v1653
      %v1655 = vpop.f32.mrb[0].mxu0
      %1656 = vmatprep.mubr.f32.mxu0 0.0
      %1657 = vmatmul.mubr.f32.gmra.mrb[0].mxu0 %v1348
      %v1658 = vpop.f32.mrb[0].mxu0
      %v1659 = vadd.f32 0.0, %v1658
      %v1660 = vpop.f32.mrb[0].mxu0
      %1661 = vmatprep.mubr.f32.mxu0 0.0
      %1662 = vmatmul.mubr.f32.gmra.mrb[0].mxu0 %v1351
      %v1663 = vpop.f32.mrb[0].mxu0
      %v1664 = vadd.f32 0.0, %v1663
      %v1665 = vpop.f32.mrb[0].mxu0
      %1666 = vmatprep.mubr.f32.mxu0 0.0
      %1667 = vmatmul.mubr.f32.gmra.mrb[0].mxu0 %v1354
      %v1668 = vpop.f32.mrb[0].mxu0
      %v1669 = vadd.f32 0.0, %v1668
      %v1670 = vpop.f32.mrb[0].mxu0
      %1671 = vmatprep.mubr.f32.mxu0 0.0
      %1672 = vmatmul.mubr.f32.gmra.mrb[0].mxu0 %v1357
      %v1673 = vpop.f32.mrb[0].mxu0
      %v1674 = vadd.f32 0.0, %v1673
      %v1675 = vpop.f32.mrb[0].mxu0
      %1676 = vmatprep.mubr.f32.mxu0 0.0
      %1677 = vmatmul.mubr.f32.gmra.mrb[0].mxu0 %v1360
      %v1678 = vpop.f32.mrb[0].mxu0
      %v1679 = vadd.f32 0.0, %v1678
      %v1680 = vpop.f32.mrb[0].mxu0
      %1681 = vmatprep.mubr.f32.mxu0 0.0
      %1682 = vmatmul.mubr.f32.gmra.mrb[0].mxu0 %v1363
      %v1683 = vpop.f32.mrb[0].mxu0
      %v1684 = vadd.f32 0.0, %v1683
      %v1685 = vpop.f32.mrb[0].mxu0
      %1686 = vmatprep.mubr.f32.mxu0 0.0
      %1687 = vmatmul.mubr.f32.gmra.mrb[0].mxu0 %v1366
      %v1688 = vpop.f32.mrb[0].mxu0
      %v1689 = vadd.f32 0.0, %v1688
      %v1690 = vpop.f32.mrb[0].mxu0
      %1691 = vmatprep.mubr.f32.mxu0 0.0
      %1692 = vmatmul.mubr.f32.gmra.mrb[0].mxu0 %v1369
      %v1693 = vpop.f32.mrb[0].mxu0
      %v1694 = vadd.f32 0.0, %v1693
      %v1695 = vpop.f32.mrb[0].mxu0
      %1696 = vmatprep.mubr.f32.mxu0 0.0
      %1697 = vmatmul.mubr.f32.gmra.mrb[0].mxu0 %v1372
      %v1698 = vpop.f32.mrb[0].mxu0
      %v1699 = vadd.f32 0.0, %v1698
      %v1700 = vpop.f32.mrb[0].mxu0
      %1701 = vmatprep.mubr.f32.mxu0 0.0
      %1702 = vmatmul.mubr.f32.gmra.mrb[0].mxu0 %v1375
      %v1703 = vpop.f32.mrb[0].mxu0
      %v1704 = vadd.f32 0.0, %v1703
      %v1705 = vpop.f32.mrb[0].mxu0
      %1706 = vmatprep.mubr.f32.mxu0 0.0
      %1707 = vmatmul.mubr.f32.gmra.mrb[0].mxu0 %v1378
      %v1708 = vpop.f32.mrb[0].mxu0
      %v1709 = vadd.f32 0.0, %v1708
      %v1710 = vpop.f32.mrb[0].mxu0
      %1711 = vmatprep.mubr.f32.mxu0 0.0
      %1712 = vmatmul.mubr.f32.gmra.mrb[0].mxu0 %v1381
      %v1713 = vpop.f32.mrb[0].mxu0
      %v1714 = vadd.f32 0.0, %v1713
      %v1715 = vpop.f32.mrb[0].mxu0
      %1716 = vmatprep.mubr.f32.mxu0 0.0
      %1717 = vmatmul.mubr.f32.gmra.mrb[0].mxu0 %v1384
      %v1718 = vpop.f32.mrb[0].mxu0
      %v1719 = vadd.f32 0.0, %v1718
      %v1720 = vpop.f32.mrb[0].mxu0
      %1721 = vmatprep.mubr.f32.mxu0 0.0
      %1722 = vmatmul.mubr.f32.gmra.mrb[0].mxu0 %v1387
      %v1723 = vpop.f32.mrb[0].mxu0
      %v1724 = vadd.f32 0.0, %v1723
      %v1725 = vpop.f32.mrb[0].mxu0
      %1726 = vmatprep.mubr.f32.mxu0 0.0
      %1727 = vmatmul.mubr.f32.gmra.mrb[0].mxu0 %v1390
      %v1728 = vpop.f32.mrb[0].mxu0
      %v1729 = vadd.f32 0.0, %v1728
      %v1730 = vpop.f32.mrb[0].mxu0
      %1731 = vmatprep.mubr.f32.mxu0 0.0
      %1732 = vmatmul.mubr.f32.gmra.mrb[0].mxu0 %v1393
      %v1733 = vpop.f32.mrb[0].mxu0
      %v1734 = vadd.f32 0.0, %v1733
      %v1735 = vpop.f32.mrb[0].mxu0
      %1736 = vmatprep.mubr.f32.mxu0 0.0
      %1737 = vmatmul.mubr.f32.gmra.mrb[0].mxu0 %v1396
      %v1738 = vpop.f32.mrb[0].mxu0
      %v1739 = vadd.f32 0.0, %v1738
      %v1740 = vpop.f32.mrb[0].mxu0
      %1741 = vmatprep.mubr.f32.mxu0 0.0
      %1742 = vmatmul.mubr.f32.gmra.mrb[0].mxu0 %v1399
      %v1743 = vpop.f32.mrb[0].mxu0
      %v1744 = vadd.f32 0.0, %v1743
      %v1745 = vpop.f32.mrb[0].mxu0
      %1746 = vmatprep.mubr.f32.mxu0 0.0
      %1747 = vmatmul.mubr.f32.gmra.mrb[0].mxu0 %v1402
      %v1748 = vpop.f32.mrb[0].mxu0
      %v1749 = vadd.f32 0.0, %v1748
      %v1750 = vpop.f32.mrb[0].mxu0
      %1751 = vmatprep.mubr.f32.mxu0 0.0
      %1752 = vmatmul.mubr.f32.gmra.mrb[0].mxu0 %v1405
      %v1753 = vpop.f32.mrb[0].mxu0
      %v1754 = vadd.f32 0.0, %v1753
      %v1755 = vpop.f32.mrb[0].mxu0
      %1756 = vmatprep.mubr.f32.mxu0 0.0
      %1757 = vmatmul.mubr.f32.gmra.mrb[0].mxu0 %v1408
      %v1758 = vpop.f32.mrb[0].mxu0
      %v1759 = vadd.f32 0.0, %v1758
      %v1760 = vpop.f32.mrb[0].mxu0
      %1761 = vmatprep.mubr.f32.mxu0 0.0
      %1762 = vmatmul.mubr.f32.gmra.mrb[0].mxu0 %v1411
      %v1763 = vpop.f32.mrb[0].mxu0
      %v1764 = vadd.f32 0.0, %v1763
      %v1765 = vpop.f32.mrb[0].mxu0
      %1766 = vmatprep.mubr.f32.mxu0 0.0
      %1767 = vmatmul.mubr.f32.gmra.mrb[0].mxu0 %v1414
      %v1768 = vpop.f32.mrb[0].mxu0
      %v1769 = vadd.f32 0.0, %v1768
      %v1770 = vpop.f32.mrb[0].mxu0
      %1771 = vmatprep.mubr.f32.mxu0 0.0
      %1772 = vmatmul.mubr.f32.gmra.mrb[0].mxu0 %v1417
      %v1773 = vpop.f32.mrb[0].mxu0
      %v1774 = vadd.f32 0.0, %v1773
      %v1775 = vpop.f32.mrb[0].mxu0
      %1776 = vmatprep.mubr.f32.mxu0 0.0
      %1777 = vmatmul.mubr.f32.gmra.mrb[0].mxu0 %v1420
      %v1778 = vpop.f32.mrb[0].mxu0
      %v1779 = vadd.f32 0.0, %v1778
      %v1780 = vpop.f32.mrb[0].mxu0
      %1781 = vmatprep.mubr.f32.mxu0 0.0
      %1782 = vmatmul.mubr.f32.gmra.mrb[0].mxu0 %v1423
      %v1783 = vpop.f32.mrb[0].mxu0
      %v1784 = vadd.f32 0.0, %v1783
      %v1785 = vpop.f32.mrb[0].mxu0
      %1786 = vmatprep.mubr.f32.mxu0 0.0
      %1787 = vmatmul.mubr.f32.gmra.mrb[0].mxu0 %v1426
      %v1788 = vpop.f32.mrb[0].mxu0
      %v1789 = vadd.f32 0.0, %v1788
      %v1790 = vpop.f32.mrb[0].mxu0
      %1791 = vmatprep.mubr.f32.mxu0 0.0
      %1792 = vmatmul.mubr.f32.gmra.mrb[0].mxu0 %v1429
      %v1793 = vpop.f32.mrb[0].mxu0
      %v1794 = vadd.f32 0.0, %v1793
      %v1795 = vpop.f32.mrb[0].mxu0
      %1796 = vmatprep.mubr.f32.mxu0 0.0
      %1797 = vmatmul.mubr.f32.gmra.mrb[0].mxu0 %v1432
      %v1798 = vpop.f32.mrb[0].mxu0
      %v1799 = vadd.f32 0.0, %v1798
      %v1800 = vpop.f32.mrb[0].mxu0
      %1801 = vmatprep.mubr.f32.mxu0 0.0
      %1802 = vmatmul.mubr.f32.gmra.mrb[0].mxu0 %v1435
      %v1803 = vpop.f32.mrb[0].mxu0
      %v1804 = vadd.f32 0.0, %v1803
      %v1805 = vpop.f32.mrb[0].mxu0
      %1806 = vmatprep.mubr.f32.mxu0 0.0
      %1807 = vmatmul.mubr.f32.gmra.mrb[0].mxu0 %v1438
      %v1808 = vpop.f32.mrb[0].mxu0
      %v1809 = vadd.f32 0.0, %v1808
      %v1810 = vpop.f32.mrb[0].mxu0
      %1811 = vmatprep.mubr.f32.mxu0 0.0
      %1812 = vmatmul.mubr.f32.gmra.mrb[0].mxu0 %v1441
      %v1813 = vpop.f32.mrb[0].mxu0
      %v1814 = vadd.f32 0.0, %v1813
      %v1815 = vpop.f32.mrb[0].mxu0
      %1816 = vmatprep.mubr.f32.mxu0 0.0
      %1817 = vmatmul.mubr.f32.gmra.mrb[0].mxu0 %v1444
      %v1818 = vpop.f32.mrb[0].mxu0
      %v1819 = vadd.f32 0.0, %v1818
      %v1820 = vpop.f32.mrb[0].mxu0
      %1821 = vmatprep.mubr.f32.mxu0 0.0
      %1822 = vmatmul.mubr.f32.gmra.mrb[0].mxu0 %v1447
      %v1823 = vpop.f32.mrb[0].mxu0
      %v1824 = vadd.f32 0.0, %v1823
      %v1825 = vpop.f32.mrb[0].mxu0
      %1826 = vmatprep.mubr.f32.mxu0 0.0
      %1827 = vmatmul.mubr.f32.gmra.mrb[0].mxu0 %v1450
      %v1828 = vpop.f32.mrb[0].mxu0
      %v1829 = vadd.f32 0.0, %v1828
      %v1830 = vpop.f32.mrb[0].mxu0
      %1831 = vmatprep.mubr.f32.mxu0 0.0
      %1832 = vmatmul.mubr.f32.gmra.mrb[0].mxu0 %v1453
      %v1833 = vpop.f32.mrb[0].mxu0
      %v1834 = vadd.f32 0.0, %v1833
      %v1835 = vpop.f32.mrb[0].mxu0
      %1836 = vmatprep.mubr.f32.mxu0 0.0
      %1837 = vmatmul.mubr.f32.gmra.mrb[0].mxu0 %v1456
      %v1838 = vpop.f32.mrb[0].mxu0
      %v1839 = vadd.f32 0.0, %v1838
      %v1840 = vpop.f32.mrb[0].mxu0
      %1841 = vmatprep.mubr.f32.mxu0 0.0
      %1842 = vmatmul.mubr.f32.gmra.mrb[0].mxu0 %v1459
      %v1843 = vpop.f32.mrb[0].mxu0
      %v1844 = vadd.f32 0.0, %v1843
      %v1845 = vpop.f32.mrb[0].mxu0
      %1846 = vmatprep.mubr.f32.mxu0 0.0
      %1847 = vmatmul.mubr.f32.gmra.mrb[0].mxu0 %v1462
      %v1848 = vpop.f32.mrb[0].mxu0
      %v1849 = vadd.f32 0.0, %v1848
      %v1850 = vpop.f32.mrb[0].mxu0
      %1851 = vdwg.mxu0
      %v1852 = vadd.f32 %v1142, %v1534
      %v1853 = vadd.f32 %v1143, %v1539
      %v1854 = vadd.f32 %v1144, %v1544
      %v1855 = vadd.f32 %v1145, %v1549
      %v1856 = vadd.f32 %v1146, %v1554
      %v1857 = vadd.f32 %v1147, %v1559
      %v1858 = vadd.f32 %v1148, %v1564
      %v1859 = vadd.f32 %v1149, %v1569
      %v1860 = vadd.f32 %v1150, %v1574
      %v1861 = vadd.f32 %v1151, %v1579
      %v1862 = vadd.f32 %v1152, %v1584
      %v1863 = vadd.f32 %v1153, %v1589
      %v1864 = vadd.f32 %v1154, %v1594
      %v1865 = vadd.f32 %v1155, %v1599
      %v1866 = vadd.f32 %v1156, %v1604
      %v1867 = vadd.f32 %v1157, %v1609
      %v1868 = vadd.f32 %v1158, %v1614
      %v1869 = vadd.f32 %v1159, %v1619
      %v1870 = vadd.f32 %v1160, %v1624
      %v1871 = vadd.f32 %v1161, %v1629
      %v1872 = vadd.f32 %v1162, %v1634
      %v1873 = vadd.f32 %v1163, %v1639
      %v1874 = vadd.f32 %v1164, %v1644
      %v1875 = vadd.f32 %v1165, %v1649
      %v1876 = vadd.f32 %v1166, %v1654
      %v1877 = vadd.f32 %v1167, %v1659
      %v1878 = vadd.f32 %v1168, %v1664
      %v1879 = vadd.f32 %v1169, %v1669
      %v1880 = vadd.f32 %v1170, %v1674
      %v1881 = vadd.f32 %v1171, %v1679
      %v1882 = vadd.f32 %v1172, %v1684
      %v1883 = vadd.f32 %v1173, %v1689
      %v1884 = vadd.f32 %v1174, %v1694
      %v1885 = vadd.f32 %v1175, %v1699
      %v1886 = vadd.f32 %v1176, %v1704
      %v1887 = vadd.f32 %v1177, %v1709
      %v1888 = vadd.f32 %v1178, %v1714
      %v1889 = vadd.f32 %v1179, %v1719
      %v1890 = vadd.f32 %v1180, %v1724
      %v1891 = vadd.f32 %v1181, %v1729
      %v1892 = vadd.f32 %v1182, %v1734
      %v1893 = vadd.f32 %v1183, %v1739
      %v1894 = vadd.f32 %v1184, %v1744
      %v1895 = vadd.f32 %v1185, %v1749
      %v1896 = vadd.f32 %v1186, %v1754
      %v1897 = vadd.f32 %v1187, %v1759
      %v1898 = vadd.f32 %v1188, %v1764
      %v1899 = vadd.f32 %v1189, %v1769
      %v1900 = vadd.f32 %v1190, %v1774
      %v1901 = vadd.f32 %v1191, %v1779
      %v1902 = vadd.f32 %v1192, %v1784
      %v1903 = vadd.f32 %v1193, %v1789
      %v1904 = vadd.f32 %v1194, %v1794
      %v1905 = vadd.f32 %v1195, %v1799
      %v1906 = vadd.f32 %v1196, %v1804
      %v1907 = vadd.f32 %v1197, %v1809
      %v1908 = vadd.f32 %v1198, %v1814
      %v1909 = vadd.f32 %v1199, %v1819
      %v1910 = vadd.f32 %v1200, %v1824
      %v1911 = vadd.f32 %v1201, %v1829
      %v1912 = vadd.f32 %v1202, %v1834
      %v1913 = vadd.f32 %v1203, %v1839
      %v1914 = vadd.f32 %v1204, %v1844
      %v1915 = vadd.f32 %v1205, %v1849
      %1916 = vst [vmem:[%s230] sm:$0xff] %v1852
      %1917 = vst [vmem:[%s230 + $0x8] sm:$0xff] %v1853
      %1918 = vst [vmem:[%s230 + $0x10] sm:$0xff] %v1854
      %1919 = vst [vmem:[%s230 + $0x18] sm:$0xff] %v1855
      %1920 = vst [vmem:[%s230 + $0x20] sm:$0xff] %v1856
      %1921 = vst [vmem:[%s230 + $0x28] sm:$0xff] %v1857
      %1922 = vst [vmem:[%s230 + $0x30] sm:$0xff] %v1858
      %1923 = vst [vmem:[%s230 + $0x38] sm:$0xff] %v1859
      %1924 = vst [vmem:[%s230 + $0x40] sm:$0xff] %v1860
      %1925 = vst [vmem:[%s230 + $0x48] sm:$0xff] %v1861
      %1926 = vst [vmem:[%s230 + $0x50] sm:$0xff] %v1862
      %1927 = vst [vmem:[%s230 + $0x58] sm:$0xff] %v1863
      %1928 = vst [vmem:[%s230 + $0x60] sm:$0xff] %v1864
      %1929 = vst [vmem:[%s230 + $0x68] sm:$0xff] %v1865
      %1930 = vst [vmem:[%s230 + $0x70] sm:$0xff] %v1866
      %1931 = vst [vmem:[%s230 + $0x78] sm:$0xff] %v1867
      %1932 = vst [vmem:[%s230 + $0x80] sm:$0xff] %v1868
      %1933 = vst [vmem:[%s230 + $0x88] sm:$0xff] %v1869
      %1934 = vst [vmem:[%s230 + $0x90] sm:$0xff] %v1870
      %1935 = vst [vmem:[%s230 + $0x98] sm:$0xff] %v1871
      %1936 = vst [vmem:[%s230 + $0xa0] sm:$0xff] %v1872
      %1937 = vst [vmem:[%s230 + $0xa8] sm:$0xff] %v1873
      %1938 = vst [vmem:[%s230 + $0xb0] sm:$0xff] %v1874
      %1939 = vst [vmem:[%s230 + $0xb8] sm:$0xff] %v1875
      %1940 = vst [vmem:[%s230 + $0xc0] sm:$0xff] %v1876
      %1941 = vst [vmem:[%s230 + $0xc8] sm:$0xff] %v1877
      %1942 = vst [vmem:[%s230 + $0xd0] sm:$0xff] %v1878
      %1943 = vst [vmem:[%s230 + $0xd8] sm:$0xff] %v1879
      %1944 = vst [vmem:[%s230 + $0xe0] sm:$0xff] %v1880
      %1945 = vst [vmem:[%s230 + $0xe8] sm:$0xff] %v1881
      %1946 = vst [vmem:[%s230 + $0xf0] sm:$0xff] %v1882
      %1947 = vst [vmem:[%s230 + $0xf8] sm:$0xff] %v1883
      %1948 = vst [vmem:[%s230 + $0x100] sm:$0xff] %v1884
      %1949 = vst [vmem:[%s230 + $0x108] sm:$0xff] %v1885
      %1950 = vst [vmem:[%s230 + $0x110] sm:$0xff] %v1886
      %1951 = vst [vmem:[%s230 + $0x118] sm:$0xff] %v1887
      %1952 = vst [vmem:[%s230 + $0x120] sm:$0xff] %v1888
      %1953 = vst [vmem:[%s230 + $0x128] sm:$0xff] %v1889
      %1954 = vst [vmem:[%s230 + $0x130] sm:$0xff] %v1890
      %1955 = vst [vmem:[%s230 + $0x138] sm:$0xff] %v1891
      %1956 = vst [vmem:[%s230 + $0x140] sm:$0xff] %v1892
      %1957 = vst [vmem:[%s230 + $0x148] sm:$0xff] %v1893
      %1958 = vst [vmem:[%s230 + $0x150] sm:$0xff] %v1894
      %1959 = vst [vmem:[%s230 + $0x158] sm:$0xff] %v1895
      %1960 = vst [vmem:[%s230 + $0x160] sm:$0xff] %v1896
      %1961 = vst [vmem:[%s230 + $0x168] sm:$0xff] %v1897
      %1962 = vst [vmem:[%s230 + $0x170] sm:$0xff] %v1898
      %1963 = vst [vmem:[%s230 + $0x178] sm:$0xff] %v1899
      %1964 = vst [vmem:[%s230 + $0x180] sm:$0xff] %v1900
      %1965 = vst [vmem:[%s230 + $0x188] sm:$0xff] %v1901
      %1966 = vst [vmem:[%s230 + $0x190] sm:$0xff] %v1902
      %1967 = vst [vmem:[%s230 + $0x198] sm:$0xff] %v1903
      %1968 = vst [vmem:[%s230 + $0x1a0] sm:$0xff] %v1904
      %1969 = vst [vmem:[%s230 + $0x1a8] sm:$0xff] %v1905
      %1970 = vst [vmem:[%s230 + $0x1b0] sm:$0xff] %v1906
      %1971 = vst [vmem:[%s230 + $0x1b8] sm:$0xff] %v1907
      %1972 = vst [vmem:[%s230 + $0x1c0] sm:$0xff] %v1908
      %1973 = vst [vmem:[%s230 + $0x1c8] sm:$0xff] %v1909
      %1974 = vst [vmem:[%s230 + $0x1d0] sm:$0xff] %v1910
      %1975 = vst [vmem:[%s230 + $0x1d8] sm:$0xff] %v1911
      %1976 = vst [vmem:[%s230 + $0x1e0] sm:$0xff] %v1912
      %1977 = vst [vmem:[%s230 + $0x1e8] sm:$0xff] %v1913
      %1978 = vst [vmem:[%s230 + $0x1f0] sm:$0xff] %v1914
      %1979 = vst [vmem:[%s230 + $0x1f8] sm:$0xff] %v1915
      %v1980 = vld [vmem:[%s230] sm:$0xff]
      %v1981 = vld [vmem:[%s230 + $0x8] sm:$0xff]
      %v1982 = vld [vmem:[%s230 + $0x10] sm:$0xff]
      %v1983 = vld [vmem:[%s230 + $0x18] sm:$0xff]
      %v1984 = vld [vmem:[%s230 + $0x20] sm:$0xff]
      %v1985 = vld [vmem:[%s230 + $0x28] sm:$0xff]
      %v1986 = vld [vmem:[%s230 + $0x30] sm:$0xff]
      %v1987 = vld [vmem:[%s230 + $0x38] sm:$0xff]
      %v1988 = vld [vmem:[%s230 + $0x40] sm:$0xff]
      %v1989 = vld [vmem:[%s230 + $0x48] sm:$0xff]
      %v1990 = vld [vmem:[%s230 + $0x50] sm:$0xff]
      %v1991 = vld [vmem:[%s230 + $0x58] sm:$0xff]
      %v1992 = vld [vmem:[%s230 + $0x60] sm:$0xff]
      %v1993 = vld [vmem:[%s230 + $0x68] sm:$0xff]
      %v1994 = vld [vmem:[%s230 + $0x70] sm:$0xff]
      %v1995 = vld [vmem:[%s230 + $0x78] sm:$0xff]
      %v1996 = vld [vmem:[%s230 + $0x80] sm:$0xff]
      %v1997 = vld [vmem:[%s230 + $0x88] sm:$0xff]
      %v1998 = vld [vmem:[%s230 + $0x90] sm:$0xff]
      %v1999 = vld [vmem:[%s230 + $0x98] sm:$0xff]
      %v2000 = vld [vmem:[%s230 + $0xa0] sm:$0xff]
      %v2001 = vld [vmem:[%s230 + $0xa8] sm:$0xff]
      %v2002 = vld [vmem:[%s230 + $0xb0] sm:$0xff]
      %v2003 = vld [vmem:[%s230 + $0xb8] sm:$0xff]
      %v2004 = vld [vmem:[%s230 + $0xc0] sm:$0xff]
      %v2005 = vld [vmem:[%s230 + $0xc8] sm:$0xff]
      %v2006 = vld [vmem:[%s230 + $0xd0] sm:$0xff]
      %v2007 = vld [vmem:[%s230 + $0xd8] sm:$0xff]
      %v2008 = vld [vmem:[%s230 + $0xe0] sm:$0xff]
      %v2009 = vld [vmem:[%s230 + $0xe8] sm:$0xff]
      %v2010 = vld [vmem:[%s230 + $0xf0] sm:$0xff]
      %v2011 = vld [vmem:[%s230 + $0xf8] sm:$0xff]
      %v2012 = vld [vmem:[%s230 + $0x100] sm:$0xff]
      %v2013 = vld [vmem:[%s230 + $0x108] sm:$0xff]
      %v2014 = vld [vmem:[%s230 + $0x110] sm:$0xff]
      %v2015 = vld [vmem:[%s230 + $0x118] sm:$0xff]
      %v2016 = vld [vmem:[%s230 + $0x120] sm:$0xff]
      %v2017 = vld [vmem:[%s230 + $0x128] sm:$0xff]
      %v2018 = vld [vmem:[%s230 + $0x130] sm:$0xff]
      %v2019 = vld [vmem:[%s230 + $0x138] sm:$0xff]
      %v2020 = vld [vmem:[%s230 + $0x140] sm:$0xff]
      %v2021 = vld [vmem:[%s230 + $0x148] sm:$0xff]
      %v2022 = vld [vmem:[%s230 + $0x150] sm:$0xff]
      %v2023 = vld [vmem:[%s230 + $0x158] sm:$0xff]
      %v2024 = vld [vmem:[%s230 + $0x160] sm:$0xff]
      %v2025 = vld [vmem:[%s230 + $0x168] sm:$0xff]
      %v2026 = vld [vmem:[%s230 + $0x170] sm:$0xff]
      %v2027 = vld [vmem:[%s230 + $0x178] sm:$0xff]
      %v2028 = vld [vmem:[%s230 + $0x180] sm:$0xff]
      %v2029 = vld [vmem:[%s230 + $0x188] sm:$0xff]
      %v2030 = vld [vmem:[%s230 + $0x190] sm:$0xff]
      %v2031 = vld [vmem:[%s230 + $0x198] sm:$0xff]
      %v2032 = vld [vmem:[%s230 + $0x1a0] sm:$0xff]
      %v2033 = vld [vmem:[%s230 + $0x1a8] sm:$0xff]
      %v2034 = vld [vmem:[%s230 + $0x1b0] sm:$0xff]
      %v2035 = vld [vmem:[%s230 + $0x1b8] sm:$0xff]
      %v2036 = vld [vmem:[%s230 + $0x1c0] sm:$0xff]
      %v2037 = vld [vmem:[%s230 + $0x1c8] sm:$0xff]
      %v2038 = vld [vmem:[%s230 + $0x1d0] sm:$0xff]
      %v2039 = vld [vmem:[%s230 + $0x1d8] sm:$0xff]
      %v2040 = vld [vmem:[%s230 + $0x1e0] sm:$0xff]
      %v2041 = vld [vmem:[%s230 + $0x1e8] sm:$0xff]
      %v2042 = vld [vmem:[%s230 + $0x1f0] sm:$0xff]
      %v2043 = vld [vmem:[%s230 + $0x1f8] sm:$0xff]
      %v2044 = vld [vmem:[%s216 + $0x2] sm:$0xff]
      %v2045 = vld [vmem:[%s216 + $0xa] sm:$0xff]
      %v2046 = vld [vmem:[%s216 + $0x12] sm:$0xff]
      %v2047 = vld [vmem:[%s216 + $0x1a] sm:$0xff]
      %v2048 = vld [vmem:[%s216 + $0x22] sm:$0xff]
      %v2049 = vld [vmem:[%s216 + $0x2a] sm:$0xff]
      %v2050 = vld [vmem:[%s216 + $0x32] sm:$0xff]
      %v2051 = vld [vmem:[%s216 + $0x3a] sm:$0xff]
      %v2052 = vld [vmem:[%s216 + $0x42] sm:$0xff]
      %v2053 = vld [vmem:[%s216 + $0x4a] sm:$0xff]
      %v2054 = vld [vmem:[%s216 + $0x52] sm:$0xff]
      %v2055 = vld [vmem:[%s216 + $0x5a] sm:$0xff]
      %v2056 = vld [vmem:[%s216 + $0x62] sm:$0xff]
      %v2057 = vld [vmem:[%s216 + $0x6a] sm:$0xff]
      %v2058 = vld [vmem:[%s216 + $0x72] sm:$0xff]
      %v2059 = vld [vmem:[%s216 + $0x7a] sm:$0xff]
      %v2060 = vld [vmem:[%s216 + $0x82] sm:$0xff]
      %v2061 = vld [vmem:[%s216 + $0x8a] sm:$0xff]
      %v2062 = vld [vmem:[%s216 + $0x92] sm:$0xff]
      %v2063 = vld [vmem:[%s216 + $0x9a] sm:$0xff]
      %v2064 = vld [vmem:[%s216 + $0xa2] sm:$0xff]
      %v2065 = vld [vmem:[%s216 + $0xaa] sm:$0xff]
      %v2066 = vld [vmem:[%s216 + $0xb2] sm:$0xff]
      %v2067 = vld [vmem:[%s216 + $0xba] sm:$0xff]
      %v2068 = vld [vmem:[%s216 + $0xc2] sm:$0xff]
      %v2069 = vld [vmem:[%s216 + $0xca] sm:$0xff]
      %v2070 = vld [vmem:[%s216 + $0xd2] sm:$0xff]
      %v2071 = vld [vmem:[%s216 + $0xda] sm:$0xff]
      %v2072 = vld [vmem:[%s216 + $0xe2] sm:$0xff]
      %v2073 = vld [vmem:[%s216 + $0xea] sm:$0xff]
      %v2074 = vld [vmem:[%s216 + $0xf2] sm:$0xff]
      %v2075 = vld [vmem:[%s216 + $0xfa] sm:$0xff]
      %v2076 = vld [vmem:[%s216 + $0x102] sm:$0xff]
      %v2077 = vld [vmem:[%s216 + $0x10a] sm:$0xff]
      %v2078 = vld [vmem:[%s216 + $0x112] sm:$0xff]
      %v2079 = vld [vmem:[%s216 + $0x11a] sm:$0xff]
      %v2080 = vld [vmem:[%s216 + $0x122] sm:$0xff]
      %v2081 = vld [vmem:[%s216 + $0x12a] sm:$0xff]
      %v2082 = vld [vmem:[%s216 + $0x132] sm:$0xff]
      %v2083 = vld [vmem:[%s216 + $0x13a] sm:$0xff]
      %v2084 = vld [vmem:[%s216 + $0x142] sm:$0xff]
      %v2085 = vld [vmem:[%s216 + $0x14a] sm:$0xff]
      %v2086 = vld [vmem:[%s216 + $0x152] sm:$0xff]
      %v2087 = vld [vmem:[%s216 + $0x15a] sm:$0xff]
      %v2088 = vld [vmem:[%s216 + $0x162] sm:$0xff]
      %v2089 = vld [vmem:[%s216 + $0x16a] sm:$0xff]
      %v2090 = vld [vmem:[%s216 + $0x172] sm:$0xff]
      %v2091 = vld [vmem:[%s216 + $0x17a] sm:$0xff]
      %v2092 = vld [vmem:[%s216 + $0x182] sm:$0xff]
      %v2093 = vld [vmem:[%s216 + $0x18a] sm:$0xff]
      %v2094 = vld [vmem:[%s216 + $0x192] sm:$0xff]
      %v2095 = vld [vmem:[%s216 + $0x19a] sm:$0xff]
      %v2096 = vld [vmem:[%s216 + $0x1a2] sm:$0xff]
      %v2097 = vld [vmem:[%s216 + $0x1aa] sm:$0xff]
      %v2098 = vld [vmem:[%s216 + $0x1b2] sm:$0xff]
      %v2099 = vld [vmem:[%s216 + $0x1ba] sm:$0xff]
      %v2100 = vld [vmem:[%s216 + $0x1c2] sm:$0xff]
      %v2101 = vld [vmem:[%s216 + $0x1ca] sm:$0xff]
      %v2102 = vld [vmem:[%s216 + $0x1d2] sm:$0xff]
      %v2103 = vld [vmem:[%s216 + $0x1da] sm:$0xff]
      %v2104 = vld [vmem:[%s216 + $0x1e2] sm:$0xff]
      %v2105 = vld [vmem:[%s216 + $0x1ea] sm:$0xff]
      %v2106 = vld [vmem:[%s216 + $0x1f2] sm:$0xff]
      %v2107 = vld [vmem:[%s216 + $0x1fa] sm:$0xff]
      %s2108 = scalar_lea.vmem %s1, 8
      %v2109 = vld [vmem:[%s2108] sm:$0xf]
      %v2111 = vsel %vm432, %v2044, 0
      %v2114 = vsel %vm432, %v2045, 0
      %v2117 = vsel %vm432, %v2046, 0
      %v2120 = vsel %vm432, %v2047, 0
      %v2123 = vsel %vm432, %v2048, 0
      %v2126 = vsel %vm432, %v2049, 0
      %v2129 = vsel %vm432, %v2050, 0
      %v2132 = vsel %vm432, %v2051, 0
      %v2135 = vsel %vm432, %v2052, 0
      %v2138 = vsel %vm432, %v2053, 0
      %v2141 = vsel %vm432, %v2054, 0
      %v2144 = vsel %vm432, %v2055, 0
      %v2147 = vsel %vm432, %v2056, 0
      %v2150 = vsel %vm432, %v2057, 0
      %v2153 = vsel %vm432, %v2058, 0
      %v2156 = vsel %vm432, %v2059, 0
      %v2159 = vsel %vm432, %v2060, 0
      %v2162 = vsel %vm432, %v2061, 0
      %v2165 = vsel %vm432, %v2062, 0
      %v2168 = vsel %vm432, %v2063, 0
      %v2171 = vsel %vm432, %v2064, 0
      %v2174 = vsel %vm432, %v2065, 0
      %v2177 = vsel %vm432, %v2066, 0
      %v2180 = vsel %vm432, %v2067, 0
      %v2183 = vsel %vm432, %v2068, 0
      %v2186 = vsel %vm432, %v2069, 0
      %v2189 = vsel %vm432, %v2070, 0
      %v2192 = vsel %vm432, %v2071, 0
      %v2195 = vsel %vm432, %v2072, 0
      %v2198 = vsel %vm432, %v2073, 0
      %v2201 = vsel %vm432, %v2074, 0
      %v2204 = vsel %vm432, %v2075, 0
      %v2207 = vsel %vm432, %v2076, 0
      %v2210 = vsel %vm432, %v2077, 0
      %v2213 = vsel %vm432, %v2078, 0
      %v2216 = vsel %vm432, %v2079, 0
      %v2219 = vsel %vm432, %v2080, 0
      %v2222 = vsel %vm432, %v2081, 0
      %v2225 = vsel %vm432, %v2082, 0
      %v2228 = vsel %vm432, %v2083, 0
      %v2231 = vsel %vm432, %v2084, 0
      %v2234 = vsel %vm432, %v2085, 0
      %v2237 = vsel %vm432, %v2086, 0
      %v2240 = vsel %vm432, %v2087, 0
      %v2243 = vsel %vm432, %v2088, 0
      %v2246 = vsel %vm432, %v2089, 0
      %v2249 = vsel %vm432, %v2090, 0
      %v2252 = vsel %vm432, %v2091, 0
      %v2255 = vsel %vm432, %v2092, 0
      %v2258 = vsel %vm432, %v2093, 0
      %v2261 = vsel %vm432, %v2094, 0
      %v2264 = vsel %vm432, %v2095, 0
      %v2267 = vsel %vm432, %v2096, 0
      %v2270 = vsel %vm432, %v2097, 0
      %v2273 = vsel %vm432, %v2098, 0
      %v2276 = vsel %vm432, %v2099, 0
      %v2279 = vsel %vm432, %v2100, 0
      %v2282 = vsel %vm432, %v2101, 0
      %v2285 = vsel %vm432, %v2102, 0
      %v2288 = vsel %vm432, %v2103, 0
      %v2291 = vsel %vm432, %v2104, 0
      %v2294 = vsel %vm432, %v2105, 0
      %v2297 = vsel %vm432, %v2106, 0
      %v2300 = vsel %vm432, %v2107, 0
      %v2303 = vsel %vm625, %v2109, 0
      %2305 = vmatprep.subr.mxu0 0.0
      %2306 = vmatpush1.msra.mxu0 %v2303
      %2307 = vmatprep.subr.mxu0 0.0
      %2308 = vmatpush1.msra.mxu0 0.0
      %2309 = vmatprep.subr.mxu0 0.0
      %2310 = vmatpush1.msra.mxu0 0.0
      %2311 = vmatprep.subr.mxu0 0.0
      %2312 = vmatpush1.msra.mxu0 0.0
      %2313 = vmatprep.subr.mxu0 0.0
      %2314 = vmatpush1.msra.mxu0 0.0
      %2315 = vmatprep.subr.mxu0 0.0
      %2316 = vmatpush1.msra.mxu0 0.0
      %2317 = vmatprep.subr.mxu0 0.0
      %2318 = vmatpush1.msra.mxu0 0.0
      %2319 = vmatprep.subr.mxu0 0.0
      %2320 = vmatpush1.msra.mxu0 0.0
      %2321 = vmatprep.subr.mxu0 0.0
      %2322 = vmatpush1.msra.mxu0 0.0
      %2323 = vmatprep.subr.mxu0 0.0
      %2324 = vmatpush1.msra.mxu0 0.0
      %2325 = vmatprep.subr.mxu0 0.0
      %2326 = vmatpush1.msra.mxu0 0.0
      %2327 = vmatprep.subr.mxu0 0.0
      %2328 = vmatpush1.msra.mxu0 0.0
      %2329 = vmatprep.subr.mxu0 0.0
      %2330 = vmatpush1.msra.mxu0 0.0
      %2331 = vmatprep.subr.mxu0 0.0
      %2332 = vmatpush1.msra.mxu0 0.0
      %2333 = vmatprep.subr.mxu0 0.0
      %2334 = vmatpush1.msra.mxu0 0.0
      %2335 = vmatprep.subr.mxu0 0.0
      %2336 = vmatpush1.msra.mxu0 0.0
      %2337 = vmatprep.subr.mxu0 0.0
      %2338 = vmatpush1.msra.mxu0 0.0
      %2339 = vmatprep.subr.mxu0 0.0
      %2340 = vmatpush1.msra.mxu0 0.0
      %2341 = vmatprep.subr.mxu0 0.0
      %2342 = vmatpush1.msra.mxu0 0.0
      %2343 = vmatprep.subr.mxu0 0.0
      %2344 = vmatpush1.msra.mxu0 0.0
      %2345 = vmatprep.subr.mxu0 0.0
      %2346 = vmatpush1.msra.mxu0 0.0
      %2347 = vmatprep.subr.mxu0 0.0
      %2348 = vmatpush1.msra.mxu0 0.0
      %2349 = vmatprep.subr.mxu0 0.0
      %2350 = vmatpush1.msra.mxu0 0.0
      %2351 = vmatprep.subr.mxu0 0.0
      %2352 = vmatpush1.msra.mxu0 0.0
      %2353 = vmatprep.subr.mxu0 0.0
      %2354 = vmatpush1.msra.mxu0 0.0
      %2355 = vmatprep.subr.mxu0 0.0
      %2356 = vmatpush1.msra.mxu0 0.0
      %2357 = vmatprep.subr.mxu0 0.0
      %2358 = vmatpush1.msra.mxu0 0.0
      %2359 = vmatprep.subr.mxu0 0.0
      %2360 = vmatpush1.msra.mxu0 0.0
      %2361 = vmatprep.subr.mxu0 0.0
      %2362 = vmatpush1.msra.mxu0 0.0
      %2363 = vmatprep.subr.mxu0 0.0
      %2364 = vmatpush1.msra.mxu0 0.0
      %2365 = vmatprep.subr.mxu0 0.0
      %2366 = vmatpush1.msra.mxu0 0.0
      %2367 = vmatprep.subr.mxu0 0.0
      %2368 = vmatpush1.msra.mxu0 0.0
      %2369 = vmatprep.mubr.f32.mxu0 0.0
      %2370 = vmatmul.mubr.f32.gmra.mrb[0].mxu0 %v2111
      %v2371 = vpop.f32.mrb[0].mxu0
      %v2372 = vadd.f32 0.0, %v2371
      %v2373 = vpop.f32.mrb[0].mxu0
      %2374 = vmatprep.mubr.f32.mxu0 0.0
      %2375 = vmatmul.mubr.f32.gmra.mrb[0].mxu0 %v2114
      %v2376 = vpop.f32.mrb[0].mxu0
      %v2377 = vadd.f32 0.0, %v2376
      %v2378 = vpop.f32.mrb[0].mxu0
      %2379 = vmatprep.mubr.f32.mxu0 0.0
      %2380 = vmatmul.mubr.f32.gmra.mrb[0].mxu0 %v2117
      %v2381 = vpop.f32.mrb[0].mxu0
      %v2382 = vadd.f32 0.0, %v2381
      %v2383 = vpop.f32.mrb[0].mxu0
      %2384 = vmatprep.mubr.f32.mxu0 0.0
      %2385 = vmatmul.mubr.f32.gmra.mrb[0].mxu0 %v2120
      %v2386 = vpop.f32.mrb[0].mxu0
      %v2387 = vadd.f32 0.0, %v2386
      %v2388 = vpop.f32.mrb[0].mxu0
      %2389 = vmatprep.mubr.f32.mxu0 0.0
      %2390 = vmatmul.mubr.f32.gmra.mrb[0].mxu0 %v2123
      %v2391 = vpop.f32.mrb[0].mxu0
      %v2392 = vadd.f32 0.0, %v2391
      %v2393 = vpop.f32.mrb[0].mxu0
      %2394 = vmatprep.mubr.f32.mxu0 0.0
      %2395 = vmatmul.mubr.f32.gmra.mrb[0].mxu0 %v2126
      %v2396 = vpop.f32.mrb[0].mxu0
      %v2397 = vadd.f32 0.0, %v2396
      %v2398 = vpop.f32.mrb[0].mxu0
      %2399 = vmatprep.mubr.f32.mxu0 0.0
      %2400 = vmatmul.mubr.f32.gmra.mrb[0].mxu0 %v2129
      %v2401 = vpop.f32.mrb[0].mxu0
      %v2402 = vadd.f32 0.0, %v2401
      %v2403 = vpop.f32.mrb[0].mxu0
      %2404 = vmatprep.mubr.f32.mxu0 0.0
      %2405 = vmatmul.mubr.f32.gmra.mrb[0].mxu0 %v2132
      %v2406 = vpop.f32.mrb[0].mxu0
      %v2407 = vadd.f32 0.0, %v2406
      %v2408 = vpop.f32.mrb[0].mxu0
      %2409 = vmatprep.mubr.f32.mxu0 0.0
      %2410 = vmatmul.mubr.f32.gmra.mrb[0].mxu0 %v2135
      %v2411 = vpop.f32.mrb[0].mxu0
      %v2412 = vadd.f32 0.0, %v2411
      %v2413 = vpop.f32.mrb[0].mxu0
      %2414 = vmatprep.mubr.f32.mxu0 0.0
      %2415 = vmatmul.mubr.f32.gmra.mrb[0].mxu0 %v2138
      %v2416 = vpop.f32.mrb[0].mxu0
      %v2417 = vadd.f32 0.0, %v2416
      %v2418 = vpop.f32.mrb[0].mxu0
      %2419 = vmatprep.mubr.f32.mxu0 0.0
      %2420 = vmatmul.mubr.f32.gmra.mrb[0].mxu0 %v2141
      %v2421 = vpop.f32.mrb[0].mxu0
      %v2422 = vadd.f32 0.0, %v2421
      %v2423 = vpop.f32.mrb[0].mxu0
      %2424 = vmatprep.mubr.f32.mxu0 0.0
      %2425 = vmatmul.mubr.f32.gmra.mrb[0].mxu0 %v2144
      %v2426 = vpop.f32.mrb[0].mxu0
      %v2427 = vadd.f32 0.0, %v2426
      %v2428 = vpop.f32.mrb[0].mxu0
      %2429 = vmatprep.mubr.f32.mxu0 0.0
      %2430 = vmatmul.mubr.f32.gmra.mrb[0].mxu0 %v2147
      %v2431 = vpop.f32.mrb[0].mxu0
      %v2432 = vadd.f32 0.0, %v2431
      %v2433 = vpop.f32.mrb[0].mxu0
      %2434 = vmatprep.mubr.f32.mxu0 0.0
      %2435 = vmatmul.mubr.f32.gmra.mrb[0].mxu0 %v2150
      %v2436 = vpop.f32.mrb[0].mxu0
      %v2437 = vadd.f32 0.0, %v2436
      %v2438 = vpop.f32.mrb[0].mxu0
      %2439 = vmatprep.mubr.f32.mxu0 0.0
      %2440 = vmatmul.mubr.f32.gmra.mrb[0].mxu0 %v2153
      %v2441 = vpop.f32.mrb[0].mxu0
      %v2442 = vadd.f32 0.0, %v2441
      %v2443 = vpop.f32.mrb[0].mxu0
      %2444 = vmatprep.mubr.f32.mxu0 0.0
      %2445 = vmatmul.mubr.f32.gmra.mrb[0].mxu0 %v2156
      %v2446 = vpop.f32.mrb[0].mxu0
      %v2447 = vadd.f32 0.0, %v2446
      %v2448 = vpop.f32.mrb[0].mxu0
      %2449 = vmatprep.mubr.f32.mxu0 0.0
      %2450 = vmatmul.mubr.f32.gmra.mrb[0].mxu0 %v2159
      %v2451 = vpop.f32.mrb[0].mxu0
      %v2452 = vadd.f32 0.0, %v2451
      %v2453 = vpop.f32.mrb[0].mxu0
      %2454 = vmatprep.mubr.f32.mxu0 0.0
      %2455 = vmatmul.mubr.f32.gmra.mrb[0].mxu0 %v2162
      %v2456 = vpop.f32.mrb[0].mxu0
      %v2457 = vadd.f32 0.0, %v2456
      %v2458 = vpop.f32.mrb[0].mxu0
      %2459 = vmatprep.mubr.f32.mxu0 0.0
      %2460 = vmatmul.mubr.f32.gmra.mrb[0].mxu0 %v2165
      %v2461 = vpop.f32.mrb[0].mxu0
      %v2462 = vadd.f32 0.0, %v2461
      %v2463 = vpop.f32.mrb[0].mxu0
      %2464 = vmatprep.mubr.f32.mxu0 0.0
      %2465 = vmatmul.mubr.f32.gmra.mrb[0].mxu0 %v2168
      %v2466 = vpop.f32.mrb[0].mxu0
      %v2467 = vadd.f32 0.0, %v2466
      %v2468 = vpop.f32.mrb[0].mxu0
      %2469 = vmatprep.mubr.f32.mxu0 0.0
      %2470 = vmatmul.mubr.f32.gmra.mrb[0].mxu0 %v2171
      %v2471 = vpop.f32.mrb[0].mxu0
      %v2472 = vadd.f32 0.0, %v2471
      %v2473 = vpop.f32.mrb[0].mxu0
      %2474 = vmatprep.mubr.f32.mxu0 0.0
      %2475 = vmatmul.mubr.f32.gmra.mrb[0].mxu0 %v2174
      %v2476 = vpop.f32.mrb[0].mxu0
      %v2477 = vadd.f32 0.0, %v2476
      %v2478 = vpop.f32.mrb[0].mxu0
      %2479 = vmatprep.mubr.f32.mxu0 0.0
      %2480 = vmatmul.mubr.f32.gmra.mrb[0].mxu0 %v2177
      %v2481 = vpop.f32.mrb[0].mxu0
      %v2482 = vadd.f32 0.0, %v2481
      %v2483 = vpop.f32.mrb[0].mxu0
      %2484 = vmatprep.mubr.f32.mxu0 0.0
      %2485 = vmatmul.mubr.f32.gmra.mrb[0].mxu0 %v2180
      %v2486 = vpop.f32.mrb[0].mxu0
      %v2487 = vadd.f32 0.0, %v2486
      %v2488 = vpop.f32.mrb[0].mxu0
      %2489 = vmatprep.mubr.f32.mxu0 0.0
      %2490 = vmatmul.mubr.f32.gmra.mrb[0].mxu0 %v2183
      %v2491 = vpop.f32.mrb[0].mxu0
      %v2492 = vadd.f32 0.0, %v2491
      %v2493 = vpop.f32.mrb[0].mxu0
      %2494 = vmatprep.mubr.f32.mxu0 0.0
      %2495 = vmatmul.mubr.f32.gmra.mrb[0].mxu0 %v2186
      %v2496 = vpop.f32.mrb[0].mxu0
      %v2497 = vadd.f32 0.0, %v2496
      %v2498 = vpop.f32.mrb[0].mxu0
      %2499 = vmatprep.mubr.f32.mxu0 0.0
      %2500 = vmatmul.mubr.f32.gmra.mrb[0].mxu0 %v2189
      %v2501 = vpop.f32.mrb[0].mxu0
      %v2502 = vadd.f32 0.0, %v2501
      %v2503 = vpop.f32.mrb[0].mxu0
      %2504 = vmatprep.mubr.f32.mxu0 0.0
      %2505 = vmatmul.mubr.f32.gmra.mrb[0].mxu0 %v2192
      %v2506 = vpop.f32.mrb[0].mxu0
      %v2507 = vadd.f32 0.0, %v2506
      %v2508 = vpop.f32.mrb[0].mxu0
      %2509 = vmatprep.mubr.f32.mxu0 0.0
      %2510 = vmatmul.mubr.f32.gmra.mrb[0].mxu0 %v2195
      %v2511 = vpop.f32.mrb[0].mxu0
      %v2512 = vadd.f32 0.0, %v2511
      %v2513 = vpop.f32.mrb[0].mxu0
      %2514 = vmatprep.mubr.f32.mxu0 0.0
      %2515 = vmatmul.mubr.f32.gmra.mrb[0].mxu0 %v2198
      %v2516 = vpop.f32.mrb[0].mxu0
      %v2517 = vadd.f32 0.0, %v2516
      %v2518 = vpop.f32.mrb[0].mxu0
      %2519 = vmatprep.mubr.f32.mxu0 0.0
      %2520 = vmatmul.mubr.f32.gmra.mrb[0].mxu0 %v2201
      %v2521 = vpop.f32.mrb[0].mxu0
      %v2522 = vadd.f32 0.0, %v2521
      %v2523 = vpop.f32.mrb[0].mxu0
      %2524 = vmatprep.mubr.f32.mxu0 0.0
      %2525 = vmatmul.mubr.f32.gmra.mrb[0].mxu0 %v2204
      %v2526 = vpop.f32.mrb[0].mxu0
      %v2527 = vadd.f32 0.0, %v2526
      %v2528 = vpop.f32.mrb[0].mxu0
      %2529 = vmatprep.mubr.f32.mxu0 0.0
      %2530 = vmatmul.mubr.f32.gmra.mrb[0].mxu0 %v2207
      %v2531 = vpop.f32.mrb[0].mxu0
      %v2532 = vadd.f32 0.0, %v2531
      %v2533 = vpop.f32.mrb[0].mxu0
      %2534 = vmatprep.mubr.f32.mxu0 0.0
      %2535 = vmatmul.mubr.f32.gmra.mrb[0].mxu0 %v2210
      %v2536 = vpop.f32.mrb[0].mxu0
      %v2537 = vadd.f32 0.0, %v2536
      %v2538 = vpop.f32.mrb[0].mxu0
      %2539 = vmatprep.mubr.f32.mxu0 0.0
      %2540 = vmatmul.mubr.f32.gmra.mrb[0].mxu0 %v2213
      %v2541 = vpop.f32.mrb[0].mxu0
      %v2542 = vadd.f32 0.0, %v2541
      %v2543 = vpop.f32.mrb[0].mxu0
      %2544 = vmatprep.mubr.f32.mxu0 0.0
      %2545 = vmatmul.mubr.f32.gmra.mrb[0].mxu0 %v2216
      %v2546 = vpop.f32.mrb[0].mxu0
      %v2547 = vadd.f32 0.0, %v2546
      %v2548 = vpop.f32.mrb[0].mxu0
      %2549 = vmatprep.mubr.f32.mxu0 0.0
      %2550 = vmatmul.mubr.f32.gmra.mrb[0].mxu0 %v2219
      %v2551 = vpop.f32.mrb[0].mxu0
      %v2552 = vadd.f32 0.0, %v2551
      %v2553 = vpop.f32.mrb[0].mxu0
      %2554 = vmatprep.mubr.f32.mxu0 0.0
      %2555 = vmatmul.mubr.f32.gmra.mrb[0].mxu0 %v2222
      %v2556 = vpop.f32.mrb[0].mxu0
      %v2557 = vadd.f32 0.0, %v2556
      %v2558 = vpop.f32.mrb[0].mxu0
      %2559 = vmatprep.mubr.f32.mxu0 0.0
      %2560 = vmatmul.mubr.f32.gmra.mrb[0].mxu0 %v2225
      %v2561 = vpop.f32.mrb[0].mxu0
      %v2562 = vadd.f32 0.0, %v2561
      %v2563 = vpop.f32.mrb[0].mxu0
      %2564 = vmatprep.mubr.f32.mxu0 0.0
      %2565 = vmatmul.mubr.f32.gmra.mrb[0].mxu0 %v2228
      %v2566 = vpop.f32.mrb[0].mxu0
      %v2567 = vadd.f32 0.0, %v2566
      %v2568 = vpop.f32.mrb[0].mxu0
      %2569 = vmatprep.mubr.f32.mxu0 0.0
      %2570 = vmatmul.mubr.f32.gmra.mrb[0].mxu0 %v2231
      %v2571 = vpop.f32.mrb[0].mxu0
      %v2572 = vadd.f32 0.0, %v2571
      %v2573 = vpop.f32.mrb[0].mxu0
      %2574 = vmatprep.mubr.f32.mxu0 0.0
      %2575 = vmatmul.mubr.f32.gmra.mrb[0].mxu0 %v2234
      %v2576 = vpop.f32.mrb[0].mxu0
      %v2577 = vadd.f32 0.0, %v2576
      %v2578 = vpop.f32.mrb[0].mxu0
      %2579 = vmatprep.mubr.f32.mxu0 0.0
      %2580 = vmatmul.mubr.f32.gmra.mrb[0].mxu0 %v2237
      %v2581 = vpop.f32.mrb[0].mxu0
      %v2582 = vadd.f32 0.0, %v2581
      %v2583 = vpop.f32.mrb[0].mxu0
      %2584 = vmatprep.mubr.f32.mxu0 0.0
      %2585 = vmatmul.mubr.f32.gmra.mrb[0].mxu0 %v2240
      %v2586 = vpop.f32.mrb[0].mxu0
      %v2587 = vadd.f32 0.0, %v2586
      %v2588 = vpop.f32.mrb[0].mxu0
      %2589 = vmatprep.mubr.f32.mxu0 0.0
      %2590 = vmatmul.mubr.f32.gmra.mrb[0].mxu0 %v2243
      %v2591 = vpop.f32.mrb[0].mxu0
      %v2592 = vadd.f32 0.0, %v2591
      %v2593 = vpop.f32.mrb[0].mxu0
      %2594 = vmatprep.mubr.f32.mxu0 0.0
      %2595 = vmatmul.mubr.f32.gmra.mrb[0].mxu0 %v2246
      %v2596 = vpop.f32.mrb[0].mxu0
      %v2597 = vadd.f32 0.0, %v2596
      %v2598 = vpop.f32.mrb[0].mxu0
      %2599 = vmatprep.mubr.f32.mxu0 0.0
      %2600 = vmatmul.mubr.f32.gmra.mrb[0].mxu0 %v2249
      %v2601 = vpop.f32.mrb[0].mxu0
      %v2602 = vadd.f32 0.0, %v2601
      %v2603 = vpop.f32.mrb[0].mxu0
      %2604 = vmatprep.mubr.f32.mxu0 0.0
      %2605 = vmatmul.mubr.f32.gmra.mrb[0].mxu0 %v2252
      %v2606 = vpop.f32.mrb[0].mxu0
      %v2607 = vadd.f32 0.0, %v2606
      %v2608 = vpop.f32.mrb[0].mxu0
      %2609 = vmatprep.mubr.f32.mxu0 0.0
      %2610 = vmatmul.mubr.f32.gmra.mrb[0].mxu0 %v2255
      %v2611 = vpop.f32.mrb[0].mxu0
      %v2612 = vadd.f32 0.0, %v2611
      %v2613 = vpop.f32.mrb[0].mxu0
      %2614 = vmatprep.mubr.f32.mxu0 0.0
      %2615 = vmatmul.mubr.f32.gmra.mrb[0].mxu0 %v2258
      %v2616 = vpop.f32.mrb[0].mxu0
      %v2617 = vadd.f32 0.0, %v2616
      %v2618 = vpop.f32.mrb[0].mxu0
      %2619 = vmatprep.mubr.f32.mxu0 0.0
      %2620 = vmatmul.mubr.f32.gmra.mrb[0].mxu0 %v2261
      %v2621 = vpop.f32.mrb[0].mxu0
      %v2622 = vadd.f32 0.0, %v2621
      %v2623 = vpop.f32.mrb[0].mxu0
      %2624 = vmatprep.mubr.f32.mxu0 0.0
      %2625 = vmatmul.mubr.f32.gmra.mrb[0].mxu0 %v2264
      %v2626 = vpop.f32.mrb[0].mxu0
      %v2627 = vadd.f32 0.0, %v2626
      %v2628 = vpop.f32.mrb[0].mxu0
      %2629 = vmatprep.mubr.f32.mxu0 0.0
      %2630 = vmatmul.mubr.f32.gmra.mrb[0].mxu0 %v2267
      %v2631 = vpop.f32.mrb[0].mxu0
      %v2632 = vadd.f32 0.0, %v2631
      %v2633 = vpop.f32.mrb[0].mxu0
      %2634 = vmatprep.mubr.f32.mxu0 0.0
      %2635 = vmatmul.mubr.f32.gmra.mrb[0].mxu0 %v2270
      %v2636 = vpop.f32.mrb[0].mxu0
      %v2637 = vadd.f32 0.0, %v2636
      %v2638 = vpop.f32.mrb[0].mxu0
      %2639 = vmatprep.mubr.f32.mxu0 0.0
      %2640 = vmatmul.mubr.f32.gmra.mrb[0].mxu0 %v2273
      %v2641 = vpop.f32.mrb[0].mxu0
      %v2642 = vadd.f32 0.0, %v2641
      %v2643 = vpop.f32.mrb[0].mxu0
      %2644 = vmatprep.mubr.f32.mxu0 0.0
      %2645 = vmatmul.mubr.f32.gmra.mrb[0].mxu0 %v2276
      %v2646 = vpop.f32.mrb[0].mxu0
      %v2647 = vadd.f32 0.0, %v2646
      %v2648 = vpop.f32.mrb[0].mxu0
      %2649 = vmatprep.mubr.f32.mxu0 0.0
      %2650 = vmatmul.mubr.f32.gmra.mrb[0].mxu0 %v2279
      %v2651 = vpop.f32.mrb[0].mxu0
      %v2652 = vadd.f32 0.0, %v2651
      %v2653 = vpop.f32.mrb[0].mxu0
      %2654 = vmatprep.mubr.f32.mxu0 0.0
      %2655 = vmatmul.mubr.f32.gmra.mrb[0].mxu0 %v2282
      %v2656 = vpop.f32.mrb[0].mxu0
      %v2657 = vadd.f32 0.0, %v2656
      %v2658 = vpop.f32.mrb[0].mxu0
      %2659 = vmatprep.mubr.f32.mxu0 0.0
      %2660 = vmatmul.mubr.f32.gmra.mrb[0].mxu0 %v2285
      %v2661 = vpop.f32.mrb[0].mxu0
      %v2662 = vadd.f32 0.0, %v2661
      %v2663 = vpop.f32.mrb[0].mxu0
      %2664 = vmatprep.mubr.f32.mxu0 0.0
      %2665 = vmatmul.mubr.f32.gmra.mrb[0].mxu0 %v2288
      %v2666 = vpop.f32.mrb[0].mxu0
      %v2667 = vadd.f32 0.0, %v2666
      %v2668 = vpop.f32.mrb[0].mxu0
      %2669 = vmatprep.mubr.f32.mxu0 0.0
      %2670 = vmatmul.mubr.f32.gmra.mrb[0].mxu0 %v2291
      %v2671 = vpop.f32.mrb[0].mxu0
      %v2672 = vadd.f32 0.0, %v2671
      %v2673 = vpop.f32.mrb[0].mxu0
      %2674 = vmatprep.mubr.f32.mxu0 0.0
      %2675 = vmatmul.mubr.f32.gmra.mrb[0].mxu0 %v2294
      %v2676 = vpop.f32.mrb[0].mxu0
      %v2677 = vadd.f32 0.0, %v2676
      %v2678 = vpop.f32.mrb[0].mxu0
      %2679 = vmatprep.mubr.f32.mxu0 0.0
      %2680 = vmatmul.mubr.f32.gmra.mrb[0].mxu0 %v2297
      %v2681 = vpop.f32.mrb[0].mxu0
      %v2682 = vadd.f32 0.0, %v2681
      %v2683 = vpop.f32.mrb[0].mxu0
      %2684 = vmatprep.mubr.f32.mxu0 0.0
      %2685 = vmatmul.mubr.f32.gmra.mrb[0].mxu0 %v2300
      %v2686 = vpop.f32.mrb[0].mxu0
      %v2687 = vadd.f32 0.0, %v2686
      %v2688 = vpop.f32.mrb[0].mxu0
      %2689 = vdwg.mxu0
      %v2690 = vadd.f32 %v1980, %v2372
      %v2691 = vadd.f32 %v1981, %v2377
      %v2692 = vadd.f32 %v1982, %v2382
      %v2693 = vadd.f32 %v1983, %v2387
      %v2694 = vadd.f32 %v1984, %v2392
      %v2695 = vadd.f32 %v1985, %v2397
      %v2696 = vadd.f32 %v1986, %v2402
      %v2697 = vadd.f32 %v1987, %v2407
      %v2698 = vadd.f32 %v1988, %v2412
      %v2699 = vadd.f32 %v1989, %v2417
      %v2700 = vadd.f32 %v1990, %v2422
      %v2701 = vadd.f32 %v1991, %v2427
      %v2702 = vadd.f32 %v1992, %v2432
      %v2703 = vadd.f32 %v1993, %v2437
      %v2704 = vadd.f32 %v1994, %v2442
      %v2705 = vadd.f32 %v1995, %v2447
      %v2706 = vadd.f32 %v1996, %v2452
      %v2707 = vadd.f32 %v1997, %v2457
      %v2708 = vadd.f32 %v1998, %v2462
      %v2709 = vadd.f32 %v1999, %v2467
      %v2710 = vadd.f32 %v2000, %v2472
      %v2711 = vadd.f32 %v2001, %v2477
      %v2712 = vadd.f32 %v2002, %v2482
      %v2713 = vadd.f32 %v2003, %v2487
      %v2714 = vadd.f32 %v2004, %v2492
      %v2715 = vadd.f32 %v2005, %v2497
      %v2716 = vadd.f32 %v2006, %v2502
      %v2717 = vadd.f32 %v2007, %v2507
      %v2718 = vadd.f32 %v2008, %v2512
      %v2719 = vadd.f32 %v2009, %v2517
      %v2720 = vadd.f32 %v2010, %v2522
      %v2721 = vadd.f32 %v2011, %v2527
      %v2722 = vadd.f32 %v2012, %v2532
      %v2723 = vadd.f32 %v2013, %v2537
      %v2724 = vadd.f32 %v2014, %v2542
      %v2725 = vadd.f32 %v2015, %v2547
      %v2726 = vadd.f32 %v2016, %v2552
      %v2727 = vadd.f32 %v2017, %v2557
      %v2728 = vadd.f32 %v2018, %v2562
      %v2729 = vadd.f32 %v2019, %v2567
      %v2730 = vadd.f32 %v2020, %v2572
      %v2731 = vadd.f32 %v2021, %v2577
      %v2732 = vadd.f32 %v2022, %v2582
      %v2733 = vadd.f32 %v2023, %v2587
      %v2734 = vadd.f32 %v2024, %v2592
      %v2735 = vadd.f32 %v2025, %v2597
      %v2736 = vadd.f32 %v2026, %v2602
      %v2737 = vadd.f32 %v2027, %v2607
      %v2738 = vadd.f32 %v2028, %v2612
      %v2739 = vadd.f32 %v2029, %v2617
      %v2740 = vadd.f32 %v2030, %v2622
      %v2741 = vadd.f32 %v2031, %v2627
      %v2742 = vadd.f32 %v2032, %v2632
      %v2743 = vadd.f32 %v2033, %v2637
      %v2744 = vadd.f32 %v2034, %v2642
      %v2745 = vadd.f32 %v2035, %v2647
      %v2746 = vadd.f32 %v2036, %v2652
      %v2747 = vadd.f32 %v2037, %v2657
      %v2748 = vadd.f32 %v2038, %v2662
      %v2749 = vadd.f32 %v2039, %v2667
      %v2750 = vadd.f32 %v2040, %v2672
      %v2751 = vadd.f32 %v2041, %v2677
      %v2752 = vadd.f32 %v2042, %v2682
      %v2753 = vadd.f32 %v2043, %v2687
      %2754 = vst [vmem:[%s230] sm:$0xff] %v2690
      %2755 = vst [vmem:[%s230 + $0x8] sm:$0xff] %v2691
      %2756 = vst [vmem:[%s230 + $0x10] sm:$0xff] %v2692
      %2757 = vst [vmem:[%s230 + $0x18] sm:$0xff] %v2693
      %2758 = vst [vmem:[%s230 + $0x20] sm:$0xff] %v2694
      %2759 = vst [vmem:[%s230 + $0x28] sm:$0xff] %v2695
      %2760 = vst [vmem:[%s230 + $0x30] sm:$0xff] %v2696
      %2761 = vst [vmem:[%s230 + $0x38] sm:$0xff] %v2697
      %2762 = vst [vmem:[%s230 + $0x40] sm:$0xff] %v2698
      %2763 = vst [vmem:[%s230 + $0x48] sm:$0xff] %v2699
      %2764 = vst [vmem:[%s230 + $0x50] sm:$0xff] %v2700
      %2765 = vst [vmem:[%s230 + $0x58] sm:$0xff] %v2701
      %2766 = vst [vmem:[%s230 + $0x60] sm:$0xff] %v2702
      %2767 = vst [vmem:[%s230 + $0x68] sm:$0xff] %v2703
      %2768 = vst [vmem:[%s230 + $0x70] sm:$0xff] %v2704
      %2769 = vst [vmem:[%s230 + $0x78] sm:$0xff] %v2705
      %2770 = vst [vmem:[%s230 + $0x80] sm:$0xff] %v2706
      %2771 = vst [vmem:[%s230 + $0x88] sm:$0xff] %v2707
      %2772 = vst [vmem:[%s230 + $0x90] sm:$0xff] %v2708
      %2773 = vst [vmem:[%s230 + $0x98] sm:$0xff] %v2709
      %2774 = vst [vmem:[%s230 + $0xa0] sm:$0xff] %v2710
      %2775 = vst [vmem:[%s230 + $0xa8] sm:$0xff] %v2711
      %2776 = vst [vmem:[%s230 + $0xb0] sm:$0xff] %v2712
      %2777 = vst [vmem:[%s230 + $0xb8] sm:$0xff] %v2713
      %2778 = vst [vmem:[%s230 + $0xc0] sm:$0xff] %v2714
      %2779 = vst [vmem:[%s230 + $0xc8] sm:$0xff] %v2715
      %2780 = vst [vmem:[%s230 + $0xd0] sm:$0xff] %v2716
      %2781 = vst [vmem:[%s230 + $0xd8] sm:$0xff] %v2717
      %2782 = vst [vmem:[%s230 + $0xe0] sm:$0xff] %v2718
      %2783 = vst [vmem:[%s230 + $0xe8] sm:$0xff] %v2719
      %2784 = vst [vmem:[%s230 + $0xf0] sm:$0xff] %v2720
      %2785 = vst [vmem:[%s230 + $0xf8] sm:$0xff] %v2721
      %2786 = vst [vmem:[%s230 + $0x100] sm:$0xff] %v2722
      %2787 = vst [vmem:[%s230 + $0x108] sm:$0xff] %v2723
      %2788 = vst [vmem:[%s230 + $0x110] sm:$0xff] %v2724
      %2789 = vst [vmem:[%s230 + $0x118] sm:$0xff] %v2725
      %2790 = vst [vmem:[%s230 + $0x120] sm:$0xff] %v2726
      %2791 = vst [vmem:[%s230 + $0x128] sm:$0xff] %v2727
      %2792 = vst [vmem:[%s230 + $0x130] sm:$0xff] %v2728
      %2793 = vst [vmem:[%s230 + $0x138] sm:$0xff] %v2729
      %2794 = vst [vmem:[%s230 + $0x140] sm:$0xff] %v2730
      %2795 = vst [vmem:[%s230 + $0x148] sm:$0xff] %v2731
      %2796 = vst [vmem:[%s230 + $0x150] sm:$0xff] %v2732
      %2797 = vst [vmem:[%s230 + $0x158] sm:$0xff] %v2733
      %2798 = vst [vmem:[%s230 + $0x160] sm:$0xff] %v2734
      %2799 = vst [vmem:[%s230 + $0x168] sm:$0xff] %v2735
      %2800 = vst [vmem:[%s230 + $0x170] sm:$0xff] %v2736
      %2801 = vst [vmem:[%s230 + $0x178] sm:$0xff] %v2737
      %2802 = vst [vmem:[%s230 + $0x180] sm:$0xff] %v2738
      %2803 = vst [vmem:[%s230 + $0x188] sm:$0xff] %v2739
      %2804 = vst [vmem:[%s230 + $0x190] sm:$0xff] %v2740
      %2805 = vst [vmem:[%s230 + $0x198] sm:$0xff] %v2741
      %2806 = vst [vmem:[%s230 + $0x1a0] sm:$0xff] %v2742
      %2807 = vst [vmem:[%s230 + $0x1a8] sm:$0xff] %v2743
      %2808 = vst [vmem:[%s230 + $0x1b0] sm:$0xff] %v2744
      %2809 = vst [vmem:[%s230 + $0x1b8] sm:$0xff] %v2745
      %2810 = vst [vmem:[%s230 + $0x1c0] sm:$0xff] %v2746
      %2811 = vst [vmem:[%s230 + $0x1c8] sm:$0xff] %v2747
      %2812 = vst [vmem:[%s230 + $0x1d0] sm:$0xff] %v2748
      %2813 = vst [vmem:[%s230 + $0x1d8] sm:$0xff] %v2749
      %2814 = vst [vmem:[%s230 + $0x1e0] sm:$0xff] %v2750
      %2815 = vst [vmem:[%s230 + $0x1e8] sm:$0xff] %v2751
      %2816 = vst [vmem:[%s230 + $0x1f0] sm:$0xff] %v2752
      %2817 = vst [vmem:[%s230 + $0x1f8] sm:$0xff] %v2753
      %v2818 = vld [vmem:[%s230] sm:$0xff]
      %v2819 = vld [vmem:[%s230 + $0x8] sm:$0xff]
      %v2820 = vld [vmem:[%s230 + $0x10] sm:$0xff]
      %v2821 = vld [vmem:[%s230 + $0x18] sm:$0xff]
      %v2822 = vld [vmem:[%s230 + $0x20] sm:$0xff]
      %v2823 = vld [vmem:[%s230 + $0x28] sm:$0xff]
      %v2824 = vld [vmem:[%s230 + $0x30] sm:$0xff]
      %v2825 = vld [vmem:[%s230 + $0x38] sm:$0xff]
      %v2826 = vld [vmem:[%s230 + $0x40] sm:$0xff]
      %v2827 = vld [vmem:[%s230 + $0x48] sm:$0xff]
      %v2828 = vld [vmem:[%s230 + $0x50] sm:$0xff]
      %v2829 = vld [vmem:[%s230 + $0x58] sm:$0xff]
      %v2830 = vld [vmem:[%s230 + $0x60] sm:$0xff]
      %v2831 = vld [vmem:[%s230 + $0x68] sm:$0xff]
      %v2832 = vld [vmem:[%s230 + $0x70] sm:$0xff]
      %v2833 = vld [vmem:[%s230 + $0x78] sm:$0xff]
      %v2834 = vld [vmem:[%s230 + $0x80] sm:$0xff]
      %v2835 = vld [vmem:[%s230 + $0x88] sm:$0xff]
      %v2836 = vld [vmem:[%s230 + $0x90] sm:$0xff]
      %v2837 = vld [vmem:[%s230 + $0x98] sm:$0xff]
      %v2838 = vld [vmem:[%s230 + $0xa0] sm:$0xff]
      %v2839 = vld [vmem:[%s230 + $0xa8] sm:$0xff]
      %v2840 = vld [vmem:[%s230 + $0xb0] sm:$0xff]
      %v2841 = vld [vmem:[%s230 + $0xb8] sm:$0xff]
      %v2842 = vld [vmem:[%s230 + $0xc0] sm:$0xff]
      %v2843 = vld [vmem:[%s230 + $0xc8] sm:$0xff]
      %v2844 = vld [vmem:[%s230 + $0xd0] sm:$0xff]
      %v2845 = vld [vmem:[%s230 + $0xd8] sm:$0xff]
      %v2846 = vld [vmem:[%s230 + $0xe0] sm:$0xff]
      %v2847 = vld [vmem:[%s230 + $0xe8] sm:$0xff]
      %v2848 = vld [vmem:[%s230 + $0xf0] sm:$0xff]
      %v2849 = vld [vmem:[%s230 + $0xf8] sm:$0xff]
      %v2850 = vld [vmem:[%s230 + $0x100] sm:$0xff]
      %v2851 = vld [vmem:[%s230 + $0x108] sm:$0xff]
      %v2852 = vld [vmem:[%s230 + $0x110] sm:$0xff]
      %v2853 = vld [vmem:[%s230 + $0x118] sm:$0xff]
      %v2854 = vld [vmem:[%s230 + $0x120] sm:$0xff]
      %v2855 = vld [vmem:[%s230 + $0x128] sm:$0xff]
      %v2856 = vld [vmem:[%s230 + $0x130] sm:$0xff]
      %v2857 = vld [vmem:[%s230 + $0x138] sm:$0xff]
      %v2858 = vld [vmem:[%s230 + $0x140] sm:$0xff]
      %v2859 = vld [vmem:[%s230 + $0x148] sm:$0xff]
      %v2860 = vld [vmem:[%s230 + $0x150] sm:$0xff]
      %v2861 = vld [vmem:[%s230 + $0x158] sm:$0xff]
      %v2862 = vld [vmem:[%s230 + $0x160] sm:$0xff]
      %v2863 = vld [vmem:[%s230 + $0x168] sm:$0xff]
      %v2864 = vld [vmem:[%s230 + $0x170] sm:$0xff]
      %v2865 = vld [vmem:[%s230 + $0x178] sm:$0xff]
      %v2866 = vld [vmem:[%s230 + $0x180] sm:$0xff]
      %v2867 = vld [vmem:[%s230 + $0x188] sm:$0xff]
      %v2868 = vld [vmem:[%s230 + $0x190] sm:$0xff]
      %v2869 = vld [vmem:[%s230 + $0x198] sm:$0xff]
      %v2870 = vld [vmem:[%s230 + $0x1a0] sm:$0xff]
      %v2871 = vld [vmem:[%s230 + $0x1a8] sm:$0xff]
      %v2872 = vld [vmem:[%s230 + $0x1b0] sm:$0xff]
      %v2873 = vld [vmem:[%s230 + $0x1b8] sm:$0xff]
      %v2874 = vld [vmem:[%s230 + $0x1c0] sm:$0xff]
      %v2875 = vld [vmem:[%s230 + $0x1c8] sm:$0xff]
      %v2876 = vld [vmem:[%s230 + $0x1d0] sm:$0xff]
      %v2877 = vld [vmem:[%s230 + $0x1d8] sm:$0xff]
      %v2878 = vld [vmem:[%s230 + $0x1e0] sm:$0xff]
      %v2879 = vld [vmem:[%s230 + $0x1e8] sm:$0xff]
      %v2880 = vld [vmem:[%s230 + $0x1f0] sm:$0xff]
      %v2881 = vld [vmem:[%s230 + $0x1f8] sm:$0xff]
      %v2882 = vld [vmem:[%s216 + $0x12] sm:$0xff]
      %v2883 = vld [vmem:[%s216 + $0x1a] sm:$0xff]
      %v2884 = vld [vmem:[%s216 + $0x22] sm:$0xff]
      %v2885 = vld [vmem:[%s216 + $0x2a] sm:$0xff]
      %v2886 = vld [vmem:[%s216 + $0x32] sm:$0xff]
      %v2887 = vld [vmem:[%s216 + $0x3a] sm:$0xff]
      %v2888 = vld [vmem:[%s216 + $0x42] sm:$0xff]
      %v2889 = vld [vmem:[%s216 + $0x4a] sm:$0xff]
      %v2890 = vld [vmem:[%s216 + $0x52] sm:$0xff]
      %v2891 = vld [vmem:[%s216 + $0x5a] sm:$0xff]
      %v2892 = vld [vmem:[%s216 + $0x62] sm:$0xff]
      %v2893 = vld [vmem:[%s216 + $0x6a] sm:$0xff]
      %v2894 = vld [vmem:[%s216 + $0x72] sm:$0xff]
      %v2895 = vld [vmem:[%s216 + $0x7a] sm:$0xff]
      %v2896 = vld [vmem:[%s216 + $0x82] sm:$0xff]
      %v2897 = vld [vmem:[%s216 + $0x8a] sm:$0xff]
      %v2898 = vld [vmem:[%s216 + $0x92] sm:$0xff]
      %v2899 = vld [vmem:[%s216 + $0x9a] sm:$0xff]
      %v2900 = vld [vmem:[%s216 + $0xa2] sm:$0xff]
      %v2901 = vld [vmem:[%s216 + $0xaa] sm:$0xff]
      %v2902 = vld [vmem:[%s216 + $0xb2] sm:$0xff]
      %v2903 = vld [vmem:[%s216 + $0xba] sm:$0xff]
      %v2904 = vld [vmem:[%s216 + $0xc2] sm:$0xff]
      %v2905 = vld [vmem:[%s216 + $0xca] sm:$0xff]
      %v2906 = vld [vmem:[%s216 + $0xd2] sm:$0xff]
      %v2907 = vld [vmem:[%s216 + $0xda] sm:$0xff]
      %v2908 = vld [vmem:[%s216 + $0xe2] sm:$0xff]
      %v2909 = vld [vmem:[%s216 + $0xea] sm:$0xff]
      %v2910 = vld [vmem:[%s216 + $0xf2] sm:$0xff]
      %v2911 = vld [vmem:[%s216 + $0xfa] sm:$0xff]
      %v2912 = vld [vmem:[%s216 + $0x102] sm:$0xff]
      %v2913 = vld [vmem:[%s216 + $0x10a] sm:$0xff]
      %v2914 = vld [vmem:[%s216 + $0x112] sm:$0xff]
      %v2915 = vld [vmem:[%s216 + $0x11a] sm:$0xff]
      %v2916 = vld [vmem:[%s216 + $0x122] sm:$0xff]
      %v2917 = vld [vmem:[%s216 + $0x12a] sm:$0xff]
      %v2918 = vld [vmem:[%s216 + $0x132] sm:$0xff]
      %v2919 = vld [vmem:[%s216 + $0x13a] sm:$0xff]
      %v2920 = vld [vmem:[%s216 + $0x142] sm:$0xff]
      %v2921 = vld [vmem:[%s216 + $0x14a] sm:$0xff]
      %v2922 = vld [vmem:[%s216 + $0x152] sm:$0xff]
      %v2923 = vld [vmem:[%s216 + $0x15a] sm:$0xff]
      %v2924 = vld [vmem:[%s216 + $0x162] sm:$0xff]
      %v2925 = vld [vmem:[%s216 + $0x16a] sm:$0xff]
      %v2926 = vld [vmem:[%s216 + $0x172] sm:$0xff]
      %v2927 = vld [vmem:[%s216 + $0x17a] sm:$0xff]
      %v2928 = vld [vmem:[%s216 + $0x182] sm:$0xff]
      %v2929 = vld [vmem:[%s216 + $0x18a] sm:$0xff]
      %v2930 = vld [vmem:[%s216 + $0x192] sm:$0xff]
      %v2931 = vld [vmem:[%s216 + $0x19a] sm:$0xff]
      %v2932 = vld [vmem:[%s216 + $0x1a2] sm:$0xff]
      %v2933 = vld [vmem:[%s216 + $0x1aa] sm:$0xff]
      %v2934 = vld [vmem:[%s216 + $0x1b2] sm:$0xff]
      %v2935 = vld [vmem:[%s216 + $0x1ba] sm:$0xff]
      %v2936 = vld [vmem:[%s216 + $0x1c2] sm:$0xff]
      %v2937 = vld [vmem:[%s216 + $0x1ca] sm:$0xff]
      %v2938 = vld [vmem:[%s216 + $0x1d2] sm:$0xff]
      %v2939 = vld [vmem:[%s216 + $0x1da] sm:$0xff]
      %v2940 = vld [vmem:[%s216 + $0x1e2] sm:$0xff]
      %v2941 = vld [vmem:[%s216 + $0x1ea] sm:$0xff]
      %v2942 = vld [vmem:[%s216 + $0x1f2] sm:$0xff]
      %v2943 = vld [vmem:[%s216 + $0x1fa] sm:$0xff]
      %v2944 = vld [vmem:[%s216 + $0x202] sm:$0xff]
      %v2945 = vld [vmem:[%s216 + $0x20a] sm:$0xff]
      %s2946 = scalar_lea.vmem %s1, 12
      %v2947 = vld [vmem:[%s2946] sm:$0xf]
      %v2949 = vsel %vm432, %v2882, 0
      %v2952 = vsel %vm432, %v2883, 0
      %v2955 = vsel %vm432, %v2884, 0
      %v2958 = vsel %vm432, %v2885, 0
      %v2961 = vsel %vm432, %v2886, 0
      %v2964 = vsel %vm432, %v2887, 0
      %v2967 = vsel %vm432, %v2888, 0
      %v2970 = vsel %vm432, %v2889, 0
      %v2973 = vsel %vm432, %v2890, 0
      %v2976 = vsel %vm432, %v2891, 0
      %v2979 = vsel %vm432, %v2892, 0
      %v2982 = vsel %vm432, %v2893, 0
      %v2985 = vsel %vm432, %v2894, 0
      %v2988 = vsel %vm432, %v2895, 0
      %v2991 = vsel %vm432, %v2896, 0
      %v2994 = vsel %vm432, %v2897, 0
      %v2997 = vsel %vm432, %v2898, 0
      %v3000 = vsel %vm432, %v2899, 0
      %v3003 = vsel %vm432, %v2900, 0
      %v3006 = vsel %vm432, %v2901, 0
      %v3009 = vsel %vm432, %v2902, 0
      %v3012 = vsel %vm432, %v2903, 0
      %v3015 = vsel %vm432, %v2904, 0
      %v3018 = vsel %vm432, %v2905, 0
      %v3021 = vsel %vm432, %v2906, 0
      %v3024 = vsel %vm432, %v2907, 0
      %v3027 = vsel %vm432, %v2908, 0
      %v3030 = vsel %vm432, %v2909, 0
      %v3033 = vsel %vm432, %v2910, 0
      %v3036 = vsel %vm432, %v2911, 0
      %v3039 = vsel %vm432, %v2912, 0
      %v3042 = vsel %vm432, %v2913, 0
      %v3045 = vsel %vm432, %v2914, 0
      %v3048 = vsel %vm432, %v2915, 0
      %v3051 = vsel %vm432, %v2916, 0
      %v3054 = vsel %vm432, %v2917, 0
      %v3057 = vsel %vm432, %v2918, 0
      %v3060 = vsel %vm432, %v2919, 0
      %v3063 = vsel %vm432, %v2920, 0
      %v3066 = vsel %vm432, %v2921, 0
      %v3069 = vsel %vm432, %v2922, 0
      %v3072 = vsel %vm432, %v2923, 0
      %v3075 = vsel %vm432, %v2924, 0
      %v3078 = vsel %vm432, %v2925, 0
      %v3081 = vsel %vm432, %v2926, 0
      %v3084 = vsel %vm432, %v2927, 0
      %v3087 = vsel %vm432, %v2928, 0
      %v3090 = vsel %vm432, %v2929, 0
      %v3093 = vsel %vm432, %v2930, 0
      %v3096 = vsel %vm432, %v2931, 0
      %v3099 = vsel %vm432, %v2932, 0
      %v3102 = vsel %vm432, %v2933, 0
      %v3105 = vsel %vm432, %v2934, 0
      %v3108 = vsel %vm432, %v2935, 0
      %v3111 = vsel %vm432, %v2936, 0
      %v3114 = vsel %vm432, %v2937, 0
      %v3117 = vsel %vm432, %v2938, 0
      %v3120 = vsel %vm432, %v2939, 0
      %v3123 = vsel %vm432, %v2940, 0
      %v3126 = vsel %vm432, %v2941, 0
      %v3129 = vsel %vm432, %v2942, 0
      %v3132 = vsel %vm432, %v2943, 0
      %v3135 = vsel %vm432, %v2944, 0
      %v3138 = vsel %vm432, %v2945, 0
      %v3141 = vsel %vm625, %v2947, 0
      %3143 = vmatprep.subr.mxu0 0.0
      %3144 = vmatpush1.msra.mxu0 %v3141
      %3145 = vmatprep.subr.mxu0 0.0
      %3146 = vmatpush1.msra.mxu0 0.0
      %3147 = vmatprep.subr.mxu0 0.0
      %3148 = vmatpush1.msra.mxu0 0.0
      %3149 = vmatprep.subr.mxu0 0.0
      %3150 = vmatpush1.msra.mxu0 0.0
      %3151 = vmatprep.subr.mxu0 0.0
      %3152 = vmatpush1.msra.mxu0 0.0
      %3153 = vmatprep.subr.mxu0 0.0
      %3154 = vmatpush1.msra.mxu0 0.0
      %3155 = vmatprep.subr.mxu0 0.0
      %3156 = vmatpush1.msra.mxu0 0.0
      %3157 = vmatprep.subr.mxu0 0.0
      %3158 = vmatpush1.msra.mxu0 0.0
      %3159 = vmatprep.subr.mxu0 0.0
      %3160 = vmatpush1.msra.mxu0 0.0
      %3161 = vmatprep.subr.mxu0 0.0
      %3162 = vmatpush1.msra.mxu0 0.0
      %3163 = vmatprep.subr.mxu0 0.0
      %3164 = vmatpush1.msra.mxu0 0.0
      %3165 = vmatprep.subr.mxu0 0.0
      %3166 = vmatpush1.msra.mxu0 0.0
      %3167 = vmatprep.subr.mxu0 0.0
      %3168 = vmatpush1.msra.mxu0 0.0
      %3169 = vmatprep.subr.mxu0 0.0
      %3170 = vmatpush1.msra.mxu0 0.0
      %3171 = vmatprep.subr.mxu0 0.0
      %3172 = vmatpush1.msra.mxu0 0.0
      %3173 = vmatprep.subr.mxu0 0.0
      %3174 = vmatpush1.msra.mxu0 0.0
      %3175 = vmatprep.subr.mxu0 0.0
      %3176 = vmatpush1.msra.mxu0 0.0
      %3177 = vmatprep.subr.mxu0 0.0
      %3178 = vmatpush1.msra.mxu0 0.0
      %3179 = vmatprep.subr.mxu0 0.0
      %3180 = vmatpush1.msra.mxu0 0.0
      %3181 = vmatprep.subr.mxu0 0.0
      %3182 = vmatpush1.msra.mxu0 0.0
      %3183 = vmatprep.subr.mxu0 0.0
      %3184 = vmatpush1.msra.mxu0 0.0
      %3185 = vmatprep.subr.mxu0 0.0
      %3186 = vmatpush1.msra.mxu0 0.0
      %3187 = vmatprep.subr.mxu0 0.0
      %3188 = vmatpush1.msra.mxu0 0.0
      %3189 = vmatprep.subr.mxu0 0.0
      %3190 = vmatpush1.msra.mxu0 0.0
      %3191 = vmatprep.subr.mxu0 0.0
      %3192 = vmatpush1.msra.mxu0 0.0
      %3193 = vmatprep.subr.mxu0 0.0
      %3194 = vmatpush1.msra.mxu0 0.0
      %3195 = vmatprep.subr.mxu0 0.0
      %3196 = vmatpush1.msra.mxu0 0.0
      %3197 = vmatprep.subr.mxu0 0.0
      %3198 = vmatpush1.msra.mxu0 0.0
      %3199 = vmatprep.subr.mxu0 0.0
      %3200 = vmatpush1.msra.mxu0 0.0
      %3201 = vmatprep.subr.mxu0 0.0
      %3202 = vmatpush1.msra.mxu0 0.0
      %3203 = vmatprep.subr.mxu0 0.0
      %3204 = vmatpush1.msra.mxu0 0.0
      %3205 = vmatprep.subr.mxu0 0.0
      %3206 = vmatpush1.msra.mxu0 0.0
      %3207 = vmatprep.mubr.f32.mxu0 0.0
      %3208 = vmatmul.mubr.f32.gmra.mrb[0].mxu0 %v2949
      %v3209 = vpop.f32.mrb[0].mxu0
      %v3210 = vadd.f32 0.0, %v3209
      %v3211 = vpop.f32.mrb[0].mxu0
      %3212 = vmatprep.mubr.f32.mxu0 0.0
      %3213 = vmatmul.mubr.f32.gmra.mrb[0].mxu0 %v2952
      %v3214 = vpop.f32.mrb[0].mxu0
      %v3215 = vadd.f32 0.0, %v3214
      %v3216 = vpop.f32.mrb[0].mxu0
      %3217 = vmatprep.mubr.f32.mxu0 0.0
      %3218 = vmatmul.mubr.f32.gmra.mrb[0].mxu0 %v2955
      %v3219 = vpop.f32.mrb[0].mxu0
      %v3220 = vadd.f32 0.0, %v3219
      %v3221 = vpop.f32.mrb[0].mxu0
      %3222 = vmatprep.mubr.f32.mxu0 0.0
      %3223 = vmatmul.mubr.f32.gmra.mrb[0].mxu0 %v2958
      %v3224 = vpop.f32.mrb[0].mxu0
      %v3225 = vadd.f32 0.0, %v3224
      %v3226 = vpop.f32.mrb[0].mxu0
      %3227 = vmatprep.mubr.f32.mxu0 0.0
      %3228 = vmatmul.mubr.f32.gmra.mrb[0].mxu0 %v2961
      %v3229 = vpop.f32.mrb[0].mxu0
      %v3230 = vadd.f32 0.0, %v3229
      %v3231 = vpop.f32.mrb[0].mxu0
      %3232 = vmatprep.mubr.f32.mxu0 0.0
      %3233 = vmatmul.mubr.f32.gmra.mrb[0].mxu0 %v2964
      %v3234 = vpop.f32.mrb[0].mxu0
      %v3235 = vadd.f32 0.0, %v3234
      %v3236 = vpop.f32.mrb[0].mxu0
      %3237 = vmatprep.mubr.f32.mxu0 0.0
      %3238 = vmatmul.mubr.f32.gmra.mrb[0].mxu0 %v2967
      %v3239 = vpop.f32.mrb[0].mxu0
      %v3240 = vadd.f32 0.0, %v3239
      %v3241 = vpop.f32.mrb[0].mxu0
      %3242 = vmatprep.mubr.f32.mxu0 0.0
      %3243 = vmatmul.mubr.f32.gmra.mrb[0].mxu0 %v2970
      %v3244 = vpop.f32.mrb[0].mxu0
      %v3245 = vadd.f32 0.0, %v3244
      %v3246 = vpop.f32.mrb[0].mxu0
      %3247 = vmatprep.mubr.f32.mxu0 0.0
      %3248 = vmatmul.mubr.f32.gmra.mrb[0].mxu0 %v2973
      %v3249 = vpop.f32.mrb[0].mxu0
      %v3250 = vadd.f32 0.0, %v3249
      %v3251 = vpop.f32.mrb[0].mxu0
      %3252 = vmatprep.mubr.f32.mxu0 0.0
      %3253 = vmatmul.mubr.f32.gmra.mrb[0].mxu0 %v2976
      %v3254 = vpop.f32.mrb[0].mxu0
      %v3255 = vadd.f32 0.0, %v3254
      %v3256 = vpop.f32.mrb[0].mxu0
      %3257 = vmatprep.mubr.f32.mxu0 0.0
      %3258 = vmatmul.mubr.f32.gmra.mrb[0].mxu0 %v2979
      %v3259 = vpop.f32.mrb[0].mxu0
      %v3260 = vadd.f32 0.0, %v3259
      %v3261 = vpop.f32.mrb[0].mxu0
      %3262 = vmatprep.mubr.f32.mxu0 0.0
      %3263 = vmatmul.mubr.f32.gmra.mrb[0].mxu0 %v2982
      %v3264 = vpop.f32.mrb[0].mxu0
      %v3265 = vadd.f32 0.0, %v3264
      %v3266 = vpop.f32.mrb[0].mxu0
      %3267 = vmatprep.mubr.f32.mxu0 0.0
      %3268 = vmatmul.mubr.f32.gmra.mrb[0].mxu0 %v2985
      %v3269 = vpop.f32.mrb[0].mxu0
      %v3270 = vadd.f32 0.0, %v3269
      %v3271 = vpop.f32.mrb[0].mxu0
      %3272 = vmatprep.mubr.f32.mxu0 0.0
      %3273 = vmatmul.mubr.f32.gmra.mrb[0].mxu0 %v2988
      %v3274 = vpop.f32.mrb[0].mxu0
      %v3275 = vadd.f32 0.0, %v3274
      %v3276 = vpop.f32.mrb[0].mxu0
      %3277 = vmatprep.mubr.f32.mxu0 0.0
      %3278 = vmatmul.mubr.f32.gmra.mrb[0].mxu0 %v2991
      %v3279 = vpop.f32.mrb[0].mxu0
      %v3280 = vadd.f32 0.0, %v3279
      %v3281 = vpop.f32.mrb[0].mxu0
      %3282 = vmatprep.mubr.f32.mxu0 0.0
      %3283 = vmatmul.mubr.f32.gmra.mrb[0].mxu0 %v2994
      %v3284 = vpop.f32.mrb[0].mxu0
      %v3285 = vadd.f32 0.0, %v3284
      %v3286 = vpop.f32.mrb[0].mxu0
      %3287 = vmatprep.mubr.f32.mxu0 0.0
      %3288 = vmatmul.mubr.f32.gmra.mrb[0].mxu0 %v2997
      %v3289 = vpop.f32.mrb[0].mxu0
      %v3290 = vadd.f32 0.0, %v3289
      %v3291 = vpop.f32.mrb[0].mxu0
      %3292 = vmatprep.mubr.f32.mxu0 0.0
      %3293 = vmatmul.mubr.f32.gmra.mrb[0].mxu0 %v3000
      %v3294 = vpop.f32.mrb[0].mxu0
      %v3295 = vadd.f32 0.0, %v3294
      %v3296 = vpop.f32.mrb[0].mxu0
      %3297 = vmatprep.mubr.f32.mxu0 0.0
      %3298 = vmatmul.mubr.f32.gmra.mrb[0].mxu0 %v3003
      %v3299 = vpop.f32.mrb[0].mxu0
      %v3300 = vadd.f32 0.0, %v3299
      %v3301 = vpop.f32.mrb[0].mxu0
      %3302 = vmatprep.mubr.f32.mxu0 0.0
      %3303 = vmatmul.mubr.f32.gmra.mrb[0].mxu0 %v3006
      %v3304 = vpop.f32.mrb[0].mxu0
      %v3305 = vadd.f32 0.0, %v3304
      %v3306 = vpop.f32.mrb[0].mxu0
      %3307 = vmatprep.mubr.f32.mxu0 0.0
      %3308 = vmatmul.mubr.f32.gmra.mrb[0].mxu0 %v3009
      %v3309 = vpop.f32.mrb[0].mxu0
      %v3310 = vadd.f32 0.0, %v3309
      %v3311 = vpop.f32.mrb[0].mxu0
      %3312 = vmatprep.mubr.f32.mxu0 0.0
      %3313 = vmatmul.mubr.f32.gmra.mrb[0].mxu0 %v3012
      %v3314 = vpop.f32.mrb[0].mxu0
      %v3315 = vadd.f32 0.0, %v3314
      %v3316 = vpop.f32.mrb[0].mxu0
      %3317 = vmatprep.mubr.f32.mxu0 0.0
      %3318 = vmatmul.mubr.f32.gmra.mrb[0].mxu0 %v3015
      %v3319 = vpop.f32.mrb[0].mxu0
      %v3320 = vadd.f32 0.0, %v3319
      %v3321 = vpop.f32.mrb[0].mxu0
      %3322 = vmatprep.mubr.f32.mxu0 0.0
      %3323 = vmatmul.mubr.f32.gmra.mrb[0].mxu0 %v3018
      %v3324 = vpop.f32.mrb[0].mxu0
      %v3325 = vadd.f32 0.0, %v3324
      %v3326 = vpop.f32.mrb[0].mxu0
      %3327 = vmatprep.mubr.f32.mxu0 0.0
      %3328 = vmatmul.mubr.f32.gmra.mrb[0].mxu0 %v3021
      %v3329 = vpop.f32.mrb[0].mxu0
      %v3330 = vadd.f32 0.0, %v3329
      %v3331 = vpop.f32.mrb[0].mxu0
      %3332 = vmatprep.mubr.f32.mxu0 0.0
      %3333 = vmatmul.mubr.f32.gmra.mrb[0].mxu0 %v3024
      %v3334 = vpop.f32.mrb[0].mxu0
      %v3335 = vadd.f32 0.0, %v3334
      %v3336 = vpop.f32.mrb[0].mxu0
      %3337 = vmatprep.mubr.f32.mxu0 0.0
      %3338 = vmatmul.mubr.f32.gmra.mrb[0].mxu0 %v3027
      %v3339 = vpop.f32.mrb[0].mxu0
      %v3340 = vadd.f32 0.0, %v3339
      %v3341 = vpop.f32.mrb[0].mxu0
      %3342 = vmatprep.mubr.f32.mxu0 0.0
      %3343 = vmatmul.mubr.f32.gmra.mrb[0].mxu0 %v3030
      %v3344 = vpop.f32.mrb[0].mxu0
      %v3345 = vadd.f32 0.0, %v3344
      %v3346 = vpop.f32.mrb[0].mxu0
      %3347 = vmatprep.mubr.f32.mxu0 0.0
      %3348 = vmatmul.mubr.f32.gmra.mrb[0].mxu0 %v3033
      %v3349 = vpop.f32.mrb[0].mxu0
      %v3350 = vadd.f32 0.0, %v3349
      %v3351 = vpop.f32.mrb[0].mxu0
      %3352 = vmatprep.mubr.f32.mxu0 0.0
      %3353 = vmatmul.mubr.f32.gmra.mrb[0].mxu0 %v3036
      %v3354 = vpop.f32.mrb[0].mxu0
      %v3355 = vadd.f32 0.0, %v3354
      %v3356 = vpop.f32.mrb[0].mxu0
      %3357 = vmatprep.mubr.f32.mxu0 0.0
      %3358 = vmatmul.mubr.f32.gmra.mrb[0].mxu0 %v3039
      %v3359 = vpop.f32.mrb[0].mxu0
      %v3360 = vadd.f32 0.0, %v3359
      %v3361 = vpop.f32.mrb[0].mxu0
      %3362 = vmatprep.mubr.f32.mxu0 0.0
      %3363 = vmatmul.mubr.f32.gmra.mrb[0].mxu0 %v3042
      %v3364 = vpop.f32.mrb[0].mxu0
      %v3365 = vadd.f32 0.0, %v3364
      %v3366 = vpop.f32.mrb[0].mxu0
      %3367 = vmatprep.mubr.f32.mxu0 0.0
      %3368 = vmatmul.mubr.f32.gmra.mrb[0].mxu0 %v3045
      %v3369 = vpop.f32.mrb[0].mxu0
      %v3370 = vadd.f32 0.0, %v3369
      %v3371 = vpop.f32.mrb[0].mxu0
      %3372 = vmatprep.mubr.f32.mxu0 0.0
      %3373 = vmatmul.mubr.f32.gmra.mrb[0].mxu0 %v3048
      %v3374 = vpop.f32.mrb[0].mxu0
      %v3375 = vadd.f32 0.0, %v3374
      %v3376 = vpop.f32.mrb[0].mxu0
      %3377 = vmatprep.mubr.f32.mxu0 0.0
      %3378 = vmatmul.mubr.f32.gmra.mrb[0].mxu0 %v3051
      %v3379 = vpop.f32.mrb[0].mxu0
      %v3380 = vadd.f32 0.0, %v3379
      %v3381 = vpop.f32.mrb[0].mxu0
      %3382 = vmatprep.mubr.f32.mxu0 0.0
      %3383 = vmatmul.mubr.f32.gmra.mrb[0].mxu0 %v3054
      %v3384 = vpop.f32.mrb[0].mxu0
      %v3385 = vadd.f32 0.0, %v3384
      %v3386 = vpop.f32.mrb[0].mxu0
      %3387 = vmatprep.mubr.f32.mxu0 0.0
      %3388 = vmatmul.mubr.f32.gmra.mrb[0].mxu0 %v3057
      %v3389 = vpop.f32.mrb[0].mxu0
      %v3390 = vadd.f32 0.0, %v3389
      %v3391 = vpop.f32.mrb[0].mxu0
      %3392 = vmatprep.mubr.f32.mxu0 0.0
      %3393 = vmatmul.mubr.f32.gmra.mrb[0].mxu0 %v3060
      %v3394 = vpop.f32.mrb[0].mxu0
      %v3395 = vadd.f32 0.0, %v3394
      %v3396 = vpop.f32.mrb[0].mxu0
      %3397 = vmatprep.mubr.f32.mxu0 0.0
      %3398 = vmatmul.mubr.f32.gmra.mrb[0].mxu0 %v3063
      %v3399 = vpop.f32.mrb[0].mxu0
      %v3400 = vadd.f32 0.0, %v3399
      %v3401 = vpop.f32.mrb[0].mxu0
      %3402 = vmatprep.mubr.f32.mxu0 0.0
      %3403 = vmatmul.mubr.f32.gmra.mrb[0].mxu0 %v3066
      %v3404 = vpop.f32.mrb[0].mxu0
      %v3405 = vadd.f32 0.0, %v3404
      %v3406 = vpop.f32.mrb[0].mxu0
      %3407 = vmatprep.mubr.f32.mxu0 0.0
      %3408 = vmatmul.mubr.f32.gmra.mrb[0].mxu0 %v3069
      %v3409 = vpop.f32.mrb[0].mxu0
      %v3410 = vadd.f32 0.0, %v3409
      %v3411 = vpop.f32.mrb[0].mxu0
      %3412 = vmatprep.mubr.f32.mxu0 0.0
      %3413 = vmatmul.mubr.f32.gmra.mrb[0].mxu0 %v3072
      %v3414 = vpop.f32.mrb[0].mxu0
      %v3415 = vadd.f32 0.0, %v3414
      %v3416 = vpop.f32.mrb[0].mxu0
      %3417 = vmatprep.mubr.f32.mxu0 0.0
      %3418 = vmatmul.mubr.f32.gmra.mrb[0].mxu0 %v3075
      %v3419 = vpop.f32.mrb[0].mxu0
      %v3420 = vadd.f32 0.0, %v3419
      %v3421 = vpop.f32.mrb[0].mxu0
      %3422 = vmatprep.mubr.f32.mxu0 0.0
      %3423 = vmatmul.mubr.f32.gmra.mrb[0].mxu0 %v3078
      %v3424 = vpop.f32.mrb[0].mxu0
      %v3425 = vadd.f32 0.0, %v3424
      %v3426 = vpop.f32.mrb[0].mxu0
      %3427 = vmatprep.mubr.f32.mxu0 0.0
      %3428 = vmatmul.mubr.f32.gmra.mrb[0].mxu0 %v3081
      %v3429 = vpop.f32.mrb[0].mxu0
      %v3430 = vadd.f32 0.0, %v3429
      %v3431 = vpop.f32.mrb[0].mxu0
      %3432 = vmatprep.mubr.f32.mxu0 0.0
      %3433 = vmatmul.mubr.f32.gmra.mrb[0].mxu0 %v3084
      %v3434 = vpop.f32.mrb[0].mxu0
      %v3435 = vadd.f32 0.0, %v3434
      %v3436 = vpop.f32.mrb[0].mxu0
      %3437 = vmatprep.mubr.f32.mxu0 0.0
      %3438 = vmatmul.mubr.f32.gmra.mrb[0].mxu0 %v3087
      %v3439 = vpop.f32.mrb[0].mxu0
      %v3440 = vadd.f32 0.0, %v3439
      %v3441 = vpop.f32.mrb[0].mxu0
      %3442 = vmatprep.mubr.f32.mxu0 0.0
      %3443 = vmatmul.mubr.f32.gmra.mrb[0].mxu0 %v3090
      %v3444 = vpop.f32.mrb[0].mxu0
      %v3445 = vadd.f32 0.0, %v3444
      %v3446 = vpop.f32.mrb[0].mxu0
      %3447 = vmatprep.mubr.f32.mxu0 0.0
      %3448 = vmatmul.mubr.f32.gmra.mrb[0].mxu0 %v3093
      %v3449 = vpop.f32.mrb[0].mxu0
      %v3450 = vadd.f32 0.0, %v3449
      %v3451 = vpop.f32.mrb[0].mxu0
      %3452 = vmatprep.mubr.f32.mxu0 0.0
      %3453 = vmatmul.mubr.f32.gmra.mrb[0].mxu0 %v3096
      %v3454 = vpop.f32.mrb[0].mxu0
      %v3455 = vadd.f32 0.0, %v3454
      %v3456 = vpop.f32.mrb[0].mxu0
      %3457 = vmatprep.mubr.f32.mxu0 0.0
      %3458 = vmatmul.mubr.f32.gmra.mrb[0].mxu0 %v3099
      %v3459 = vpop.f32.mrb[0].mxu0
      %v3460 = vadd.f32 0.0, %v3459
      %v3461 = vpop.f32.mrb[0].mxu0
      %3462 = vmatprep.mubr.f32.mxu0 0.0
      %3463 = vmatmul.mubr.f32.gmra.mrb[0].mxu0 %v3102
      %v3464 = vpop.f32.mrb[0].mxu0
      %v3465 = vadd.f32 0.0, %v3464
      %v3466 = vpop.f32.mrb[0].mxu0
      %3467 = vmatprep.mubr.f32.mxu0 0.0
      %3468 = vmatmul.mubr.f32.gmra.mrb[0].mxu0 %v3105
      %v3469 = vpop.f32.mrb[0].mxu0
      %v3470 = vadd.f32 0.0, %v3469
      %v3471 = vpop.f32.mrb[0].mxu0
      %3472 = vmatprep.mubr.f32.mxu0 0.0
      %3473 = vmatmul.mubr.f32.gmra.mrb[0].mxu0 %v3108
      %v3474 = vpop.f32.mrb[0].mxu0
      %v3475 = vadd.f32 0.0, %v3474
      %v3476 = vpop.f32.mrb[0].mxu0
      %3477 = vmatprep.mubr.f32.mxu0 0.0
      %3478 = vmatmul.mubr.f32.gmra.mrb[0].mxu0 %v3111
      %v3479 = vpop.f32.mrb[0].mxu0
      %v3480 = vadd.f32 0.0, %v3479
      %v3481 = vpop.f32.mrb[0].mxu0
      %3482 = vmatprep.mubr.f32.mxu0 0.0
      %3483 = vmatmul.mubr.f32.gmra.mrb[0].mxu0 %v3114
      %v3484 = vpop.f32.mrb[0].mxu0
      %v3485 = vadd.f32 0.0, %v3484
      %v3486 = vpop.f32.mrb[0].mxu0
      %3487 = vmatprep.mubr.f32.mxu0 0.0
      %3488 = vmatmul.mubr.f32.gmra.mrb[0].mxu0 %v3117
      %v3489 = vpop.f32.mrb[0].mxu0
      %v3490 = vadd.f32 0.0, %v3489
      %v3491 = vpop.f32.mrb[0].mxu0
      %3492 = vmatprep.mubr.f32.mxu0 0.0
      %3493 = vmatmul.mubr.f32.gmra.mrb[0].mxu0 %v3120
      %v3494 = vpop.f32.mrb[0].mxu0
      %v3495 = vadd.f32 0.0, %v3494
      %v3496 = vpop.f32.mrb[0].mxu0
      %3497 = vmatprep.mubr.f32.mxu0 0.0
      %3498 = vmatmul.mubr.f32.gmra.mrb[0].mxu0 %v3123
      %v3499 = vpop.f32.mrb[0].mxu0
      %v3500 = vadd.f32 0.0, %v3499
      %v3501 = vpop.f32.mrb[0].mxu0
      %3502 = vmatprep.mubr.f32.mxu0 0.0
      %3503 = vmatmul.mubr.f32.gmra.mrb[0].mxu0 %v3126
      %v3504 = vpop.f32.mrb[0].mxu0
      %v3505 = vadd.f32 0.0, %v3504
      %v3506 = vpop.f32.mrb[0].mxu0
      %3507 = vmatprep.mubr.f32.mxu0 0.0
      %3508 = vmatmul.mubr.f32.gmra.mrb[0].mxu0 %v3129
      %v3509 = vpop.f32.mrb[0].mxu0
      %v3510 = vadd.f32 0.0, %v3509
      %v3511 = vpop.f32.mrb[0].mxu0
      %3512 = vmatprep.mubr.f32.mxu0 0.0
      %3513 = vmatmul.mubr.f32.gmra.mrb[0].mxu0 %v3132
      %v3514 = vpop.f32.mrb[0].mxu0
      %v3515 = vadd.f32 0.0, %v3514
      %v3516 = vpop.f32.mrb[0].mxu0
      %3517 = vmatprep.mubr.f32.mxu0 0.0
      %3518 = vmatmul.mubr.f32.gmra.mrb[0].mxu0 %v3135
      %v3519 = vpop.f32.mrb[0].mxu0
      %v3520 = vadd.f32 0.0, %v3519
      %v3521 = vpop.f32.mrb[0].mxu0
      %3522 = vmatprep.mubr.f32.mxu0 0.0
      %3523 = vmatmul.mubr.f32.gmra.mrb[0].mxu0 %v3138
      %v3524 = vpop.f32.mrb[0].mxu0
      %v3525 = vadd.f32 0.0, %v3524
      %v3526 = vpop.f32.mrb[0].mxu0
      %3527 = vdwg.mxu0
      %v3528 = vadd.f32 %v2818, %v3210
      %v3529 = vadd.f32 %v2819, %v3215
      %v3530 = vadd.f32 %v2820, %v3220
      %v3531 = vadd.f32 %v2821, %v3225
      %v3532 = vadd.f32 %v2822, %v3230
      %v3533 = vadd.f32 %v2823, %v3235
      %v3534 = vadd.f32 %v2824, %v3240
      %v3535 = vadd.f32 %v2825, %v3245
      %v3536 = vadd.f32 %v2826, %v3250
      %v3537 = vadd.f32 %v2827, %v3255
      %v3538 = vadd.f32 %v2828, %v3260
      %v3539 = vadd.f32 %v2829, %v3265
      %v3540 = vadd.f32 %v2830, %v3270
      %v3541 = vadd.f32 %v2831, %v3275
      %v3542 = vadd.f32 %v2832, %v3280
      %v3543 = vadd.f32 %v2833, %v3285
      %v3544 = vadd.f32 %v2834, %v3290
      %v3545 = vadd.f32 %v2835, %v3295
      %v3546 = vadd.f32 %v2836, %v3300
      %v3547 = vadd.f32 %v2837, %v3305
      %v3548 = vadd.f32 %v2838, %v3310
      %v3549 = vadd.f32 %v2839, %v3315
      %v3550 = vadd.f32 %v2840, %v3320
      %v3551 = vadd.f32 %v2841, %v3325
      %v3552 = vadd.f32 %v2842, %v3330
      %v3553 = vadd.f32 %v2843, %v3335
      %v3554 = vadd.f32 %v2844, %v3340
      %v3555 = vadd.f32 %v2845, %v3345
      %v3556 = vadd.f32 %v2846, %v3350
      %v3557 = vadd.f32 %v2847, %v3355
      %v3558 = vadd.f32 %v2848, %v3360
      %v3559 = vadd.f32 %v2849, %v3365
      %v3560 = vadd.f32 %v2850, %v3370
      %v3561 = vadd.f32 %v2851, %v3375
      %v3562 = vadd.f32 %v2852, %v3380
      %v3563 = vadd.f32 %v2853, %v3385
      %v3564 = vadd.f32 %v2854, %v3390
      %v3565 = vadd.f32 %v2855, %v3395
      %v3566 = vadd.f32 %v2856, %v3400
      %v3567 = vadd.f32 %v2857, %v3405
      %v3568 = vadd.f32 %v2858, %v3410
      %v3569 = vadd.f32 %v2859, %v3415
      %v3570 = vadd.f32 %v2860, %v3420
      %v3571 = vadd.f32 %v2861, %v3425
      %v3572 = vadd.f32 %v2862, %v3430
      %v3573 = vadd.f32 %v2863, %v3435
      %v3574 = vadd.f32 %v2864, %v3440
      %v3575 = vadd.f32 %v2865, %v3445
      %v3576 = vadd.f32 %v2866, %v3450
      %v3577 = vadd.f32 %v2867, %v3455
      %v3578 = vadd.f32 %v2868, %v3460
      %v3579 = vadd.f32 %v2869, %v3465
      %v3580 = vadd.f32 %v2870, %v3470
      %v3581 = vadd.f32 %v2871, %v3475
      %v3582 = vadd.f32 %v2872, %v3480
      %v3583 = vadd.f32 %v2873, %v3485
      %v3584 = vadd.f32 %v2874, %v3490
      %v3585 = vadd.f32 %v2875, %v3495
      %v3586 = vadd.f32 %v2876, %v3500
      %v3587 = vadd.f32 %v2877, %v3505
      %v3588 = vadd.f32 %v2878, %v3510
      %v3589 = vadd.f32 %v2879, %v3515
      %v3590 = vadd.f32 %v2880, %v3520
      %v3591 = vadd.f32 %v2881, %v3525
      %3592 = vst [vmem:[%s230] sm:$0xff] %v3528
      %3593 = vst [vmem:[%s230 + $0x8] sm:$0xff] %v3529
      %3594 = vst [vmem:[%s230 + $0x10] sm:$0xff] %v3530
      %3595 = vst [vmem:[%s230 + $0x18] sm:$0xff] %v3531
      %3596 = vst [vmem:[%s230 + $0x20] sm:$0xff] %v3532
      %3597 = vst [vmem:[%s230 + $0x28] sm:$0xff] %v3533
      %3598 = vst [vmem:[%s230 + $0x30] sm:$0xff] %v3534
      %3599 = vst [vmem:[%s230 + $0x38] sm:$0xff] %v3535
      %3600 = vst [vmem:[%s230 + $0x40] sm:$0xff] %v3536
      %3601 = vst [vmem:[%s230 + $0x48] sm:$0xff] %v3537
      %3602 = vst [vmem:[%s230 + $0x50] sm:$0xff] %v3538
      %3603 = vst [vmem:[%s230 + $0x58] sm:$0xff] %v3539
      %3604 = vst [vmem:[%s230 + $0x60] sm:$0xff] %v3540
      %3605 = vst [vmem:[%s230 + $0x68] sm:$0xff] %v3541
      %3606 = vst [vmem:[%s230 + $0x70] sm:$0xff] %v3542
      %3607 = vst [vmem:[%s230 + $0x78] sm:$0xff] %v3543
      %3608 = vst [vmem:[%s230 + $0x80] sm:$0xff] %v3544
      %3609 = vst [vmem:[%s230 + $0x88] sm:$0xff] %v3545
      %3610 = vst [vmem:[%s230 + $0x90] sm:$0xff] %v3546
      %3611 = vst [vmem:[%s230 + $0x98] sm:$0xff] %v3547
      %3612 = vst [vmem:[%s230 + $0xa0] sm:$0xff] %v3548
      %3613 = vst [vmem:[%s230 + $0xa8] sm:$0xff] %v3549
      %3614 = vst [vmem:[%s230 + $0xb0] sm:$0xff] %v3550
      %3615 = vst [vmem:[%s230 + $0xb8] sm:$0xff] %v3551
      %3616 = vst [vmem:[%s230 + $0xc0] sm:$0xff] %v3552
      %3617 = vst [vmem:[%s230 + $0xc8] sm:$0xff] %v3553
      %3618 = vst [vmem:[%s230 + $0xd0] sm:$0xff] %v3554
      %3619 = vst [vmem:[%s230 + $0xd8] sm:$0xff] %v3555
      %3620 = vst [vmem:[%s230 + $0xe0] sm:$0xff] %v3556
      %3621 = vst [vmem:[%s230 + $0xe8] sm:$0xff] %v3557
      %3622 = vst [vmem:[%s230 + $0xf0] sm:$0xff] %v3558
      %3623 = vst [vmem:[%s230 + $0xf8] sm:$0xff] %v3559
      %3624 = vst [vmem:[%s230 + $0x100] sm:$0xff] %v3560
      %3625 = vst [vmem:[%s230 + $0x108] sm:$0xff] %v3561
      %3626 = vst [vmem:[%s230 + $0x110] sm:$0xff] %v3562
      %3627 = vst [vmem:[%s230 + $0x118] sm:$0xff] %v3563
      %3628 = vst [vmem:[%s230 + $0x120] sm:$0xff] %v3564
      %3629 = vst [vmem:[%s230 + $0x128] sm:$0xff] %v3565
      %3630 = vst [vmem:[%s230 + $0x130] sm:$0xff] %v3566
      %3631 = vst [vmem:[%s230 + $0x138] sm:$0xff] %v3567
      %3632 = vst [vmem:[%s230 + $0x140] sm:$0xff] %v3568
      %3633 = vst [vmem:[%s230 + $0x148] sm:$0xff] %v3569
      %3634 = vst [vmem:[%s230 + $0x150] sm:$0xff] %v3570
      %3635 = vst [vmem:[%s230 + $0x158] sm:$0xff] %v3571
      %3636 = vst [vmem:[%s230 + $0x160] sm:$0xff] %v3572
      %3637 = vst [vmem:[%s230 + $0x168] sm:$0xff] %v3573
      %3638 = vst [vmem:[%s230 + $0x170] sm:$0xff] %v3574
      %3639 = vst [vmem:[%s230 + $0x178] sm:$0xff] %v3575
      %3640 = vst [vmem:[%s230 + $0x180] sm:$0xff] %v3576
      %3641 = vst [vmem:[%s230 + $0x188] sm:$0xff] %v3577
      %3642 = vst [vmem:[%s230 + $0x190] sm:$0xff] %v3578
      %3643 = vst [vmem:[%s230 + $0x198] sm:$0xff] %v3579
      %3644 = vst [vmem:[%s230 + $0x1a0] sm:$0xff] %v3580
      %3645 = vst [vmem:[%s230 + $0x1a8] sm:$0xff] %v3581
      %3646 = vst [vmem:[%s230 + $0x1b0] sm:$0xff] %v3582
      %3647 = vst [vmem:[%s230 + $0x1b8] sm:$0xff] %v3583
      %3648 = vst [vmem:[%s230 + $0x1c0] sm:$0xff] %v3584
      %3649 = vst [vmem:[%s230 + $0x1c8] sm:$0xff] %v3585
      %3650 = vst [vmem:[%s230 + $0x1d0] sm:$0xff] %v3586
      %3651 = vst [vmem:[%s230 + $0x1d8] sm:$0xff] %v3587
      %3652 = vst [vmem:[%s230 + $0x1e0] sm:$0xff] %v3588
      %3653 = vst [vmem:[%s230 + $0x1e8] sm:$0xff] %v3589
      %3654 = vst [vmem:[%s230 + $0x1f0] sm:$0xff] %v3590
      %3655 = vst [vmem:[%s230 + $0x1f8] sm:$0xff] %v3591
      %v3656 = vld [vmem:[%s230] sm:$0xff]
      %v3657 = vld [vmem:[%s230 + $0x8] sm:$0xff]
      %v3658 = vld [vmem:[%s230 + $0x10] sm:$0xff]
      %v3659 = vld [vmem:[%s230 + $0x18] sm:$0xff]
      %v3660 = vld [vmem:[%s230 + $0x20] sm:$0xff]
      %v3661 = vld [vmem:[%s230 + $0x28] sm:$0xff]
      %v3662 = vld [vmem:[%s230 + $0x30] sm:$0xff]
      %v3663 = vld [vmem:[%s230 + $0x38] sm:$0xff]
      %v3664 = vld [vmem:[%s230 + $0x40] sm:$0xff]
      %v3665 = vld [vmem:[%s230 + $0x48] sm:$0xff]
      %v3666 = vld [vmem:[%s230 + $0x50] sm:$0xff]
      %v3667 = vld [vmem:[%s230 + $0x58] sm:$0xff]
      %v3668 = vld [vmem:[%s230 + $0x60] sm:$0xff]
      %v3669 = vld [vmem:[%s230 + $0x68] sm:$0xff]
      %v3670 = vld [vmem:[%s230 + $0x70] sm:$0xff]
      %v3671 = vld [vmem:[%s230 + $0x78] sm:$0xff]
      %v3672 = vld [vmem:[%s230 + $0x80] sm:$0xff]
      %v3673 = vld [vmem:[%s230 + $0x88] sm:$0xff]
      %v3674 = vld [vmem:[%s230 + $0x90] sm:$0xff]
      %v3675 = vld [vmem:[%s230 + $0x98] sm:$0xff]
      %v3676 = vld [vmem:[%s230 + $0xa0] sm:$0xff]
      %v3677 = vld [vmem:[%s230 + $0xa8] sm:$0xff]
      %v3678 = vld [vmem:[%s230 + $0xb0] sm:$0xff]
      %v3679 = vld [vmem:[%s230 + $0xb8] sm:$0xff]
      %v3680 = vld [vmem:[%s230 + $0xc0] sm:$0xff]
      %v3681 = vld [vmem:[%s230 + $0xc8] sm:$0xff]
      %v3682 = vld [vmem:[%s230 + $0xd0] sm:$0xff]
      %v3683 = vld [vmem:[%s230 + $0xd8] sm:$0xff]
      %v3684 = vld [vmem:[%s230 + $0xe0] sm:$0xff]
      %v3685 = vld [vmem:[%s230 + $0xe8] sm:$0xff]
      %v3686 = vld [vmem:[%s230 + $0xf0] sm:$0xff]
      %v3687 = vld [vmem:[%s230 + $0xf8] sm:$0xff]
      %v3688 = vld [vmem:[%s230 + $0x100] sm:$0xff]
      %v3689 = vld [vmem:[%s230 + $0x108] sm:$0xff]
      %v3690 = vld [vmem:[%s230 + $0x110] sm:$0xff]
      %v3691 = vld [vmem:[%s230 + $0x118] sm:$0xff]
      %v3692 = vld [vmem:[%s230 + $0x120] sm:$0xff]
      %v3693 = vld [vmem:[%s230 + $0x128] sm:$0xff]
      %v3694 = vld [vmem:[%s230 + $0x130] sm:$0xff]
      %v3695 = vld [vmem:[%s230 + $0x138] sm:$0xff]
      %v3696 = vld [vmem:[%s230 + $0x140] sm:$0xff]
      %v3697 = vld [vmem:[%s230 + $0x148] sm:$0xff]
      %v3698 = vld [vmem:[%s230 + $0x150] sm:$0xff]
      %v3699 = vld [vmem:[%s230 + $0x158] sm:$0xff]
      %v3700 = vld [vmem:[%s230 + $0x160] sm:$0xff]
      %v3701 = vld [vmem:[%s230 + $0x168] sm:$0xff]
      %v3702 = vld [vmem:[%s230 + $0x170] sm:$0xff]
      %v3703 = vld [vmem:[%s230 + $0x178] sm:$0xff]
      %v3704 = vld [vmem:[%s230 + $0x180] sm:$0xff]
      %v3705 = vld [vmem:[%s230 + $0x188] sm:$0xff]
      %v3706 = vld [vmem:[%s230 + $0x190] sm:$0xff]
      %v3707 = vld [vmem:[%s230 + $0x198] sm:$0xff]
      %v3708 = vld [vmem:[%s230 + $0x1a0] sm:$0xff]
      %v3709 = vld [vmem:[%s230 + $0x1a8] sm:$0xff]
      %v3710 = vld [vmem:[%s230 + $0x1b0] sm:$0xff]
      %v3711 = vld [vmem:[%s230 + $0x1b8] sm:$0xff]
      %v3712 = vld [vmem:[%s230 + $0x1c0] sm:$0xff]
      %v3713 = vld [vmem:[%s230 + $0x1c8] sm:$0xff]
      %v3714 = vld [vmem:[%s230 + $0x1d0] sm:$0xff]
      %v3715 = vld [vmem:[%s230 + $0x1d8] sm:$0xff]
      %v3716 = vld [vmem:[%s230 + $0x1e0] sm:$0xff]
      %v3717 = vld [vmem:[%s230 + $0x1e8] sm:$0xff]
      %v3718 = vld [vmem:[%s230 + $0x1f0] sm:$0xff]
      %v3719 = vld [vmem:[%s230 + $0x1f8] sm:$0xff]
      %v3720 = vld [vmem:[%s216 + $0x13] sm:$0xff]
      %v3721 = vld [vmem:[%s216 + $0x1b] sm:$0xff]
      %v3722 = vld [vmem:[%s216 + $0x23] sm:$0xff]
      %v3723 = vld [vmem:[%s216 + $0x2b] sm:$0xff]
      %v3724 = vld [vmem:[%s216 + $0x33] sm:$0xff]
      %v3725 = vld [vmem:[%s216 + $0x3b] sm:$0xff]
      %v3726 = vld [vmem:[%s216 + $0x43] sm:$0xff]
      %v3727 = vld [vmem:[%s216 + $0x4b] sm:$0xff]
      %v3728 = vld [vmem:[%s216 + $0x53] sm:$0xff]
      %v3729 = vld [vmem:[%s216 + $0x5b] sm:$0xff]
      %v3730 = vld [vmem:[%s216 + $0x63] sm:$0xff]
      %v3731 = vld [vmem:[%s216 + $0x6b] sm:$0xff]
      %v3732 = vld [vmem:[%s216 + $0x73] sm:$0xff]
      %v3733 = vld [vmem:[%s216 + $0x7b] sm:$0xff]
      %v3734 = vld [vmem:[%s216 + $0x83] sm:$0xff]
      %v3735 = vld [vmem:[%s216 + $0x8b] sm:$0xff]
      %v3736 = vld [vmem:[%s216 + $0x93] sm:$0xff]
      %v3737 = vld [vmem:[%s216 + $0x9b] sm:$0xff]
      %v3738 = vld [vmem:[%s216 + $0xa3] sm:$0xff]
      %v3739 = vld [vmem:[%s216 + $0xab] sm:$0xff]
      %v3740 = vld [vmem:[%s216 + $0xb3] sm:$0xff]
      %v3741 = vld [vmem:[%s216 + $0xbb] sm:$0xff]
      %v3742 = vld [vmem:[%s216 + $0xc3] sm:$0xff]
      %v3743 = vld [vmem:[%s216 + $0xcb] sm:$0xff]
      %v3744 = vld [vmem:[%s216 + $0xd3] sm:$0xff]
      %v3745 = vld [vmem:[%s216 + $0xdb] sm:$0xff]
      %v3746 = vld [vmem:[%s216 + $0xe3] sm:$0xff]
      %v3747 = vld [vmem:[%s216 + $0xeb] sm:$0xff]
      %v3748 = vld [vmem:[%s216 + $0xf3] sm:$0xff]
      %v3749 = vld [vmem:[%s216 + $0xfb] sm:$0xff]
      %v3750 = vld [vmem:[%s216 + $0x103] sm:$0xff]
      %v3751 = vld [vmem:[%s216 + $0x10b] sm:$0xff]
      %v3752 = vld [vmem:[%s216 + $0x113] sm:$0xff]
      %v3753 = vld [vmem:[%s216 + $0x11b] sm:$0xff]
      %v3754 = vld [vmem:[%s216 + $0x123] sm:$0xff]
      %v3755 = vld [vmem:[%s216 + $0x12b] sm:$0xff]
      %v3756 = vld [vmem:[%s216 + $0x133] sm:$0xff]
      %v3757 = vld [vmem:[%s216 + $0x13b] sm:$0xff]
      %v3758 = vld [vmem:[%s216 + $0x143] sm:$0xff]
      %v3759 = vld [vmem:[%s216 + $0x14b] sm:$0xff]
      %v3760 = vld [vmem:[%s216 + $0x153] sm:$0xff]
      %v3761 = vld [vmem:[%s216 + $0x15b] sm:$0xff]
      %v3762 = vld [vmem:[%s216 + $0x163] sm:$0xff]
      %v3763 = vld [vmem:[%s216 + $0x16b] sm:$0xff]
      %v3764 = vld [vmem:[%s216 + $0x173] sm:$0xff]
      %v3765 = vld [vmem:[%s216 + $0x17b] sm:$0xff]
      %v3766 = vld [vmem:[%s216 + $0x183] sm:$0xff]
      %v3767 = vld [vmem:[%s216 + $0x18b] sm:$0xff]
      %v3768 = vld [vmem:[%s216 + $0x193] sm:$0xff]
      %v3769 = vld [vmem:[%s216 + $0x19b] sm:$0xff]
      %v3770 = vld [vmem:[%s216 + $0x1a3] sm:$0xff]
      %v3771 = vld [vmem:[%s216 + $0x1ab] sm:$0xff]
      %v3772 = vld [vmem:[%s216 + $0x1b3] sm:$0xff]
      %v3773 = vld [vmem:[%s216 + $0x1bb] sm:$0xff]
      %v3774 = vld [vmem:[%s216 + $0x1c3] sm:$0xff]
      %v3775 = vld [vmem:[%s216 + $0x1cb] sm:$0xff]
      %v3776 = vld [vmem:[%s216 + $0x1d3] sm:$0xff]
      %v3777 = vld [vmem:[%s216 + $0x1db] sm:$0xff]
      %v3778 = vld [vmem:[%s216 + $0x1e3] sm:$0xff]
      %v3779 = vld [vmem:[%s216 + $0x1eb] sm:$0xff]
      %v3780 = vld [vmem:[%s216 + $0x1f3] sm:$0xff]
      %v3781 = vld [vmem:[%s216 + $0x1fb] sm:$0xff]
      %v3782 = vld [vmem:[%s216 + $0x203] sm:$0xff]
      %v3783 = vld [vmem:[%s216 + $0x20b] sm:$0xff]
      %s3784 = scalar_lea.vmem %s1, 16
      %v3785 = vld [vmem:[%s3784] sm:$0xf]
      %v3787 = vsel %vm432, %v3720, 0
      %v3790 = vsel %vm432, %v3721, 0
      %v3793 = vsel %vm432, %v3722, 0
      %v3796 = vsel %vm432, %v3723, 0
      %v3799 = vsel %vm432, %v3724, 0
      %v3802 = vsel %vm432, %v3725, 0
      %v3805 = vsel %vm432, %v3726, 0
      %v3808 = vsel %vm432, %v3727, 0
      %v3811 = vsel %vm432, %v3728, 0
      %v3814 = vsel %vm432, %v3729, 0
      %v3817 = vsel %vm432, %v3730, 0
      %v3820 = vsel %vm432, %v3731, 0
      %v3823 = vsel %vm432, %v3732, 0
      %v3826 = vsel %vm432, %v3733, 0
      %v3829 = vsel %vm432, %v3734, 0
      %v3832 = vsel %vm432, %v3735, 0
      %v3835 = vsel %vm432, %v3736, 0
      %v3838 = vsel %vm432, %v3737, 0
      %v3841 = vsel %vm432, %v3738, 0
      %v3844 = vsel %vm432, %v3739, 0
      %v3847 = vsel %vm432, %v3740, 0
      %v3850 = vsel %vm432, %v3741, 0
      %v3853 = vsel %vm432, %v3742, 0
      %v3856 = vsel %vm432, %v3743, 0
      %v3859 = vsel %vm432, %v3744, 0
      %v3862 = vsel %vm432, %v3745, 0
      %v3865 = vsel %vm432, %v3746, 0
      %v3868 = vsel %vm432, %v3747, 0
      %v3871 = vsel %vm432, %v3748, 0
      %v3874 = vsel %vm432, %v3749, 0
      %v3877 = vsel %vm432, %v3750, 0
      %v3880 = vsel %vm432, %v3751, 0
      %v3883 = vsel %vm432, %v3752, 0
      %v3886 = vsel %vm432, %v3753, 0
      %v3889 = vsel %vm432, %v3754, 0
      %v3892 = vsel %vm432, %v3755, 0
      %v3895 = vsel %vm432, %v3756, 0
      %v3898 = vsel %vm432, %v3757, 0
      %v3901 = vsel %vm432, %v3758, 0
      %v3904 = vsel %vm432, %v3759, 0
      %v3907 = vsel %vm432, %v3760, 0
      %v3910 = vsel %vm432, %v3761, 0
      %v3913 = vsel %vm432, %v3762, 0
      %v3916 = vsel %vm432, %v3763, 0
      %v3919 = vsel %vm432, %v3764, 0
      %v3922 = vsel %vm432, %v3765, 0
      %v3925 = vsel %vm432, %v3766, 0
      %v3928 = vsel %vm432, %v3767, 0
      %v3931 = vsel %vm432, %v3768, 0
      %v3934 = vsel %vm432, %v3769, 0
      %v3937 = vsel %vm432, %v3770, 0
      %v3940 = vsel %vm432, %v3771, 0
      %v3943 = vsel %vm432, %v3772, 0
      %v3946 = vsel %vm432, %v3773, 0
      %v3949 = vsel %vm432, %v3774, 0
      %v3952 = vsel %vm432, %v3775, 0
      %v3955 = vsel %vm432, %v3776, 0
      %v3958 = vsel %vm432, %v3777, 0
      %v3961 = vsel %vm432, %v3778, 0
      %v3964 = vsel %vm432, %v3779, 0
      %v3967 = vsel %vm432, %v3780, 0
      %v3970 = vsel %vm432, %v3781, 0
      %v3973 = vsel %vm432, %v3782, 0
      %v3976 = vsel %vm432, %v3783, 0
      %v3979 = vsel %vm625, %v3785, 0
      %3981 = vmatprep.subr.mxu0 0.0
      %3982 = vmatpush1.msra.mxu0 %v3979
      %3983 = vmatprep.subr.mxu0 0.0
      %3984 = vmatpush1.msra.mxu0 0.0
      %3985 = vmatprep.subr.mxu0 0.0
      %3986 = vmatpush1.msra.mxu0 0.0
      %3987 = vmatprep.subr.mxu0 0.0
      %3988 = vmatpush1.msra.mxu0 0.0
      %3989 = vmatprep.subr.mxu0 0.0
      %3990 = vmatpush1.msra.mxu0 0.0
      %3991 = vmatprep.subr.mxu0 0.0
      %3992 = vmatpush1.msra.mxu0 0.0
      %3993 = vmatprep.subr.mxu0 0.0
      %3994 = vmatpush1.msra.mxu0 0.0
      %3995 = vmatprep.subr.mxu0 0.0
      %3996 = vmatpush1.msra.mxu0 0.0
      %3997 = vmatprep.subr.mxu0 0.0
      %3998 = vmatpush1.msra.mxu0 0.0
      %3999 = vmatprep.subr.mxu0 0.0
      %4000 = vmatpush1.msra.mxu0 0.0
      %4001 = vmatprep.subr.mxu0 0.0
      %4002 = vmatpush1.msra.mxu0 0.0
      %4003 = vmatprep.subr.mxu0 0.0
      %4004 = vmatpush1.msra.mxu0 0.0
      %4005 = vmatprep.subr.mxu0 0.0
      %4006 = vmatpush1.msra.mxu0 0.0
      %4007 = vmatprep.subr.mxu0 0.0
      %4008 = vmatpush1.msra.mxu0 0.0
      %4009 = vmatprep.subr.mxu0 0.0
      %4010 = vmatpush1.msra.mxu0 0.0
      %4011 = vmatprep.subr.mxu0 0.0
      %4012 = vmatpush1.msra.mxu0 0.0
      %4013 = vmatprep.subr.mxu0 0.0
      %4014 = vmatpush1.msra.mxu0 0.0
      %4015 = vmatprep.subr.mxu0 0.0
      %4016 = vmatpush1.msra.mxu0 0.0
      %4017 = vmatprep.subr.mxu0 0.0
      %4018 = vmatpush1.msra.mxu0 0.0
      %4019 = vmatprep.subr.mxu0 0.0
      %4020 = vmatpush1.msra.mxu0 0.0
      %4021 = vmatprep.subr.mxu0 0.0
      %4022 = vmatpush1.msra.mxu0 0.0
      %4023 = vmatprep.subr.mxu0 0.0
      %4024 = vmatpush1.msra.mxu0 0.0
      %4025 = vmatprep.subr.mxu0 0.0
      %4026 = vmatpush1.msra.mxu0 0.0
      %4027 = vmatprep.subr.mxu0 0.0
      %4028 = vmatpush1.msra.mxu0 0.0
      %4029 = vmatprep.subr.mxu0 0.0
      %4030 = vmatpush1.msra.mxu0 0.0
      %4031 = vmatprep.subr.mxu0 0.0
      %4032 = vmatpush1.msra.mxu0 0.0
      %4033 = vmatprep.subr.mxu0 0.0
      %4034 = vmatpush1.msra.mxu0 0.0
      %4035 = vmatprep.subr.mxu0 0.0
      %4036 = vmatpush1.msra.mxu0 0.0
      %4037 = vmatprep.subr.mxu0 0.0
      %4038 = vmatpush1.msra.mxu0 0.0
      %4039 = vmatprep.subr.mxu0 0.0
      %4040 = vmatpush1.msra.mxu0 0.0
      %4041 = vmatprep.subr.mxu0 0.0
      %4042 = vmatpush1.msra.mxu0 0.0
      %4043 = vmatprep.subr.mxu0 0.0
      %4044 = vmatpush1.msra.mxu0 0.0
      %4045 = vmatprep.mubr.f32.mxu0 0.0
      %4046 = vmatmul.mubr.f32.gmra.mrb[0].mxu0 %v3787
      %v4047 = vpop.f32.mrb[0].mxu0
      %v4048 = vadd.f32 0.0, %v4047
      %v4049 = vpop.f32.mrb[0].mxu0
      %4050 = vmatprep.mubr.f32.mxu0 0.0
      %4051 = vmatmul.mubr.f32.gmra.mrb[0].mxu0 %v3790
      %v4052 = vpop.f32.mrb[0].mxu0
      %v4053 = vadd.f32 0.0, %v4052
      %v4054 = vpop.f32.mrb[0].mxu0
      %4055 = vmatprep.mubr.f32.mxu0 0.0
      %4056 = vmatmul.mubr.f32.gmra.mrb[0].mxu0 %v3793
      %v4057 = vpop.f32.mrb[0].mxu0
      %v4058 = vadd.f32 0.0, %v4057
      %v4059 = vpop.f32.mrb[0].mxu0
      %4060 = vmatprep.mubr.f32.mxu0 0.0
      %4061 = vmatmul.mubr.f32.gmra.mrb[0].mxu0 %v3796
      %v4062 = vpop.f32.mrb[0].mxu0
      %v4063 = vadd.f32 0.0, %v4062
      %v4064 = vpop.f32.mrb[0].mxu0
      %4065 = vmatprep.mubr.f32.mxu0 0.0
      %4066 = vmatmul.mubr.f32.gmra.mrb[0].mxu0 %v3799
      %v4067 = vpop.f32.mrb[0].mxu0
      %v4068 = vadd.f32 0.0, %v4067
      %v4069 = vpop.f32.mrb[0].mxu0
      %4070 = vmatprep.mubr.f32.mxu0 0.0
      %4071 = vmatmul.mubr.f32.gmra.mrb[0].mxu0 %v3802
      %v4072 = vpop.f32.mrb[0].mxu0
      %v4073 = vadd.f32 0.0, %v4072
      %v4074 = vpop.f32.mrb[0].mxu0
      %4075 = vmatprep.mubr.f32.mxu0 0.0
      %4076 = vmatmul.mubr.f32.gmra.mrb[0].mxu0 %v3805
      %v4077 = vpop.f32.mrb[0].mxu0
      %v4078 = vadd.f32 0.0, %v4077
      %v4079 = vpop.f32.mrb[0].mxu0
      %4080 = vmatprep.mubr.f32.mxu0 0.0
      %4081 = vmatmul.mubr.f32.gmra.mrb[0].mxu0 %v3808
      %v4082 = vpop.f32.mrb[0].mxu0
      %v4083 = vadd.f32 0.0, %v4082
      %v4084 = vpop.f32.mrb[0].mxu0
      %4085 = vmatprep.mubr.f32.mxu0 0.0
      %4086 = vmatmul.mubr.f32.gmra.mrb[0].mxu0 %v3811
      %v4087 = vpop.f32.mrb[0].mxu0
      %v4088 = vadd.f32 0.0, %v4087
      %v4089 = vpop.f32.mrb[0].mxu0
      %4090 = vmatprep.mubr.f32.mxu0 0.0
      %4091 = vmatmul.mubr.f32.gmra.mrb[0].mxu0 %v3814
      %v4092 = vpop.f32.mrb[0].mxu0
      %v4093 = vadd.f32 0.0, %v4092
      %v4094 = vpop.f32.mrb[0].mxu0
      %4095 = vmatprep.mubr.f32.mxu0 0.0
      %4096 = vmatmul.mubr.f32.gmra.mrb[0].mxu0 %v3817
      %v4097 = vpop.f32.mrb[0].mxu0
      %v4098 = vadd.f32 0.0, %v4097
      %v4099 = vpop.f32.mrb[0].mxu0
      %4100 = vmatprep.mubr.f32.mxu0 0.0
      %4101 = vmatmul.mubr.f32.gmra.mrb[0].mxu0 %v3820
      %v4102 = vpop.f32.mrb[0].mxu0
      %v4103 = vadd.f32 0.0, %v4102
      %v4104 = vpop.f32.mrb[0].mxu0
      %4105 = vmatprep.mubr.f32.mxu0 0.0
      %4106 = vmatmul.mubr.f32.gmra.mrb[0].mxu0 %v3823
      %v4107 = vpop.f32.mrb[0].mxu0
      %v4108 = vadd.f32 0.0, %v4107
      %v4109 = vpop.f32.mrb[0].mxu0
      %4110 = vmatprep.mubr.f32.mxu0 0.0
      %4111 = vmatmul.mubr.f32.gmra.mrb[0].mxu0 %v3826
      %v4112 = vpop.f32.mrb[0].mxu0
      %v4113 = vadd.f32 0.0, %v4112
      %v4114 = vpop.f32.mrb[0].mxu0
      %4115 = vmatprep.mubr.f32.mxu0 0.0
      %4116 = vmatmul.mubr.f32.gmra.mrb[0].mxu0 %v3829
      %v4117 = vpop.f32.mrb[0].mxu0
      %v4118 = vadd.f32 0.0, %v4117
      %v4119 = vpop.f32.mrb[0].mxu0
      %4120 = vmatprep.mubr.f32.mxu0 0.0
      %4121 = vmatmul.mubr.f32.gmra.mrb[0].mxu0 %v3832
      %v4122 = vpop.f32.mrb[0].mxu0
      %v4123 = vadd.f32 0.0, %v4122
      %v4124 = vpop.f32.mrb[0].mxu0
      %4125 = vmatprep.mubr.f32.mxu0 0.0
      %4126 = vmatmul.mubr.f32.gmra.mrb[0].mxu0 %v3835
      %v4127 = vpop.f32.mrb[0].mxu0
      %v4128 = vadd.f32 0.0, %v4127
      %v4129 = vpop.f32.mrb[0].mxu0
      %4130 = vmatprep.mubr.f32.mxu0 0.0
      %4131 = vmatmul.mubr.f32.gmra.mrb[0].mxu0 %v3838
      %v4132 = vpop.f32.mrb[0].mxu0
      %v4133 = vadd.f32 0.0, %v4132
      %v4134 = vpop.f32.mrb[0].mxu0
      %4135 = vmatprep.mubr.f32.mxu0 0.0
      %4136 = vmatmul.mubr.f32.gmra.mrb[0].mxu0 %v3841
      %v4137 = vpop.f32.mrb[0].mxu0
      %v4138 = vadd.f32 0.0, %v4137
      %v4139 = vpop.f32.mrb[0].mxu0
      %4140 = vmatprep.mubr.f32.mxu0 0.0
      %4141 = vmatmul.mubr.f32.gmra.mrb[0].mxu0 %v3844
      %v4142 = vpop.f32.mrb[0].mxu0
      %v4143 = vadd.f32 0.0, %v4142
      %v4144 = vpop.f32.mrb[0].mxu0
      %4145 = vmatprep.mubr.f32.mxu0 0.0
      %4146 = vmatmul.mubr.f32.gmra.mrb[0].mxu0 %v3847
      %v4147 = vpop.f32.mrb[0].mxu0
      %v4148 = vadd.f32 0.0, %v4147
      %v4149 = vpop.f32.mrb[0].mxu0
      %4150 = vmatprep.mubr.f32.mxu0 0.0
      %4151 = vmatmul.mubr.f32.gmra.mrb[0].mxu0 %v3850
      %v4152 = vpop.f32.mrb[0].mxu0
      %v4153 = vadd.f32 0.0, %v4152
      %v4154 = vpop.f32.mrb[0].mxu0
      %4155 = vmatprep.mubr.f32.mxu0 0.0
      %4156 = vmatmul.mubr.f32.gmra.mrb[0].mxu0 %v3853
      %v4157 = vpop.f32.mrb[0].mxu0
      %v4158 = vadd.f32 0.0, %v4157
      %v4159 = vpop.f32.mrb[0].mxu0
      %4160 = vmatprep.mubr.f32.mxu0 0.0
      %4161 = vmatmul.mubr.f32.gmra.mrb[0].mxu0 %v3856
      %v4162 = vpop.f32.mrb[0].mxu0
      %v4163 = vadd.f32 0.0, %v4162
      %v4164 = vpop.f32.mrb[0].mxu0
      %4165 = vmatprep.mubr.f32.mxu0 0.0
      %4166 = vmatmul.mubr.f32.gmra.mrb[0].mxu0 %v3859
      %v4167 = vpop.f32.mrb[0].mxu0
      %v4168 = vadd.f32 0.0, %v4167
      %v4169 = vpop.f32.mrb[0].mxu0
      %4170 = vmatprep.mubr.f32.mxu0 0.0
      %4171 = vmatmul.mubr.f32.gmra.mrb[0].mxu0 %v3862
      %v4172 = vpop.f32.mrb[0].mxu0
      %v4173 = vadd.f32 0.0, %v4172
      %v4174 = vpop.f32.mrb[0].mxu0
      %4175 = vmatprep.mubr.f32.mxu0 0.0
      %4176 = vmatmul.mubr.f32.gmra.mrb[0].mxu0 %v3865
      %v4177 = vpop.f32.mrb[0].mxu0
      %v4178 = vadd.f32 0.0, %v4177
      %v4179 = vpop.f32.mrb[0].mxu0
      %4180 = vmatprep.mubr.f32.mxu0 0.0
      %4181 = vmatmul.mubr.f32.gmra.mrb[0].mxu0 %v3868
      %v4182 = vpop.f32.mrb[0].mxu0
      %v4183 = vadd.f32 0.0, %v4182
      %v4184 = vpop.f32.mrb[0].mxu0
      %4185 = vmatprep.mubr.f32.mxu0 0.0
      %4186 = vmatmul.mubr.f32.gmra.mrb[0].mxu0 %v3871
      %v4187 = vpop.f32.mrb[0].mxu0
      %v4188 = vadd.f32 0.0, %v4187
      %v4189 = vpop.f32.mrb[0].mxu0
      %4190 = vmatprep.mubr.f32.mxu0 0.0
      %4191 = vmatmul.mubr.f32.gmra.mrb[0].mxu0 %v3874
      %v4192 = vpop.f32.mrb[0].mxu0
      %v4193 = vadd.f32 0.0, %v4192
      %v4194 = vpop.f32.mrb[0].mxu0
      %4195 = vmatprep.mubr.f32.mxu0 0.0
      %4196 = vmatmul.mubr.f32.gmra.mrb[0].mxu0 %v3877
      %v4197 = vpop.f32.mrb[0].mxu0
      %v4198 = vadd.f32 0.0, %v4197
      %v4199 = vpop.f32.mrb[0].mxu0
      %4200 = vmatprep.mubr.f32.mxu0 0.0
      %4201 = vmatmul.mubr.f32.gmra.mrb[0].mxu0 %v3880
      %v4202 = vpop.f32.mrb[0].mxu0
      %v4203 = vadd.f32 0.0, %v4202
      %v4204 = vpop.f32.mrb[0].mxu0
      %4205 = vmatprep.mubr.f32.mxu0 0.0
      %4206 = vmatmul.mubr.f32.gmra.mrb[0].mxu0 %v3883
      %v4207 = vpop.f32.mrb[0].mxu0
      %v4208 = vadd.f32 0.0, %v4207
      %v4209 = vpop.f32.mrb[0].mxu0
      %4210 = vmatprep.mubr.f32.mxu0 0.0
      %4211 = vmatmul.mubr.f32.gmra.mrb[0].mxu0 %v3886
      %v4212 = vpop.f32.mrb[0].mxu0
      %v4213 = vadd.f32 0.0, %v4212
      %v4214 = vpop.f32.mrb[0].mxu0
      %4215 = vmatprep.mubr.f32.mxu0 0.0
      %4216 = vmatmul.mubr.f32.gmra.mrb[0].mxu0 %v3889
      %v4217 = vpop.f32.mrb[0].mxu0
      %v4218 = vadd.f32 0.0, %v4217
      %v4219 = vpop.f32.mrb[0].mxu0
      %4220 = vmatprep.mubr.f32.mxu0 0.0
      %4221 = vmatmul.mubr.f32.gmra.mrb[0].mxu0 %v3892
      %v4222 = vpop.f32.mrb[0].mxu0
      %v4223 = vadd.f32 0.0, %v4222
      %v4224 = vpop.f32.mrb[0].mxu0
      %4225 = vmatprep.mubr.f32.mxu0 0.0
      %4226 = vmatmul.mubr.f32.gmra.mrb[0].mxu0 %v3895
      %v4227 = vpop.f32.mrb[0].mxu0
      %v4228 = vadd.f32 0.0, %v4227
      %v4229 = vpop.f32.mrb[0].mxu0
      %4230 = vmatprep.mubr.f32.mxu0 0.0
      %4231 = vmatmul.mubr.f32.gmra.mrb[0].mxu0 %v3898
      %v4232 = vpop.f32.mrb[0].mxu0
      %v4233 = vadd.f32 0.0, %v4232
      %v4234 = vpop.f32.mrb[0].mxu0
      %4235 = vmatprep.mubr.f32.mxu0 0.0
      %4236 = vmatmul.mubr.f32.gmra.mrb[0].mxu0 %v3901
      %v4237 = vpop.f32.mrb[0].mxu0
      %v4238 = vadd.f32 0.0, %v4237
      %v4239 = vpop.f32.mrb[0].mxu0
      %4240 = vmatprep.mubr.f32.mxu0 0.0
      %4241 = vmatmul.mubr.f32.gmra.mrb[0].mxu0 %v3904
      %v4242 = vpop.f32.mrb[0].mxu0
      %v4243 = vadd.f32 0.0, %v4242
      %v4244 = vpop.f32.mrb[0].mxu0
      %4245 = vmatprep.mubr.f32.mxu0 0.0
      %4246 = vmatmul.mubr.f32.gmra.mrb[0].mxu0 %v3907
      %v4247 = vpop.f32.mrb[0].mxu0
      %v4248 = vadd.f32 0.0, %v4247
      %v4249 = vpop.f32.mrb[0].mxu0
      %4250 = vmatprep.mubr.f32.mxu0 0.0
      %4251 = vmatmul.mubr.f32.gmra.mrb[0].mxu0 %v3910
      %v4252 = vpop.f32.mrb[0].mxu0
      %v4253 = vadd.f32 0.0, %v4252
      %v4254 = vpop.f32.mrb[0].mxu0
      %4255 = vmatprep.mubr.f32.mxu0 0.0
      %4256 = vmatmul.mubr.f32.gmra.mrb[0].mxu0 %v3913
      %v4257 = vpop.f32.mrb[0].mxu0
      %v4258 = vadd.f32 0.0, %v4257
      %v4259 = vpop.f32.mrb[0].mxu0
      %4260 = vmatprep.mubr.f32.mxu0 0.0
      %4261 = vmatmul.mubr.f32.gmra.mrb[0].mxu0 %v3916
      %v4262 = vpop.f32.mrb[0].mxu0
      %v4263 = vadd.f32 0.0, %v4262
      %v4264 = vpop.f32.mrb[0].mxu0
      %4265 = vmatprep.mubr.f32.mxu0 0.0
      %4266 = vmatmul.mubr.f32.gmra.mrb[0].mxu0 %v3919
      %v4267 = vpop.f32.mrb[0].mxu0
      %v4268 = vadd.f32 0.0, %v4267
      %v4269 = vpop.f32.mrb[0].mxu0
      %4270 = vmatprep.mubr.f32.mxu0 0.0
      %4271 = vmatmul.mubr.f32.gmra.mrb[0].mxu0 %v3922
      %v4272 = vpop.f32.mrb[0].mxu0
      %v4273 = vadd.f32 0.0, %v4272
      %v4274 = vpop.f32.mrb[0].mxu0
      %4275 = vmatprep.mubr.f32.mxu0 0.0
      %4276 = vmatmul.mubr.f32.gmra.mrb[0].mxu0 %v3925
      %v4277 = vpop.f32.mrb[0].mxu0
      %v4278 = vadd.f32 0.0, %v4277
      %v4279 = vpop.f32.mrb[0].mxu0
      %4280 = vmatprep.mubr.f32.mxu0 0.0
      %4281 = vmatmul.mubr.f32.gmra.mrb[0].mxu0 %v3928
      %v4282 = vpop.f32.mrb[0].mxu0
      %v4283 = vadd.f32 0.0, %v4282
      %v4284 = vpop.f32.mrb[0].mxu0
      %4285 = vmatprep.mubr.f32.mxu0 0.0
      %4286 = vmatmul.mubr.f32.gmra.mrb[0].mxu0 %v3931
      %v4287 = vpop.f32.mrb[0].mxu0
      %v4288 = vadd.f32 0.0, %v4287
      %v4289 = vpop.f32.mrb[0].mxu0
      %4290 = vmatprep.mubr.f32.mxu0 0.0
      %4291 = vmatmul.mubr.f32.gmra.mrb[0].mxu0 %v3934
      %v4292 = vpop.f32.mrb[0].mxu0
      %v4293 = vadd.f32 0.0, %v4292
      %v4294 = vpop.f32.mrb[0].mxu0
      %4295 = vmatprep.mubr.f32.mxu0 0.0
      %4296 = vmatmul.mubr.f32.gmra.mrb[0].mxu0 %v3937
      %v4297 = vpop.f32.mrb[0].mxu0
      %v4298 = vadd.f32 0.0, %v4297
      %v4299 = vpop.f32.mrb[0].mxu0
      %4300 = vmatprep.mubr.f32.mxu0 0.0
      %4301 = vmatmul.mubr.f32.gmra.mrb[0].mxu0 %v3940
      %v4302 = vpop.f32.mrb[0].mxu0
      %v4303 = vadd.f32 0.0, %v4302
      %v4304 = vpop.f32.mrb[0].mxu0
      %4305 = vmatprep.mubr.f32.mxu0 0.0
      %4306 = vmatmul.mubr.f32.gmra.mrb[0].mxu0 %v3943
      %v4307 = vpop.f32.mrb[0].mxu0
      %v4308 = vadd.f32 0.0, %v4307
      %v4309 = vpop.f32.mrb[0].mxu0
      %4310 = vmatprep.mubr.f32.mxu0 0.0
      %4311 = vmatmul.mubr.f32.gmra.mrb[0].mxu0 %v3946
      %v4312 = vpop.f32.mrb[0].mxu0
      %v4313 = vadd.f32 0.0, %v4312
      %v4314 = vpop.f32.mrb[0].mxu0
      %4315 = vmatprep.mubr.f32.mxu0 0.0
      %4316 = vmatmul.mubr.f32.gmra.mrb[0].mxu0 %v3949
      %v4317 = vpop.f32.mrb[0].mxu0
      %v4318 = vadd.f32 0.0, %v4317
      %v4319 = vpop.f32.mrb[0].mxu0
      %4320 = vmatprep.mubr.f32.mxu0 0.0
      %4321 = vmatmul.mubr.f32.gmra.mrb[0].mxu0 %v3952
      %v4322 = vpop.f32.mrb[0].mxu0
      %v4323 = vadd.f32 0.0, %v4322
      %v4324 = vpop.f32.mrb[0].mxu0
      %4325 = vmatprep.mubr.f32.mxu0 0.0
      %4326 = vmatmul.mubr.f32.gmra.mrb[0].mxu0 %v3955
      %v4327 = vpop.f32.mrb[0].mxu0
      %v4328 = vadd.f32 0.0, %v4327
      %v4329 = vpop.f32.mrb[0].mxu0
      %4330 = vmatprep.mubr.f32.mxu0 0.0
      %4331 = vmatmul.mubr.f32.gmra.mrb[0].mxu0 %v3958
      %v4332 = vpop.f32.mrb[0].mxu0
      %v4333 = vadd.f32 0.0, %v4332
      %v4334 = vpop.f32.mrb[0].mxu0
      %4335 = vmatprep.mubr.f32.mxu0 0.0
      %4336 = vmatmul.mubr.f32.gmra.mrb[0].mxu0 %v3961
      %v4337 = vpop.f32.mrb[0].mxu0
      %v4338 = vadd.f32 0.0, %v4337
      %v4339 = vpop.f32.mrb[0].mxu0
      %4340 = vmatprep.mubr.f32.mxu0 0.0
      %4341 = vmatmul.mubr.f32.gmra.mrb[0].mxu0 %v3964
      %v4342 = vpop.f32.mrb[0].mxu0
      %v4343 = vadd.f32 0.0, %v4342
      %v4344 = vpop.f32.mrb[0].mxu0
      %4345 = vmatprep.mubr.f32.mxu0 0.0
      %4346 = vmatmul.mubr.f32.gmra.mrb[0].mxu0 %v3967
      %v4347 = vpop.f32.mrb[0].mxu0
      %v4348 = vadd.f32 0.0, %v4347
      %v4349 = vpop.f32.mrb[0].mxu0
      %4350 = vmatprep.mubr.f32.mxu0 0.0
      %4351 = vmatmul.mubr.f32.gmra.mrb[0].mxu0 %v3970
      %v4352 = vpop.f32.mrb[0].mxu0
      %v4353 = vadd.f32 0.0, %v4352
      %v4354 = vpop.f32.mrb[0].mxu0
      %4355 = vmatprep.mubr.f32.mxu0 0.0
      %4356 = vmatmul.mubr.f32.gmra.mrb[0].mxu0 %v3973
      %v4357 = vpop.f32.mrb[0].mxu0
      %v4358 = vadd.f32 0.0, %v4357
      %v4359 = vpop.f32.mrb[0].mxu0
      %4360 = vmatprep.mubr.f32.mxu0 0.0
      %4361 = vmatmul.mubr.f32.gmra.mrb[0].mxu0 %v3976
      %v4362 = vpop.f32.mrb[0].mxu0
      %v4363 = vadd.f32 0.0, %v4362
      %v4364 = vpop.f32.mrb[0].mxu0
      %4365 = vdwg.mxu0
      %v4366 = vadd.f32 %v3656, %v4048
      %v4367 = vadd.f32 %v3657, %v4053
      %v4368 = vadd.f32 %v3658, %v4058
      %v4369 = vadd.f32 %v3659, %v4063
      %v4370 = vadd.f32 %v3660, %v4068
      %v4371 = vadd.f32 %v3661, %v4073
      %v4372 = vadd.f32 %v3662, %v4078
      %v4373 = vadd.f32 %v3663, %v4083
      %v4374 = vadd.f32 %v3664, %v4088
      %v4375 = vadd.f32 %v3665, %v4093
      %v4376 = vadd.f32 %v3666, %v4098
      %v4377 = vadd.f32 %v3667, %v4103
      %v4378 = vadd.f32 %v3668, %v4108
      %v4379 = vadd.f32 %v3669, %v4113
      %v4380 = vadd.f32 %v3670, %v4118
      %v4381 = vadd.f32 %v3671, %v4123
      %v4382 = vadd.f32 %v3672, %v4128
      %v4383 = vadd.f32 %v3673, %v4133
      %v4384 = vadd.f32 %v3674, %v4138
      %v4385 = vadd.f32 %v3675, %v4143
      %v4386 = vadd.f32 %v3676, %v4148
      %v4387 = vadd.f32 %v3677, %v4153
      %v4388 = vadd.f32 %v3678, %v4158
      %v4389 = vadd.f32 %v3679, %v4163
      %v4390 = vadd.f32 %v3680, %v4168
      %v4391 = vadd.f32 %v3681, %v4173
      %v4392 = vadd.f32 %v3682, %v4178
      %v4393 = vadd.f32 %v3683, %v4183
      %v4394 = vadd.f32 %v3684, %v4188
      %v4395 = vadd.f32 %v3685, %v4193
      %v4396 = vadd.f32 %v3686, %v4198
      %v4397 = vadd.f32 %v3687, %v4203
      %v4398 = vadd.f32 %v3688, %v4208
      %v4399 = vadd.f32 %v3689, %v4213
      %v4400 = vadd.f32 %v3690, %v4218
      %v4401 = vadd.f32 %v3691, %v4223
      %v4402 = vadd.f32 %v3692, %v4228
      %v4403 = vadd.f32 %v3693, %v4233
      %v4404 = vadd.f32 %v3694, %v4238
      %v4405 = vadd.f32 %v3695, %v4243
      %v4406 = vadd.f32 %v3696, %v4248
      %v4407 = vadd.f32 %v3697, %v4253
      %v4408 = vadd.f32 %v3698, %v4258
      %v4409 = vadd.f32 %v3699, %v4263
      %v4410 = vadd.f32 %v3700, %v4268
      %v4411 = vadd.f32 %v3701, %v4273
      %v4412 = vadd.f32 %v3702, %v4278
      %v4413 = vadd.f32 %v3703, %v4283
      %v4414 = vadd.f32 %v3704, %v4288
      %v4415 = vadd.f32 %v3705, %v4293
      %v4416 = vadd.f32 %v3706, %v4298
      %v4417 = vadd.f32 %v3707, %v4303
      %v4418 = vadd.f32 %v3708, %v4308
      %v4419 = vadd.f32 %v3709, %v4313
      %v4420 = vadd.f32 %v3710, %v4318
      %v4421 = vadd.f32 %v3711, %v4323
      %v4422 = vadd.f32 %v3712, %v4328
      %v4423 = vadd.f32 %v3713, %v4333
      %v4424 = vadd.f32 %v3714, %v4338
      %v4425 = vadd.f32 %v3715, %v4343
      %v4426 = vadd.f32 %v3716, %v4348
      %v4427 = vadd.f32 %v3717, %v4353
      %v4428 = vadd.f32 %v3718, %v4358
      %v4429 = vadd.f32 %v3719, %v4363
      %4430 = vst [vmem:[%s230] sm:$0xff] %v4366
      %4431 = vst [vmem:[%s230 + $0x8] sm:$0xff] %v4367
      %4432 = vst [vmem:[%s230 + $0x10] sm:$0xff] %v4368
      %4433 = vst [vmem:[%s230 + $0x18] sm:$0xff] %v4369
      %4434 = vst [vmem:[%s230 + $0x20] sm:$0xff] %v4370
      %4435 = vst [vmem:[%s230 + $0x28] sm:$0xff] %v4371
      %4436 = vst [vmem:[%s230 + $0x30] sm:$0xff] %v4372
      %4437 = vst [vmem:[%s230 + $0x38] sm:$0xff] %v4373
      %4438 = vst [vmem:[%s230 + $0x40] sm:$0xff] %v4374
      %4439 = vst [vmem:[%s230 + $0x48] sm:$0xff] %v4375
      %4440 = vst [vmem:[%s230 + $0x50] sm:$0xff] %v4376
      %4441 = vst [vmem:[%s230 + $0x58] sm:$0xff] %v4377
      %4442 = vst [vmem:[%s230 + $0x60] sm:$0xff] %v4378
      %4443 = vst [vmem:[%s230 + $0x68] sm:$0xff] %v4379
      %4444 = vst [vmem:[%s230 + $0x70] sm:$0xff] %v4380
      %4445 = vst [vmem:[%s230 + $0x78] sm:$0xff] %v4381
      %4446 = vst [vmem:[%s230 + $0x80] sm:$0xff] %v4382
      %4447 = vst [vmem:[%s230 + $0x88] sm:$0xff] %v4383
      %4448 = vst [vmem:[%s230 + $0x90] sm:$0xff] %v4384
      %4449 = vst [vmem:[%s230 + $0x98] sm:$0xff] %v4385
      %4450 = vst [vmem:[%s230 + $0xa0] sm:$0xff] %v4386
      %4451 = vst [vmem:[%s230 + $0xa8] sm:$0xff] %v4387
      %4452 = vst [vmem:[%s230 + $0xb0] sm:$0xff] %v4388
      %4453 = vst [vmem:[%s230 + $0xb8] sm:$0xff] %v4389
      %4454 = vst [vmem:[%s230 + $0xc0] sm:$0xff] %v4390
      %4455 = vst [vmem:[%s230 + $0xc8] sm:$0xff] %v4391
      %4456 = vst [vmem:[%s230 + $0xd0] sm:$0xff] %v4392
      %4457 = vst [vmem:[%s230 + $0xd8] sm:$0xff] %v4393
      %4458 = vst [vmem:[%s230 + $0xe0] sm:$0xff] %v4394
      %4459 = vst [vmem:[%s230 + $0xe8] sm:$0xff] %v4395
      %4460 = vst [vmem:[%s230 + $0xf0] sm:$0xff] %v4396
      %4461 = vst [vmem:[%s230 + $0xf8] sm:$0xff] %v4397
      %4462 = vst [vmem:[%s230 + $0x100] sm:$0xff] %v4398
      %4463 = vst [vmem:[%s230 + $0x108] sm:$0xff] %v4399
      %4464 = vst [vmem:[%s230 + $0x110] sm:$0xff] %v4400
      %4465 = vst [vmem:[%s230 + $0x118] sm:$0xff] %v4401
      %4466 = vst [vmem:[%s230 + $0x120] sm:$0xff] %v4402
      %4467 = vst [vmem:[%s230 + $0x128] sm:$0xff] %v4403
      %4468 = vst [vmem:[%s230 + $0x130] sm:$0xff] %v4404
      %4469 = vst [vmem:[%s230 + $0x138] sm:$0xff] %v4405
      %4470 = vst [vmem:[%s230 + $0x140] sm:$0xff] %v4406
      %4471 = vst [vmem:[%s230 + $0x148] sm:$0xff] %v4407
      %4472 = vst [vmem:[%s230 + $0x150] sm:$0xff] %v4408
      %4473 = vst [vmem:[%s230 + $0x158] sm:$0xff] %v4409
      %4474 = vst [vmem:[%s230 + $0x160] sm:$0xff] %v4410
      %4475 = vst [vmem:[%s230 + $0x168] sm:$0xff] %v4411
      %4476 = vst [vmem:[%s230 + $0x170] sm:$0xff] %v4412
      %4477 = vst [vmem:[%s230 + $0x178] sm:$0xff] %v4413
      %4478 = vst [vmem:[%s230 + $0x180] sm:$0xff] %v4414
      %4479 = vst [vmem:[%s230 + $0x188] sm:$0xff] %v4415
      %4480 = vst [vmem:[%s230 + $0x190] sm:$0xff] %v4416
      %4481 = vst [vmem:[%s230 + $0x198] sm:$0xff] %v4417
      %4482 = vst [vmem:[%s230 + $0x1a0] sm:$0xff] %v4418
      %4483 = vst [vmem:[%s230 + $0x1a8] sm:$0xff] %v4419
      %4484 = vst [vmem:[%s230 + $0x1b0] sm:$0xff] %v4420
      %4485 = vst [vmem:[%s230 + $0x1b8] sm:$0xff] %v4421
      %4486 = vst [vmem:[%s230 + $0x1c0] sm:$0xff] %v4422
      %4487 = vst [vmem:[%s230 + $0x1c8] sm:$0xff] %v4423
      %4488 = vst [vmem:[%s230 + $0x1d0] sm:$0xff] %v4424
      %4489 = vst [vmem:[%s230 + $0x1d8] sm:$0xff] %v4425
      %4490 = vst [vmem:[%s230 + $0x1e0] sm:$0xff] %v4426
      %4491 = vst [vmem:[%s230 + $0x1e8] sm:$0xff] %v4427
      %4492 = vst [vmem:[%s230 + $0x1f0] sm:$0xff] %v4428
      %4493 = vst [vmem:[%s230 + $0x1f8] sm:$0xff] %v4429
      %v4494 = vld [vmem:[%s230] sm:$0xff]
      %v4495 = vld [vmem:[%s230 + $0x8] sm:$0xff]
      %v4496 = vld [vmem:[%s230 + $0x10] sm:$0xff]
      %v4497 = vld [vmem:[%s230 + $0x18] sm:$0xff]
      %v4498 = vld [vmem:[%s230 + $0x20] sm:$0xff]
      %v4499 = vld [vmem:[%s230 + $0x28] sm:$0xff]
      %v4500 = vld [vmem:[%s230 + $0x30] sm:$0xff]
      %v4501 = vld [vmem:[%s230 + $0x38] sm:$0xff]
      %v4502 = vld [vmem:[%s230 + $0x40] sm:$0xff]
      %v4503 = vld [vmem:[%s230 + $0x48] sm:$0xff]
      %v4504 = vld [vmem:[%s230 + $0x50] sm:$0xff]
      %v4505 = vld [vmem:[%s230 + $0x58] sm:$0xff]
      %v4506 = vld [vmem:[%s230 + $0x60] sm:$0xff]
      %v4507 = vld [vmem:[%s230 + $0x68] sm:$0xff]
      %v4508 = vld [vmem:[%s230 + $0x70] sm:$0xff]
      %v4509 = vld [vmem:[%s230 + $0x78] sm:$0xff]
      %v4510 = vld [vmem:[%s230 + $0x80] sm:$0xff]
      %v4511 = vld [vmem:[%s230 + $0x88] sm:$0xff]
      %v4512 = vld [vmem:[%s230 + $0x90] sm:$0xff]
      %v4513 = vld [vmem:[%s230 + $0x98] sm:$0xff]
      %v4514 = vld [vmem:[%s230 + $0xa0] sm:$0xff]
      %v4515 = vld [vmem:[%s230 + $0xa8] sm:$0xff]
      %v4516 = vld [vmem:[%s230 + $0xb0] sm:$0xff]
      %v4517 = vld [vmem:[%s230 + $0xb8] sm:$0xff]
      %v4518 = vld [vmem:[%s230 + $0xc0] sm:$0xff]
      %v4519 = vld [vmem:[%s230 + $0xc8] sm:$0xff]
      %v4520 = vld [vmem:[%s230 + $0xd0] sm:$0xff]
      %v4521 = vld [vmem:[%s230 + $0xd8] sm:$0xff]
      %v4522 = vld [vmem:[%s230 + $0xe0] sm:$0xff]
      %v4523 = vld [vmem:[%s230 + $0xe8] sm:$0xff]
      %v4524 = vld [vmem:[%s230 + $0xf0] sm:$0xff]
      %v4525 = vld [vmem:[%s230 + $0xf8] sm:$0xff]
      %v4526 = vld [vmem:[%s230 + $0x100] sm:$0xff]
      %v4527 = vld [vmem:[%s230 + $0x108] sm:$0xff]
      %v4528 = vld [vmem:[%s230 + $0x110] sm:$0xff]
      %v4529 = vld [vmem:[%s230 + $0x118] sm:$0xff]
      %v4530 = vld [vmem:[%s230 + $0x120] sm:$0xff]
      %v4531 = vld [vmem:[%s230 + $0x128] sm:$0xff]
      %v4532 = vld [vmem:[%s230 + $0x130] sm:$0xff]
      %v4533 = vld [vmem:[%s230 + $0x138] sm:$0xff]
      %v4534 = vld [vmem:[%s230 + $0x140] sm:$0xff]
      %v4535 = vld [vmem:[%s230 + $0x148] sm:$0xff]
      %v4536 = vld [vmem:[%s230 + $0x150] sm:$0xff]
      %v4537 = vld [vmem:[%s230 + $0x158] sm:$0xff]
      %v4538 = vld [vmem:[%s230 + $0x160] sm:$0xff]
      %v4539 = vld [vmem:[%s230 + $0x168] sm:$0xff]
      %v4540 = vld [vmem:[%s230 + $0x170] sm:$0xff]
      %v4541 = vld [vmem:[%s230 + $0x178] sm:$0xff]
      %v4542 = vld [vmem:[%s230 + $0x180] sm:$0xff]
      %v4543 = vld [vmem:[%s230 + $0x188] sm:$0xff]
      %v4544 = vld [vmem:[%s230 + $0x190] sm:$0xff]
      %v4545 = vld [vmem:[%s230 + $0x198] sm:$0xff]
      %v4546 = vld [vmem:[%s230 + $0x1a0] sm:$0xff]
      %v4547 = vld [vmem:[%s230 + $0x1a8] sm:$0xff]
      %v4548 = vld [vmem:[%s230 + $0x1b0] sm:$0xff]
      %v4549 = vld [vmem:[%s230 + $0x1b8] sm:$0xff]
      %v4550 = vld [vmem:[%s230 + $0x1c0] sm:$0xff]
      %v4551 = vld [vmem:[%s230 + $0x1c8] sm:$0xff]
      %v4552 = vld [vmem:[%s230 + $0x1d0] sm:$0xff]
      %v4553 = vld [vmem:[%s230 + $0x1d8] sm:$0xff]
      %v4554 = vld [vmem:[%s230 + $0x1e0] sm:$0xff]
      %v4555 = vld [vmem:[%s230 + $0x1e8] sm:$0xff]
      %v4556 = vld [vmem:[%s230 + $0x1f0] sm:$0xff]
      %v4557 = vld [vmem:[%s230 + $0x1f8] sm:$0xff]
      %v4558 = vld [vmem:[%s216 + $0x14] sm:$0xff]
      %v4559 = vld [vmem:[%s216 + $0x1c] sm:$0xff]
      %v4560 = vld [vmem:[%s216 + $0x24] sm:$0xff]
      %v4561 = vld [vmem:[%s216 + $0x2c] sm:$0xff]
      %v4562 = vld [vmem:[%s216 + $0x34] sm:$0xff]
      %v4563 = vld [vmem:[%s216 + $0x3c] sm:$0xff]
      %v4564 = vld [vmem:[%s216 + $0x44] sm:$0xff]
      %v4565 = vld [vmem:[%s216 + $0x4c] sm:$0xff]
      %v4566 = vld [vmem:[%s216 + $0x54] sm:$0xff]
      %v4567 = vld [vmem:[%s216 + $0x5c] sm:$0xff]
      %v4568 = vld [vmem:[%s216 + $0x64] sm:$0xff]
      %v4569 = vld [vmem:[%s216 + $0x6c] sm:$0xff]
      %v4570 = vld [vmem:[%s216 + $0x74] sm:$0xff]
      %v4571 = vld [vmem:[%s216 + $0x7c] sm:$0xff]
      %v4572 = vld [vmem:[%s216 + $0x84] sm:$0xff]
      %v4573 = vld [vmem:[%s216 + $0x8c] sm:$0xff]
      %v4574 = vld [vmem:[%s216 + $0x94] sm:$0xff]
      %v4575 = vld [vmem:[%s216 + $0x9c] sm:$0xff]
      %v4576 = vld [vmem:[%s216 + $0xa4] sm:$0xff]
      %v4577 = vld [vmem:[%s216 + $0xac] sm:$0xff]
      %v4578 = vld [vmem:[%s216 + $0xb4] sm:$0xff]
      %v4579 = vld [vmem:[%s216 + $0xbc] sm:$0xff]
      %v4580 = vld [vmem:[%s216 + $0xc4] sm:$0xff]
      %v4581 = vld [vmem:[%s216 + $0xcc] sm:$0xff]
      %v4582 = vld [vmem:[%s216 + $0xd4] sm:$0xff]
      %v4583 = vld [vmem:[%s216 + $0xdc] sm:$0xff]
      %v4584 = vld [vmem:[%s216 + $0xe4] sm:$0xff]
      %v4585 = vld [vmem:[%s216 + $0xec] sm:$0xff]
      %v4586 = vld [vmem:[%s216 + $0xf4] sm:$0xff]
      %v4587 = vld [vmem:[%s216 + $0xfc] sm:$0xff]
      %v4588 = vld [vmem:[%s216 + $0x104] sm:$0xff]
      %v4589 = vld [vmem:[%s216 + $0x10c] sm:$0xff]
      %v4590 = vld [vmem:[%s216 + $0x114] sm:$0xff]
      %v4591 = vld [vmem:[%s216 + $0x11c] sm:$0xff]
      %v4592 = vld [vmem:[%s216 + $0x124] sm:$0xff]
      %v4593 = vld [vmem:[%s216 + $0x12c] sm:$0xff]
      %v4594 = vld [vmem:[%s216 + $0x134] sm:$0xff]
      %v4595 = vld [vmem:[%s216 + $0x13c] sm:$0xff]
      %v4596 = vld [vmem:[%s216 + $0x144] sm:$0xff]
      %v4597 = vld [vmem:[%s216 + $0x14c] sm:$0xff]
      %v4598 = vld [vmem:[%s216 + $0x154] sm:$0xff]
      %v4599 = vld [vmem:[%s216 + $0x15c] sm:$0xff]
      %v4600 = vld [vmem:[%s216 + $0x164] sm:$0xff]
      %v4601 = vld [vmem:[%s216 + $0x16c] sm:$0xff]
      %v4602 = vld [vmem:[%s216 + $0x174] sm:$0xff]
      %v4603 = vld [vmem:[%s216 + $0x17c] sm:$0xff]
      %v4604 = vld [vmem:[%s216 + $0x184] sm:$0xff]
      %v4605 = vld [vmem:[%s216 + $0x18c] sm:$0xff]
      %v4606 = vld [vmem:[%s216 + $0x194] sm:$0xff]
      %v4607 = vld [vmem:[%s216 + $0x19c] sm:$0xff]
      %v4608 = vld [vmem:[%s216 + $0x1a4] sm:$0xff]
      %v4609 = vld [vmem:[%s216 + $0x1ac] sm:$0xff]
      %v4610 = vld [vmem:[%s216 + $0x1b4] sm:$0xff]
      %v4611 = vld [vmem:[%s216 + $0x1bc] sm:$0xff]
      %v4612 = vld [vmem:[%s216 + $0x1c4] sm:$0xff]
      %v4613 = vld [vmem:[%s216 + $0x1cc] sm:$0xff]
      %v4614 = vld [vmem:[%s216 + $0x1d4] sm:$0xff]
      %v4615 = vld [vmem:[%s216 + $0x1dc] sm:$0xff]
      %v4616 = vld [vmem:[%s216 + $0x1e4] sm:$0xff]
      %v4617 = vld [vmem:[%s216 + $0x1ec] sm:$0xff]
      %v4618 = vld [vmem:[%s216 + $0x1f4] sm:$0xff]
      %v4619 = vld [vmem:[%s216 + $0x1fc] sm:$0xff]
      %v4620 = vld [vmem:[%s216 + $0x204] sm:$0xff]
      %v4621 = vld [vmem:[%s216 + $0x20c] sm:$0xff]
      %s4622 = scalar_lea.vmem %s1, 20
      %v4623 = vld [vmem:[%s4622] sm:$0xf]
      %v4625 = vsel %vm432, %v4558, 0
      %v4628 = vsel %vm432, %v4559, 0
      %v4631 = vsel %vm432, %v4560, 0
      %v4634 = vsel %vm432, %v4561, 0
      %v4637 = vsel %vm432, %v4562, 0
      %v4640 = vsel %vm432, %v4563, 0
      %v4643 = vsel %vm432, %v4564, 0
      %v4646 = vsel %vm432, %v4565, 0
      %v4649 = vsel %vm432, %v4566, 0
      %v4652 = vsel %vm432, %v4567, 0
      %v4655 = vsel %vm432, %v4568, 0
      %v4658 = vsel %vm432, %v4569, 0
      %v4661 = vsel %vm432, %v4570, 0
      %v4664 = vsel %vm432, %v4571, 0
      %v4667 = vsel %vm432, %v4572, 0
      %v4670 = vsel %vm432, %v4573, 0
      %v4673 = vsel %vm432, %v4574, 0
      %v4676 = vsel %vm432, %v4575, 0
      %v4679 = vsel %vm432, %v4576, 0
      %v4682 = vsel %vm432, %v4577, 0
      %v4685 = vsel %vm432, %v4578, 0
      %v4688 = vsel %vm432, %v4579, 0
      %v4691 = vsel %vm432, %v4580, 0
      %v4694 = vsel %vm432, %v4581, 0
      %v4697 = vsel %vm432, %v4582, 0
      %v4700 = vsel %vm432, %v4583, 0
      %v4703 = vsel %vm432, %v4584, 0
      %v4706 = vsel %vm432, %v4585, 0
      %v4709 = vsel %vm432, %v4586, 0
      %v4712 = vsel %vm432, %v4587, 0
      %v4715 = vsel %vm432, %v4588, 0
      %v4718 = vsel %vm432, %v4589, 0
      %v4721 = vsel %vm432, %v4590, 0
      %v4724 = vsel %vm432, %v4591, 0
      %v4727 = vsel %vm432, %v4592, 0
      %v4730 = vsel %vm432, %v4593, 0
      %v4733 = vsel %vm432, %v4594, 0
      %v4736 = vsel %vm432, %v4595, 0
      %v4739 = vsel %vm432, %v4596, 0
      %v4742 = vsel %vm432, %v4597, 0
      %v4745 = vsel %vm432, %v4598, 0
      %v4748 = vsel %vm432, %v4599, 0
      %v4751 = vsel %vm432, %v4600, 0
      %v4754 = vsel %vm432, %v4601, 0
      %v4757 = vsel %vm432, %v4602, 0
      %v4760 = vsel %vm432, %v4603, 0
      %v4763 = vsel %vm432, %v4604, 0
      %v4766 = vsel %vm432, %v4605, 0
      %v4769 = vsel %vm432, %v4606, 0
      %v4772 = vsel %vm432, %v4607, 0
      %v4775 = vsel %vm432, %v4608, 0
      %v4778 = vsel %vm432, %v4609, 0
      %v4781 = vsel %vm432, %v4610, 0
      %v4784 = vsel %vm432, %v4611, 0
      %v4787 = vsel %vm432, %v4612, 0
      %v4790 = vsel %vm432, %v4613, 0
      %v4793 = vsel %vm432, %v4614, 0
      %v4796 = vsel %vm432, %v4615, 0
      %v4799 = vsel %vm432, %v4616, 0
      %v4802 = vsel %vm432, %v4617, 0
      %v4805 = vsel %vm432, %v4618, 0
      %v4808 = vsel %vm432, %v4619, 0
      %v4811 = vsel %vm432, %v4620, 0
      %v4814 = vsel %vm432, %v4621, 0
      %v4817 = vsel %vm625, %v4623, 0
      %4819 = vmatprep.subr.mxu0 0.0
      %4820 = vmatpush1.msra.mxu0 %v4817
      %4821 = vmatprep.subr.mxu0 0.0
      %4822 = vmatpush1.msra.mxu0 0.0
      %4823 = vmatprep.subr.mxu0 0.0
      %4824 = vmatpush1.msra.mxu0 0.0
      %4825 = vmatprep.subr.mxu0 0.0
      %4826 = vmatpush1.msra.mxu0 0.0
      %4827 = vmatprep.subr.mxu0 0.0
      %4828 = vmatpush1.msra.mxu0 0.0
      %4829 = vmatprep.subr.mxu0 0.0
      %4830 = vmatpush1.msra.mxu0 0.0
      %4831 = vmatprep.subr.mxu0 0.0
      %4832 = vmatpush1.msra.mxu0 0.0
      %4833 = vmatprep.subr.mxu0 0.0
      %4834 = vmatpush1.msra.mxu0 0.0
      %4835 = vmatprep.subr.mxu0 0.0
      %4836 = vmatpush1.msra.mxu0 0.0
      %4837 = vmatprep.subr.mxu0 0.0
      %4838 = vmatpush1.msra.mxu0 0.0
      %4839 = vmatprep.subr.mxu0 0.0
      %4840 = vmatpush1.msra.mxu0 0.0
      %4841 = vmatprep.subr.mxu0 0.0
      %4842 = vmatpush1.msra.mxu0 0.0
      %4843 = vmatprep.subr.mxu0 0.0
      %4844 = vmatpush1.msra.mxu0 0.0
      %4845 = vmatprep.subr.mxu0 0.0
      %4846 = vmatpush1.msra.mxu0 0.0
      %4847 = vmatprep.subr.mxu0 0.0
      %4848 = vmatpush1.msra.mxu0 0.0
      %4849 = vmatprep.subr.mxu0 0.0
      %4850 = vmatpush1.msra.mxu0 0.0
      %4851 = vmatprep.subr.mxu0 0.0
      %4852 = vmatpush1.msra.mxu0 0.0
      %4853 = vmatprep.subr.mxu0 0.0
      %4854 = vmatpush1.msra.mxu0 0.0
      %4855 = vmatprep.subr.mxu0 0.0
      %4856 = vmatpush1.msra.mxu0 0.0
      %4857 = vmatprep.subr.mxu0 0.0
      %4858 = vmatpush1.msra.mxu0 0.0
      %4859 = vmatprep.subr.mxu0 0.0
      %4860 = vmatpush1.msra.mxu0 0.0
      %4861 = vmatprep.subr.mxu0 0.0
      %4862 = vmatpush1.msra.mxu0 0.0
      %4863 = vmatprep.subr.mxu0 0.0
      %4864 = vmatpush1.msra.mxu0 0.0
      %4865 = vmatprep.subr.mxu0 0.0
      %4866 = vmatpush1.msra.mxu0 0.0
      %4867 = vmatprep.subr.mxu0 0.0
      %4868 = vmatpush1.msra.mxu0 0.0
      %4869 = vmatprep.subr.mxu0 0.0
      %4870 = vmatpush1.msra.mxu0 0.0
      %4871 = vmatprep.subr.mxu0 0.0
      %4872 = vmatpush1.msra.mxu0 0.0
      %4873 = vmatprep.subr.mxu0 0.0
      %4874 = vmatpush1.msra.mxu0 0.0
      %4875 = vmatprep.subr.mxu0 0.0
      %4876 = vmatpush1.msra.mxu0 0.0
      %4877 = vmatprep.subr.mxu0 0.0
      %4878 = vmatpush1.msra.mxu0 0.0
      %4879 = vmatprep.subr.mxu0 0.0
      %4880 = vmatpush1.msra.mxu0 0.0
      %4881 = vmatprep.subr.mxu0 0.0
      %4882 = vmatpush1.msra.mxu0 0.0
      %4883 = vmatprep.mubr.f32.mxu0 0.0
      %4884 = vmatmul.mubr.f32.gmra.mrb[0].mxu0 %v4625
      %v4885 = vpop.f32.mrb[0].mxu0
      %v4886 = vadd.f32 0.0, %v4885
      %v4887 = vpop.f32.mrb[0].mxu0
      %4888 = vmatprep.mubr.f32.mxu0 0.0
      %4889 = vmatmul.mubr.f32.gmra.mrb[0].mxu0 %v4628
      %v4890 = vpop.f32.mrb[0].mxu0
      %v4891 = vadd.f32 0.0, %v4890
      %v4892 = vpop.f32.mrb[0].mxu0
      %4893 = vmatprep.mubr.f32.mxu0 0.0
      %4894 = vmatmul.mubr.f32.gmra.mrb[0].mxu0 %v4631
      %v4895 = vpop.f32.mrb[0].mxu0
      %v4896 = vadd.f32 0.0, %v4895
      %v4897 = vpop.f32.mrb[0].mxu0
      %4898 = vmatprep.mubr.f32.mxu0 0.0
      %4899 = vmatmul.mubr.f32.gmra.mrb[0].mxu0 %v4634
      %v4900 = vpop.f32.mrb[0].mxu0
      %v4901 = vadd.f32 0.0, %v4900
      %v4902 = vpop.f32.mrb[0].mxu0
      %4903 = vmatprep.mubr.f32.mxu0 0.0
      %4904 = vmatmul.mubr.f32.gmra.mrb[0].mxu0 %v4637
      %v4905 = vpop.f32.mrb[0].mxu0
      %v4906 = vadd.f32 0.0, %v4905
      %v4907 = vpop.f32.mrb[0].mxu0
      %4908 = vmatprep.mubr.f32.mxu0 0.0
      %4909 = vmatmul.mubr.f32.gmra.mrb[0].mxu0 %v4640
      %v4910 = vpop.f32.mrb[0].mxu0
      %v4911 = vadd.f32 0.0, %v4910
      %v4912 = vpop.f32.mrb[0].mxu0
      %4913 = vmatprep.mubr.f32.mxu0 0.0
      %4914 = vmatmul.mubr.f32.gmra.mrb[0].mxu0 %v4643
      %v4915 = vpop.f32.mrb[0].mxu0
      %v4916 = vadd.f32 0.0, %v4915
      %v4917 = vpop.f32.mrb[0].mxu0
      %4918 = vmatprep.mubr.f32.mxu0 0.0
      %4919 = vmatmul.mubr.f32.gmra.mrb[0].mxu0 %v4646
      %v4920 = vpop.f32.mrb[0].mxu0
      %v4921 = vadd.f32 0.0, %v4920
      %v4922 = vpop.f32.mrb[0].mxu0
      %4923 = vmatprep.mubr.f32.mxu0 0.0
      %4924 = vmatmul.mubr.f32.gmra.mrb[0].mxu0 %v4649
      %v4925 = vpop.f32.mrb[0].mxu0
      %v4926 = vadd.f32 0.0, %v4925
      %v4927 = vpop.f32.mrb[0].mxu0
      %4928 = vmatprep.mubr.f32.mxu0 0.0
      %4929 = vmatmul.mubr.f32.gmra.mrb[0].mxu0 %v4652
      %v4930 = vpop.f32.mrb[0].mxu0
      %v4931 = vadd.f32 0.0, %v4930
      %v4932 = vpop.f32.mrb[0].mxu0
      %4933 = vmatprep.mubr.f32.mxu0 0.0
      %4934 = vmatmul.mubr.f32.gmra.mrb[0].mxu0 %v4655
      %v4935 = vpop.f32.mrb[0].mxu0
      %v4936 = vadd.f32 0.0, %v4935
      %v4937 = vpop.f32.mrb[0].mxu0
      %4938 = vmatprep.mubr.f32.mxu0 0.0
      %4939 = vmatmul.mubr.f32.gmra.mrb[0].mxu0 %v4658
      %v4940 = vpop.f32.mrb[0].mxu0
      %v4941 = vadd.f32 0.0, %v4940
      %v4942 = vpop.f32.mrb[0].mxu0
      %4943 = vmatprep.mubr.f32.mxu0 0.0
      %4944 = vmatmul.mubr.f32.gmra.mrb[0].mxu0 %v4661
      %v4945 = vpop.f32.mrb[0].mxu0
      %v4946 = vadd.f32 0.0, %v4945
      %v4947 = vpop.f32.mrb[0].mxu0
      %4948 = vmatprep.mubr.f32.mxu0 0.0
      %4949 = vmatmul.mubr.f32.gmra.mrb[0].mxu0 %v4664
      %v4950 = vpop.f32.mrb[0].mxu0
      %v4951 = vadd.f32 0.0, %v4950
      %v4952 = vpop.f32.mrb[0].mxu0
      %4953 = vmatprep.mubr.f32.mxu0 0.0
      %4954 = vmatmul.mubr.f32.gmra.mrb[0].mxu0 %v4667
      %v4955 = vpop.f32.mrb[0].mxu0
      %v4956 = vadd.f32 0.0, %v4955
      %v4957 = vpop.f32.mrb[0].mxu0
      %4958 = vmatprep.mubr.f32.mxu0 0.0
      %4959 = vmatmul.mubr.f32.gmra.mrb[0].mxu0 %v4670
      %v4960 = vpop.f32.mrb[0].mxu0
      %v4961 = vadd.f32 0.0, %v4960
      %v4962 = vpop.f32.mrb[0].mxu0
      %4963 = vmatprep.mubr.f32.mxu0 0.0
      %4964 = vmatmul.mubr.f32.gmra.mrb[0].mxu0 %v4673
      %v4965 = vpop.f32.mrb[0].mxu0
      %v4966 = vadd.f32 0.0, %v4965
      %v4967 = vpop.f32.mrb[0].mxu0
      %4968 = vmatprep.mubr.f32.mxu0 0.0
      %4969 = vmatmul.mubr.f32.gmra.mrb[0].mxu0 %v4676
      %v4970 = vpop.f32.mrb[0].mxu0
      %v4971 = vadd.f32 0.0, %v4970
      %v4972 = vpop.f32.mrb[0].mxu0
      %4973 = vmatprep.mubr.f32.mxu0 0.0
      %4974 = vmatmul.mubr.f32.gmra.mrb[0].mxu0 %v4679
      %v4975 = vpop.f32.mrb[0].mxu0
      %v4976 = vadd.f32 0.0, %v4975
      %v4977 = vpop.f32.mrb[0].mxu0
      %4978 = vmatprep.mubr.f32.mxu0 0.0
      %4979 = vmatmul.mubr.f32.gmra.mrb[0].mxu0 %v4682
      %v4980 = vpop.f32.mrb[0].mxu0
      %v4981 = vadd.f32 0.0, %v4980
      %v4982 = vpop.f32.mrb[0].mxu0
      %4983 = vmatprep.mubr.f32.mxu0 0.0
      %4984 = vmatmul.mubr.f32.gmra.mrb[0].mxu0 %v4685
      %v4985 = vpop.f32.mrb[0].mxu0
      %v4986 = vadd.f32 0.0, %v4985
      %v4987 = vpop.f32.mrb[0].mxu0
      %4988 = vmatprep.mubr.f32.mxu0 0.0
      %4989 = vmatmul.mubr.f32.gmra.mrb[0].mxu0 %v4688
      %v4990 = vpop.f32.mrb[0].mxu0
      %v4991 = vadd.f32 0.0, %v4990
      %v4992 = vpop.f32.mrb[0].mxu0
      %4993 = vmatprep.mubr.f32.mxu0 0.0
      %4994 = vmatmul.mubr.f32.gmra.mrb[0].mxu0 %v4691
      %v4995 = vpop.f32.mrb[0].mxu0
      %v4996 = vadd.f32 0.0, %v4995
      %v4997 = vpop.f32.mrb[0].mxu0
      %4998 = vmatprep.mubr.f32.mxu0 0.0
      %4999 = vmatmul.mubr.f32.gmra.mrb[0].mxu0 %v4694
      %v5000 = vpop.f32.mrb[0].mxu0
      %v5001 = vadd.f32 0.0, %v5000
      %v5002 = vpop.f32.mrb[0].mxu0
      %5003 = vmatprep.mubr.f32.mxu0 0.0
      %5004 = vmatmul.mubr.f32.gmra.mrb[0].mxu0 %v4697
      %v5005 = vpop.f32.mrb[0].mxu0
      %v5006 = vadd.f32 0.0, %v5005
      %v5007 = vpop.f32.mrb[0].mxu0
      %5008 = vmatprep.mubr.f32.mxu0 0.0
      %5009 = vmatmul.mubr.f32.gmra.mrb[0].mxu0 %v4700
      %v5010 = vpop.f32.mrb[0].mxu0
      %v5011 = vadd.f32 0.0, %v5010
      %v5012 = vpop.f32.mrb[0].mxu0
      %5013 = vmatprep.mubr.f32.mxu0 0.0
      %5014 = vmatmul.mubr.f32.gmra.mrb[0].mxu0 %v4703
      %v5015 = vpop.f32.mrb[0].mxu0
      %v5016 = vadd.f32 0.0, %v5015
      %v5017 = vpop.f32.mrb[0].mxu0
      %5018 = vmatprep.mubr.f32.mxu0 0.0
      %5019 = vmatmul.mubr.f32.gmra.mrb[0].mxu0 %v4706
      %v5020 = vpop.f32.mrb[0].mxu0
      %v5021 = vadd.f32 0.0, %v5020
      %v5022 = vpop.f32.mrb[0].mxu0
      %5023 = vmatprep.mubr.f32.mxu0 0.0
      %5024 = vmatmul.mubr.f32.gmra.mrb[0].mxu0 %v4709
      %v5025 = vpop.f32.mrb[0].mxu0
      %v5026 = vadd.f32 0.0, %v5025
      %v5027 = vpop.f32.mrb[0].mxu0
      %5028 = vmatprep.mubr.f32.mxu0 0.0
      %5029 = vmatmul.mubr.f32.gmra.mrb[0].mxu0 %v4712
      %v5030 = vpop.f32.mrb[0].mxu0
      %v5031 = vadd.f32 0.0, %v5030
      %v5032 = vpop.f32.mrb[0].mxu0
      %5033 = vmatprep.mubr.f32.mxu0 0.0
      %5034 = vmatmul.mubr.f32.gmra.mrb[0].mxu0 %v4715
      %v5035 = vpop.f32.mrb[0].mxu0
      %v5036 = vadd.f32 0.0, %v5035
      %v5037 = vpop.f32.mrb[0].mxu0
      %5038 = vmatprep.mubr.f32.mxu0 0.0
      %5039 = vmatmul.mubr.f32.gmra.mrb[0].mxu0 %v4718
      %v5040 = vpop.f32.mrb[0].mxu0
      %v5041 = vadd.f32 0.0, %v5040
      %v5042 = vpop.f32.mrb[0].mxu0
      %5043 = vmatprep.mubr.f32.mxu0 0.0
      %5044 = vmatmul.mubr.f32.gmra.mrb[0].mxu0 %v4721
      %v5045 = vpop.f32.mrb[0].mxu0
      %v5046 = vadd.f32 0.0, %v5045
      %v5047 = vpop.f32.mrb[0].mxu0
      %5048 = vmatprep.mubr.f32.mxu0 0.0
      %5049 = vmatmul.mubr.f32.gmra.mrb[0].mxu0 %v4724
      %v5050 = vpop.f32.mrb[0].mxu0
      %v5051 = vadd.f32 0.0, %v5050
      %v5052 = vpop.f32.mrb[0].mxu0
      %5053 = vmatprep.mubr.f32.mxu0 0.0
      %5054 = vmatmul.mubr.f32.gmra.mrb[0].mxu0 %v4727
      %v5055 = vpop.f32.mrb[0].mxu0
      %v5056 = vadd.f32 0.0, %v5055
      %v5057 = vpop.f32.mrb[0].mxu0
      %5058 = vmatprep.mubr.f32.mxu0 0.0
      %5059 = vmatmul.mubr.f32.gmra.mrb[0].mxu0 %v4730
      %v5060 = vpop.f32.mrb[0].mxu0
      %v5061 = vadd.f32 0.0, %v5060
      %v5062 = vpop.f32.mrb[0].mxu0
      %5063 = vmatprep.mubr.f32.mxu0 0.0
      %5064 = vmatmul.mubr.f32.gmra.mrb[0].mxu0 %v4733
      %v5065 = vpop.f32.mrb[0].mxu0
      %v5066 = vadd.f32 0.0, %v5065
      %v5067 = vpop.f32.mrb[0].mxu0
      %5068 = vmatprep.mubr.f32.mxu0 0.0
      %5069 = vmatmul.mubr.f32.gmra.mrb[0].mxu0 %v4736
      %v5070 = vpop.f32.mrb[0].mxu0
      %v5071 = vadd.f32 0.0, %v5070
      %v5072 = vpop.f32.mrb[0].mxu0
      %5073 = vmatprep.mubr.f32.mxu0 0.0
      %5074 = vmatmul.mubr.f32.gmra.mrb[0].mxu0 %v4739
      %v5075 = vpop.f32.mrb[0].mxu0
      %v5076 = vadd.f32 0.0, %v5075
      %v5077 = vpop.f32.mrb[0].mxu0
      %5078 = vmatprep.mubr.f32.mxu0 0.0
      %5079 = vmatmul.mubr.f32.gmra.mrb[0].mxu0 %v4742
      %v5080 = vpop.f32.mrb[0].mxu0
      %v5081 = vadd.f32 0.0, %v5080
      %v5082 = vpop.f32.mrb[0].mxu0
      %5083 = vmatprep.mubr.f32.mxu0 0.0
      %5084 = vmatmul.mubr.f32.gmra.mrb[0].mxu0 %v4745
      %v5085 = vpop.f32.mrb[0].mxu0
      %v5086 = vadd.f32 0.0, %v5085
      %v5087 = vpop.f32.mrb[0].mxu0
      %5088 = vmatprep.mubr.f32.mxu0 0.0
      %5089 = vmatmul.mubr.f32.gmra.mrb[0].mxu0 %v4748
      %v5090 = vpop.f32.mrb[0].mxu0
      %v5091 = vadd.f32 0.0, %v5090
      %v5092 = vpop.f32.mrb[0].mxu0
      %5093 = vmatprep.mubr.f32.mxu0 0.0
      %5094 = vmatmul.mubr.f32.gmra.mrb[0].mxu0 %v4751
      %v5095 = vpop.f32.mrb[0].mxu0
      %v5096 = vadd.f32 0.0, %v5095
      %v5097 = vpop.f32.mrb[0].mxu0
      %5098 = vmatprep.mubr.f32.mxu0 0.0
      %5099 = vmatmul.mubr.f32.gmra.mrb[0].mxu0 %v4754
      %v5100 = vpop.f32.mrb[0].mxu0
      %v5101 = vadd.f32 0.0, %v5100
      %v5102 = vpop.f32.mrb[0].mxu0
      %5103 = vmatprep.mubr.f32.mxu0 0.0
      %5104 = vmatmul.mubr.f32.gmra.mrb[0].mxu0 %v4757
      %v5105 = vpop.f32.mrb[0].mxu0
      %v5106 = vadd.f32 0.0, %v5105
      %v5107 = vpop.f32.mrb[0].mxu0
      %5108 = vmatprep.mubr.f32.mxu0 0.0
      %5109 = vmatmul.mubr.f32.gmra.mrb[0].mxu0 %v4760
      %v5110 = vpop.f32.mrb[0].mxu0
      %v5111 = vadd.f32 0.0, %v5110
      %v5112 = vpop.f32.mrb[0].mxu0
      %5113 = vmatprep.mubr.f32.mxu0 0.0
      %5114 = vmatmul.mubr.f32.gmra.mrb[0].mxu0 %v4763
      %v5115 = vpop.f32.mrb[0].mxu0
      %v5116 = vadd.f32 0.0, %v5115
      %v5117 = vpop.f32.mrb[0].mxu0
      %5118 = vmatprep.mubr.f32.mxu0 0.0
      %5119 = vmatmul.mubr.f32.gmra.mrb[0].mxu0 %v4766
      %v5120 = vpop.f32.mrb[0].mxu0
      %v5121 = vadd.f32 0.0, %v5120
      %v5122 = vpop.f32.mrb[0].mxu0
      %5123 = vmatprep.mubr.f32.mxu0 0.0
      %5124 = vmatmul.mubr.f32.gmra.mrb[0].mxu0 %v4769
      %v5125 = vpop.f32.mrb[0].mxu0
      %v5126 = vadd.f32 0.0, %v5125
      %v5127 = vpop.f32.mrb[0].mxu0
      %5128 = vmatprep.mubr.f32.mxu0 0.0
      %5129 = vmatmul.mubr.f32.gmra.mrb[0].mxu0 %v4772
      %v5130 = vpop.f32.mrb[0].mxu0
      %v5131 = vadd.f32 0.0, %v5130
      %v5132 = vpop.f32.mrb[0].mxu0
      %5133 = vmatprep.mubr.f32.mxu0 0.0
      %5134 = vmatmul.mubr.f32.gmra.mrb[0].mxu0 %v4775
      %v5135 = vpop.f32.mrb[0].mxu0
      %v5136 = vadd.f32 0.0, %v5135
      %v5137 = vpop.f32.mrb[0].mxu0
      %5138 = vmatprep.mubr.f32.mxu0 0.0
      %5139 = vmatmul.mubr.f32.gmra.mrb[0].mxu0 %v4778
      %v5140 = vpop.f32.mrb[0].mxu0
      %v5141 = vadd.f32 0.0, %v5140
      %v5142 = vpop.f32.mrb[0].mxu0
      %5143 = vmatprep.mubr.f32.mxu0 0.0
      %5144 = vmatmul.mubr.f32.gmra.mrb[0].mxu0 %v4781
      %v5145 = vpop.f32.mrb[0].mxu0
      %v5146 = vadd.f32 0.0, %v5145
      %v5147 = vpop.f32.mrb[0].mxu0
      %5148 = vmatprep.mubr.f32.mxu0 0.0
      %5149 = vmatmul.mubr.f32.gmra.mrb[0].mxu0 %v4784
      %v5150 = vpop.f32.mrb[0].mxu0
      %v5151 = vadd.f32 0.0, %v5150
      %v5152 = vpop.f32.mrb[0].mxu0
      %5153 = vmatprep.mubr.f32.mxu0 0.0
      %5154 = vmatmul.mubr.f32.gmra.mrb[0].mxu0 %v4787
      %v5155 = vpop.f32.mrb[0].mxu0
      %v5156 = vadd.f32 0.0, %v5155
      %v5157 = vpop.f32.mrb[0].mxu0
      %5158 = vmatprep.mubr.f32.mxu0 0.0
      %5159 = vmatmul.mubr.f32.gmra.mrb[0].mxu0 %v4790
      %v5160 = vpop.f32.mrb[0].mxu0
      %v5161 = vadd.f32 0.0, %v5160
      %v5162 = vpop.f32.mrb[0].mxu0
      %5163 = vmatprep.mubr.f32.mxu0 0.0
      %5164 = vmatmul.mubr.f32.gmra.mrb[0].mxu0 %v4793
      %v5165 = vpop.f32.mrb[0].mxu0
      %v5166 = vadd.f32 0.0, %v5165
      %v5167 = vpop.f32.mrb[0].mxu0
      %5168 = vmatprep.mubr.f32.mxu0 0.0
      %5169 = vmatmul.mubr.f32.gmra.mrb[0].mxu0 %v4796
      %v5170 = vpop.f32.mrb[0].mxu0
      %v5171 = vadd.f32 0.0, %v5170
      %v5172 = vpop.f32.mrb[0].mxu0
      %5173 = vmatprep.mubr.f32.mxu0 0.0
      %5174 = vmatmul.mubr.f32.gmra.mrb[0].mxu0 %v4799
      %v5175 = vpop.f32.mrb[0].mxu0
      %v5176 = vadd.f32 0.0, %v5175
      %v5177 = vpop.f32.mrb[0].mxu0
      %5178 = vmatprep.mubr.f32.mxu0 0.0
      %5179 = vmatmul.mubr.f32.gmra.mrb[0].mxu0 %v4802
      %v5180 = vpop.f32.mrb[0].mxu0
      %v5181 = vadd.f32 0.0, %v5180
      %v5182 = vpop.f32.mrb[0].mxu0
      %5183 = vmatprep.mubr.f32.mxu0 0.0
      %5184 = vmatmul.mubr.f32.gmra.mrb[0].mxu0 %v4805
      %v5185 = vpop.f32.mrb[0].mxu0
      %v5186 = vadd.f32 0.0, %v5185
      %v5187 = vpop.f32.mrb[0].mxu0
      %5188 = vmatprep.mubr.f32.mxu0 0.0
      %5189 = vmatmul.mubr.f32.gmra.mrb[0].mxu0 %v4808
      %v5190 = vpop.f32.mrb[0].mxu0
      %v5191 = vadd.f32 0.0, %v5190
      %v5192 = vpop.f32.mrb[0].mxu0
      %5193 = vmatprep.mubr.f32.mxu0 0.0
      %5194 = vmatmul.mubr.f32.gmra.mrb[0].mxu0 %v4811
      %v5195 = vpop.f32.mrb[0].mxu0
      %v5196 = vadd.f32 0.0, %v5195
      %v5197 = vpop.f32.mrb[0].mxu0
      %5198 = vmatprep.mubr.f32.mxu0 0.0
      %5199 = vmatmul.mubr.f32.gmra.mrb[0].mxu0 %v4814
      %v5200 = vpop.f32.mrb[0].mxu0
      %v5201 = vadd.f32 0.0, %v5200
      %v5202 = vpop.f32.mrb[0].mxu0
      %5203 = vdwg.mxu0
      %v5204 = vadd.f32 %v4494, %v4886
      %v5205 = vadd.f32 %v4495, %v4891
      %v5206 = vadd.f32 %v4496, %v4896
      %v5207 = vadd.f32 %v4497, %v4901
      %v5208 = vadd.f32 %v4498, %v4906
      %v5209 = vadd.f32 %v4499, %v4911
      %v5210 = vadd.f32 %v4500, %v4916
      %v5211 = vadd.f32 %v4501, %v4921
      %v5212 = vadd.f32 %v4502, %v4926
      %v5213 = vadd.f32 %v4503, %v4931
      %v5214 = vadd.f32 %v4504, %v4936
      %v5215 = vadd.f32 %v4505, %v4941
      %v5216 = vadd.f32 %v4506, %v4946
      %v5217 = vadd.f32 %v4507, %v4951
      %v5218 = vadd.f32 %v4508, %v4956
      %v5219 = vadd.f32 %v4509, %v4961
      %v5220 = vadd.f32 %v4510, %v4966
      %v5221 = vadd.f32 %v4511, %v4971
      %v5222 = vadd.f32 %v4512, %v4976
      %v5223 = vadd.f32 %v4513, %v4981
      %v5224 = vadd.f32 %v4514, %v4986
      %v5225 = vadd.f32 %v4515, %v4991
      %v5226 = vadd.f32 %v4516, %v4996
      %v5227 = vadd.f32 %v4517, %v5001
      %v5228 = vadd.f32 %v4518, %v5006
      %v5229 = vadd.f32 %v4519, %v5011
      %v5230 = vadd.f32 %v4520, %v5016
      %v5231 = vadd.f32 %v4521, %v5021
      %v5232 = vadd.f32 %v4522, %v5026
      %v5233 = vadd.f32 %v4523, %v5031
      %v5234 = vadd.f32 %v4524, %v5036
      %v5235 = vadd.f32 %v4525, %v5041
      %v5236 = vadd.f32 %v4526, %v5046
      %v5237 = vadd.f32 %v4527, %v5051
      %v5238 = vadd.f32 %v4528, %v5056
      %v5239 = vadd.f32 %v4529, %v5061
      %v5240 = vadd.f32 %v4530, %v5066
      %v5241 = vadd.f32 %v4531, %v5071
      %v5242 = vadd.f32 %v4532, %v5076
      %v5243 = vadd.f32 %v4533, %v5081
      %v5244 = vadd.f32 %v4534, %v5086
      %v5245 = vadd.f32 %v4535, %v5091
      %v5246 = vadd.f32 %v4536, %v5096
      %v5247 = vadd.f32 %v4537, %v5101
      %v5248 = vadd.f32 %v4538, %v5106
      %v5249 = vadd.f32 %v4539, %v5111
      %v5250 = vadd.f32 %v4540, %v5116
      %v5251 = vadd.f32 %v4541, %v5121
      %v5252 = vadd.f32 %v4542, %v5126
      %v5253 = vadd.f32 %v4543, %v5131
      %v5254 = vadd.f32 %v4544, %v5136
      %v5255 = vadd.f32 %v4545, %v5141
      %v5256 = vadd.f32 %v4546, %v5146
      %v5257 = vadd.f32 %v4547, %v5151
      %v5258 = vadd.f32 %v4548, %v5156
      %v5259 = vadd.f32 %v4549, %v5161
      %v5260 = vadd.f32 %v4550, %v5166
      %v5261 = vadd.f32 %v4551, %v5171
      %v5262 = vadd.f32 %v4552, %v5176
      %v5263 = vadd.f32 %v4553, %v5181
      %v5264 = vadd.f32 %v4554, %v5186
      %v5265 = vadd.f32 %v4555, %v5191
      %v5266 = vadd.f32 %v4556, %v5196
      %v5267 = vadd.f32 %v4557, %v5201
      %5268 = vst [vmem:[%s230] sm:$0xff] %v5204
      %5269 = vst [vmem:[%s230 + $0x8] sm:$0xff] %v5205
      %5270 = vst [vmem:[%s230 + $0x10] sm:$0xff] %v5206
      %5271 = vst [vmem:[%s230 + $0x18] sm:$0xff] %v5207
      %5272 = vst [vmem:[%s230 + $0x20] sm:$0xff] %v5208
      %5273 = vst [vmem:[%s230 + $0x28] sm:$0xff] %v5209
      %5274 = vst [vmem:[%s230 + $0x30] sm:$0xff] %v5210
      %5275 = vst [vmem:[%s230 + $0x38] sm:$0xff] %v5211
      %5276 = vst [vmem:[%s230 + $0x40] sm:$0xff] %v5212
      %5277 = vst [vmem:[%s230 + $0x48] sm:$0xff] %v5213
      %5278 = vst [vmem:[%s230 + $0x50] sm:$0xff] %v5214
      %5279 = vst [vmem:[%s230 + $0x58] sm:$0xff] %v5215
      %5280 = vst [vmem:[%s230 + $0x60] sm:$0xff] %v5216
      %5281 = vst [vmem:[%s230 + $0x68] sm:$0xff] %v5217
      %5282 = vst [vmem:[%s230 + $0x70] sm:$0xff] %v5218
      %5283 = vst [vmem:[%s230 + $0x78] sm:$0xff] %v5219
      %5284 = vst [vmem:[%s230 + $0x80] sm:$0xff] %v5220
      %5285 = vst [vmem:[%s230 + $0x88] sm:$0xff] %v5221
      %5286 = vst [vmem:[%s230 + $0x90] sm:$0xff] %v5222
      %5287 = vst [vmem:[%s230 + $0x98] sm:$0xff] %v5223
      %5288 = vst [vmem:[%s230 + $0xa0] sm:$0xff] %v5224
      %5289 = vst [vmem:[%s230 + $0xa8] sm:$0xff] %v5225
      %5290 = vst [vmem:[%s230 + $0xb0] sm:$0xff] %v5226
      %5291 = vst [vmem:[%s230 + $0xb8] sm:$0xff] %v5227
      %5292 = vst [vmem:[%s230 + $0xc0] sm:$0xff] %v5228
      %5293 = vst [vmem:[%s230 + $0xc8] sm:$0xff] %v5229
      %5294 = vst [vmem:[%s230 + $0xd0] sm:$0xff] %v5230
      %5295 = vst [vmem:[%s230 + $0xd8] sm:$0xff] %v5231
      %5296 = vst [vmem:[%s230 + $0xe0] sm:$0xff] %v5232
      %5297 = vst [vmem:[%s230 + $0xe8] sm:$0xff] %v5233
      %5298 = vst [vmem:[%s230 + $0xf0] sm:$0xff] %v5234
      %5299 = vst [vmem:[%s230 + $0xf8] sm:$0xff] %v5235
      %5300 = vst [vmem:[%s230 + $0x100] sm:$0xff] %v5236
      %5301 = vst [vmem:[%s230 + $0x108] sm:$0xff] %v5237
      %5302 = vst [vmem:[%s230 + $0x110] sm:$0xff] %v5238
      %5303 = vst [vmem:[%s230 + $0x118] sm:$0xff] %v5239
      %5304 = vst [vmem:[%s230 + $0x120] sm:$0xff] %v5240
      %5305 = vst [vmem:[%s230 + $0x128] sm:$0xff] %v5241
      %5306 = vst [vmem:[%s230 + $0x130] sm:$0xff] %v5242
      %5307 = vst [vmem:[%s230 + $0x138] sm:$0xff] %v5243
      %5308 = vst [vmem:[%s230 + $0x140] sm:$0xff] %v5244
      %5309 = vst [vmem:[%s230 + $0x148] sm:$0xff] %v5245
      %5310 = vst [vmem:[%s230 + $0x150] sm:$0xff] %v5246
      %5311 = vst [vmem:[%s230 + $0x158] sm:$0xff] %v5247
      %5312 = vst [vmem:[%s230 + $0x160] sm:$0xff] %v5248
      %5313 = vst [vmem:[%s230 + $0x168] sm:$0xff] %v5249
      %5314 = vst [vmem:[%s230 + $0x170] sm:$0xff] %v5250
      %5315 = vst [vmem:[%s230 + $0x178] sm:$0xff] %v5251
      %5316 = vst [vmem:[%s230 + $0x180] sm:$0xff] %v5252
      %5317 = vst [vmem:[%s230 + $0x188] sm:$0xff] %v5253
      %5318 = vst [vmem:[%s230 + $0x190] sm:$0xff] %v5254
      %5319 = vst [vmem:[%s230 + $0x198] sm:$0xff] %v5255
      %5320 = vst [vmem:[%s230 + $0x1a0] sm:$0xff] %v5256
      %5321 = vst [vmem:[%s230 + $0x1a8] sm:$0xff] %v5257
      %5322 = vst [vmem:[%s230 + $0x1b0] sm:$0xff] %v5258
      %5323 = vst [vmem:[%s230 + $0x1b8] sm:$0xff] %v5259
      %5324 = vst [vmem:[%s230 + $0x1c0] sm:$0xff] %v5260
      %5325 = vst [vmem:[%s230 + $0x1c8] sm:$0xff] %v5261
      %5326 = vst [vmem:[%s230 + $0x1d0] sm:$0xff] %v5262
      %5327 = vst [vmem:[%s230 + $0x1d8] sm:$0xff] %v5263
      %5328 = vst [vmem:[%s230 + $0x1e0] sm:$0xff] %v5264
      %5329 = vst [vmem:[%s230 + $0x1e8] sm:$0xff] %v5265
      %5330 = vst [vmem:[%s230 + $0x1f0] sm:$0xff] %v5266
      %5331 = vst [vmem:[%s230 + $0x1f8] sm:$0xff] %v5267
      %v5332 = vld [vmem:[%s230] sm:$0xff]
      %v5333 = vld [vmem:[%s230 + $0x8] sm:$0xff]
      %v5334 = vld [vmem:[%s230 + $0x10] sm:$0xff]
      %v5335 = vld [vmem:[%s230 + $0x18] sm:$0xff]
      %v5336 = vld [vmem:[%s230 + $0x20] sm:$0xff]
      %v5337 = vld [vmem:[%s230 + $0x28] sm:$0xff]
      %v5338 = vld [vmem:[%s230 + $0x30] sm:$0xff]
      %v5339 = vld [vmem:[%s230 + $0x38] sm:$0xff]
      %v5340 = vld [vmem:[%s230 + $0x40] sm:$0xff]
      %v5341 = vld [vmem:[%s230 + $0x48] sm:$0xff]
      %v5342 = vld [vmem:[%s230 + $0x50] sm:$0xff]
      %v5343 = vld [vmem:[%s230 + $0x58] sm:$0xff]
      %v5344 = vld [vmem:[%s230 + $0x60] sm:$0xff]
      %v5345 = vld [vmem:[%s230 + $0x68] sm:$0xff]
      %v5346 = vld [vmem:[%s230 + $0x70] sm:$0xff]
      %v5347 = vld [vmem:[%s230 + $0x78] sm:$0xff]
      %v5348 = vld [vmem:[%s230 + $0x80] sm:$0xff]
      %v5349 = vld [vmem:[%s230 + $0x88] sm:$0xff]
      %v5350 = vld [vmem:[%s230 + $0x90] sm:$0xff]
      %v5351 = vld [vmem:[%s230 + $0x98] sm:$0xff]
      %v5352 = vld [vmem:[%s230 + $0xa0] sm:$0xff]
      %v5353 = vld [vmem:[%s230 + $0xa8] sm:$0xff]
      %v5354 = vld [vmem:[%s230 + $0xb0] sm:$0xff]
      %v5355 = vld [vmem:[%s230 + $0xb8] sm:$0xff]
      %v5356 = vld [vmem:[%s230 + $0xc0] sm:$0xff]
      %v5357 = vld [vmem:[%s230 + $0xc8] sm:$0xff]
      %v5358 = vld [vmem:[%s230 + $0xd0] sm:$0xff]
      %v5359 = vld [vmem:[%s230 + $0xd8] sm:$0xff]
      %v5360 = vld [vmem:[%s230 + $0xe0] sm:$0xff]
      %v5361 = vld [vmem:[%s230 + $0xe8] sm:$0xff]
      %v5362 = vld [vmem:[%s230 + $0xf0] sm:$0xff]
      %v5363 = vld [vmem:[%s230 + $0xf8] sm:$0xff]
      %v5364 = vld [vmem:[%s230 + $0x100] sm:$0xff]
      %v5365 = vld [vmem:[%s230 + $0x108] sm:$0xff]
      %v5366 = vld [vmem:[%s230 + $0x110] sm:$0xff]
      %v5367 = vld [vmem:[%s230 + $0x118] sm:$0xff]
      %v5368 = vld [vmem:[%s230 + $0x120] sm:$0xff]
      %v5369 = vld [vmem:[%s230 + $0x128] sm:$0xff]
      %v5370 = vld [vmem:[%s230 + $0x130] sm:$0xff]
      %v5371 = vld [vmem:[%s230 + $0x138] sm:$0xff]
      %v5372 = vld [vmem:[%s230 + $0x140] sm:$0xff]
      %v5373 = vld [vmem:[%s230 + $0x148] sm:$0xff]
      %v5374 = vld [vmem:[%s230 + $0x150] sm:$0xff]
      %v5375 = vld [vmem:[%s230 + $0x158] sm:$0xff]
      %v5376 = vld [vmem:[%s230 + $0x160] sm:$0xff]
      %v5377 = vld [vmem:[%s230 + $0x168] sm:$0xff]
      %v5378 = vld [vmem:[%s230 + $0x170] sm:$0xff]
      %v5379 = vld [vmem:[%s230 + $0x178] sm:$0xff]
      %v5380 = vld [vmem:[%s230 + $0x180] sm:$0xff]
      %v5381 = vld [vmem:[%s230 + $0x188] sm:$0xff]
      %v5382 = vld [vmem:[%s230 + $0x190] sm:$0xff]
      %v5383 = vld [vmem:[%s230 + $0x198] sm:$0xff]
      %v5384 = vld [vmem:[%s230 + $0x1a0] sm:$0xff]
      %v5385 = vld [vmem:[%s230 + $0x1a8] sm:$0xff]
      %v5386 = vld [vmem:[%s230 + $0x1b0] sm:$0xff]
      %v5387 = vld [vmem:[%s230 + $0x1b8] sm:$0xff]
      %v5388 = vld [vmem:[%s230 + $0x1c0] sm:$0xff]
      %v5389 = vld [vmem:[%s230 + $0x1c8] sm:$0xff]
      %v5390 = vld [vmem:[%s230 + $0x1d0] sm:$0xff]
      %v5391 = vld [vmem:[%s230 + $0x1d8] sm:$0xff]
      %v5392 = vld [vmem:[%s230 + $0x1e0] sm:$0xff]
      %v5393 = vld [vmem:[%s230 + $0x1e8] sm:$0xff]
      %v5394 = vld [vmem:[%s230 + $0x1f0] sm:$0xff]
      %v5395 = vld [vmem:[%s230 + $0x1f8] sm:$0xff]
      %v5396 = vld [vmem:[%s216 + $0x24] sm:$0xff]
      %v5397 = vld [vmem:[%s216 + $0x2c] sm:$0xff]
      %v5398 = vld [vmem:[%s216 + $0x34] sm:$0xff]
      %v5399 = vld [vmem:[%s216 + $0x3c] sm:$0xff]
      %v5400 = vld [vmem:[%s216 + $0x44] sm:$0xff]
      %v5401 = vld [vmem:[%s216 + $0x4c] sm:$0xff]
      %v5402 = vld [vmem:[%s216 + $0x54] sm:$0xff]
      %v5403 = vld [vmem:[%s216 + $0x5c] sm:$0xff]
      %v5404 = vld [vmem:[%s216 + $0x64] sm:$0xff]
      %v5405 = vld [vmem:[%s216 + $0x6c] sm:$0xff]
      %v5406 = vld [vmem:[%s216 + $0x74] sm:$0xff]
      %v5407 = vld [vmem:[%s216 + $0x7c] sm:$0xff]
      %v5408 = vld [vmem:[%s216 + $0x84] sm:$0xff]
      %v5409 = vld [vmem:[%s216 + $0x8c] sm:$0xff]
      %v5410 = vld [vmem:[%s216 + $0x94] sm:$0xff]
      %v5411 = vld [vmem:[%s216 + $0x9c] sm:$0xff]
      %v5412 = vld [vmem:[%s216 + $0xa4] sm:$0xff]
      %v5413 = vld [vmem:[%s216 + $0xac] sm:$0xff]
      %v5414 = vld [vmem:[%s216 + $0xb4] sm:$0xff]
      %v5415 = vld [vmem:[%s216 + $0xbc] sm:$0xff]
      %v5416 = vld [vmem:[%s216 + $0xc4] sm:$0xff]
      %v5417 = vld [vmem:[%s216 + $0xcc] sm:$0xff]
      %v5418 = vld [vmem:[%s216 + $0xd4] sm:$0xff]
      %v5419 = vld [vmem:[%s216 + $0xdc] sm:$0xff]
      %v5420 = vld [vmem:[%s216 + $0xe4] sm:$0xff]
      %v5421 = vld [vmem:[%s216 + $0xec] sm:$0xff]
      %v5422 = vld [vmem:[%s216 + $0xf4] sm:$0xff]
      %v5423 = vld [vmem:[%s216 + $0xfc] sm:$0xff]
      %v5424 = vld [vmem:[%s216 + $0x104] sm:$0xff]
      %v5425 = vld [vmem:[%s216 + $0x10c] sm:$0xff]
      %v5426 = vld [vmem:[%s216 + $0x114] sm:$0xff]
      %v5427 = vld [vmem:[%s216 + $0x11c] sm:$0xff]
      %v5428 = vld [vmem:[%s216 + $0x124] sm:$0xff]
      %v5429 = vld [vmem:[%s216 + $0x12c] sm:$0xff]
      %v5430 = vld [vmem:[%s216 + $0x134] sm:$0xff]
      %v5431 = vld [vmem:[%s216 + $0x13c] sm:$0xff]
      %v5432 = vld [vmem:[%s216 + $0x144] sm:$0xff]
      %v5433 = vld [vmem:[%s216 + $0x14c] sm:$0xff]
      %v5434 = vld [vmem:[%s216 + $0x154] sm:$0xff]
      %v5435 = vld [vmem:[%s216 + $0x15c] sm:$0xff]
      %v5436 = vld [vmem:[%s216 + $0x164] sm:$0xff]
      %v5437 = vld [vmem:[%s216 + $0x16c] sm:$0xff]
      %v5438 = vld [vmem:[%s216 + $0x174] sm:$0xff]
      %v5439 = vld [vmem:[%s216 + $0x17c] sm:$0xff]
      %v5440 = vld [vmem:[%s216 + $0x184] sm:$0xff]
      %v5441 = vld [vmem:[%s216 + $0x18c] sm:$0xff]
      %v5442 = vld [vmem:[%s216 + $0x194] sm:$0xff]
      %v5443 = vld [vmem:[%s216 + $0x19c] sm:$0xff]
      %v5444 = vld [vmem:[%s216 + $0x1a4] sm:$0xff]
      %v5445 = vld [vmem:[%s216 + $0x1ac] sm:$0xff]
      %v5446 = vld [vmem:[%s216 + $0x1b4] sm:$0xff]
      %v5447 = vld [vmem:[%s216 + $0x1bc] sm:$0xff]
      %v5448 = vld [vmem:[%s216 + $0x1c4] sm:$0xff]
      %v5449 = vld [vmem:[%s216 + $0x1cc] sm:$0xff]
      %v5450 = vld [vmem:[%s216 + $0x1d4] sm:$0xff]
      %v5451 = vld [vmem:[%s216 + $0x1dc] sm:$0xff]
      %v5452 = vld [vmem:[%s216 + $0x1e4] sm:$0xff]
      %v5453 = vld [vmem:[%s216 + $0x1ec] sm:$0xff]
      %v5454 = vld [vmem:[%s216 + $0x1f4] sm:$0xff]
      %v5455 = vld [vmem:[%s216 + $0x1fc] sm:$0xff]
      %v5456 = vld [vmem:[%s216 + $0x204] sm:$0xff]
      %v5457 = vld [vmem:[%s216 + $0x20c] sm:$0xff]
      %v5458 = vld [vmem:[%s216 + $0x214] sm:$0xff]
      %v5459 = vld [vmem:[%s216 + $0x21c] sm:$0xff]
      %s5460 = scalar_lea.vmem %s1, 24
      %v5461 = vld [vmem:[%s5460] sm:$0xf]
      %v5463 = vsel %vm432, %v5396, 0
      %v5466 = vsel %vm432, %v5397, 0
      %v5469 = vsel %vm432, %v5398, 0
      %v5472 = vsel %vm432, %v5399, 0
      %v5475 = vsel %vm432, %v5400, 0
      %v5478 = vsel %vm432, %v5401, 0
      %v5481 = vsel %vm432, %v5402, 0
      %v5484 = vsel %vm432, %v5403, 0
      %v5487 = vsel %vm432, %v5404, 0
      %v5490 = vsel %vm432, %v5405, 0
      %v5493 = vsel %vm432, %v5406, 0
      %v5496 = vsel %vm432, %v5407, 0
      %v5499 = vsel %vm432, %v5408, 0
      %v5502 = vsel %vm432, %v5409, 0
      %v5505 = vsel %vm432, %v5410, 0
      %v5508 = vsel %vm432, %v5411, 0
      %v5511 = vsel %vm432, %v5412, 0
      %v5514 = vsel %vm432, %v5413, 0
      %v5517 = vsel %vm432, %v5414, 0
      %v5520 = vsel %vm432, %v5415, 0
      %v5523 = vsel %vm432, %v5416, 0
      %v5526 = vsel %vm432, %v5417, 0
      %v5529 = vsel %vm432, %v5418, 0
      %v5532 = vsel %vm432, %v5419, 0
      %v5535 = vsel %vm432, %v5420, 0
      %v5538 = vsel %vm432, %v5421, 0
      %v5541 = vsel %vm432, %v5422, 0
      %v5544 = vsel %vm432, %v5423, 0
      %v5547 = vsel %vm432, %v5424, 0
      %v5550 = vsel %vm432, %v5425, 0
      %v5553 = vsel %vm432, %v5426, 0
      %v5556 = vsel %vm432, %v5427, 0
      %v5559 = vsel %vm432, %v5428, 0
      %v5562 = vsel %vm432, %v5429, 0
      %v5565 = vsel %vm432, %v5430, 0
      %v5568 = vsel %vm432, %v5431, 0
      %v5571 = vsel %vm432, %v5432, 0
      %v5574 = vsel %vm432, %v5433, 0
      %v5577 = vsel %vm432, %v5434, 0
      %v5580 = vsel %vm432, %v5435, 0
      %v5583 = vsel %vm432, %v5436, 0
      %v5586 = vsel %vm432, %v5437, 0
      %v5589 = vsel %vm432, %v5438, 0
      %v5592 = vsel %vm432, %v5439, 0
      %v5595 = vsel %vm432, %v5440, 0
      %v5598 = vsel %vm432, %v5441, 0
      %v5601 = vsel %vm432, %v5442, 0
      %v5604 = vsel %vm432, %v5443, 0
      %v5607 = vsel %vm432, %v5444, 0
      %v5610 = vsel %vm432, %v5445, 0
      %v5613 = vsel %vm432, %v5446, 0
      %v5616 = vsel %vm432, %v5447, 0
      %v5619 = vsel %vm432, %v5448, 0
      %v5622 = vsel %vm432, %v5449, 0
      %v5625 = vsel %vm432, %v5450, 0
      %v5628 = vsel %vm432, %v5451, 0
      %v5631 = vsel %vm432, %v5452, 0
      %v5634 = vsel %vm432, %v5453, 0
      %v5637 = vsel %vm432, %v5454, 0
      %v5640 = vsel %vm432, %v5455, 0
      %v5643 = vsel %vm432, %v5456, 0
      %v5646 = vsel %vm432, %v5457, 0
      %v5649 = vsel %vm432, %v5458, 0
      %v5652 = vsel %vm432, %v5459, 0
      %v5655 = vsel %vm625, %v5461, 0
      %5657 = vmatprep.subr.mxu0 0.0
      %5658 = vmatpush1.msra.mxu0 %v5655
      %5659 = vmatprep.subr.mxu0 0.0
      %5660 = vmatpush1.msra.mxu0 0.0
      %5661 = vmatprep.subr.mxu0 0.0
      %5662 = vmatpush1.msra.mxu0 0.0
      %5663 = vmatprep.subr.mxu0 0.0
      %5664 = vmatpush1.msra.mxu0 0.0
      %5665 = vmatprep.subr.mxu0 0.0
      %5666 = vmatpush1.msra.mxu0 0.0
      %5667 = vmatprep.subr.mxu0 0.0
      %5668 = vmatpush1.msra.mxu0 0.0
      %5669 = vmatprep.subr.mxu0 0.0
      %5670 = vmatpush1.msra.mxu0 0.0
      %5671 = vmatprep.subr.mxu0 0.0
      %5672 = vmatpush1.msra.mxu0 0.0
      %5673 = vmatprep.subr.mxu0 0.0
      %5674 = vmatpush1.msra.mxu0 0.0
      %5675 = vmatprep.subr.mxu0 0.0
      %5676 = vmatpush1.msra.mxu0 0.0
      %5677 = vmatprep.subr.mxu0 0.0
      %5678 = vmatpush1.msra.mxu0 0.0
      %5679 = vmatprep.subr.mxu0 0.0
      %5680 = vmatpush1.msra.mxu0 0.0
      %5681 = vmatprep.subr.mxu0 0.0
      %5682 = vmatpush1.msra.mxu0 0.0
      %5683 = vmatprep.subr.mxu0 0.0
      %5684 = vmatpush1.msra.mxu0 0.0
      %5685 = vmatprep.subr.mxu0 0.0
      %5686 = vmatpush1.msra.mxu0 0.0
      %5687 = vmatprep.subr.mxu0 0.0
      %5688 = vmatpush1.msra.mxu0 0.0
      %5689 = vmatprep.subr.mxu0 0.0
      %5690 = vmatpush1.msra.mxu0 0.0
      %5691 = vmatprep.subr.mxu0 0.0
      %5692 = vmatpush1.msra.mxu0 0.0
      %5693 = vmatprep.subr.mxu0 0.0
      %5694 = vmatpush1.msra.mxu0 0.0
      %5695 = vmatprep.subr.mxu0 0.0
      %5696 = vmatpush1.msra.mxu0 0.0
      %5697 = vmatprep.subr.mxu0 0.0
      %5698 = vmatpush1.msra.mxu0 0.0
      %5699 = vmatprep.subr.mxu0 0.0
      %5700 = vmatpush1.msra.mxu0 0.0
      %5701 = vmatprep.subr.mxu0 0.0
      %5702 = vmatpush1.msra.mxu0 0.0
      %5703 = vmatprep.subr.mxu0 0.0
      %5704 = vmatpush1.msra.mxu0 0.0
      %5705 = vmatprep.subr.mxu0 0.0
      %5706 = vmatpush1.msra.mxu0 0.0
      %5707 = vmatprep.subr.mxu0 0.0
      %5708 = vmatpush1.msra.mxu0 0.0
      %5709 = vmatprep.subr.mxu0 0.0
      %5710 = vmatpush1.msra.mxu0 0.0
      %5711 = vmatprep.subr.mxu0 0.0
      %5712 = vmatpush1.msra.mxu0 0.0
      %5713 = vmatprep.subr.mxu0 0.0
      %5714 = vmatpush1.msra.mxu0 0.0
      %5715 = vmatprep.subr.mxu0 0.0
      %5716 = vmatpush1.msra.mxu0 0.0
      %5717 = vmatprep.subr.mxu0 0.0
      %5718 = vmatpush1.msra.mxu0 0.0
      %5719 = vmatprep.subr.mxu0 0.0
      %5720 = vmatpush1.msra.mxu0 0.0
      %5721 = vmatprep.mubr.f32.mxu0 0.0
      %5722 = vmatmul.mubr.f32.gmra.mrb[0].mxu0 %v5463
      %v5723 = vpop.f32.mrb[0].mxu0
      %v5724 = vadd.f32 0.0, %v5723
      %v5725 = vpop.f32.mrb[0].mxu0
      %5726 = vmatprep.mubr.f32.mxu0 0.0
      %5727 = vmatmul.mubr.f32.gmra.mrb[0].mxu0 %v5466
      %v5728 = vpop.f32.mrb[0].mxu0
      %v5729 = vadd.f32 0.0, %v5728
      %v5730 = vpop.f32.mrb[0].mxu0
      %5731 = vmatprep.mubr.f32.mxu0 0.0
      %5732 = vmatmul.mubr.f32.gmra.mrb[0].mxu0 %v5469
      %v5733 = vpop.f32.mrb[0].mxu0
      %v5734 = vadd.f32 0.0, %v5733
      %v5735 = vpop.f32.mrb[0].mxu0
      %5736 = vmatprep.mubr.f32.mxu0 0.0
      %5737 = vmatmul.mubr.f32.gmra.mrb[0].mxu0 %v5472
      %v5738 = vpop.f32.mrb[0].mxu0
      %v5739 = vadd.f32 0.0, %v5738
      %v5740 = vpop.f32.mrb[0].mxu0
      %5741 = vmatprep.mubr.f32.mxu0 0.0
      %5742 = vmatmul.mubr.f32.gmra.mrb[0].mxu0 %v5475
      %v5743 = vpop.f32.mrb[0].mxu0
      %v5744 = vadd.f32 0.0, %v5743
      %v5745 = vpop.f32.mrb[0].mxu0
      %5746 = vmatprep.mubr.f32.mxu0 0.0
      %5747 = vmatmul.mubr.f32.gmra.mrb[0].mxu0 %v5478
      %v5748 = vpop.f32.mrb[0].mxu0
      %v5749 = vadd.f32 0.0, %v5748
      %v5750 = vpop.f32.mrb[0].mxu0
      %5751 = vmatprep.mubr.f32.mxu0 0.0
      %5752 = vmatmul.mubr.f32.gmra.mrb[0].mxu0 %v5481
      %v5753 = vpop.f32.mrb[0].mxu0
      %v5754 = vadd.f32 0.0, %v5753
      %v5755 = vpop.f32.mrb[0].mxu0
      %5756 = vmatprep.mubr.f32.mxu0 0.0
      %5757 = vmatmul.mubr.f32.gmra.mrb[0].mxu0 %v5484
      %v5758 = vpop.f32.mrb[0].mxu0
      %v5759 = vadd.f32 0.0, %v5758
      %v5760 = vpop.f32.mrb[0].mxu0
      %5761 = vmatprep.mubr.f32.mxu0 0.0
      %5762 = vmatmul.mubr.f32.gmra.mrb[0].mxu0 %v5487
      %v5763 = vpop.f32.mrb[0].mxu0
      %v5764 = vadd.f32 0.0, %v5763
      %v5765 = vpop.f32.mrb[0].mxu0
      %5766 = vmatprep.mubr.f32.mxu0 0.0
      %5767 = vmatmul.mubr.f32.gmra.mrb[0].mxu0 %v5490
      %v5768 = vpop.f32.mrb[0].mxu0
      %v5769 = vadd.f32 0.0, %v5768
      %v5770 = vpop.f32.mrb[0].mxu0
      %5771 = vmatprep.mubr.f32.mxu0 0.0
      %5772 = vmatmul.mubr.f32.gmra.mrb[0].mxu0 %v5493
      %v5773 = vpop.f32.mrb[0].mxu0
      %v5774 = vadd.f32 0.0, %v5773
      %v5775 = vpop.f32.mrb[0].mxu0
      %5776 = vmatprep.mubr.f32.mxu0 0.0
      %5777 = vmatmul.mubr.f32.gmra.mrb[0].mxu0 %v5496
      %v5778 = vpop.f32.mrb[0].mxu0
      %v5779 = vadd.f32 0.0, %v5778
      %v5780 = vpop.f32.mrb[0].mxu0
      %5781 = vmatprep.mubr.f32.mxu0 0.0
      %5782 = vmatmul.mubr.f32.gmra.mrb[0].mxu0 %v5499
      %v5783 = vpop.f32.mrb[0].mxu0
      %v5784 = vadd.f32 0.0, %v5783
      %v5785 = vpop.f32.mrb[0].mxu0
      %5786 = vmatprep.mubr.f32.mxu0 0.0
      %5787 = vmatmul.mubr.f32.gmra.mrb[0].mxu0 %v5502
      %v5788 = vpop.f32.mrb[0].mxu0
      %v5789 = vadd.f32 0.0, %v5788
      %v5790 = vpop.f32.mrb[0].mxu0
      %5791 = vmatprep.mubr.f32.mxu0 0.0
      %5792 = vmatmul.mubr.f32.gmra.mrb[0].mxu0 %v5505
      %v5793 = vpop.f32.mrb[0].mxu0
      %v5794 = vadd.f32 0.0, %v5793
      %v5795 = vpop.f32.mrb[0].mxu0
      %5796 = vmatprep.mubr.f32.mxu0 0.0
      %5797 = vmatmul.mubr.f32.gmra.mrb[0].mxu0 %v5508
      %v5798 = vpop.f32.mrb[0].mxu0
      %v5799 = vadd.f32 0.0, %v5798
      %v5800 = vpop.f32.mrb[0].mxu0
      %5801 = vmatprep.mubr.f32.mxu0 0.0
      %5802 = vmatmul.mubr.f32.gmra.mrb[0].mxu0 %v5511
      %v5803 = vpop.f32.mrb[0].mxu0
      %v5804 = vadd.f32 0.0, %v5803
      %v5805 = vpop.f32.mrb[0].mxu0
      %5806 = vmatprep.mubr.f32.mxu0 0.0
      %5807 = vmatmul.mubr.f32.gmra.mrb[0].mxu0 %v5514
      %v5808 = vpop.f32.mrb[0].mxu0
      %v5809 = vadd.f32 0.0, %v5808
      %v5810 = vpop.f32.mrb[0].mxu0
      %5811 = vmatprep.mubr.f32.mxu0 0.0
      %5812 = vmatmul.mubr.f32.gmra.mrb[0].mxu0 %v5517
      %v5813 = vpop.f32.mrb[0].mxu0
      %v5814 = vadd.f32 0.0, %v5813
      %v5815 = vpop.f32.mrb[0].mxu0
      %5816 = vmatprep.mubr.f32.mxu0 0.0
      %5817 = vmatmul.mubr.f32.gmra.mrb[0].mxu0 %v5520
      %v5818 = vpop.f32.mrb[0].mxu0
      %v5819 = vadd.f32 0.0, %v5818
      %v5820 = vpop.f32.mrb[0].mxu0
      %5821 = vmatprep.mubr.f32.mxu0 0.0
      %5822 = vmatmul.mubr.f32.gmra.mrb[0].mxu0 %v5523
      %v5823 = vpop.f32.mrb[0].mxu0
      %v5824 = vadd.f32 0.0, %v5823
      %v5825 = vpop.f32.mrb[0].mxu0
      %5826 = vmatprep.mubr.f32.mxu0 0.0
      %5827 = vmatmul.mubr.f32.gmra.mrb[0].mxu0 %v5526
      %v5828 = vpop.f32.mrb[0].mxu0
      %v5829 = vadd.f32 0.0, %v5828
      %v5830 = vpop.f32.mrb[0].mxu0
      %5831 = vmatprep.mubr.f32.mxu0 0.0
      %5832 = vmatmul.mubr.f32.gmra.mrb[0].mxu0 %v5529
      %v5833 = vpop.f32.mrb[0].mxu0
      %v5834 = vadd.f32 0.0, %v5833
      %v5835 = vpop.f32.mrb[0].mxu0
      %5836 = vmatprep.mubr.f32.mxu0 0.0
      %5837 = vmatmul.mubr.f32.gmra.mrb[0].mxu0 %v5532
      %v5838 = vpop.f32.mrb[0].mxu0
      %v5839 = vadd.f32 0.0, %v5838
      %v5840 = vpop.f32.mrb[0].mxu0
      %5841 = vmatprep.mubr.f32.mxu0 0.0
      %5842 = vmatmul.mubr.f32.gmra.mrb[0].mxu0 %v5535
      %v5843 = vpop.f32.mrb[0].mxu0
      %v5844 = vadd.f32 0.0, %v5843
      %v5845 = vpop.f32.mrb[0].mxu0
      %5846 = vmatprep.mubr.f32.mxu0 0.0
      %5847 = vmatmul.mubr.f32.gmra.mrb[0].mxu0 %v5538
      %v5848 = vpop.f32.mrb[0].mxu0
      %v5849 = vadd.f32 0.0, %v5848
      %v5850 = vpop.f32.mrb[0].mxu0
      %5851 = vmatprep.mubr.f32.mxu0 0.0
      %5852 = vmatmul.mubr.f32.gmra.mrb[0].mxu0 %v5541
      %v5853 = vpop.f32.mrb[0].mxu0
      %v5854 = vadd.f32 0.0, %v5853
      %v5855 = vpop.f32.mrb[0].mxu0
      %5856 = vmatprep.mubr.f32.mxu0 0.0
      %5857 = vmatmul.mubr.f32.gmra.mrb[0].mxu0 %v5544
      %v5858 = vpop.f32.mrb[0].mxu0
      %v5859 = vadd.f32 0.0, %v5858
      %v5860 = vpop.f32.mrb[0].mxu0
      %5861 = vmatprep.mubr.f32.mxu0 0.0
      %5862 = vmatmul.mubr.f32.gmra.mrb[0].mxu0 %v5547
      %v5863 = vpop.f32.mrb[0].mxu0
      %v5864 = vadd.f32 0.0, %v5863
      %v5865 = vpop.f32.mrb[0].mxu0
      %5866 = vmatprep.mubr.f32.mxu0 0.0
      %5867 = vmatmul.mubr.f32.gmra.mrb[0].mxu0 %v5550
      %v5868 = vpop.f32.mrb[0].mxu0
      %v5869 = vadd.f32 0.0, %v5868
      %v5870 = vpop.f32.mrb[0].mxu0
      %5871 = vmatprep.mubr.f32.mxu0 0.0
      %5872 = vmatmul.mubr.f32.gmra.mrb[0].mxu0 %v5553
      %v5873 = vpop.f32.mrb[0].mxu0
      %v5874 = vadd.f32 0.0, %v5873
      %v5875 = vpop.f32.mrb[0].mxu0
      %5876 = vmatprep.mubr.f32.mxu0 0.0
      %5877 = vmatmul.mubr.f32.gmra.mrb[0].mxu0 %v5556
      %v5878 = vpop.f32.mrb[0].mxu0
      %v5879 = vadd.f32 0.0, %v5878
      %v5880 = vpop.f32.mrb[0].mxu0
      %5881 = vmatprep.mubr.f32.mxu0 0.0
      %5882 = vmatmul.mubr.f32.gmra.mrb[0].mxu0 %v5559
      %v5883 = vpop.f32.mrb[0].mxu0
      %v5884 = vadd.f32 0.0, %v5883
      %v5885 = vpop.f32.mrb[0].mxu0
      %5886 = vmatprep.mubr.f32.mxu0 0.0
      %5887 = vmatmul.mubr.f32.gmra.mrb[0].mxu0 %v5562
      %v5888 = vpop.f32.mrb[0].mxu0
      %v5889 = vadd.f32 0.0, %v5888
      %v5890 = vpop.f32.mrb[0].mxu0
      %5891 = vmatprep.mubr.f32.mxu0 0.0
      %5892 = vmatmul.mubr.f32.gmra.mrb[0].mxu0 %v5565
      %v5893 = vpop.f32.mrb[0].mxu0
      %v5894 = vadd.f32 0.0, %v5893
      %v5895 = vpop.f32.mrb[0].mxu0
      %5896 = vmatprep.mubr.f32.mxu0 0.0
      %5897 = vmatmul.mubr.f32.gmra.mrb[0].mxu0 %v5568
      %v5898 = vpop.f32.mrb[0].mxu0
      %v5899 = vadd.f32 0.0, %v5898
      %v5900 = vpop.f32.mrb[0].mxu0
      %5901 = vmatprep.mubr.f32.mxu0 0.0
      %5902 = vmatmul.mubr.f32.gmra.mrb[0].mxu0 %v5571
      %v5903 = vpop.f32.mrb[0].mxu0
      %v5904 = vadd.f32 0.0, %v5903
      %v5905 = vpop.f32.mrb[0].mxu0
      %5906 = vmatprep.mubr.f32.mxu0 0.0
      %5907 = vmatmul.mubr.f32.gmra.mrb[0].mxu0 %v5574
      %v5908 = vpop.f32.mrb[0].mxu0
      %v5909 = vadd.f32 0.0, %v5908
      %v5910 = vpop.f32.mrb[0].mxu0
      %5911 = vmatprep.mubr.f32.mxu0 0.0
      %5912 = vmatmul.mubr.f32.gmra.mrb[0].mxu0 %v5577
      %v5913 = vpop.f32.mrb[0].mxu0
      %v5914 = vadd.f32 0.0, %v5913
      %v5915 = vpop.f32.mrb[0].mxu0
      %5916 = vmatprep.mubr.f32.mxu0 0.0
      %5917 = vmatmul.mubr.f32.gmra.mrb[0].mxu0 %v5580
      %v5918 = vpop.f32.mrb[0].mxu0
      %v5919 = vadd.f32 0.0, %v5918
      %v5920 = vpop.f32.mrb[0].mxu0
      %5921 = vmatprep.mubr.f32.mxu0 0.0
      %5922 = vmatmul.mubr.f32.gmra.mrb[0].mxu0 %v5583
      %v5923 = vpop.f32.mrb[0].mxu0
      %v5924 = vadd.f32 0.0, %v5923
      %v5925 = vpop.f32.mrb[0].mxu0
      %5926 = vmatprep.mubr.f32.mxu0 0.0
      %5927 = vmatmul.mubr.f32.gmra.mrb[0].mxu0 %v5586
      %v5928 = vpop.f32.mrb[0].mxu0
      %v5929 = vadd.f32 0.0, %v5928
      %v5930 = vpop.f32.mrb[0].mxu0
      %5931 = vmatprep.mubr.f32.mxu0 0.0
      %5932 = vmatmul.mubr.f32.gmra.mrb[0].mxu0 %v5589
      %v5933 = vpop.f32.mrb[0].mxu0
      %v5934 = vadd.f32 0.0, %v5933
      %v5935 = vpop.f32.mrb[0].mxu0
      %5936 = vmatprep.mubr.f32.mxu0 0.0
      %5937 = vmatmul.mubr.f32.gmra.mrb[0].mxu0 %v5592
      %v5938 = vpop.f32.mrb[0].mxu0
      %v5939 = vadd.f32 0.0, %v5938
      %v5940 = vpop.f32.mrb[0].mxu0
      %5941 = vmatprep.mubr.f32.mxu0 0.0
      %5942 = vmatmul.mubr.f32.gmra.mrb[0].mxu0 %v5595
      %v5943 = vpop.f32.mrb[0].mxu0
      %v5944 = vadd.f32 0.0, %v5943
      %v5945 = vpop.f32.mrb[0].mxu0
      %5946 = vmatprep.mubr.f32.mxu0 0.0
      %5947 = vmatmul.mubr.f32.gmra.mrb[0].mxu0 %v5598
      %v5948 = vpop.f32.mrb[0].mxu0
      %v5949 = vadd.f32 0.0, %v5948
      %v5950 = vpop.f32.mrb[0].mxu0
      %5951 = vmatprep.mubr.f32.mxu0 0.0
      %5952 = vmatmul.mubr.f32.gmra.mrb[0].mxu0 %v5601
      %v5953 = vpop.f32.mrb[0].mxu0
      %v5954 = vadd.f32 0.0, %v5953
      %v5955 = vpop.f32.mrb[0].mxu0
      %5956 = vmatprep.mubr.f32.mxu0 0.0
      %5957 = vmatmul.mubr.f32.gmra.mrb[0].mxu0 %v5604
      %v5958 = vpop.f32.mrb[0].mxu0
      %v5959 = vadd.f32 0.0, %v5958
      %v5960 = vpop.f32.mrb[0].mxu0
      %5961 = vmatprep.mubr.f32.mxu0 0.0
      %5962 = vmatmul.mubr.f32.gmra.mrb[0].mxu0 %v5607
      %v5963 = vpop.f32.mrb[0].mxu0
      %v5964 = vadd.f32 0.0, %v5963
      %v5965 = vpop.f32.mrb[0].mxu0
      %5966 = vmatprep.mubr.f32.mxu0 0.0
      %5967 = vmatmul.mubr.f32.gmra.mrb[0].mxu0 %v5610
      %v5968 = vpop.f32.mrb[0].mxu0
      %v5969 = vadd.f32 0.0, %v5968
      %v5970 = vpop.f32.mrb[0].mxu0
      %5971 = vmatprep.mubr.f32.mxu0 0.0
      %5972 = vmatmul.mubr.f32.gmra.mrb[0].mxu0 %v5613
      %v5973 = vpop.f32.mrb[0].mxu0
      %v5974 = vadd.f32 0.0, %v5973
      %v5975 = vpop.f32.mrb[0].mxu0
      %5976 = vmatprep.mubr.f32.mxu0 0.0
      %5977 = vmatmul.mubr.f32.gmra.mrb[0].mxu0 %v5616
      %v5978 = vpop.f32.mrb[0].mxu0
      %v5979 = vadd.f32 0.0, %v5978
      %v5980 = vpop.f32.mrb[0].mxu0
      %5981 = vmatprep.mubr.f32.mxu0 0.0
      %5982 = vmatmul.mubr.f32.gmra.mrb[0].mxu0 %v5619
      %v5983 = vpop.f32.mrb[0].mxu0
      %v5984 = vadd.f32 0.0, %v5983
      %v5985 = vpop.f32.mrb[0].mxu0
      %5986 = vmatprep.mubr.f32.mxu0 0.0
      %5987 = vmatmul.mubr.f32.gmra.mrb[0].mxu0 %v5622
      %v5988 = vpop.f32.mrb[0].mxu0
      %v5989 = vadd.f32 0.0, %v5988
      %v5990 = vpop.f32.mrb[0].mxu0
      %5991 = vmatprep.mubr.f32.mxu0 0.0
      %5992 = vmatmul.mubr.f32.gmra.mrb[0].mxu0 %v5625
      %v5993 = vpop.f32.mrb[0].mxu0
      %v5994 = vadd.f32 0.0, %v5993
      %v5995 = vpop.f32.mrb[0].mxu0
      %5996 = vmatprep.mubr.f32.mxu0 0.0
      %5997 = vmatmul.mubr.f32.gmra.mrb[0].mxu0 %v5628
      %v5998 = vpop.f32.mrb[0].mxu0
      %v5999 = vadd.f32 0.0, %v5998
      %v6000 = vpop.f32.mrb[0].mxu0
      %6001 = vmatprep.mubr.f32.mxu0 0.0
      %6002 = vmatmul.mubr.f32.gmra.mrb[0].mxu0 %v5631
      %v6003 = vpop.f32.mrb[0].mxu0
      %v6004 = vadd.f32 0.0, %v6003
      %v6005 = vpop.f32.mrb[0].mxu0
      %6006 = vmatprep.mubr.f32.mxu0 0.0
      %6007 = vmatmul.mubr.f32.gmra.mrb[0].mxu0 %v5634
      %v6008 = vpop.f32.mrb[0].mxu0
      %v6009 = vadd.f32 0.0, %v6008
      %v6010 = vpop.f32.mrb[0].mxu0
      %6011 = vmatprep.mubr.f32.mxu0 0.0
      %6012 = vmatmul.mubr.f32.gmra.mrb[0].mxu0 %v5637
      %v6013 = vpop.f32.mrb[0].mxu0
      %v6014 = vadd.f32 0.0, %v6013
      %v6015 = vpop.f32.mrb[0].mxu0
      %6016 = vmatprep.mubr.f32.mxu0 0.0
      %6017 = vmatmul.mubr.f32.gmra.mrb[0].mxu0 %v5640
      %v6018 = vpop.f32.mrb[0].mxu0
      %v6019 = vadd.f32 0.0, %v6018
      %v6020 = vpop.f32.mrb[0].mxu0
      %6021 = vmatprep.mubr.f32.mxu0 0.0
      %6022 = vmatmul.mubr.f32.gmra.mrb[0].mxu0 %v5643
      %v6023 = vpop.f32.mrb[0].mxu0
      %v6024 = vadd.f32 0.0, %v6023
      %v6025 = vpop.f32.mrb[0].mxu0
      %6026 = vmatprep.mubr.f32.mxu0 0.0
      %6027 = vmatmul.mubr.f32.gmra.mrb[0].mxu0 %v5646
      %v6028 = vpop.f32.mrb[0].mxu0
      %v6029 = vadd.f32 0.0, %v6028
      %v6030 = vpop.f32.mrb[0].mxu0
      %6031 = vmatprep.mubr.f32.mxu0 0.0
      %6032 = vmatmul.mubr.f32.gmra.mrb[0].mxu0 %v5649
      %v6033 = vpop.f32.mrb[0].mxu0
      %v6034 = vadd.f32 0.0, %v6033
      %v6035 = vpop.f32.mrb[0].mxu0
      %6036 = vmatprep.mubr.f32.mxu0 0.0
      %6037 = vmatmul.mubr.f32.gmra.mrb[0].mxu0 %v5652
      %v6038 = vpop.f32.mrb[0].mxu0
      %v6039 = vadd.f32 0.0, %v6038
      %v6040 = vpop.f32.mrb[0].mxu0
      %6041 = vdwg.mxu0
      %v6042 = vadd.f32 %v5332, %v5724
      %v6043 = vadd.f32 %v5333, %v5729
      %v6044 = vadd.f32 %v5334, %v5734
      %v6045 = vadd.f32 %v5335, %v5739
      %v6046 = vadd.f32 %v5336, %v5744
      %v6047 = vadd.f32 %v5337, %v5749
      %v6048 = vadd.f32 %v5338, %v5754
      %v6049 = vadd.f32 %v5339, %v5759
      %v6050 = vadd.f32 %v5340, %v5764
      %v6051 = vadd.f32 %v5341, %v5769
      %v6052 = vadd.f32 %v5342, %v5774
      %v6053 = vadd.f32 %v5343, %v5779
      %v6054 = vadd.f32 %v5344, %v5784
      %v6055 = vadd.f32 %v5345, %v5789
      %v6056 = vadd.f32 %v5346, %v5794
      %v6057 = vadd.f32 %v5347, %v5799
      %v6058 = vadd.f32 %v5348, %v5804
      %v6059 = vadd.f32 %v5349, %v5809
      %v6060 = vadd.f32 %v5350, %v5814
      %v6061 = vadd.f32 %v5351, %v5819
      %v6062 = vadd.f32 %v5352, %v5824
      %v6063 = vadd.f32 %v5353, %v5829
      %v6064 = vadd.f32 %v5354, %v5834
      %v6065 = vadd.f32 %v5355, %v5839
      %v6066 = vadd.f32 %v5356, %v5844
      %v6067 = vadd.f32 %v5357, %v5849
      %v6068 = vadd.f32 %v5358, %v5854
      %v6069 = vadd.f32 %v5359, %v5859
      %v6070 = vadd.f32 %v5360, %v5864
      %v6071 = vadd.f32 %v5361, %v5869
      %v6072 = vadd.f32 %v5362, %v5874
      %v6073 = vadd.f32 %v5363, %v5879
      %v6074 = vadd.f32 %v5364, %v5884
      %v6075 = vadd.f32 %v5365, %v5889
      %v6076 = vadd.f32 %v5366, %v5894
      %v6077 = vadd.f32 %v5367, %v5899
      %v6078 = vadd.f32 %v5368, %v5904
      %v6079 = vadd.f32 %v5369, %v5909
      %v6080 = vadd.f32 %v5370, %v5914
      %v6081 = vadd.f32 %v5371, %v5919
      %v6082 = vadd.f32 %v5372, %v5924
      %v6083 = vadd.f32 %v5373, %v5929
      %v6084 = vadd.f32 %v5374, %v5934
      %v6085 = vadd.f32 %v5375, %v5939
      %v6086 = vadd.f32 %v5376, %v5944
      %v6087 = vadd.f32 %v5377, %v5949
      %v6088 = vadd.f32 %v5378, %v5954
      %v6089 = vadd.f32 %v5379, %v5959
      %v6090 = vadd.f32 %v5380, %v5964
      %v6091 = vadd.f32 %v5381, %v5969
      %v6092 = vadd.f32 %v5382, %v5974
      %v6093 = vadd.f32 %v5383, %v5979
      %v6094 = vadd.f32 %v5384, %v5984
      %v6095 = vadd.f32 %v5385, %v5989
      %v6096 = vadd.f32 %v5386, %v5994
      %v6097 = vadd.f32 %v5387, %v5999
      %v6098 = vadd.f32 %v5388, %v6004
      %v6099 = vadd.f32 %v5389, %v6009
      %v6100 = vadd.f32 %v5390, %v6014
      %v6101 = vadd.f32 %v5391, %v6019
      %v6102 = vadd.f32 %v5392, %v6024
      %v6103 = vadd.f32 %v5393, %v6029
      %v6104 = vadd.f32 %v5394, %v6034
      %v6105 = vadd.f32 %v5395, %v6039
      %6106 = vst [vmem:[%s230] sm:$0xff] %v6042
      %6107 = vst [vmem:[%s230 + $0x8] sm:$0xff] %v6043
      %6108 = vst [vmem:[%s230 + $0x10] sm:$0xff] %v6044
      %6109 = vst [vmem:[%s230 + $0x18] sm:$0xff] %v6045
      %6110 = vst [vmem:[%s230 + $0x20] sm:$0xff] %v6046
      %6111 = vst [vmem:[%s230 + $0x28] sm:$0xff] %v6047
      %6112 = vst [vmem:[%s230 + $0x30] sm:$0xff] %v6048
      %6113 = vst [vmem:[%s230 + $0x38] sm:$0xff] %v6049
      %6114 = vst [vmem:[%s230 + $0x40] sm:$0xff] %v6050
      %6115 = vst [vmem:[%s230 + $0x48] sm:$0xff] %v6051
      %6116 = vst [vmem:[%s230 + $0x50] sm:$0xff] %v6052
      %6117 = vst [vmem:[%s230 + $0x58] sm:$0xff] %v6053
      %6118 = vst [vmem:[%s230 + $0x60] sm:$0xff] %v6054
      %6119 = vst [vmem:[%s230 + $0x68] sm:$0xff] %v6055
      %6120 = vst [vmem:[%s230 + $0x70] sm:$0xff] %v6056
      %6121 = vst [vmem:[%s230 + $0x78] sm:$0xff] %v6057
      %6122 = vst [vmem:[%s230 + $0x80] sm:$0xff] %v6058
      %6123 = vst [vmem:[%s230 + $0x88] sm:$0xff] %v6059
      %6124 = vst [vmem:[%s230 + $0x90] sm:$0xff] %v6060
      %6125 = vst [vmem:[%s230 + $0x98] sm:$0xff] %v6061
      %6126 = vst [vmem:[%s230 + $0xa0] sm:$0xff] %v6062
      %6127 = vst [vmem:[%s230 + $0xa8] sm:$0xff] %v6063
      %6128 = vst [vmem:[%s230 + $0xb0] sm:$0xff] %v6064
      %6129 = vst [vmem:[%s230 + $0xb8] sm:$0xff] %v6065
      %6130 = vst [vmem:[%s230 + $0xc0] sm:$0xff] %v6066
      %6131 = vst [vmem:[%s230 + $0xc8] sm:$0xff] %v6067
      %6132 = vst [vmem:[%s230 + $0xd0] sm:$0xff] %v6068
      %6133 = vst [vmem:[%s230 + $0xd8] sm:$0xff] %v6069
      %6134 = vst [vmem:[%s230 + $0xe0] sm:$0xff] %v6070
      %6135 = vst [vmem:[%s230 + $0xe8] sm:$0xff] %v6071
      %6136 = vst [vmem:[%s230 + $0xf0] sm:$0xff] %v6072
      %6137 = vst [vmem:[%s230 + $0xf8] sm:$0xff] %v6073
      %6138 = vst [vmem:[%s230 + $0x100] sm:$0xff] %v6074
      %6139 = vst [vmem:[%s230 + $0x108] sm:$0xff] %v6075
      %6140 = vst [vmem:[%s230 + $0x110] sm:$0xff] %v6076
      %6141 = vst [vmem:[%s230 + $0x118] sm:$0xff] %v6077
      %6142 = vst [vmem:[%s230 + $0x120] sm:$0xff] %v6078
      %6143 = vst [vmem:[%s230 + $0x128] sm:$0xff] %v6079
      %6144 = vst [vmem:[%s230 + $0x130] sm:$0xff] %v6080
      %6145 = vst [vmem:[%s230 + $0x138] sm:$0xff] %v6081
      %6146 = vst [vmem:[%s230 + $0x140] sm:$0xff] %v6082
      %6147 = vst [vmem:[%s230 + $0x148] sm:$0xff] %v6083
      %6148 = vst [vmem:[%s230 + $0x150] sm:$0xff] %v6084
      %6149 = vst [vmem:[%s230 + $0x158] sm:$0xff] %v6085
      %6150 = vst [vmem:[%s230 + $0x160] sm:$0xff] %v6086
      %6151 = vst [vmem:[%s230 + $0x168] sm:$0xff] %v6087
      %6152 = vst [vmem:[%s230 + $0x170] sm:$0xff] %v6088
      %6153 = vst [vmem:[%s230 + $0x178] sm:$0xff] %v6089
      %6154 = vst [vmem:[%s230 + $0x180] sm:$0xff] %v6090
      %6155 = vst [vmem:[%s230 + $0x188] sm:$0xff] %v6091
      %6156 = vst [vmem:[%s230 + $0x190] sm:$0xff] %v6092
      %6157 = vst [vmem:[%s230 + $0x198] sm:$0xff] %v6093
      %6158 = vst [vmem:[%s230 + $0x1a0] sm:$0xff] %v6094
      %6159 = vst [vmem:[%s230 + $0x1a8] sm:$0xff] %v6095
      %6160 = vst [vmem:[%s230 + $0x1b0] sm:$0xff] %v6096
      %6161 = vst [vmem:[%s230 + $0x1b8] sm:$0xff] %v6097
      %6162 = vst [vmem:[%s230 + $0x1c0] sm:$0xff] %v6098
      %6163 = vst [vmem:[%s230 + $0x1c8] sm:$0xff] %v6099
      %6164 = vst [vmem:[%s230 + $0x1d0] sm:$0xff] %v6100
      %6165 = vst [vmem:[%s230 + $0x1d8] sm:$0xff] %v6101
      %6166 = vst [vmem:[%s230 + $0x1e0] sm:$0xff] %v6102
      %6167 = vst [vmem:[%s230 + $0x1e8] sm:$0xff] %v6103
      %6168 = vst [vmem:[%s230 + $0x1f0] sm:$0xff] %v6104
      %6169 = vst [vmem:[%s230 + $0x1f8] sm:$0xff] %v6105
      %v6170 = vld [vmem:[%s230] sm:$0xff]
      %v6171 = vld [vmem:[%s230 + $0x8] sm:$0xff]
      %v6172 = vld [vmem:[%s230 + $0x10] sm:$0xff]
      %v6173 = vld [vmem:[%s230 + $0x18] sm:$0xff]
      %v6174 = vld [vmem:[%s230 + $0x20] sm:$0xff]
      %v6175 = vld [vmem:[%s230 + $0x28] sm:$0xff]
      %v6176 = vld [vmem:[%s230 + $0x30] sm:$0xff]
      %v6177 = vld [vmem:[%s230 + $0x38] sm:$0xff]
      %v6178 = vld [vmem:[%s230 + $0x40] sm:$0xff]
      %v6179 = vld [vmem:[%s230 + $0x48] sm:$0xff]
      %v6180 = vld [vmem:[%s230 + $0x50] sm:$0xff]
      %v6181 = vld [vmem:[%s230 + $0x58] sm:$0xff]
      %v6182 = vld [vmem:[%s230 + $0x60] sm:$0xff]
      %v6183 = vld [vmem:[%s230 + $0x68] sm:$0xff]
      %v6184 = vld [vmem:[%s230 + $0x70] sm:$0xff]
      %v6185 = vld [vmem:[%s230 + $0x78] sm:$0xff]
      %v6186 = vld [vmem:[%s230 + $0x80] sm:$0xff]
      %v6187 = vld [vmem:[%s230 + $0x88] sm:$0xff]
      %v6188 = vld [vmem:[%s230 + $0x90] sm:$0xff]
      %v6189 = vld [vmem:[%s230 + $0x98] sm:$0xff]
      %v6190 = vld [vmem:[%s230 + $0xa0] sm:$0xff]
      %v6191 = vld [vmem:[%s230 + $0xa8] sm:$0xff]
      %v6192 = vld [vmem:[%s230 + $0xb0] sm:$0xff]
      %v6193 = vld [vmem:[%s230 + $0xb8] sm:$0xff]
      %v6194 = vld [vmem:[%s230 + $0xc0] sm:$0xff]
      %v6195 = vld [vmem:[%s230 + $0xc8] sm:$0xff]
      %v6196 = vld [vmem:[%s230 + $0xd0] sm:$0xff]
      %v6197 = vld [vmem:[%s230 + $0xd8] sm:$0xff]
      %v6198 = vld [vmem:[%s230 + $0xe0] sm:$0xff]
      %v6199 = vld [vmem:[%s230 + $0xe8] sm:$0xff]
      %v6200 = vld [vmem:[%s230 + $0xf0] sm:$0xff]
      %v6201 = vld [vmem:[%s230 + $0xf8] sm:$0xff]
      %v6202 = vld [vmem:[%s230 + $0x100] sm:$0xff]
      %v6203 = vld [vmem:[%s230 + $0x108] sm:$0xff]
      %v6204 = vld [vmem:[%s230 + $0x110] sm:$0xff]
      %v6205 = vld [vmem:[%s230 + $0x118] sm:$0xff]
      %v6206 = vld [vmem:[%s230 + $0x120] sm:$0xff]
      %v6207 = vld [vmem:[%s230 + $0x128] sm:$0xff]
      %v6208 = vld [vmem:[%s230 + $0x130] sm:$0xff]
      %v6209 = vld [vmem:[%s230 + $0x138] sm:$0xff]
      %v6210 = vld [vmem:[%s230 + $0x140] sm:$0xff]
      %v6211 = vld [vmem:[%s230 + $0x148] sm:$0xff]
      %v6212 = vld [vmem:[%s230 + $0x150] sm:$0xff]
      %v6213 = vld [vmem:[%s230 + $0x158] sm:$0xff]
      %v6214 = vld [vmem:[%s230 + $0x160] sm:$0xff]
      %v6215 = vld [vmem:[%s230 + $0x168] sm:$0xff]
      %v6216 = vld [vmem:[%s230 + $0x170] sm:$0xff]
      %v6217 = vld [vmem:[%s230 + $0x178] sm:$0xff]
      %v6218 = vld [vmem:[%s230 + $0x180] sm:$0xff]
      %v6219 = vld [vmem:[%s230 + $0x188] sm:$0xff]
      %v6220 = vld [vmem:[%s230 + $0x190] sm:$0xff]
      %v6221 = vld [vmem:[%s230 + $0x198] sm:$0xff]
      %v6222 = vld [vmem:[%s230 + $0x1a0] sm:$0xff]
      %v6223 = vld [vmem:[%s230 + $0x1a8] sm:$0xff]
      %v6224 = vld [vmem:[%s230 + $0x1b0] sm:$0xff]
      %v6225 = vld [vmem:[%s230 + $0x1b8] sm:$0xff]
      %v6226 = vld [vmem:[%s230 + $0x1c0] sm:$0xff]
      %v6227 = vld [vmem:[%s230 + $0x1c8] sm:$0xff]
      %v6228 = vld [vmem:[%s230 + $0x1d0] sm:$0xff]
      %v6229 = vld [vmem:[%s230 + $0x1d8] sm:$0xff]
      %v6230 = vld [vmem:[%s230 + $0x1e0] sm:$0xff]
      %v6231 = vld [vmem:[%s230 + $0x1e8] sm:$0xff]
      %v6232 = vld [vmem:[%s230 + $0x1f0] sm:$0xff]
      %v6233 = vld [vmem:[%s230 + $0x1f8] sm:$0xff]
      %v6234 = vld [vmem:[%s216 + $0x25] sm:$0xff]
      %v6235 = vld [vmem:[%s216 + $0x2d] sm:$0xff]
      %v6236 = vld [vmem:[%s216 + $0x35] sm:$0xff]
      %v6237 = vld [vmem:[%s216 + $0x3d] sm:$0xff]
      %v6238 = vld [vmem:[%s216 + $0x45] sm:$0xff]
      %v6239 = vld [vmem:[%s216 + $0x4d] sm:$0xff]
      %v6240 = vld [vmem:[%s216 + $0x55] sm:$0xff]
      %v6241 = vld [vmem:[%s216 + $0x5d] sm:$0xff]
      %v6242 = vld [vmem:[%s216 + $0x65] sm:$0xff]
      %v6243 = vld [vmem:[%s216 + $0x6d] sm:$0xff]
      %v6244 = vld [vmem:[%s216 + $0x75] sm:$0xff]
      %v6245 = vld [vmem:[%s216 + $0x7d] sm:$0xff]
      %v6246 = vld [vmem:[%s216 + $0x85] sm:$0xff]
      %v6247 = vld [vmem:[%s216 + $0x8d] sm:$0xff]
      %v6248 = vld [vmem:[%s216 + $0x95] sm:$0xff]
      %v6249 = vld [vmem:[%s216 + $0x9d] sm:$0xff]
      %v6250 = vld [vmem:[%s216 + $0xa5] sm:$0xff]
      %v6251 = vld [vmem:[%s216 + $0xad] sm:$0xff]
      %v6252 = vld [vmem:[%s216 + $0xb5] sm:$0xff]
      %v6253 = vld [vmem:[%s216 + $0xbd] sm:$0xff]
      %v6254 = vld [vmem:[%s216 + $0xc5] sm:$0xff]
      %v6255 = vld [vmem:[%s216 + $0xcd] sm:$0xff]
      %v6256 = vld [vmem:[%s216 + $0xd5] sm:$0xff]
      %v6257 = vld [vmem:[%s216 + $0xdd] sm:$0xff]
      %v6258 = vld [vmem:[%s216 + $0xe5] sm:$0xff]
      %v6259 = vld [vmem:[%s216 + $0xed] sm:$0xff]
      %v6260 = vld [vmem:[%s216 + $0xf5] sm:$0xff]
      %v6261 = vld [vmem:[%s216 + $0xfd] sm:$0xff]
      %v6262 = vld [vmem:[%s216 + $0x105] sm:$0xff]
      %v6263 = vld [vmem:[%s216 + $0x10d] sm:$0xff]
      %v6264 = vld [vmem:[%s216 + $0x115] sm:$0xff]
      %v6265 = vld [vmem:[%s216 + $0x11d] sm:$0xff]
      %v6266 = vld [vmem:[%s216 + $0x125] sm:$0xff]
      %v6267 = vld [vmem:[%s216 + $0x12d] sm:$0xff]
      %v6268 = vld [vmem:[%s216 + $0x135] sm:$0xff]
      %v6269 = vld [vmem:[%s216 + $0x13d] sm:$0xff]
      %v6270 = vld [vmem:[%s216 + $0x145] sm:$0xff]
      %v6271 = vld [vmem:[%s216 + $0x14d] sm:$0xff]
      %v6272 = vld [vmem:[%s216 + $0x155] sm:$0xff]
      %v6273 = vld [vmem:[%s216 + $0x15d] sm:$0xff]
      %v6274 = vld [vmem:[%s216 + $0x165] sm:$0xff]
      %v6275 = vld [vmem:[%s216 + $0x16d] sm:$0xff]
      %v6276 = vld [vmem:[%s216 + $0x175] sm:$0xff]
      %v6277 = vld [vmem:[%s216 + $0x17d] sm:$0xff]
      %v6278 = vld [vmem:[%s216 + $0x185] sm:$0xff]
      %v6279 = vld [vmem:[%s216 + $0x18d] sm:$0xff]
      %v6280 = vld [vmem:[%s216 + $0x195] sm:$0xff]
      %v6281 = vld [vmem:[%s216 + $0x19d] sm:$0xff]
      %v6282 = vld [vmem:[%s216 + $0x1a5] sm:$0xff]
      %v6283 = vld [vmem:[%s216 + $0x1ad] sm:$0xff]
      %v6284 = vld [vmem:[%s216 + $0x1b5] sm:$0xff]
      %v6285 = vld [vmem:[%s216 + $0x1bd] sm:$0xff]
      %v6286 = vld [vmem:[%s216 + $0x1c5] sm:$0xff]
      %v6287 = vld [vmem:[%s216 + $0x1cd] sm:$0xff]
      %v6288 = vld [vmem:[%s216 + $0x1d5] sm:$0xff]
      %v6289 = vld [vmem:[%s216 + $0x1dd] sm:$0xff]
      %v6290 = vld [vmem:[%s216 + $0x1e5] sm:$0xff]
      %v6291 = vld [vmem:[%s216 + $0x1ed] sm:$0xff]
      %v6292 = vld [vmem:[%s216 + $0x1f5] sm:$0xff]
      %v6293 = vld [vmem:[%s216 + $0x1fd] sm:$0xff]
      %v6294 = vld [vmem:[%s216 + $0x205] sm:$0xff]
      %v6295 = vld [vmem:[%s216 + $0x20d] sm:$0xff]
      %v6296 = vld [vmem:[%s216 + $0x215] sm:$0xff]
      %v6297 = vld [vmem:[%s216 + $0x21d] sm:$0xff]
      %s6298 = scalar_lea.vmem %s1, 28
      %v6299 = vld [vmem:[%s6298] sm:$0xf]
      %v6301 = vsel %vm432, %v6234, 0
      %v6304 = vsel %vm432, %v6235, 0
      %v6307 = vsel %vm432, %v6236, 0
      %v6310 = vsel %vm432, %v6237, 0
      %v6313 = vsel %vm432, %v6238, 0
      %v6316 = vsel %vm432, %v6239, 0
      %v6319 = vsel %vm432, %v6240, 0
      %v6322 = vsel %vm432, %v6241, 0
      %v6325 = vsel %vm432, %v6242, 0
      %v6328 = vsel %vm432, %v6243, 0
      %v6331 = vsel %vm432, %v6244, 0
      %v6334 = vsel %vm432, %v6245, 0
      %v6337 = vsel %vm432, %v6246, 0
      %v6340 = vsel %vm432, %v6247, 0
      %v6343 = vsel %vm432, %v6248, 0
      %v6346 = vsel %vm432, %v6249, 0
      %v6349 = vsel %vm432, %v6250, 0
      %v6352 = vsel %vm432, %v6251, 0
      %v6355 = vsel %vm432, %v6252, 0
      %v6358 = vsel %vm432, %v6253, 0
      %v6361 = vsel %vm432, %v6254, 0
      %v6364 = vsel %vm432, %v6255, 0
      %v6367 = vsel %vm432, %v6256, 0
      %v6370 = vsel %vm432, %v6257, 0
      %v6373 = vsel %vm432, %v6258, 0
      %v6376 = vsel %vm432, %v6259, 0
      %v6379 = vsel %vm432, %v6260, 0
      %v6382 = vsel %vm432, %v6261, 0
      %v6385 = vsel %vm432, %v6262, 0
      %v6388 = vsel %vm432, %v6263, 0
      %v6391 = vsel %vm432, %v6264, 0
      %v6394 = vsel %vm432, %v6265, 0
      %v6397 = vsel %vm432, %v6266, 0
      %v6400 = vsel %vm432, %v6267, 0
      %v6403 = vsel %vm432, %v6268, 0
      %v6406 = vsel %vm432, %v6269, 0
      %v6409 = vsel %vm432, %v6270, 0
      %v6412 = vsel %vm432, %v6271, 0
      %v6415 = vsel %vm432, %v6272, 0
      %v6418 = vsel %vm432, %v6273, 0
      %v6421 = vsel %vm432, %v6274, 0
      %v6424 = vsel %vm432, %v6275, 0
      %v6427 = vsel %vm432, %v6276, 0
      %v6430 = vsel %vm432, %v6277, 0
      %v6433 = vsel %vm432, %v6278, 0
      %v6436 = vsel %vm432, %v6279, 0
      %v6439 = vsel %vm432, %v6280, 0
      %v6442 = vsel %vm432, %v6281, 0
      %v6445 = vsel %vm432, %v6282, 0
      %v6448 = vsel %vm432, %v6283, 0
      %v6451 = vsel %vm432, %v6284, 0
      %v6454 = vsel %vm432, %v6285, 0
      %v6457 = vsel %vm432, %v6286, 0
      %v6460 = vsel %vm432, %v6287, 0
      %v6463 = vsel %vm432, %v6288, 0
      %v6466 = vsel %vm432, %v6289, 0
      %v6469 = vsel %vm432, %v6290, 0
      %v6472 = vsel %vm432, %v6291, 0
      %v6475 = vsel %vm432, %v6292, 0
      %v6478 = vsel %vm432, %v6293, 0
      %v6481 = vsel %vm432, %v6294, 0
      %v6484 = vsel %vm432, %v6295, 0
      %v6487 = vsel %vm432, %v6296, 0
      %v6490 = vsel %vm432, %v6297, 0
      %v6493 = vsel %vm625, %v6299, 0
      %6495 = vmatprep.subr.mxu0 0.0
      %6496 = vmatpush1.msra.mxu0 %v6493
      %6497 = vmatprep.subr.mxu0 0.0
      %6498 = vmatpush1.msra.mxu0 0.0
      %6499 = vmatprep.subr.mxu0 0.0
      %6500 = vmatpush1.msra.mxu0 0.0
      %6501 = vmatprep.subr.mxu0 0.0
      %6502 = vmatpush1.msra.mxu0 0.0
      %6503 = vmatprep.subr.mxu0 0.0
      %6504 = vmatpush1.msra.mxu0 0.0
      %6505 = vmatprep.subr.mxu0 0.0
      %6506 = vmatpush1.msra.mxu0 0.0
      %6507 = vmatprep.subr.mxu0 0.0
      %6508 = vmatpush1.msra.mxu0 0.0
      %6509 = vmatprep.subr.mxu0 0.0
      %6510 = vmatpush1.msra.mxu0 0.0
      %6511 = vmatprep.subr.mxu0 0.0
      %6512 = vmatpush1.msra.mxu0 0.0
      %6513 = vmatprep.subr.mxu0 0.0
      %6514 = vmatpush1.msra.mxu0 0.0
      %6515 = vmatprep.subr.mxu0 0.0
      %6516 = vmatpush1.msra.mxu0 0.0
      %6517 = vmatprep.subr.mxu0 0.0
      %6518 = vmatpush1.msra.mxu0 0.0
      %6519 = vmatprep.subr.mxu0 0.0
      %6520 = vmatpush1.msra.mxu0 0.0
      %6521 = vmatprep.subr.mxu0 0.0
      %6522 = vmatpush1.msra.mxu0 0.0
      %6523 = vmatprep.subr.mxu0 0.0
      %6524 = vmatpush1.msra.mxu0 0.0
      %6525 = vmatprep.subr.mxu0 0.0
      %6526 = vmatpush1.msra.mxu0 0.0
      %6527 = vmatprep.subr.mxu0 0.0
      %6528 = vmatpush1.msra.mxu0 0.0
      %6529 = vmatprep.subr.mxu0 0.0
      %6530 = vmatpush1.msra.mxu0 0.0
      %6531 = vmatprep.subr.mxu0 0.0
      %6532 = vmatpush1.msra.mxu0 0.0
      %6533 = vmatprep.subr.mxu0 0.0
      %6534 = vmatpush1.msra.mxu0 0.0
      %6535 = vmatprep.subr.mxu0 0.0
      %6536 = vmatpush1.msra.mxu0 0.0
      %6537 = vmatprep.subr.mxu0 0.0
      %6538 = vmatpush1.msra.mxu0 0.0
      %6539 = vmatprep.subr.mxu0 0.0
      %6540 = vmatpush1.msra.mxu0 0.0
      %6541 = vmatprep.subr.mxu0 0.0
      %6542 = vmatpush1.msra.mxu0 0.0
      %6543 = vmatprep.subr.mxu0 0.0
      %6544 = vmatpush1.msra.mxu0 0.0
      %6545 = vmatprep.subr.mxu0 0.0
      %6546 = vmatpush1.msra.mxu0 0.0
      %6547 = vmatprep.subr.mxu0 0.0
      %6548 = vmatpush1.msra.mxu0 0.0
      %6549 = vmatprep.subr.mxu0 0.0
      %6550 = vmatpush1.msra.mxu0 0.0
      %6551 = vmatprep.subr.mxu0 0.0
      %6552 = vmatpush1.msra.mxu0 0.0
      %6553 = vmatprep.subr.mxu0 0.0
      %6554 = vmatpush1.msra.mxu0 0.0
      %6555 = vmatprep.subr.mxu0 0.0
      %6556 = vmatpush1.msra.mxu0 0.0
      %6557 = vmatprep.subr.mxu0 0.0
      %6558 = vmatpush1.msra.mxu0 0.0
      %6559 = vmatprep.mubr.f32.mxu0 0.0
      %6560 = vmatmul.mubr.f32.gmra.mrb[0].mxu0 %v6301
      %v6561 = vpop.f32.mrb[0].mxu0
      %v6562 = vadd.f32 0.0, %v6561
      %v6563 = vpop.f32.mrb[0].mxu0
      %6564 = vmatprep.mubr.f32.mxu0 0.0
      %6565 = vmatmul.mubr.f32.gmra.mrb[0].mxu0 %v6304
      %v6566 = vpop.f32.mrb[0].mxu0
      %v6567 = vadd.f32 0.0, %v6566
      %v6568 = vpop.f32.mrb[0].mxu0
      %6569 = vmatprep.mubr.f32.mxu0 0.0
      %6570 = vmatmul.mubr.f32.gmra.mrb[0].mxu0 %v6307
      %v6571 = vpop.f32.mrb[0].mxu0
      %v6572 = vadd.f32 0.0, %v6571
      %v6573 = vpop.f32.mrb[0].mxu0
      %6574 = vmatprep.mubr.f32.mxu0 0.0
      %6575 = vmatmul.mubr.f32.gmra.mrb[0].mxu0 %v6310
      %v6576 = vpop.f32.mrb[0].mxu0
      %v6577 = vadd.f32 0.0, %v6576
      %v6578 = vpop.f32.mrb[0].mxu0
      %6579 = vmatprep.mubr.f32.mxu0 0.0
      %6580 = vmatmul.mubr.f32.gmra.mrb[0].mxu0 %v6313
      %v6581 = vpop.f32.mrb[0].mxu0
      %v6582 = vadd.f32 0.0, %v6581
      %v6583 = vpop.f32.mrb[0].mxu0
      %6584 = vmatprep.mubr.f32.mxu0 0.0
      %6585 = vmatmul.mubr.f32.gmra.mrb[0].mxu0 %v6316
      %v6586 = vpop.f32.mrb[0].mxu0
      %v6587 = vadd.f32 0.0, %v6586
      %v6588 = vpop.f32.mrb[0].mxu0
      %6589 = vmatprep.mubr.f32.mxu0 0.0
      %6590 = vmatmul.mubr.f32.gmra.mrb[0].mxu0 %v6319
      %v6591 = vpop.f32.mrb[0].mxu0
      %v6592 = vadd.f32 0.0, %v6591
      %v6593 = vpop.f32.mrb[0].mxu0
      %6594 = vmatprep.mubr.f32.mxu0 0.0
      %6595 = vmatmul.mubr.f32.gmra.mrb[0].mxu0 %v6322
      %v6596 = vpop.f32.mrb[0].mxu0
      %v6597 = vadd.f32 0.0, %v6596
      %v6598 = vpop.f32.mrb[0].mxu0
      %6599 = vmatprep.mubr.f32.mxu0 0.0
      %6600 = vmatmul.mubr.f32.gmra.mrb[0].mxu0 %v6325
      %v6601 = vpop.f32.mrb[0].mxu0
      %v6602 = vadd.f32 0.0, %v6601
      %v6603 = vpop.f32.mrb[0].mxu0
      %6604 = vmatprep.mubr.f32.mxu0 0.0
      %6605 = vmatmul.mubr.f32.gmra.mrb[0].mxu0 %v6328
      %v6606 = vpop.f32.mrb[0].mxu0
      %v6607 = vadd.f32 0.0, %v6606
      %v6608 = vpop.f32.mrb[0].mxu0
      %6609 = vmatprep.mubr.f32.mxu0 0.0
      %6610 = vmatmul.mubr.f32.gmra.mrb[0].mxu0 %v6331
      %v6611 = vpop.f32.mrb[0].mxu0
      %v6612 = vadd.f32 0.0, %v6611
      %v6613 = vpop.f32.mrb[0].mxu0
      %6614 = vmatprep.mubr.f32.mxu0 0.0
      %6615 = vmatmul.mubr.f32.gmra.mrb[0].mxu0 %v6334
      %v6616 = vpop.f32.mrb[0].mxu0
      %v6617 = vadd.f32 0.0, %v6616
      %v6618 = vpop.f32.mrb[0].mxu0
      %6619 = vmatprep.mubr.f32.mxu0 0.0
      %6620 = vmatmul.mubr.f32.gmra.mrb[0].mxu0 %v6337
      %v6621 = vpop.f32.mrb[0].mxu0
      %v6622 = vadd.f32 0.0, %v6621
      %v6623 = vpop.f32.mrb[0].mxu0
      %6624 = vmatprep.mubr.f32.mxu0 0.0
      %6625 = vmatmul.mubr.f32.gmra.mrb[0].mxu0 %v6340
      %v6626 = vpop.f32.mrb[0].mxu0
      %v6627 = vadd.f32 0.0, %v6626
      %v6628 = vpop.f32.mrb[0].mxu0
      %6629 = vmatprep.mubr.f32.mxu0 0.0
      %6630 = vmatmul.mubr.f32.gmra.mrb[0].mxu0 %v6343
      %v6631 = vpop.f32.mrb[0].mxu0
      %v6632 = vadd.f32 0.0, %v6631
      %v6633 = vpop.f32.mrb[0].mxu0
      %6634 = vmatprep.mubr.f32.mxu0 0.0
      %6635 = vmatmul.mubr.f32.gmra.mrb[0].mxu0 %v6346
      %v6636 = vpop.f32.mrb[0].mxu0
      %v6637 = vadd.f32 0.0, %v6636
      %v6638 = vpop.f32.mrb[0].mxu0
      %6639 = vmatprep.mubr.f32.mxu0 0.0
      %6640 = vmatmul.mubr.f32.gmra.mrb[0].mxu0 %v6349
      %v6641 = vpop.f32.mrb[0].mxu0
      %v6642 = vadd.f32 0.0, %v6641
      %v6643 = vpop.f32.mrb[0].mxu0
      %6644 = vmatprep.mubr.f32.mxu0 0.0
      %6645 = vmatmul.mubr.f32.gmra.mrb[0].mxu0 %v6352
      %v6646 = vpop.f32.mrb[0].mxu0
      %v6647 = vadd.f32 0.0, %v6646
      %v6648 = vpop.f32.mrb[0].mxu0
      %6649 = vmatprep.mubr.f32.mxu0 0.0
      %6650 = vmatmul.mubr.f32.gmra.mrb[0].mxu0 %v6355
      %v6651 = vpop.f32.mrb[0].mxu0
      %v6652 = vadd.f32 0.0, %v6651
      %v6653 = vpop.f32.mrb[0].mxu0
      %6654 = vmatprep.mubr.f32.mxu0 0.0
      %6655 = vmatmul.mubr.f32.gmra.mrb[0].mxu0 %v6358
      %v6656 = vpop.f32.mrb[0].mxu0
      %v6657 = vadd.f32 0.0, %v6656
      %v6658 = vpop.f32.mrb[0].mxu0
      %6659 = vmatprep.mubr.f32.mxu0 0.0
      %6660 = vmatmul.mubr.f32.gmra.mrb[0].mxu0 %v6361
      %v6661 = vpop.f32.mrb[0].mxu0
      %v6662 = vadd.f32 0.0, %v6661
      %v6663 = vpop.f32.mrb[0].mxu0
      %6664 = vmatprep.mubr.f32.mxu0 0.0
      %6665 = vmatmul.mubr.f32.gmra.mrb[0].mxu0 %v6364
      %v6666 = vpop.f32.mrb[0].mxu0
      %v6667 = vadd.f32 0.0, %v6666
      %v6668 = vpop.f32.mrb[0].mxu0
      %6669 = vmatprep.mubr.f32.mxu0 0.0
      %6670 = vmatmul.mubr.f32.gmra.mrb[0].mxu0 %v6367
      %v6671 = vpop.f32.mrb[0].mxu0
      %v6672 = vadd.f32 0.0, %v6671
      %v6673 = vpop.f32.mrb[0].mxu0
      %6674 = vmatprep.mubr.f32.mxu0 0.0
      %6675 = vmatmul.mubr.f32.gmra.mrb[0].mxu0 %v6370
      %v6676 = vpop.f32.mrb[0].mxu0
      %v6677 = vadd.f32 0.0, %v6676
      %v6678 = vpop.f32.mrb[0].mxu0
      %6679 = vmatprep.mubr.f32.mxu0 0.0
      %6680 = vmatmul.mubr.f32.gmra.mrb[0].mxu0 %v6373
      %v6681 = vpop.f32.mrb[0].mxu0
      %v6682 = vadd.f32 0.0, %v6681
      %v6683 = vpop.f32.mrb[0].mxu0
      %6684 = vmatprep.mubr.f32.mxu0 0.0
      %6685 = vmatmul.mubr.f32.gmra.mrb[0].mxu0 %v6376
      %v6686 = vpop.f32.mrb[0].mxu0
      %v6687 = vadd.f32 0.0, %v6686
      %v6688 = vpop.f32.mrb[0].mxu0
      %6689 = vmatprep.mubr.f32.mxu0 0.0
      %6690 = vmatmul.mubr.f32.gmra.mrb[0].mxu0 %v6379
      %v6691 = vpop.f32.mrb[0].mxu0
      %v6692 = vadd.f32 0.0, %v6691
      %v6693 = vpop.f32.mrb[0].mxu0
      %6694 = vmatprep.mubr.f32.mxu0 0.0
      %6695 = vmatmul.mubr.f32.gmra.mrb[0].mxu0 %v6382
      %v6696 = vpop.f32.mrb[0].mxu0
      %v6697 = vadd.f32 0.0, %v6696
      %v6698 = vpop.f32.mrb[0].mxu0
      %6699 = vmatprep.mubr.f32.mxu0 0.0
      %6700 = vmatmul.mubr.f32.gmra.mrb[0].mxu0 %v6385
      %v6701 = vpop.f32.mrb[0].mxu0
      %v6702 = vadd.f32 0.0, %v6701
      %v6703 = vpop.f32.mrb[0].mxu0
      %6704 = vmatprep.mubr.f32.mxu0 0.0
      %6705 = vmatmul.mubr.f32.gmra.mrb[0].mxu0 %v6388
      %v6706 = vpop.f32.mrb[0].mxu0
      %v6707 = vadd.f32 0.0, %v6706
      %v6708 = vpop.f32.mrb[0].mxu0
      %6709 = vmatprep.mubr.f32.mxu0 0.0
      %6710 = vmatmul.mubr.f32.gmra.mrb[0].mxu0 %v6391
      %v6711 = vpop.f32.mrb[0].mxu0
      %v6712 = vadd.f32 0.0, %v6711
      %v6713 = vpop.f32.mrb[0].mxu0
      %6714 = vmatprep.mubr.f32.mxu0 0.0
      %6715 = vmatmul.mubr.f32.gmra.mrb[0].mxu0 %v6394
      %v6716 = vpop.f32.mrb[0].mxu0
      %v6717 = vadd.f32 0.0, %v6716
      %v6718 = vpop.f32.mrb[0].mxu0
      %6719 = vmatprep.mubr.f32.mxu0 0.0
      %6720 = vmatmul.mubr.f32.gmra.mrb[0].mxu0 %v6397
      %v6721 = vpop.f32.mrb[0].mxu0
      %v6722 = vadd.f32 0.0, %v6721
      %v6723 = vpop.f32.mrb[0].mxu0
      %6724 = vmatprep.mubr.f32.mxu0 0.0
      %6725 = vmatmul.mubr.f32.gmra.mrb[0].mxu0 %v6400
      %v6726 = vpop.f32.mrb[0].mxu0
      %v6727 = vadd.f32 0.0, %v6726
      %v6728 = vpop.f32.mrb[0].mxu0
      %6729 = vmatprep.mubr.f32.mxu0 0.0
      %6730 = vmatmul.mubr.f32.gmra.mrb[0].mxu0 %v6403
      %v6731 = vpop.f32.mrb[0].mxu0
      %v6732 = vadd.f32 0.0, %v6731
      %v6733 = vpop.f32.mrb[0].mxu0
      %6734 = vmatprep.mubr.f32.mxu0 0.0
      %6735 = vmatmul.mubr.f32.gmra.mrb[0].mxu0 %v6406
      %v6736 = vpop.f32.mrb[0].mxu0
      %v6737 = vadd.f32 0.0, %v6736
      %v6738 = vpop.f32.mrb[0].mxu0
      %6739 = vmatprep.mubr.f32.mxu0 0.0
      %6740 = vmatmul.mubr.f32.gmra.mrb[0].mxu0 %v6409
      %v6741 = vpop.f32.mrb[0].mxu0
      %v6742 = vadd.f32 0.0, %v6741
      %v6743 = vpop.f32.mrb[0].mxu0
      %6744 = vmatprep.mubr.f32.mxu0 0.0
      %6745 = vmatmul.mubr.f32.gmra.mrb[0].mxu0 %v6412
      %v6746 = vpop.f32.mrb[0].mxu0
      %v6747 = vadd.f32 0.0, %v6746
      %v6748 = vpop.f32.mrb[0].mxu0
      %6749 = vmatprep.mubr.f32.mxu0 0.0
      %6750 = vmatmul.mubr.f32.gmra.mrb[0].mxu0 %v6415
      %v6751 = vpop.f32.mrb[0].mxu0
      %v6752 = vadd.f32 0.0, %v6751
      %v6753 = vpop.f32.mrb[0].mxu0
      %6754 = vmatprep.mubr.f32.mxu0 0.0
      %6755 = vmatmul.mubr.f32.gmra.mrb[0].mxu0 %v6418
      %v6756 = vpop.f32.mrb[0].mxu0
      %v6757 = vadd.f32 0.0, %v6756
      %v6758 = vpop.f32.mrb[0].mxu0
      %6759 = vmatprep.mubr.f32.mxu0 0.0
      %6760 = vmatmul.mubr.f32.gmra.mrb[0].mxu0 %v6421
      %v6761 = vpop.f32.mrb[0].mxu0
      %v6762 = vadd.f32 0.0, %v6761
      %v6763 = vpop.f32.mrb[0].mxu0
      %6764 = vmatprep.mubr.f32.mxu0 0.0
      %6765 = vmatmul.mubr.f32.gmra.mrb[0].mxu0 %v6424
      %v6766 = vpop.f32.mrb[0].mxu0
      %v6767 = vadd.f32 0.0, %v6766
      %v6768 = vpop.f32.mrb[0].mxu0
      %6769 = vmatprep.mubr.f32.mxu0 0.0
      %6770 = vmatmul.mubr.f32.gmra.mrb[0].mxu0 %v6427
      %v6771 = vpop.f32.mrb[0].mxu0
      %v6772 = vadd.f32 0.0, %v6771
      %v6773 = vpop.f32.mrb[0].mxu0
      %6774 = vmatprep.mubr.f32.mxu0 0.0
      %6775 = vmatmul.mubr.f32.gmra.mrb[0].mxu0 %v6430
      %v6776 = vpop.f32.mrb[0].mxu0
      %v6777 = vadd.f32 0.0, %v6776
      %v6778 = vpop.f32.mrb[0].mxu0
      %6779 = vmatprep.mubr.f32.mxu0 0.0
      %6780 = vmatmul.mubr.f32.gmra.mrb[0].mxu0 %v6433
      %v6781 = vpop.f32.mrb[0].mxu0
      %v6782 = vadd.f32 0.0, %v6781
      %v6783 = vpop.f32.mrb[0].mxu0
      %6784 = vmatprep.mubr.f32.mxu0 0.0
      %6785 = vmatmul.mubr.f32.gmra.mrb[0].mxu0 %v6436
      %v6786 = vpop.f32.mrb[0].mxu0
      %v6787 = vadd.f32 0.0, %v6786
      %v6788 = vpop.f32.mrb[0].mxu0
      %6789 = vmatprep.mubr.f32.mxu0 0.0
      %6790 = vmatmul.mubr.f32.gmra.mrb[0].mxu0 %v6439
      %v6791 = vpop.f32.mrb[0].mxu0
      %v6792 = vadd.f32 0.0, %v6791
      %v6793 = vpop.f32.mrb[0].mxu0
      %6794 = vmatprep.mubr.f32.mxu0 0.0
      %6795 = vmatmul.mubr.f32.gmra.mrb[0].mxu0 %v6442
      %v6796 = vpop.f32.mrb[0].mxu0
      %v6797 = vadd.f32 0.0, %v6796
      %v6798 = vpop.f32.mrb[0].mxu0
      %6799 = vmatprep.mubr.f32.mxu0 0.0
      %6800 = vmatmul.mubr.f32.gmra.mrb[0].mxu0 %v6445
      %v6801 = vpop.f32.mrb[0].mxu0
      %v6802 = vadd.f32 0.0, %v6801
      %v6803 = vpop.f32.mrb[0].mxu0
      %6804 = vmatprep.mubr.f32.mxu0 0.0
      %6805 = vmatmul.mubr.f32.gmra.mrb[0].mxu0 %v6448
      %v6806 = vpop.f32.mrb[0].mxu0
      %v6807 = vadd.f32 0.0, %v6806
      %v6808 = vpop.f32.mrb[0].mxu0
      %6809 = vmatprep.mubr.f32.mxu0 0.0
      %6810 = vmatmul.mubr.f32.gmra.mrb[0].mxu0 %v6451
      %v6811 = vpop.f32.mrb[0].mxu0
      %v6812 = vadd.f32 0.0, %v6811
      %v6813 = vpop.f32.mrb[0].mxu0
      %6814 = vmatprep.mubr.f32.mxu0 0.0
      %6815 = vmatmul.mubr.f32.gmra.mrb[0].mxu0 %v6454
      %v6816 = vpop.f32.mrb[0].mxu0
      %v6817 = vadd.f32 0.0, %v6816
      %v6818 = vpop.f32.mrb[0].mxu0
      %6819 = vmatprep.mubr.f32.mxu0 0.0
      %6820 = vmatmul.mubr.f32.gmra.mrb[0].mxu0 %v6457
      %v6821 = vpop.f32.mrb[0].mxu0
      %v6822 = vadd.f32 0.0, %v6821
      %v6823 = vpop.f32.mrb[0].mxu0
      %6824 = vmatprep.mubr.f32.mxu0 0.0
      %6825 = vmatmul.mubr.f32.gmra.mrb[0].mxu0 %v6460
      %v6826 = vpop.f32.mrb[0].mxu0
      %v6827 = vadd.f32 0.0, %v6826
      %v6828 = vpop.f32.mrb[0].mxu0
      %6829 = vmatprep.mubr.f32.mxu0 0.0
      %6830 = vmatmul.mubr.f32.gmra.mrb[0].mxu0 %v6463
      %v6831 = vpop.f32.mrb[0].mxu0
      %v6832 = vadd.f32 0.0, %v6831
      %v6833 = vpop.f32.mrb[0].mxu0
      %6834 = vmatprep.mubr.f32.mxu0 0.0
      %6835 = vmatmul.mubr.f32.gmra.mrb[0].mxu0 %v6466
      %v6836 = vpop.f32.mrb[0].mxu0
      %v6837 = vadd.f32 0.0, %v6836
      %v6838 = vpop.f32.mrb[0].mxu0
      %6839 = vmatprep.mubr.f32.mxu0 0.0
      %6840 = vmatmul.mubr.f32.gmra.mrb[0].mxu0 %v6469
      %v6841 = vpop.f32.mrb[0].mxu0
      %v6842 = vadd.f32 0.0, %v6841
      %v6843 = vpop.f32.mrb[0].mxu0
      %6844 = vmatprep.mubr.f32.mxu0 0.0
      %6845 = vmatmul.mubr.f32.gmra.mrb[0].mxu0 %v6472
      %v6846 = vpop.f32.mrb[0].mxu0
      %v6847 = vadd.f32 0.0, %v6846
      %v6848 = vpop.f32.mrb[0].mxu0
      %6849 = vmatprep.mubr.f32.mxu0 0.0
      %6850 = vmatmul.mubr.f32.gmra.mrb[0].mxu0 %v6475
      %v6851 = vpop.f32.mrb[0].mxu0
      %v6852 = vadd.f32 0.0, %v6851
      %v6853 = vpop.f32.mrb[0].mxu0
      %6854 = vmatprep.mubr.f32.mxu0 0.0
      %6855 = vmatmul.mubr.f32.gmra.mrb[0].mxu0 %v6478
      %v6856 = vpop.f32.mrb[0].mxu0
      %v6857 = vadd.f32 0.0, %v6856
      %v6858 = vpop.f32.mrb[0].mxu0
      %6859 = vmatprep.mubr.f32.mxu0 0.0
      %6860 = vmatmul.mubr.f32.gmra.mrb[0].mxu0 %v6481
      %v6861 = vpop.f32.mrb[0].mxu0
      %v6862 = vadd.f32 0.0, %v6861
      %v6863 = vpop.f32.mrb[0].mxu0
      %6864 = vmatprep.mubr.f32.mxu0 0.0
      %6865 = vmatmul.mubr.f32.gmra.mrb[0].mxu0 %v6484
      %v6866 = vpop.f32.mrb[0].mxu0
      %v6867 = vadd.f32 0.0, %v6866
      %v6868 = vpop.f32.mrb[0].mxu0
      %6869 = vmatprep.mubr.f32.mxu0 0.0
      %6870 = vmatmul.mubr.f32.gmra.mrb[0].mxu0 %v6487
      %v6871 = vpop.f32.mrb[0].mxu0
      %v6872 = vadd.f32 0.0, %v6871
      %v6873 = vpop.f32.mrb[0].mxu0
      %6874 = vmatprep.mubr.f32.mxu0 0.0
      %6875 = vmatmul.mubr.f32.gmra.mrb[0].mxu0 %v6490
      %v6876 = vpop.f32.mrb[0].mxu0
      %v6877 = vadd.f32 0.0, %v6876
      %v6878 = vpop.f32.mrb[0].mxu0
      %6879 = vdwg.mxu0
      %v6880 = vadd.f32 %v6170, %v6562
      %v6881 = vadd.f32 %v6171, %v6567
      %v6882 = vadd.f32 %v6172, %v6572
      %v6883 = vadd.f32 %v6173, %v6577
      %v6884 = vadd.f32 %v6174, %v6582
      %v6885 = vadd.f32 %v6175, %v6587
      %v6886 = vadd.f32 %v6176, %v6592
      %v6887 = vadd.f32 %v6177, %v6597
      %v6888 = vadd.f32 %v6178, %v6602
      %v6889 = vadd.f32 %v6179, %v6607
      %v6890 = vadd.f32 %v6180, %v6612
      %v6891 = vadd.f32 %v6181, %v6617
      %v6892 = vadd.f32 %v6182, %v6622
      %v6893 = vadd.f32 %v6183, %v6627
      %v6894 = vadd.f32 %v6184, %v6632
      %v6895 = vadd.f32 %v6185, %v6637
      %v6896 = vadd.f32 %v6186, %v6642
      %v6897 = vadd.f32 %v6187, %v6647
      %v6898 = vadd.f32 %v6188, %v6652
      %v6899 = vadd.f32 %v6189, %v6657
      %v6900 = vadd.f32 %v6190, %v6662
      %v6901 = vadd.f32 %v6191, %v6667
      %v6902 = vadd.f32 %v6192, %v6672
      %v6903 = vadd.f32 %v6193, %v6677
      %v6904 = vadd.f32 %v6194, %v6682
      %v6905 = vadd.f32 %v6195, %v6687
      %v6906 = vadd.f32 %v6196, %v6692
      %v6907 = vadd.f32 %v6197, %v6697
      %v6908 = vadd.f32 %v6198, %v6702
      %v6909 = vadd.f32 %v6199, %v6707
      %v6910 = vadd.f32 %v6200, %v6712
      %v6911 = vadd.f32 %v6201, %v6717
      %v6912 = vadd.f32 %v6202, %v6722
      %v6913 = vadd.f32 %v6203, %v6727
      %v6914 = vadd.f32 %v6204, %v6732
      %v6915 = vadd.f32 %v6205, %v6737
      %v6916 = vadd.f32 %v6206, %v6742
      %v6917 = vadd.f32 %v6207, %v6747
      %v6918 = vadd.f32 %v6208, %v6752
      %v6919 = vadd.f32 %v6209, %v6757
      %v6920 = vadd.f32 %v6210, %v6762
      %v6921 = vadd.f32 %v6211, %v6767
      %v6922 = vadd.f32 %v6212, %v6772
      %v6923 = vadd.f32 %v6213, %v6777
      %v6924 = vadd.f32 %v6214, %v6782
      %v6925 = vadd.f32 %v6215, %v6787
      %v6926 = vadd.f32 %v6216, %v6792
      %v6927 = vadd.f32 %v6217, %v6797
      %v6928 = vadd.f32 %v6218, %v6802
      %v6929 = vadd.f32 %v6219, %v6807
      %v6930 = vadd.f32 %v6220, %v6812
      %v6931 = vadd.f32 %v6221, %v6817
      %v6932 = vadd.f32 %v6222, %v6822
      %v6933 = vadd.f32 %v6223, %v6827
      %v6934 = vadd.f32 %v6224, %v6832
      %v6935 = vadd.f32 %v6225, %v6837
      %v6936 = vadd.f32 %v6226, %v6842
      %v6937 = vadd.f32 %v6227, %v6847
      %v6938 = vadd.f32 %v6228, %v6852
      %v6939 = vadd.f32 %v6229, %v6857
      %v6940 = vadd.f32 %v6230, %v6862
      %v6941 = vadd.f32 %v6231, %v6867
      %v6942 = vadd.f32 %v6232, %v6872
      %v6943 = vadd.f32 %v6233, %v6877
      %6944 = vst [vmem:[%s230] sm:$0xff] %v6880
      %6945 = vst [vmem:[%s230 + $0x8] sm:$0xff] %v6881
      %6946 = vst [vmem:[%s230 + $0x10] sm:$0xff] %v6882
      %6947 = vst [vmem:[%s230 + $0x18] sm:$0xff] %v6883
      %6948 = vst [vmem:[%s230 + $0x20] sm:$0xff] %v6884
      %6949 = vst [vmem:[%s230 + $0x28] sm:$0xff] %v6885
      %6950 = vst [vmem:[%s230 + $0x30] sm:$0xff] %v6886
      %6951 = vst [vmem:[%s230 + $0x38] sm:$0xff] %v6887
      %6952 = vst [vmem:[%s230 + $0x40] sm:$0xff] %v6888
      %6953 = vst [vmem:[%s230 + $0x48] sm:$0xff] %v6889
      %6954 = vst [vmem:[%s230 + $0x50] sm:$0xff] %v6890
      %6955 = vst [vmem:[%s230 + $0x58] sm:$0xff] %v6891
      %6956 = vst [vmem:[%s230 + $0x60] sm:$0xff] %v6892
      %6957 = vst [vmem:[%s230 + $0x68] sm:$0xff] %v6893
      %6958 = vst [vmem:[%s230 + $0x70] sm:$0xff] %v6894
      %6959 = vst [vmem:[%s230 + $0x78] sm:$0xff] %v6895
      %6960 = vst [vmem:[%s230 + $0x80] sm:$0xff] %v6896
      %6961 = vst [vmem:[%s230 + $0x88] sm:$0xff] %v6897
      %6962 = vst [vmem:[%s230 + $0x90] sm:$0xff] %v6898
      %6963 = vst [vmem:[%s230 + $0x98] sm:$0xff] %v6899
      %6964 = vst [vmem:[%s230 + $0xa0] sm:$0xff] %v6900
      %6965 = vst [vmem:[%s230 + $0xa8] sm:$0xff] %v6901
      %6966 = vst [vmem:[%s230 + $0xb0] sm:$0xff] %v6902
      %6967 = vst [vmem:[%s230 + $0xb8] sm:$0xff] %v6903
      %6968 = vst [vmem:[%s230 + $0xc0] sm:$0xff] %v6904
      %6969 = vst [vmem:[%s230 + $0xc8] sm:$0xff] %v6905
      %6970 = vst [vmem:[%s230 + $0xd0] sm:$0xff] %v6906
      %6971 = vst [vmem:[%s230 + $0xd8] sm:$0xff] %v6907
      %6972 = vst [vmem:[%s230 + $0xe0] sm:$0xff] %v6908
      %6973 = vst [vmem:[%s230 + $0xe8] sm:$0xff] %v6909
      %6974 = vst [vmem:[%s230 + $0xf0] sm:$0xff] %v6910
      %6975 = vst [vmem:[%s230 + $0xf8] sm:$0xff] %v6911
      %6976 = vst [vmem:[%s230 + $0x100] sm:$0xff] %v6912
      %6977 = vst [vmem:[%s230 + $0x108] sm:$0xff] %v6913
      %6978 = vst [vmem:[%s230 + $0x110] sm:$0xff] %v6914
      %6979 = vst [vmem:[%s230 + $0x118] sm:$0xff] %v6915
      %6980 = vst [vmem:[%s230 + $0x120] sm:$0xff] %v6916
      %6981 = vst [vmem:[%s230 + $0x128] sm:$0xff] %v6917
      %6982 = vst [vmem:[%s230 + $0x130] sm:$0xff] %v6918
      %6983 = vst [vmem:[%s230 + $0x138] sm:$0xff] %v6919
      %6984 = vst [vmem:[%s230 + $0x140] sm:$0xff] %v6920
      %6985 = vst [vmem:[%s230 + $0x148] sm:$0xff] %v6921
      %6986 = vst [vmem:[%s230 + $0x150] sm:$0xff] %v6922
      %6987 = vst [vmem:[%s230 + $0x158] sm:$0xff] %v6923
      %6988 = vst [vmem:[%s230 + $0x160] sm:$0xff] %v6924
      %6989 = vst [vmem:[%s230 + $0x168] sm:$0xff] %v6925
      %6990 = vst [vmem:[%s230 + $0x170] sm:$0xff] %v6926
      %6991 = vst [vmem:[%s230 + $0x178] sm:$0xff] %v6927
      %6992 = vst [vmem:[%s230 + $0x180] sm:$0xff] %v6928
      %6993 = vst [vmem:[%s230 + $0x188] sm:$0xff] %v6929
      %6994 = vst [vmem:[%s230 + $0x190] sm:$0xff] %v6930
      %6995 = vst [vmem:[%s230 + $0x198] sm:$0xff] %v6931
      %6996 = vst [vmem:[%s230 + $0x1a0] sm:$0xff] %v6932
      %6997 = vst [vmem:[%s230 + $0x1a8] sm:$0xff] %v6933
      %6998 = vst [vmem:[%s230 + $0x1b0] sm:$0xff] %v6934
      %6999 = vst [vmem:[%s230 + $0x1b8] sm:$0xff] %v6935
      %7000 = vst [vmem:[%s230 + $0x1c0] sm:$0xff] %v6936
      %7001 = vst [vmem:[%s230 + $0x1c8] sm:$0xff] %v6937
      %7002 = vst [vmem:[%s230 + $0x1d0] sm:$0xff] %v6938
      %7003 = vst [vmem:[%s230 + $0x1d8] sm:$0xff] %v6939
      %7004 = vst [vmem:[%s230 + $0x1e0] sm:$0xff] %v6940
      %7005 = vst [vmem:[%s230 + $0x1e8] sm:$0xff] %v6941
      %7006 = vst [vmem:[%s230 + $0x1f0] sm:$0xff] %v6942
      %7007 = vst [vmem:[%s230 + $0x1f8] sm:$0xff] %v6943
      %v7008 = vld [vmem:[%s230] sm:$0xff]
      %v7009 = vld [vmem:[%s230 + $0x8] sm:$0xff]
      %v7010 = vld [vmem:[%s230 + $0x10] sm:$0xff]
      %v7011 = vld [vmem:[%s230 + $0x18] sm:$0xff]
      %v7012 = vld [vmem:[%s230 + $0x20] sm:$0xff]
      %v7013 = vld [vmem:[%s230 + $0x28] sm:$0xff]
      %v7014 = vld [vmem:[%s230 + $0x30] sm:$0xff]
      %v7015 = vld [vmem:[%s230 + $0x38] sm:$0xff]
      %v7016 = vld [vmem:[%s230 + $0x40] sm:$0xff]
      %v7017 = vld [vmem:[%s230 + $0x48] sm:$0xff]
      %v7018 = vld [vmem:[%s230 + $0x50] sm:$0xff]
      %v7019 = vld [vmem:[%s230 + $0x58] sm:$0xff]
      %v7020 = vld [vmem:[%s230 + $0x60] sm:$0xff]
      %v7021 = vld [vmem:[%s230 + $0x68] sm:$0xff]
      %v7022 = vld [vmem:[%s230 + $0x70] sm:$0xff]
      %v7023 = vld [vmem:[%s230 + $0x78] sm:$0xff]
      %v7024 = vld [vmem:[%s230 + $0x80] sm:$0xff]
      %v7025 = vld [vmem:[%s230 + $0x88] sm:$0xff]
      %v7026 = vld [vmem:[%s230 + $0x90] sm:$0xff]
      %v7027 = vld [vmem:[%s230 + $0x98] sm:$0xff]
      %v7028 = vld [vmem:[%s230 + $0xa0] sm:$0xff]
      %v7029 = vld [vmem:[%s230 + $0xa8] sm:$0xff]
      %v7030 = vld [vmem:[%s230 + $0xb0] sm:$0xff]
      %v7031 = vld [vmem:[%s230 + $0xb8] sm:$0xff]
      %v7032 = vld [vmem:[%s230 + $0xc0] sm:$0xff]
      %v7033 = vld [vmem:[%s230 + $0xc8] sm:$0xff]
      %v7034 = vld [vmem:[%s230 + $0xd0] sm:$0xff]
      %v7035 = vld [vmem:[%s230 + $0xd8] sm:$0xff]
      %v7036 = vld [vmem:[%s230 + $0xe0] sm:$0xff]
      %v7037 = vld [vmem:[%s230 + $0xe8] sm:$0xff]
      %v7038 = vld [vmem:[%s230 + $0xf0] sm:$0xff]
      %v7039 = vld [vmem:[%s230 + $0xf8] sm:$0xff]
      %v7040 = vld [vmem:[%s230 + $0x100] sm:$0xff]
      %v7041 = vld [vmem:[%s230 + $0x108] sm:$0xff]
      %v7042 = vld [vmem:[%s230 + $0x110] sm:$0xff]
      %v7043 = vld [vmem:[%s230 + $0x118] sm:$0xff]
      %v7044 = vld [vmem:[%s230 + $0x120] sm:$0xff]
      %v7045 = vld [vmem:[%s230 + $0x128] sm:$0xff]
      %v7046 = vld [vmem:[%s230 + $0x130] sm:$0xff]
      %v7047 = vld [vmem:[%s230 + $0x138] sm:$0xff]
      %v7048 = vld [vmem:[%s230 + $0x140] sm:$0xff]
      %v7049 = vld [vmem:[%s230 + $0x148] sm:$0xff]
      %v7050 = vld [vmem:[%s230 + $0x150] sm:$0xff]
      %v7051 = vld [vmem:[%s230 + $0x158] sm:$0xff]
      %v7052 = vld [vmem:[%s230 + $0x160] sm:$0xff]
      %v7053 = vld [vmem:[%s230 + $0x168] sm:$0xff]
      %v7054 = vld [vmem:[%s230 + $0x170] sm:$0xff]
      %v7055 = vld [vmem:[%s230 + $0x178] sm:$0xff]
      %v7056 = vld [vmem:[%s230 + $0x180] sm:$0xff]
      %v7057 = vld [vmem:[%s230 + $0x188] sm:$0xff]
      %v7058 = vld [vmem:[%s230 + $0x190] sm:$0xff]
      %v7059 = vld [vmem:[%s230 + $0x198] sm:$0xff]
      %v7060 = vld [vmem:[%s230 + $0x1a0] sm:$0xff]
      %v7061 = vld [vmem:[%s230 + $0x1a8] sm:$0xff]
      %v7062 = vld [vmem:[%s230 + $0x1b0] sm:$0xff]
      %v7063 = vld [vmem:[%s230 + $0x1b8] sm:$0xff]
      %v7064 = vld [vmem:[%s230 + $0x1c0] sm:$0xff]
      %v7065 = vld [vmem:[%s230 + $0x1c8] sm:$0xff]
      %v7066 = vld [vmem:[%s230 + $0x1d0] sm:$0xff]
      %v7067 = vld [vmem:[%s230 + $0x1d8] sm:$0xff]
      %v7068 = vld [vmem:[%s230 + $0x1e0] sm:$0xff]
      %v7069 = vld [vmem:[%s230 + $0x1e8] sm:$0xff]
      %v7070 = vld [vmem:[%s230 + $0x1f0] sm:$0xff]
      %v7071 = vld [vmem:[%s230 + $0x1f8] sm:$0xff]
      %v7072 = vld [vmem:[%s216 + $0x26] sm:$0xff]
      %v7073 = vld [vmem:[%s216 + $0x2e] sm:$0xff]
      %v7074 = vld [vmem:[%s216 + $0x36] sm:$0xff]
      %v7075 = vld [vmem:[%s216 + $0x3e] sm:$0xff]
      %v7076 = vld [vmem:[%s216 + $0x46] sm:$0xff]
      %v7077 = vld [vmem:[%s216 + $0x4e] sm:$0xff]
      %v7078 = vld [vmem:[%s216 + $0x56] sm:$0xff]
      %v7079 = vld [vmem:[%s216 + $0x5e] sm:$0xff]
      %v7080 = vld [vmem:[%s216 + $0x66] sm:$0xff]
      %v7081 = vld [vmem:[%s216 + $0x6e] sm:$0xff]
      %v7082 = vld [vmem:[%s216 + $0x76] sm:$0xff]
      %v7083 = vld [vmem:[%s216 + $0x7e] sm:$0xff]
      %v7084 = vld [vmem:[%s216 + $0x86] sm:$0xff]
      %v7085 = vld [vmem:[%s216 + $0x8e] sm:$0xff]
      %v7086 = vld [vmem:[%s216 + $0x96] sm:$0xff]
      %v7087 = vld [vmem:[%s216 + $0x9e] sm:$0xff]
      %v7088 = vld [vmem:[%s216 + $0xa6] sm:$0xff]
      %v7089 = vld [vmem:[%s216 + $0xae] sm:$0xff]
      %v7090 = vld [vmem:[%s216 + $0xb6] sm:$0xff]
      %v7091 = vld [vmem:[%s216 + $0xbe] sm:$0xff]
      %v7092 = vld [vmem:[%s216 + $0xc6] sm:$0xff]
      %v7093 = vld [vmem:[%s216 + $0xce] sm:$0xff]
      %v7094 = vld [vmem:[%s216 + $0xd6] sm:$0xff]
      %v7095 = vld [vmem:[%s216 + $0xde] sm:$0xff]
      %v7096 = vld [vmem:[%s216 + $0xe6] sm:$0xff]
      %v7097 = vld [vmem:[%s216 + $0xee] sm:$0xff]
      %v7098 = vld [vmem:[%s216 + $0xf6] sm:$0xff]
      %v7099 = vld [vmem:[%s216 + $0xfe] sm:$0xff]
      %v7100 = vld [vmem:[%s216 + $0x106] sm:$0xff]
      %v7101 = vld [vmem:[%s216 + $0x10e] sm:$0xff]
      %v7102 = vld [vmem:[%s216 + $0x116] sm:$0xff]
      %v7103 = vld [vmem:[%s216 + $0x11e] sm:$0xff]
      %v7104 = vld [vmem:[%s216 + $0x126] sm:$0xff]
      %v7105 = vld [vmem:[%s216 + $0x12e] sm:$0xff]
      %v7106 = vld [vmem:[%s216 + $0x136] sm:$0xff]
      %v7107 = vld [vmem:[%s216 + $0x13e] sm:$0xff]
      %v7108 = vld [vmem:[%s216 + $0x146] sm:$0xff]
      %v7109 = vld [vmem:[%s216 + $0x14e] sm:$0xff]
      %v7110 = vld [vmem:[%s216 + $0x156] sm:$0xff]
      %v7111 = vld [vmem:[%s216 + $0x15e] sm:$0xff]
      %v7112 = vld [vmem:[%s216 + $0x166] sm:$0xff]
      %v7113 = vld [vmem:[%s216 + $0x16e] sm:$0xff]
      %v7114 = vld [vmem:[%s216 + $0x176] sm:$0xff]
      %v7115 = vld [vmem:[%s216 + $0x17e] sm:$0xff]
      %v7116 = vld [vmem:[%s216 + $0x186] sm:$0xff]
      %v7117 = vld [vmem:[%s216 + $0x18e] sm:$0xff]
      %v7118 = vld [vmem:[%s216 + $0x196] sm:$0xff]
      %v7119 = vld [vmem:[%s216 + $0x19e] sm:$0xff]
      %v7120 = vld [vmem:[%s216 + $0x1a6] sm:$0xff]
      %v7121 = vld [vmem:[%s216 + $0x1ae] sm:$0xff]
      %v7122 = vld [vmem:[%s216 + $0x1b6] sm:$0xff]
      %v7123 = vld [vmem:[%s216 + $0x1be] sm:$0xff]
      %v7124 = vld [vmem:[%s216 + $0x1c6] sm:$0xff]
      %v7125 = vld [vmem:[%s216 + $0x1ce] sm:$0xff]
      %v7126 = vld [vmem:[%s216 + $0x1d6] sm:$0xff]
      %v7127 = vld [vmem:[%s216 + $0x1de] sm:$0xff]
      %v7128 = vld [vmem:[%s216 + $0x1e6] sm:$0xff]
      %v7129 = vld [vmem:[%s216 + $0x1ee] sm:$0xff]
      %v7130 = vld [vmem:[%s216 + $0x1f6] sm:$0xff]
      %v7131 = vld [vmem:[%s216 + $0x1fe] sm:$0xff]
      %v7132 = vld [vmem:[%s216 + $0x206] sm:$0xff]
      %v7133 = vld [vmem:[%s216 + $0x20e] sm:$0xff]
      %v7134 = vld [vmem:[%s216 + $0x216] sm:$0xff]
      %v7135 = vld [vmem:[%s216 + $0x21e] sm:$0xff]
      %s7136 = scalar_lea.vmem %s1, 32
      %v7137 = vld [vmem:[%s7136] sm:$0xf]
      %v7139 = vsel %vm432, %v7072, 0
      %v7142 = vsel %vm432, %v7073, 0
      %v7145 = vsel %vm432, %v7074, 0
      %v7148 = vsel %vm432, %v7075, 0
      %v7151 = vsel %vm432, %v7076, 0
      %v7154 = vsel %vm432, %v7077, 0
      %v7157 = vsel %vm432, %v7078, 0
      %v7160 = vsel %vm432, %v7079, 0
      %v7163 = vsel %vm432, %v7080, 0
      %v7166 = vsel %vm432, %v7081, 0
      %v7169 = vsel %vm432, %v7082, 0
      %v7172 = vsel %vm432, %v7083, 0
      %v7175 = vsel %vm432, %v7084, 0
      %v7178 = vsel %vm432, %v7085, 0
      %v7181 = vsel %vm432, %v7086, 0
      %v7184 = vsel %vm432, %v7087, 0
      %v7187 = vsel %vm432, %v7088, 0
      %v7190 = vsel %vm432, %v7089, 0
      %v7193 = vsel %vm432, %v7090, 0
      %v7196 = vsel %vm432, %v7091, 0
      %v7199 = vsel %vm432, %v7092, 0
      %v7202 = vsel %vm432, %v7093, 0
      %v7205 = vsel %vm432, %v7094, 0
      %v7208 = vsel %vm432, %v7095, 0
      %v7211 = vsel %vm432, %v7096, 0
      %v7214 = vsel %vm432, %v7097, 0
      %v7217 = vsel %vm432, %v7098, 0
      %v7220 = vsel %vm432, %v7099, 0
      %v7223 = vsel %vm432, %v7100, 0
      %v7226 = vsel %vm432, %v7101, 0
      %v7229 = vsel %vm432, %v7102, 0
      %v7232 = vsel %vm432, %v7103, 0
      %v7235 = vsel %vm432, %v7104, 0
      %v7238 = vsel %vm432, %v7105, 0
      %v7241 = vsel %vm432, %v7106, 0
      %v7244 = vsel %vm432, %v7107, 0
      %v7247 = vsel %vm432, %v7108, 0
      %v7250 = vsel %vm432, %v7109, 0
      %v7253 = vsel %vm432, %v7110, 0
      %v7256 = vsel %vm432, %v7111, 0
      %v7259 = vsel %vm432, %v7112, 0
      %v7262 = vsel %vm432, %v7113, 0
      %v7265 = vsel %vm432, %v7114, 0
      %v7268 = vsel %vm432, %v7115, 0
      %v7271 = vsel %vm432, %v7116, 0
      %v7274 = vsel %vm432, %v7117, 0
      %v7277 = vsel %vm432, %v7118, 0
      %v7280 = vsel %vm432, %v7119, 0
      %v7283 = vsel %vm432, %v7120, 0
      %v7286 = vsel %vm432, %v7121, 0
      %v7289 = vsel %vm432, %v7122, 0
      %v7292 = vsel %vm432, %v7123, 0
      %v7295 = vsel %vm432, %v7124, 0
      %v7298 = vsel %vm432, %v7125, 0
      %v7301 = vsel %vm432, %v7126, 0
      %v7304 = vsel %vm432, %v7127, 0
      %v7307 = vsel %vm432, %v7128, 0
      %v7310 = vsel %vm432, %v7129, 0
      %v7313 = vsel %vm432, %v7130, 0
      %v7316 = vsel %vm432, %v7131, 0
      %v7319 = vsel %vm432, %v7132, 0
      %v7322 = vsel %vm432, %v7133, 0
      %v7325 = vsel %vm432, %v7134, 0
      %v7328 = vsel %vm432, %v7135, 0
      %v7331 = vsel %vm625, %v7137, 0
      %7333 = vmatprep.subr.mxu0 0.0
      %7334 = vmatpush1.msra.mxu0 %v7331
      %7335 = vmatprep.subr.mxu0 0.0
      %7336 = vmatpush1.msra.mxu0 0.0
      %7337 = vmatprep.subr.mxu0 0.0
      %7338 = vmatpush1.msra.mxu0 0.0
      %7339 = vmatprep.subr.mxu0 0.0
      %7340 = vmatpush1.msra.mxu0 0.0
      %7341 = vmatprep.subr.mxu0 0.0
      %7342 = vmatpush1.msra.mxu0 0.0
      %7343 = vmatprep.subr.mxu0 0.0
      %7344 = vmatpush1.msra.mxu0 0.0
      %7345 = vmatprep.subr.mxu0 0.0
      %7346 = vmatpush1.msra.mxu0 0.0
      %7347 = vmatprep.subr.mxu0 0.0
      %7348 = vmatpush1.msra.mxu0 0.0
      %7349 = vmatprep.subr.mxu0 0.0
      %7350 = vmatpush1.msra.mxu0 0.0
      %7351 = vmatprep.subr.mxu0 0.0
      %7352 = vmatpush1.msra.mxu0 0.0
      %7353 = vmatprep.subr.mxu0 0.0
      %7354 = vmatpush1.msra.mxu0 0.0
      %7355 = vmatprep.subr.mxu0 0.0
      %7356 = vmatpush1.msra.mxu0 0.0
      %7357 = vmatprep.subr.mxu0 0.0
      %7358 = vmatpush1.msra.mxu0 0.0
      %7359 = vmatprep.subr.mxu0 0.0
      %7360 = vmatpush1.msra.mxu0 0.0
      %7361 = vmatprep.subr.mxu0 0.0
      %7362 = vmatpush1.msra.mxu0 0.0
      %7363 = vmatprep.subr.mxu0 0.0
      %7364 = vmatpush1.msra.mxu0 0.0
      %7365 = vmatprep.subr.mxu0 0.0
      %7366 = vmatpush1.msra.mxu0 0.0
      %7367 = vmatprep.subr.mxu0 0.0
      %7368 = vmatpush1.msra.mxu0 0.0
      %7369 = vmatprep.subr.mxu0 0.0
      %7370 = vmatpush1.msra.mxu0 0.0
      %7371 = vmatprep.subr.mxu0 0.0
      %7372 = vmatpush1.msra.mxu0 0.0
      %7373 = vmatprep.subr.mxu0 0.0
      %7374 = vmatpush1.msra.mxu0 0.0
      %7375 = vmatprep.subr.mxu0 0.0
      %7376 = vmatpush1.msra.mxu0 0.0
      %7377 = vmatprep.subr.mxu0 0.0
      %7378 = vmatpush1.msra.mxu0 0.0
      %7379 = vmatprep.subr.mxu0 0.0
      %7380 = vmatpush1.msra.mxu0 0.0
      %7381 = vmatprep.subr.mxu0 0.0
      %7382 = vmatpush1.msra.mxu0 0.0
      %7383 = vmatprep.subr.mxu0 0.0
      %7384 = vmatpush1.msra.mxu0 0.0
      %7385 = vmatprep.subr.mxu0 0.0
      %7386 = vmatpush1.msra.mxu0 0.0
      %7387 = vmatprep.subr.mxu0 0.0
      %7388 = vmatpush1.msra.mxu0 0.0
      %7389 = vmatprep.subr.mxu0 0.0
      %7390 = vmatpush1.msra.mxu0 0.0
      %7391 = vmatprep.subr.mxu0 0.0
      %7392 = vmatpush1.msra.mxu0 0.0
      %7393 = vmatprep.subr.mxu0 0.0
      %7394 = vmatpush1.msra.mxu0 0.0
      %7395 = vmatprep.subr.mxu0 0.0
      %7396 = vmatpush1.msra.mxu0 0.0
      %7397 = vmatprep.mubr.f32.mxu0 0.0
      %7398 = vmatmul.mubr.f32.gmra.mrb[0].mxu0 %v7139
      %v7399 = vpop.f32.mrb[0].mxu0
      %v7400 = vadd.f32 0.0, %v7399
      %v7401 = vpop.f32.mrb[0].mxu0
      %7402 = vmatprep.mubr.f32.mxu0 0.0
      %7403 = vmatmul.mubr.f32.gmra.mrb[0].mxu0 %v7142
      %v7404 = vpop.f32.mrb[0].mxu0
      %v7405 = vadd.f32 0.0, %v7404
      %v7406 = vpop.f32.mrb[0].mxu0
      %7407 = vmatprep.mubr.f32.mxu0 0.0
      %7408 = vmatmul.mubr.f32.gmra.mrb[0].mxu0 %v7145
      %v7409 = vpop.f32.mrb[0].mxu0
      %v7410 = vadd.f32 0.0, %v7409
      %v7411 = vpop.f32.mrb[0].mxu0
      %7412 = vmatprep.mubr.f32.mxu0 0.0
      %7413 = vmatmul.mubr.f32.gmra.mrb[0].mxu0 %v7148
      %v7414 = vpop.f32.mrb[0].mxu0
      %v7415 = vadd.f32 0.0, %v7414
      %v7416 = vpop.f32.mrb[0].mxu0
      %7417 = vmatprep.mubr.f32.mxu0 0.0
      %7418 = vmatmul.mubr.f32.gmra.mrb[0].mxu0 %v7151
      %v7419 = vpop.f32.mrb[0].mxu0
      %v7420 = vadd.f32 0.0, %v7419
      %v7421 = vpop.f32.mrb[0].mxu0
      %7422 = vmatprep.mubr.f32.mxu0 0.0
      %7423 = vmatmul.mubr.f32.gmra.mrb[0].mxu0 %v7154
      %v7424 = vpop.f32.mrb[0].mxu0
      %v7425 = vadd.f32 0.0, %v7424
      %v7426 = vpop.f32.mrb[0].mxu0
      %7427 = vmatprep.mubr.f32.mxu0 0.0
      %7428 = vmatmul.mubr.f32.gmra.mrb[0].mxu0 %v7157
      %v7429 = vpop.f32.mrb[0].mxu0
      %v7430 = vadd.f32 0.0, %v7429
      %v7431 = vpop.f32.mrb[0].mxu0
      %7432 = vmatprep.mubr.f32.mxu0 0.0
      %7433 = vmatmul.mubr.f32.gmra.mrb[0].mxu0 %v7160
      %v7434 = vpop.f32.mrb[0].mxu0
      %v7435 = vadd.f32 0.0, %v7434
      %v7436 = vpop.f32.mrb[0].mxu0
      %7437 = vmatprep.mubr.f32.mxu0 0.0
      %7438 = vmatmul.mubr.f32.gmra.mrb[0].mxu0 %v7163
      %v7439 = vpop.f32.mrb[0].mxu0
      %v7440 = vadd.f32 0.0, %v7439
      %v7441 = vpop.f32.mrb[0].mxu0
      %7442 = vmatprep.mubr.f32.mxu0 0.0
      %7443 = vmatmul.mubr.f32.gmra.mrb[0].mxu0 %v7166
      %v7444 = vpop.f32.mrb[0].mxu0
      %v7445 = vadd.f32 0.0, %v7444
      %v7446 = vpop.f32.mrb[0].mxu0
      %7447 = vmatprep.mubr.f32.mxu0 0.0
      %7448 = vmatmul.mubr.f32.gmra.mrb[0].mxu0 %v7169
      %v7449 = vpop.f32.mrb[0].mxu0
      %v7450 = vadd.f32 0.0, %v7449
      %v7451 = vpop.f32.mrb[0].mxu0
      %7452 = vmatprep.mubr.f32.mxu0 0.0
      %7453 = vmatmul.mubr.f32.gmra.mrb[0].mxu0 %v7172
      %v7454 = vpop.f32.mrb[0].mxu0
      %v7455 = vadd.f32 0.0, %v7454
      %v7456 = vpop.f32.mrb[0].mxu0
      %7457 = vmatprep.mubr.f32.mxu0 0.0
      %7458 = vmatmul.mubr.f32.gmra.mrb[0].mxu0 %v7175
      %v7459 = vpop.f32.mrb[0].mxu0
      %v7460 = vadd.f32 0.0, %v7459
      %v7461 = vpop.f32.mrb[0].mxu0
      %7462 = vmatprep.mubr.f32.mxu0 0.0
      %7463 = vmatmul.mubr.f32.gmra.mrb[0].mxu0 %v7178
      %v7464 = vpop.f32.mrb[0].mxu0
      %v7465 = vadd.f32 0.0, %v7464
      %v7466 = vpop.f32.mrb[0].mxu0
      %7467 = vmatprep.mubr.f32.mxu0 0.0
      %7468 = vmatmul.mubr.f32.gmra.mrb[0].mxu0 %v7181
      %v7469 = vpop.f32.mrb[0].mxu0
      %v7470 = vadd.f32 0.0, %v7469
      %v7471 = vpop.f32.mrb[0].mxu0
      %7472 = vmatprep.mubr.f32.mxu0 0.0
      %7473 = vmatmul.mubr.f32.gmra.mrb[0].mxu0 %v7184
      %v7474 = vpop.f32.mrb[0].mxu0
      %v7475 = vadd.f32 0.0, %v7474
      %v7476 = vpop.f32.mrb[0].mxu0
      %7477 = vmatprep.mubr.f32.mxu0 0.0
      %7478 = vmatmul.mubr.f32.gmra.mrb[0].mxu0 %v7187
      %v7479 = vpop.f32.mrb[0].mxu0
      %v7480 = vadd.f32 0.0, %v7479
      %v7481 = vpop.f32.mrb[0].mxu0
      %7482 = vmatprep.mubr.f32.mxu0 0.0
      %7483 = vmatmul.mubr.f32.gmra.mrb[0].mxu0 %v7190
      %v7484 = vpop.f32.mrb[0].mxu0
      %v7485 = vadd.f32 0.0, %v7484
      %v7486 = vpop.f32.mrb[0].mxu0
      %7487 = vmatprep.mubr.f32.mxu0 0.0
      %7488 = vmatmul.mubr.f32.gmra.mrb[0].mxu0 %v7193
      %v7489 = vpop.f32.mrb[0].mxu0
      %v7490 = vadd.f32 0.0, %v7489
      %v7491 = vpop.f32.mrb[0].mxu0
      %7492 = vmatprep.mubr.f32.mxu0 0.0
      %7493 = vmatmul.mubr.f32.gmra.mrb[0].mxu0 %v7196
      %v7494 = vpop.f32.mrb[0].mxu0
      %v7495 = vadd.f32 0.0, %v7494
      %v7496 = vpop.f32.mrb[0].mxu0
      %7497 = vmatprep.mubr.f32.mxu0 0.0
      %7498 = vmatmul.mubr.f32.gmra.mrb[0].mxu0 %v7199
      %v7499 = vpop.f32.mrb[0].mxu0
      %v7500 = vadd.f32 0.0, %v7499
      %v7501 = vpop.f32.mrb[0].mxu0
      %7502 = vmatprep.mubr.f32.mxu0 0.0
      %7503 = vmatmul.mubr.f32.gmra.mrb[0].mxu0 %v7202
      %v7504 = vpop.f32.mrb[0].mxu0
      %v7505 = vadd.f32 0.0, %v7504
      %v7506 = vpop.f32.mrb[0].mxu0
      %7507 = vmatprep.mubr.f32.mxu0 0.0
      %7508 = vmatmul.mubr.f32.gmra.mrb[0].mxu0 %v7205
      %v7509 = vpop.f32.mrb[0].mxu0
      %v7510 = vadd.f32 0.0, %v7509
      %v7511 = vpop.f32.mrb[0].mxu0
      %7512 = vmatprep.mubr.f32.mxu0 0.0
      %7513 = vmatmul.mubr.f32.gmra.mrb[0].mxu0 %v7208
      %v7514 = vpop.f32.mrb[0].mxu0
      %v7515 = vadd.f32 0.0, %v7514
      %v7516 = vpop.f32.mrb[0].mxu0
      %7517 = vmatprep.mubr.f32.mxu0 0.0
      %7518 = vmatmul.mubr.f32.gmra.mrb[0].mxu0 %v7211
      %v7519 = vpop.f32.mrb[0].mxu0
      %v7520 = vadd.f32 0.0, %v7519
      %v7521 = vpop.f32.mrb[0].mxu0
      %7522 = vmatprep.mubr.f32.mxu0 0.0
      %7523 = vmatmul.mubr.f32.gmra.mrb[0].mxu0 %v7214
      %v7524 = vpop.f32.mrb[0].mxu0
      %v7525 = vadd.f32 0.0, %v7524
      %v7526 = vpop.f32.mrb[0].mxu0
      %7527 = vmatprep.mubr.f32.mxu0 0.0
      %7528 = vmatmul.mubr.f32.gmra.mrb[0].mxu0 %v7217
      %v7529 = vpop.f32.mrb[0].mxu0
      %v7530 = vadd.f32 0.0, %v7529
      %v7531 = vpop.f32.mrb[0].mxu0
      %7532 = vmatprep.mubr.f32.mxu0 0.0
      %7533 = vmatmul.mubr.f32.gmra.mrb[0].mxu0 %v7220
      %v7534 = vpop.f32.mrb[0].mxu0
      %v7535 = vadd.f32 0.0, %v7534
      %v7536 = vpop.f32.mrb[0].mxu0
      %7537 = vmatprep.mubr.f32.mxu0 0.0
      %7538 = vmatmul.mubr.f32.gmra.mrb[0].mxu0 %v7223
      %v7539 = vpop.f32.mrb[0].mxu0
      %v7540 = vadd.f32 0.0, %v7539
      %v7541 = vpop.f32.mrb[0].mxu0
      %7542 = vmatprep.mubr.f32.mxu0 0.0
      %7543 = vmatmul.mubr.f32.gmra.mrb[0].mxu0 %v7226
      %v7544 = vpop.f32.mrb[0].mxu0
      %v7545 = vadd.f32 0.0, %v7544
      %v7546 = vpop.f32.mrb[0].mxu0
      %7547 = vmatprep.mubr.f32.mxu0 0.0
      %7548 = vmatmul.mubr.f32.gmra.mrb[0].mxu0 %v7229
      %v7549 = vpop.f32.mrb[0].mxu0
      %v7550 = vadd.f32 0.0, %v7549
      %v7551 = vpop.f32.mrb[0].mxu0
      %7552 = vmatprep.mubr.f32.mxu0 0.0
      %7553 = vmatmul.mubr.f32.gmra.mrb[0].mxu0 %v7232
      %v7554 = vpop.f32.mrb[0].mxu0
      %v7555 = vadd.f32 0.0, %v7554
      %v7556 = vpop.f32.mrb[0].mxu0
      %7557 = vmatprep.mubr.f32.mxu0 0.0
      %7558 = vmatmul.mubr.f32.gmra.mrb[0].mxu0 %v7235
      %v7559 = vpop.f32.mrb[0].mxu0
      %v7560 = vadd.f32 0.0, %v7559
      %v7561 = vpop.f32.mrb[0].mxu0
      %7562 = vmatprep.mubr.f32.mxu0 0.0
      %7563 = vmatmul.mubr.f32.gmra.mrb[0].mxu0 %v7238
      %v7564 = vpop.f32.mrb[0].mxu0
      %v7565 = vadd.f32 0.0, %v7564
      %v7566 = vpop.f32.mrb[0].mxu0
      %7567 = vmatprep.mubr.f32.mxu0 0.0
      %7568 = vmatmul.mubr.f32.gmra.mrb[0].mxu0 %v7241
      %v7569 = vpop.f32.mrb[0].mxu0
      %v7570 = vadd.f32 0.0, %v7569
      %v7571 = vpop.f32.mrb[0].mxu0
      %7572 = vmatprep.mubr.f32.mxu0 0.0
      %7573 = vmatmul.mubr.f32.gmra.mrb[0].mxu0 %v7244
      %v7574 = vpop.f32.mrb[0].mxu0
      %v7575 = vadd.f32 0.0, %v7574
      %v7576 = vpop.f32.mrb[0].mxu0
      %7577 = vmatprep.mubr.f32.mxu0 0.0
      %7578 = vmatmul.mubr.f32.gmra.mrb[0].mxu0 %v7247
      %v7579 = vpop.f32.mrb[0].mxu0
      %v7580 = vadd.f32 0.0, %v7579
      %v7581 = vpop.f32.mrb[0].mxu0
      %7582 = vmatprep.mubr.f32.mxu0 0.0
      %7583 = vmatmul.mubr.f32.gmra.mrb[0].mxu0 %v7250
      %v7584 = vpop.f32.mrb[0].mxu0
      %v7585 = vadd.f32 0.0, %v7584
      %v7586 = vpop.f32.mrb[0].mxu0
      %7587 = vmatprep.mubr.f32.mxu0 0.0
      %7588 = vmatmul.mubr.f32.gmra.mrb[0].mxu0 %v7253
      %v7589 = vpop.f32.mrb[0].mxu0
      %v7590 = vadd.f32 0.0, %v7589
      %v7591 = vpop.f32.mrb[0].mxu0
      %7592 = vmatprep.mubr.f32.mxu0 0.0
      %7593 = vmatmul.mubr.f32.gmra.mrb[0].mxu0 %v7256
      %v7594 = vpop.f32.mrb[0].mxu0
      %v7595 = vadd.f32 0.0, %v7594
      %v7596 = vpop.f32.mrb[0].mxu0
      %7597 = vmatprep.mubr.f32.mxu0 0.0
      %7598 = vmatmul.mubr.f32.gmra.mrb[0].mxu0 %v7259
      %v7599 = vpop.f32.mrb[0].mxu0
      %v7600 = vadd.f32 0.0, %v7599
      %v7601 = vpop.f32.mrb[0].mxu0
      %7602 = vmatprep.mubr.f32.mxu0 0.0
      %7603 = vmatmul.mubr.f32.gmra.mrb[0].mxu0 %v7262
      %v7604 = vpop.f32.mrb[0].mxu0
      %v7605 = vadd.f32 0.0, %v7604
      %v7606 = vpop.f32.mrb[0].mxu0
      %7607 = vmatprep.mubr.f32.mxu0 0.0
      %7608 = vmatmul.mubr.f32.gmra.mrb[0].mxu0 %v7265
      %v7609 = vpop.f32.mrb[0].mxu0
      %v7610 = vadd.f32 0.0, %v7609
      %v7611 = vpop.f32.mrb[0].mxu0
      %7612 = vmatprep.mubr.f32.mxu0 0.0
      %7613 = vmatmul.mubr.f32.gmra.mrb[0].mxu0 %v7268
      %v7614 = vpop.f32.mrb[0].mxu0
      %v7615 = vadd.f32 0.0, %v7614
      %v7616 = vpop.f32.mrb[0].mxu0
      %7617 = vmatprep.mubr.f32.mxu0 0.0
      %7618 = vmatmul.mubr.f32.gmra.mrb[0].mxu0 %v7271
      %v7619 = vpop.f32.mrb[0].mxu0
      %v7620 = vadd.f32 0.0, %v7619
      %v7621 = vpop.f32.mrb[0].mxu0
      %7622 = vmatprep.mubr.f32.mxu0 0.0
      %7623 = vmatmul.mubr.f32.gmra.mrb[0].mxu0 %v7274
      %v7624 = vpop.f32.mrb[0].mxu0
      %v7625 = vadd.f32 0.0, %v7624
      %v7626 = vpop.f32.mrb[0].mxu0
      %7627 = vmatprep.mubr.f32.mxu0 0.0
      %7628 = vmatmul.mubr.f32.gmra.mrb[0].mxu0 %v7277
      %v7629 = vpop.f32.mrb[0].mxu0
      %v7630 = vadd.f32 0.0, %v7629
      %v7631 = vpop.f32.mrb[0].mxu0
      %7632 = vmatprep.mubr.f32.mxu0 0.0
      %7633 = vmatmul.mubr.f32.gmra.mrb[0].mxu0 %v7280
      %v7634 = vpop.f32.mrb[0].mxu0
      %v7635 = vadd.f32 0.0, %v7634
      %v7636 = vpop.f32.mrb[0].mxu0
      %7637 = vmatprep.mubr.f32.mxu0 0.0
      %7638 = vmatmul.mubr.f32.gmra.mrb[0].mxu0 %v7283
      %v7639 = vpop.f32.mrb[0].mxu0
      %v7640 = vadd.f32 0.0, %v7639
      %v7641 = vpop.f32.mrb[0].mxu0
      %7642 = vmatprep.mubr.f32.mxu0 0.0
      %7643 = vmatmul.mubr.f32.gmra.mrb[0].mxu0 %v7286
      %v7644 = vpop.f32.mrb[0].mxu0
      %v7645 = vadd.f32 0.0, %v7644
      %v7646 = vpop.f32.mrb[0].mxu0
      %7647 = vmatprep.mubr.f32.mxu0 0.0
      %7648 = vmatmul.mubr.f32.gmra.mrb[0].mxu0 %v7289
      %v7649 = vpop.f32.mrb[0].mxu0
      %v7650 = vadd.f32 0.0, %v7649
      %v7651 = vpop.f32.mrb[0].mxu0
      %7652 = vmatprep.mubr.f32.mxu0 0.0
      %7653 = vmatmul.mubr.f32.gmra.mrb[0].mxu0 %v7292
      %v7654 = vpop.f32.mrb[0].mxu0
      %v7655 = vadd.f32 0.0, %v7654
      %v7656 = vpop.f32.mrb[0].mxu0
      %7657 = vmatprep.mubr.f32.mxu0 0.0
      %7658 = vmatmul.mubr.f32.gmra.mrb[0].mxu0 %v7295
      %v7659 = vpop.f32.mrb[0].mxu0
      %v7660 = vadd.f32 0.0, %v7659
      %v7661 = vpop.f32.mrb[0].mxu0
      %7662 = vmatprep.mubr.f32.mxu0 0.0
      %7663 = vmatmul.mubr.f32.gmra.mrb[0].mxu0 %v7298
      %v7664 = vpop.f32.mrb[0].mxu0
      %v7665 = vadd.f32 0.0, %v7664
      %v7666 = vpop.f32.mrb[0].mxu0
      %7667 = vmatprep.mubr.f32.mxu0 0.0
      %7668 = vmatmul.mubr.f32.gmra.mrb[0].mxu0 %v7301
      %v7669 = vpop.f32.mrb[0].mxu0
      %v7670 = vadd.f32 0.0, %v7669
      %v7671 = vpop.f32.mrb[0].mxu0
      %7672 = vmatprep.mubr.f32.mxu0 0.0
      %7673 = vmatmul.mubr.f32.gmra.mrb[0].mxu0 %v7304
      %v7674 = vpop.f32.mrb[0].mxu0
      %v7675 = vadd.f32 0.0, %v7674
      %v7676 = vpop.f32.mrb[0].mxu0
      %7677 = vmatprep.mubr.f32.mxu0 0.0
      %7678 = vmatmul.mubr.f32.gmra.mrb[0].mxu0 %v7307
      %v7679 = vpop.f32.mrb[0].mxu0
      %v7680 = vadd.f32 0.0, %v7679
      %v7681 = vpop.f32.mrb[0].mxu0
      %7682 = vmatprep.mubr.f32.mxu0 0.0
      %7683 = vmatmul.mubr.f32.gmra.mrb[0].mxu0 %v7310
      %v7684 = vpop.f32.mrb[0].mxu0
      %v7685 = vadd.f32 0.0, %v7684
      %v7686 = vpop.f32.mrb[0].mxu0
      %7687 = vmatprep.mubr.f32.mxu0 0.0
      %7688 = vmatmul.mubr.f32.gmra.mrb[0].mxu0 %v7313
      %v7689 = vpop.f32.mrb[0].mxu0
      %v7690 = vadd.f32 0.0, %v7689
      %v7691 = vpop.f32.mrb[0].mxu0
      %7692 = vmatprep.mubr.f32.mxu0 0.0
      %7693 = vmatmul.mubr.f32.gmra.mrb[0].mxu0 %v7316
      %v7694 = vpop.f32.mrb[0].mxu0
      %v7695 = vadd.f32 0.0, %v7694
      %v7696 = vpop.f32.mrb[0].mxu0
      %7697 = vmatprep.mubr.f32.mxu0 0.0
      %7698 = vmatmul.mubr.f32.gmra.mrb[0].mxu0 %v7319
      %v7699 = vpop.f32.mrb[0].mxu0
      %v7700 = vadd.f32 0.0, %v7699
      %v7701 = vpop.f32.mrb[0].mxu0
      %7702 = vmatprep.mubr.f32.mxu0 0.0
      %7703 = vmatmul.mubr.f32.gmra.mrb[0].mxu0 %v7322
      %v7704 = vpop.f32.mrb[0].mxu0
      %v7705 = vadd.f32 0.0, %v7704
      %v7706 = vpop.f32.mrb[0].mxu0
      %7707 = vmatprep.mubr.f32.mxu0 0.0
      %7708 = vmatmul.mubr.f32.gmra.mrb[0].mxu0 %v7325
      %v7709 = vpop.f32.mrb[0].mxu0
      %v7710 = vadd.f32 0.0, %v7709
      %v7711 = vpop.f32.mrb[0].mxu0
      %7712 = vmatprep.mubr.f32.mxu0 0.0
      %7713 = vmatmul.mubr.f32.gmra.mrb[0].mxu0 %v7328
      %v7714 = vpop.f32.mrb[0].mxu0
      %v7715 = vadd.f32 0.0, %v7714
      %v7716 = vpop.f32.mrb[0].mxu0
      %7717 = vdwg.mxu0
      %v7718 = vadd.f32 %v7008, %v7400
      %v7719 = vadd.f32 %v7009, %v7405
      %v7720 = vadd.f32 %v7010, %v7410
      %v7721 = vadd.f32 %v7011, %v7415
      %v7722 = vadd.f32 %v7012, %v7420
      %v7723 = vadd.f32 %v7013, %v7425
      %v7724 = vadd.f32 %v7014, %v7430
      %v7725 = vadd.f32 %v7015, %v7435
      %v7726 = vadd.f32 %v7016, %v7440
      %v7727 = vadd.f32 %v7017, %v7445
      %v7728 = vadd.f32 %v7018, %v7450
      %v7729 = vadd.f32 %v7019, %v7455
      %v7730 = vadd.f32 %v7020, %v7460
      %v7731 = vadd.f32 %v7021, %v7465
      %v7732 = vadd.f32 %v7022, %v7470
      %v7733 = vadd.f32 %v7023, %v7475
      %v7734 = vadd.f32 %v7024, %v7480
      %v7735 = vadd.f32 %v7025, %v7485
      %v7736 = vadd.f32 %v7026, %v7490
      %v7737 = vadd.f32 %v7027, %v7495
      %v7738 = vadd.f32 %v7028, %v7500
      %v7739 = vadd.f32 %v7029, %v7505
      %v7740 = vadd.f32 %v7030, %v7510
      %v7741 = vadd.f32 %v7031, %v7515
      %v7742 = vadd.f32 %v7032, %v7520
      %v7743 = vadd.f32 %v7033, %v7525
      %v7744 = vadd.f32 %v7034, %v7530
      %v7745 = vadd.f32 %v7035, %v7535
      %v7746 = vadd.f32 %v7036, %v7540
      %v7747 = vadd.f32 %v7037, %v7545
      %v7748 = vadd.f32 %v7038, %v7550
      %v7749 = vadd.f32 %v7039, %v7555
      %v7750 = vadd.f32 %v7040, %v7560
      %v7751 = vadd.f32 %v7041, %v7565
      %v7752 = vadd.f32 %v7042, %v7570
      %v7753 = vadd.f32 %v7043, %v7575
      %v7754 = vadd.f32 %v7044, %v7580
      %v7755 = vadd.f32 %v7045, %v7585
      %v7756 = vadd.f32 %v7046, %v7590
      %v7757 = vadd.f32 %v7047, %v7595
      %v7758 = vadd.f32 %v7048, %v7600
      %v7759 = vadd.f32 %v7049, %v7605
      %v7760 = vadd.f32 %v7050, %v7610
      %v7761 = vadd.f32 %v7051, %v7615
      %v7762 = vadd.f32 %v7052, %v7620
      %v7763 = vadd.f32 %v7053, %v7625
      %v7764 = vadd.f32 %v7054, %v7630
      %v7765 = vadd.f32 %v7055, %v7635
      %v7766 = vadd.f32 %v7056, %v7640
      %v7767 = vadd.f32 %v7057, %v7645
      %v7768 = vadd.f32 %v7058, %v7650
      %v7769 = vadd.f32 %v7059, %v7655
      %v7770 = vadd.f32 %v7060, %v7660
      %v7771 = vadd.f32 %v7061, %v7665
      %v7772 = vadd.f32 %v7062, %v7670
      %v7773 = vadd.f32 %v7063, %v7675
      %v7774 = vadd.f32 %v7064, %v7680
      %v7775 = vadd.f32 %v7065, %v7685
      %v7776 = vadd.f32 %v7066, %v7690
      %v7777 = vadd.f32 %v7067, %v7695
      %v7778 = vadd.f32 %v7068, %v7700
      %v7779 = vadd.f32 %v7069, %v7705
      %v7780 = vadd.f32 %v7070, %v7710
      %v7781 = vadd.f32 %v7071, %v7715
      %7782 = vst [vmem:[%s230] sm:$0xff] %v7718
      %7783 = vst [vmem:[%s230 + $0x8] sm:$0xff] %v7719
      %7784 = vst [vmem:[%s230 + $0x10] sm:$0xff] %v7720
      %7785 = vst [vmem:[%s230 + $0x18] sm:$0xff] %v7721
      %7786 = vst [vmem:[%s230 + $0x20] sm:$0xff] %v7722
      %7787 = vst [vmem:[%s230 + $0x28] sm:$0xff] %v7723
      %7788 = vst [vmem:[%s230 + $0x30] sm:$0xff] %v7724
      %7789 = vst [vmem:[%s230 + $0x38] sm:$0xff] %v7725
      %7790 = vst [vmem:[%s230 + $0x40] sm:$0xff] %v7726
      %7791 = vst [vmem:[%s230 + $0x48] sm:$0xff] %v7727
      %7792 = vst [vmem:[%s230 + $0x50] sm:$0xff] %v7728
      %7793 = vst [vmem:[%s230 + $0x58] sm:$0xff] %v7729
      %7794 = vst [vmem:[%s230 + $0x60] sm:$0xff] %v7730
      %7795 = vst [vmem:[%s230 + $0x68] sm:$0xff] %v7731
      %7796 = vst [vmem:[%s230 + $0x70] sm:$0xff] %v7732
      %7797 = vst [vmem:[%s230 + $0x78] sm:$0xff] %v7733
      %7798 = vst [vmem:[%s230 + $0x80] sm:$0xff] %v7734
      %7799 = vst [vmem:[%s230 + $0x88] sm:$0xff] %v7735
      %7800 = vst [vmem:[%s230 + $0x90] sm:$0xff] %v7736
      %7801 = vst [vmem:[%s230 + $0x98] sm:$0xff] %v7737
      %7802 = vst [vmem:[%s230 + $0xa0] sm:$0xff] %v7738
      %7803 = vst [vmem:[%s230 + $0xa8] sm:$0xff] %v7739
      %7804 = vst [vmem:[%s230 + $0xb0] sm:$0xff] %v7740
      %7805 = vst [vmem:[%s230 + $0xb8] sm:$0xff] %v7741
      %7806 = vst [vmem:[%s230 + $0xc0] sm:$0xff] %v7742
      %7807 = vst [vmem:[%s230 + $0xc8] sm:$0xff] %v7743
      %7808 = vst [vmem:[%s230 + $0xd0] sm:$0xff] %v7744
      %7809 = vst [vmem:[%s230 + $0xd8] sm:$0xff] %v7745
      %7810 = vst [vmem:[%s230 + $0xe0] sm:$0xff] %v7746
      %7811 = vst [vmem:[%s230 + $0xe8] sm:$0xff] %v7747
      %7812 = vst [vmem:[%s230 + $0xf0] sm:$0xff] %v7748
      %7813 = vst [vmem:[%s230 + $0xf8] sm:$0xff] %v7749
      %7814 = vst [vmem:[%s230 + $0x100] sm:$0xff] %v7750
      %7815 = vst [vmem:[%s230 + $0x108] sm:$0xff] %v7751
      %7816 = vst [vmem:[%s230 + $0x110] sm:$0xff] %v7752
      %7817 = vst [vmem:[%s230 + $0x118] sm:$0xff] %v7753
      %7818 = vst [vmem:[%s230 + $0x120] sm:$0xff] %v7754
      %7819 = vst [vmem:[%s230 + $0x128] sm:$0xff] %v7755
      %7820 = vst [vmem:[%s230 + $0x130] sm:$0xff] %v7756
      %7821 = vst [vmem:[%s230 + $0x138] sm:$0xff] %v7757
      %7822 = vst [vmem:[%s230 + $0x140] sm:$0xff] %v7758
      %7823 = vst [vmem:[%s230 + $0x148] sm:$0xff] %v7759
      %7824 = vst [vmem:[%s230 + $0x150] sm:$0xff] %v7760
      %7825 = vst [vmem:[%s230 + $0x158] sm:$0xff] %v7761
      %7826 = vst [vmem:[%s230 + $0x160] sm:$0xff] %v7762
      %7827 = vst [vmem:[%s230 + $0x168] sm:$0xff] %v7763
      %7828 = vst [vmem:[%s230 + $0x170] sm:$0xff] %v7764
      %7829 = vst [vmem:[%s230 + $0x178] sm:$0xff] %v7765
      %7830 = vst [vmem:[%s230 + $0x180] sm:$0xff] %v7766
      %7831 = vst [vmem:[%s230 + $0x188] sm:$0xff] %v7767
      %7832 = vst [vmem:[%s230 + $0x190] sm:$0xff] %v7768
      %7833 = vst [vmem:[%s230 + $0x198] sm:$0xff] %v7769
      %7834 = vst [vmem:[%s230 + $0x1a0] sm:$0xff] %v7770
      %7835 = vst [vmem:[%s230 + $0x1a8] sm:$0xff] %v7771
      %7836 = vst [vmem:[%s230 + $0x1b0] sm:$0xff] %v7772
      %7837 = vst [vmem:[%s230 + $0x1b8] sm:$0xff] %v7773
      %7838 = vst [vmem:[%s230 + $0x1c0] sm:$0xff] %v7774
      %7839 = vst [vmem:[%s230 + $0x1c8] sm:$0xff] %v7775
      %7840 = vst [vmem:[%s230 + $0x1d0] sm:$0xff] %v7776
      %7841 = vst [vmem:[%s230 + $0x1d8] sm:$0xff] %v7777
      %7842 = vst [vmem:[%s230 + $0x1e0] sm:$0xff] %v7778
      %7843 = vst [vmem:[%s230 + $0x1e8] sm:$0xff] %v7779
      %7844 = vst [vmem:[%s230 + $0x1f0] sm:$0xff] %v7780
      %7845 = vst [vmem:[%s230 + $0x1f8] sm:$0xff] %v7781
      %v7846 = vld [vmem:[%s230] sm:$0xff]
      %v7847 = vld [vmem:[%s230 + $0x8] sm:$0xff]
      %v7848 = vld [vmem:[%s230 + $0x10] sm:$0xff]
      %v7849 = vld [vmem:[%s230 + $0x18] sm:$0xff]
      %v7850 = vld [vmem:[%s230 + $0x20] sm:$0xff]
      %v7851 = vld [vmem:[%s230 + $0x28] sm:$0xff]
      %v7852 = vld [vmem:[%s230 + $0x30] sm:$0xff]
      %v7853 = vld [vmem:[%s230 + $0x38] sm:$0xff]
      %v7854 = vld [vmem:[%s230 + $0x40] sm:$0xff]
      %v7855 = vld [vmem:[%s230 + $0x48] sm:$0xff]
      %v7856 = vld [vmem:[%s230 + $0x50] sm:$0xff]
      %v7857 = vld [vmem:[%s230 + $0x58] sm:$0xff]
      %v7858 = vld [vmem:[%s230 + $0x60] sm:$0xff]
      %v7859 = vld [vmem:[%s230 + $0x68] sm:$0xff]
      %v7860 = vld [vmem:[%s230 + $0x70] sm:$0xff]
      %v7861 = vld [vmem:[%s230 + $0x78] sm:$0xff]
      %v7862 = vld [vmem:[%s230 + $0x80] sm:$0xff]
      %v7863 = vld [vmem:[%s230 + $0x88] sm:$0xff]
      %v7864 = vld [vmem:[%s230 + $0x90] sm:$0xff]
      %v7865 = vld [vmem:[%s230 + $0x98] sm:$0xff]
      %v7866 = vld [vmem:[%s230 + $0xa0] sm:$0xff]
      %v7867 = vld [vmem:[%s230 + $0xa8] sm:$0xff]
      %v7868 = vld [vmem:[%s230 + $0xb0] sm:$0xff]
      %v7869 = vld [vmem:[%s230 + $0xb8] sm:$0xff]
      %v7870 = vld [vmem:[%s230 + $0xc0] sm:$0xff]
      %v7871 = vld [vmem:[%s230 + $0xc8] sm:$0xff]
      %v7872 = vld [vmem:[%s230 + $0xd0] sm:$0xff]
      %v7873 = vld [vmem:[%s230 + $0xd8] sm:$0xff]
      %v7874 = vld [vmem:[%s230 + $0xe0] sm:$0xff]
      %v7875 = vld [vmem:[%s230 + $0xe8] sm:$0xff]
      %v7876 = vld [vmem:[%s230 + $0xf0] sm:$0xff]
      %v7877 = vld [vmem:[%s230 + $0xf8] sm:$0xff]
      %v7878 = vld [vmem:[%s230 + $0x100] sm:$0xff]
      %v7879 = vld [vmem:[%s230 + $0x108] sm:$0xff]
      %v7880 = vld [vmem:[%s230 + $0x110] sm:$0xff]
      %v7881 = vld [vmem:[%s230 + $0x118] sm:$0xff]
      %v7882 = vld [vmem:[%s230 + $0x120] sm:$0xff]
      %v7883 = vld [vmem:[%s230 + $0x128] sm:$0xff]
      %v7884 = vld [vmem:[%s230 + $0x130] sm:$0xff]
      %v7885 = vld [vmem:[%s230 + $0x138] sm:$0xff]
      %v7886 = vld [vmem:[%s230 + $0x140] sm:$0xff]
      %v7887 = vld [vmem:[%s230 + $0x148] sm:$0xff]
      %v7888 = vld [vmem:[%s230 + $0x150] sm:$0xff]
      %v7889 = vld [vmem:[%s230 + $0x158] sm:$0xff]
      %v7890 = vld [vmem:[%s230 + $0x160] sm:$0xff]
      %v7891 = vld [vmem:[%s230 + $0x168] sm:$0xff]
      %v7892 = vld [vmem:[%s230 + $0x170] sm:$0xff]
      %v7893 = vld [vmem:[%s230 + $0x178] sm:$0xff]
      %v7894 = vld [vmem:[%s230 + $0x180] sm:$0xff]
      %v7895 = vld [vmem:[%s230 + $0x188] sm:$0xff]
      %v7896 = vld [vmem:[%s230 + $0x190] sm:$0xff]
      %v7897 = vld [vmem:[%s230 + $0x198] sm:$0xff]
      %v7898 = vld [vmem:[%s230 + $0x1a0] sm:$0xff]
      %v7899 = vld [vmem:[%s230 + $0x1a8] sm:$0xff]
      %v7900 = vld [vmem:[%s230 + $0x1b0] sm:$0xff]
      %v7901 = vld [vmem:[%s230 + $0x1b8] sm:$0xff]
      %v7902 = vld [vmem:[%s230 + $0x1c0] sm:$0xff]
      %v7903 = vld [vmem:[%s230 + $0x1c8] sm:$0xff]
      %v7904 = vld [vmem:[%s230 + $0x1d0] sm:$0xff]
      %v7905 = vld [vmem:[%s230 + $0x1d8] sm:$0xff]
      %v7906 = vld [vmem:[%s230 + $0x1e0] sm:$0xff]
      %v7907 = vld [vmem:[%s230 + $0x1e8] sm:$0xff]
      %v7908 = vld [vmem:[%s230 + $0x1f0] sm:$0xff]
      %v7909 = vld [vmem:[%s230 + $0x1f8] sm:$0xff]
      %v7910 = vmax.f32 %v7846, 0.0
      %v7911 = vmax.f32 %v7847, 0.0
      %v7912 = vmax.f32 %v7848, 0.0
      %v7913 = vmax.f32 %v7849, 0.0
      %v7914 = vmax.f32 %v7850, 0.0
      %v7915 = vmax.f32 %v7851, 0.0
      %v7916 = vmax.f32 %v7852, 0.0
      %v7917 = vmax.f32 %v7853, 0.0
      %v7918 = vmax.f32 %v7854, 0.0
      %v7919 = vmax.f32 %v7855, 0.0
      %v7920 = vmax.f32 %v7856, 0.0
      %v7921 = vmax.f32 %v7857, 0.0
      %v7922 = vmax.f32 %v7858, 0.0
      %v7923 = vmax.f32 %v7859, 0.0
      %v7924 = vmax.f32 %v7860, 0.0
      %v7925 = vmax.f32 %v7861, 0.0
      %v7926 = vmax.f32 %v7862, 0.0
      %v7927 = vmax.f32 %v7863, 0.0
      %v7928 = vmax.f32 %v7864, 0.0
      %v7929 = vmax.f32 %v7865, 0.0
      %v7930 = vmax.f32 %v7866, 0.0
      %v7931 = vmax.f32 %v7867, 0.0
      %v7932 = vmax.f32 %v7868, 0.0
      %v7933 = vmax.f32 %v7869, 0.0
      %v7934 = vmax.f32 %v7870, 0.0
      %v7935 = vmax.f32 %v7871, 0.0
      %v7936 = vmax.f32 %v7872, 0.0
      %v7937 = vmax.f32 %v7873, 0.0
      %v7938 = vmax.f32 %v7874, 0.0
      %v7939 = vmax.f32 %v7875, 0.0
      %v7940 = vmax.f32 %v7876, 0.0
      %v7941 = vmax.f32 %v7877, 0.0
      %v7942 = vmax.f32 %v7878, 0.0
      %v7943 = vmax.f32 %v7879, 0.0
      %v7944 = vmax.f32 %v7880, 0.0
      %v7945 = vmax.f32 %v7881, 0.0
      %v7946 = vmax.f32 %v7882, 0.0
      %v7947 = vmax.f32 %v7883, 0.0
      %v7948 = vmax.f32 %v7884, 0.0
      %v7949 = vmax.f32 %v7885, 0.0
      %v7950 = vmax.f32 %v7886, 0.0
      %v7951 = vmax.f32 %v7887, 0.0
      %v7952 = vmax.f32 %v7888, 0.0
      %v7953 = vmax.f32 %v7889, 0.0
      %v7954 = vmax.f32 %v7890, 0.0
      %v7955 = vmax.f32 %v7891, 0.0
      %v7956 = vmax.f32 %v7892, 0.0
      %v7957 = vmax.f32 %v7893, 0.0
      %v7958 = vmax.f32 %v7894, 0.0
      %v7959 = vmax.f32 %v7895, 0.0
      %v7960 = vmax.f32 %v7896, 0.0
      %v7961 = vmax.f32 %v7897, 0.0
      %v7962 = vmax.f32 %v7898, 0.0
      %v7963 = vmax.f32 %v7899, 0.0
      %v7964 = vmax.f32 %v7900, 0.0
      %v7965 = vmax.f32 %v7901, 0.0
      %v7966 = vmax.f32 %v7902, 0.0
      %v7967 = vmax.f32 %v7903, 0.0
      %v7968 = vmax.f32 %v7904, 0.0
      %v7969 = vmax.f32 %v7905, 0.0
      %v7970 = vmax.f32 %v7906, 0.0
      %v7971 = vmax.f32 %v7907, 0.0
      %v7972 = vmax.f32 %v7908, 0.0
      %v7973 = vmax.f32 %v7909, 0.0
      %7974 = vst [vmem:[%s230] sm:$0xff] %v7910
      %7975 = vst [vmem:[%s230 + $0x8] sm:$0xff] %v7911
      %7976 = vst [vmem:[%s230 + $0x10] sm:$0xff] %v7912
      %7977 = vst [vmem:[%s230 + $0x18] sm:$0xff] %v7913
      %7978 = vst [vmem:[%s230 + $0x20] sm:$0xff] %v7914
      %7979 = vst [vmem:[%s230 + $0x28] sm:$0xff] %v7915
      %7980 = vst [vmem:[%s230 + $0x30] sm:$0xff] %v7916
      %7981 = vst [vmem:[%s230 + $0x38] sm:$0xff] %v7917
      %7982 = vst [vmem:[%s230 + $0x40] sm:$0xff] %v7918
      %7983 = vst [vmem:[%s230 + $0x48] sm:$0xff] %v7919
      %7984 = vst [vmem:[%s230 + $0x50] sm:$0xff] %v7920
      %7985 = vst [vmem:[%s230 + $0x58] sm:$0xff] %v7921
      %7986 = vst [vmem:[%s230 + $0x60] sm:$0xff] %v7922
      %7987 = vst [vmem:[%s230 + $0x68] sm:$0xff] %v7923
      %7988 = vst [vmem:[%s230 + $0x70] sm:$0xff] %v7924
      %7989 = vst [vmem:[%s230 + $0x78] sm:$0xff] %v7925
      %7990 = vst [vmem:[%s230 + $0x80] sm:$0xff] %v7926
      %7991 = vst [vmem:[%s230 + $0x88] sm:$0xff] %v7927
      %7992 = vst [vmem:[%s230 + $0x90] sm:$0xff] %v7928
      %7993 = vst [vmem:[%s230 + $0x98] sm:$0xff] %v7929
      %7994 = vst [vmem:[%s230 + $0xa0] sm:$0xff] %v7930
      %7995 = vst [vmem:[%s230 + $0xa8] sm:$0xff] %v7931
      %7996 = vst [vmem:[%s230 + $0xb0] sm:$0xff] %v7932
      %7997 = vst [vmem:[%s230 + $0xb8] sm:$0xff] %v7933
      %7998 = vst [vmem:[%s230 + $0xc0] sm:$0xff] %v7934
      %7999 = vst [vmem:[%s230 + $0xc8] sm:$0xff] %v7935
      %8000 = vst [vmem:[%s230 + $0xd0] sm:$0xff] %v7936
      %8001 = vst [vmem:[%s230 + $0xd8] sm:$0xff] %v7937
      %8002 = vst [vmem:[%s230 + $0xe0] sm:$0xff] %v7938
      %8003 = vst [vmem:[%s230 + $0xe8] sm:$0xff] %v7939
      %8004 = vst [vmem:[%s230 + $0xf0] sm:$0xff] %v7940
      %8005 = vst [vmem:[%s230 + $0xf8] sm:$0xff] %v7941
      %8006 = vst [vmem:[%s230 + $0x100] sm:$0xff] %v7942
      %8007 = vst [vmem:[%s230 + $0x108] sm:$0xff] %v7943
      %8008 = vst [vmem:[%s230 + $0x110] sm:$0xff] %v7944
      %8009 = vst [vmem:[%s230 + $0x118] sm:$0xff] %v7945
      %8010 = vst [vmem:[%s230 + $0x120] sm:$0xff] %v7946
      %8011 = vst [vmem:[%s230 + $0x128] sm:$0xff] %v7947
      %8012 = vst [vmem:[%s230 + $0x130] sm:$0xff] %v7948
      %8013 = vst [vmem:[%s230 + $0x138] sm:$0xff] %v7949
      %8014 = vst [vmem:[%s230 + $0x140] sm:$0xff] %v7950
      %8015 = vst [vmem:[%s230 + $0x148] sm:$0xff] %v7951
      %8016 = vst [vmem:[%s230 + $0x150] sm:$0xff] %v7952
      %8017 = vst [vmem:[%s230 + $0x158] sm:$0xff] %v7953
      %8018 = vst [vmem:[%s230 + $0x160] sm:$0xff] %v7954
      %8019 = vst [vmem:[%s230 + $0x168] sm:$0xff] %v7955
      %8020 = vst [vmem:[%s230 + $0x170] sm:$0xff] %v7956
      %8021 = vst [vmem:[%s230 + $0x178] sm:$0xff] %v7957
      %8022 = vst [vmem:[%s230 + $0x180] sm:$0xff] %v7958
      %8023 = vst [vmem:[%s230 + $0x188] sm:$0xff] %v7959
      %8024 = vst [vmem:[%s230 + $0x190] sm:$0xff] %v7960
      %8025 = vst [vmem:[%s230 + $0x198] sm:$0xff] %v7961
      %8026 = vst [vmem:[%s230 + $0x1a0] sm:$0xff] %v7962
      %8027 = vst [vmem:[%s230 + $0x1a8] sm:$0xff] %v7963
      %8028 = vst [vmem:[%s230 + $0x1b0] sm:$0xff] %v7964
      %8029 = vst [vmem:[%s230 + $0x1b8] sm:$0xff] %v7965
      %8030 = vst [vmem:[%s230 + $0x1c0] sm:$0xff] %v7966
      %8031 = vst [vmem:[%s230 + $0x1c8] sm:$0xff] %v7967
      %8032 = vst [vmem:[%s230 + $0x1d0] sm:$0xff] %v7968
      %8033 = vst [vmem:[%s230 + $0x1d8] sm:$0xff] %v7969
      %8034 = vst [vmem:[%s230 + $0x1e0] sm:$0xff] %v7970
      %8035 = vst [vmem:[%s230 + $0x1e8] sm:$0xff] %v7971
      %8036 = vst [vmem:[%s230 + $0x1f0] sm:$0xff] %v7972
      %8037 = vst [vmem:[%s230 + $0x1f8] sm:$0xff] %v7973
      %s8038 = smul.u32 64, %s14
      %p8039 = scmp.lt.s32.totalorder %s8038, 127
      %s8040 = scalar_select %p8039, %s8038, 127
      %s8041 = smul.addr %s8040, 8
      %s8042 = scalar_lea.vmem %s3, %s8041
      // Predicated region
      $region33: #{double_conv_forward.1} parent=31 // pred_check
        %p8043 = pneg %p118
      $region34: #{double_conv_forward.1} parent=31 // pred_check_branch
        %8045 = sbr.rel (%p8043) target = $region36
      $region35: #{double_conv_forward.1} parent=31 // pred_region
        %s8046 = smul.u32 64, %s14
      $region36: #{double_conv_forward.1} parent=31 // pred_fallthru
        _
    $region32: #{double_conv_forward.1} parent=5 // pred_fallthru
      _
    %p8047 = scmp.le.s32.totalorder 2, %s9
    // Predicated region
    $region37: #{double_conv_forward.1} parent=5 // pred_check
      %p8048 = pneg %p8047
    $region38: #{double_conv_forward.1} parent=5 // pred_check_branch
      %8050 = sbr.rel (%p8048) target = $region40
    $region39: #{double_conv_forward.1} parent=5 // pred_region
      %s8051 = ssub.s32 %s9, 2
      // Predicated region
      $region41: #{double_conv_forward.1} parent=39 // pred_check
        %p8052 = pneg %p124
      $region42: #{double_conv_forward.1} parent=39 // pred_check_branch
        %8054 = sbr.rel (%p8052) target = $region44
      $region43: #{double_conv_forward.1} parent=39 // pred_region
        %s8055 = smul.u32 64, %s15
        %p8056 = scmp.lt.s32.totalorder %s8055, 127
        %s8057 = scalar_select %p8056, %s8055, 127
        %s8058 = smul.addr %s8057, 8
        %s8059 = scalar_lea.vmem %s3, %s8058
      $region44: #{double_conv_forward.1} parent=39 // pred_fallthru
        _
    $region40: #{double_conv_forward.1} parent=5 // pred_fallthru
      _
  $region6: #{double_conv_forward.1} parent=0 // loop_footer
    %s13 = sadd.s32 1, %s9
  $region7: #{double_conv_forward.1} parent=0 // loop_footer_branch
    %8 = sbr.rel target = $region3
  $region8: #{double_conv_forward.1} parent=0 // loop_exit
    _

</llo_original>
